<compile_context>
chip_gen: v6e
topology: v6e:2x2x1
jax: 0.10.0
libtpu: 0.0.40
codegen_flags: <defaults>
</compile_context>

<pallas_src>
import numpy as np
import jax
import jax.numpy as jnp
from jax import lax
from jax.experimental import pallas as pl
from jax.experimental.pallas import tpu as pltpu

NET_FACTOR = 8          # network width factor (global in the PyTorch file)
IN_NORM_EPS = 1e-5      # PyTorch InstanceNorm2d default eps


# ---------------------------------------------------------------------------
# Host-side constant builders (hoisted out of the kernel)
# ---------------------------------------------------------------------------
def _choose_nb(n, w):
    """Batch-block size: largest of (8,4,2,1) dividing N that keeps the grid
    length >= 2 (both v7x TensorCores busy) and the input block lane width a
    multiple of 128 (or the full array)."""
    for nb in (8, 4, 2, 1):
        if n % nb:
            continue
        grid_ok = (n // nb >= 2) or (nb == n)
        lane_ok = ((nb * w) % 128 == 0) or (nb == n)
        if grid_ok and lane_ok:
            return nb
    return 1


def _layer_consts(w, b, h, w_in, nb):
    """Constants for one conv(k=4, s=2, p=1) layer.

    wg   (OH*Cout, 4*H*Cin): kj-blocked; fuses channel contraction, height
                             gather (incl. zero pad) and the ki-sum.
    scol (4*Nb*W, Nb*OW):    kj-blocked 0/1 width gather (incl. zero pad),
                             block-diagonal per sample.
    bcol (OH*Cout, 1):       bias per output row.
    pavg (Nb*OW, Nb*OW):     per-sample spatial averaging (incl. 1/(OH*OW)).
    """
    cout, cin, _, _ = w.shape
    oh_n, ow_n = h // 2, w_in // 2

    # WG depends on weight values -> built with jnp (jit/trace friendly).
    oh_idx = np.arange(oh_n)
    h_idx = np.arange(h)
    ki = h_idx[None, :] - 2 * oh_idx[:, None] + 1            # (OH, H)
    valid = ((ki >= 0) & (ki <= 3)).astype(np.float32)
    ki_cl = np.clip(ki, 0, 3)
    wt = jnp.transpose(w, (2, 3, 0, 1))                      # (ki, kj, co, ci)
    g = wt[ki_cl] * jnp.asarray(valid)[:, :, None, None, None]  # (OH,H,4,co,ci)
    wg = jnp.transpose(g, (0, 3, 2, 1, 4)).reshape(oh_n * cout, 4 * h * cin)

    # Static 0/1 width-gather matrix (stride 2, pad 1), per-sample blocks.
    scol1 = np.zeros((4, w_in, ow_n), np.float32)
    for kj in range(4):
        for ow in range(ow_n):
            ws = 2 * ow + kj - 1
            if 0 <= ws < w_in:
                scol1[kj, ws, ow] = 1.0
    eye_nb = np.eye(nb, dtype=np.float32)
    scol = np.einsum("ab,kwo->kawbo", eye_nb, scol1)
    scol = scol.reshape(4 * nb * w_in, nb * ow_n)

    bcol = jnp.tile(b.reshape(1, cout), (oh_n, 1)).reshape(oh_n * cout, 1)
    pavg = np.kron(eye_nb, np.full((ow_n, ow_n), 1.0 / (oh_n * ow_n),
                                   np.float32))

    return (wg.astype(jnp.float32), jnp.asarray(scol),
            bcol.astype(jnp.float32), jnp.asarray(pavg))


# ---------------------------------------------------------------------------
# Kernel
# ---------------------------------------------------------------------------
def _make_kernel(dims, nb):
    n_layers = len(dims)
    n_norm = sum(1 for d in dims if d[4])

    def kernel(x_ref, *refs):
        wg_refs = refs[0:n_layers]
        sc_refs = refs[n_layers:2 * n_layers]
        b_refs = refs[2 * n_layers:3 * n_layers]
        p_refs = refs[3 * n_layers:3 * n_layers + n_norm]
        o_ref = refs[3 * n_layers + n_norm]

        a = x_ref[...]                       # (H*Cin, Nb*W) f32
        pidx = 0
        for li, (cin, cout, h, w_sp, use_norm, act) in enumerate(dims):
            oh_n, ow_n = h // 2, w_sp // 2
            l_in = nb * w_sp
            l_out = nb * ow_n
            hcin = h * cin

            # conv(k=4, s=2, p=1): 4 kj terms, each two aligned 2-D matmuls.
            acc = None
            for kj in range(4):
                gathered = jnp.dot(
                    a, sc_refs[li][kj * l_in:(kj + 1) * l_in, :],
                    preferred_element_type=jnp.float32)        # (H*Cin, Nb*OW)
                term = jnp.dot(
                    wg_refs[li][:, kj * hcin:(kj + 1) * hcin], gathered,
                    preferred_element_type=jnp.float32)        # (OH*Cout, Nb*OW)
                acc = term if acc is None else acc + term
            y = acc + b_refs[li][...]                          # + bias

            if use_norm:  # InstanceNorm2d (affine=False, biased var)
                pavg = p_refs[pidx][...]
                pidx += 1
                y3 = y.reshape(oh_n, cout, l_out)              # (OH, Cout, NbOW)
                mean = jnp.dot(jnp.sum(y3, axis=0), pavg,
                               preferred_element_type=jnp.float32)
                cen = y3 - mean[None]
                var = jnp.dot(jnp.sum(cen * cen, axis=0), pavg,
                              preferred_element_type=jnp.float32)
                y = (cen * lax.rsqrt(var + IN_NORM_EPS)[None]).reshape(
                    oh_n * cout, l_out)

            if act == "leaky":
                y = jnp.where(y >= 0.0, y, 0.2 * y)            # LeakyReLU(0.2)
            else:
                y = jax.nn.sigmoid(y)
            a = y

        o_ref[0] = a                                           # (OH5, Nb*OW5)

    return kernel


# ---------------------------------------------------------------------------
# Host-side wrapper
# ---------------------------------------------------------------------------
def init_params(key):
    specs = [(NET_FACTOR, 4), (2 * NET_FACTOR, NET_FACTOR),
             (4 * NET_FACTOR, 2 * NET_FACTOR), (8 * NET_FACTOR, 4 * NET_FACTOR),
             (1, 8 * NET_FACTOR)]
    params = []
    for li, (cout, cin) in enumerate(specs):
        kw_, kb_ = jax.random.split(jax.random.fold_in(key, li))
        w = 0.05 * jax.random.normal(kw_, (cout, cin, 4, 4), dtype=jnp.float32)
        b = 0.05 * jax.random.normal(kb_, (cout,), dtype=jnp.float32)
        params.append((w, b))
    return params


def discriminator_forward(x, params):
    """x: (N, 4, H, W) f32 with H, W multiples of 32 -> (N, 1, H/32, W/32)."""
    n, c, h, w = x.shape
    assert c == 4, "Discriminator expects 4 input channels"
    assert h % 32 == 0 and w % 32 == 0, "spatial dims must be multiples of 32"

    nb = _choose_nb(n, w)
    nblk = n // nb

    chans = [4, NET_FACTOR, 2 * NET_FACTOR, 4 * NET_FACTOR, 8 * NET_FACTOR, 1]
    norms = [False, True, True, True, False]
    acts = ["leaky", "leaky", "leaky", "leaky", "sigmoid"]
    dims = []
    hh, ww = h, w
    for li in range(5):
        dims.append((chans[li], chans[li + 1], hh, ww, norms[li], acts[li]))
        hh, ww = hh // 2, ww // 2
    oh5, ow5 = hh, ww

    wgs, scs, bcols, pavgs = [], [], [], []
    for (cin, cout, lh, lw, use_norm, act), (wp, bp) in zip(dims, params):
        wg, sc, bc, pv = _layer_consts(wp, bp, lh, lw, nb)
        wgs.append(wg)
        scs.append(sc)
        bcols.append(bc)
        if use_norm:
            pavgs.append(pv)

    # Host-side relayout to the kernel's canonical 2-D activation layout:
    # xh[h*C + c, n*W + w] = x[n, c, h, w].
    xh = jnp.transpose(x, (2, 1, 0, 3)).reshape(h * c, n * w).astype(jnp.float32)

    consts = [*wgs, *scs, *bcols, *pavgs]
    in_specs = [pl.BlockSpec((h * c, nb * w), lambda g: (0, g))]
    for arr in consts:
        in_specs.append(pl.BlockSpec(arr.shape, lambda g: (0, 0)))

    out = pl.pallas_call(
        _make_kernel(dims, nb),
        out_shape=jax.ShapeDtypeStruct((nblk, oh5, nb * ow5), jnp.float32),
        grid_spec=pltpu.PrefetchScalarGridSpec(
            num_scalar_prefetch=0,
            grid=(nblk,),
            in_specs=in_specs,
            out_specs=pl.BlockSpec((1, oh5, nb * ow5), lambda g: (g, 0, 0)),
        ),
        compiler_params=pltpu.CompilerParams(
            dimension_semantics=("parallel",)),
    )(xh, *consts)

    # (nblk, OH5, Nb*OW5) -> (N, 1, OH5, OW5)
    out = out.reshape(nblk, oh5, nb, ow5).transpose(0, 2, 1, 3)
    return out.reshape(n, 1, oh5, ow5)


# ---------------------------------------------------------------------------
# Pure-JAX reference (sanity check)
# ---------------------------------------------------------------------------
def _reference_forward(x, params):
    dn = lax.conv_dimension_numbers(x.shape, params[0][0].shape,
                                    ("NCHW", "OIHW", "NCHW"))
    cfg = [(False, "leaky"), (True, "leaky"), (True, "leaky"),
           (True, "leaky"), (False, "sigmoid")]
    for (w, b), (use_norm, act) in zip(params, cfg):
        x = lax.conv_general_dilated(x, w, (2, 2), [(1, 1), (1, 1)],
                                     dimension_numbers=dn,
                                     precision=lax.Precision.HIGHEST)
        x = x + b.reshape(1, -1, 1, 1)
        if use_norm:
            mean = jnp.mean(x, axis=(2, 3), keepdims=True)
            var = jnp.mean((x - mean) ** 2, axis=(2, 3), keepdims=True)
            x = (x - mean) * lax.rsqrt(var + IN_NORM_EPS)
        if act == "leaky":
            x = jnp.where(x >= 0, x, 0.2 * x)
        else:
            x = jax.nn.sigmoid(x)
    return x


if __name__ == "__main__":
    key = jax.random.PRNGKey(0)
    k_x, k_p = jax.random.split(key)

    # 32x32 input: 5 stride-2 convs -> 16 -> 8 -> 4 -> 2 -> 1 (1x1 patch map).
    # Batch 16 -> two batch-blocks of 8 samples (grid of length 2).
    x = jax.random.normal(k_x, (16, 4, 32, 32), dtype=jnp.float32)  # NCHW
    params = init_params(k_p)

    fwd = jax.jit(discriminator_forward)
    out = jax.block_until_ready(fwd(x, params))
    assert out.shape == (16, 1, 1, 1), out.shape

    ref = jax.block_until_ready(_reference_forward(x, params))
    err = float(jnp.max(jnp.abs(out - ref)))
    assert err < 2e-3, f"max abs err {err}"

    print("KERNEL_OK")
</pallas_src>

<mosaic_0001>
module attributes {stable_mosaic.version = 11 : i64} {
  func.func @kernel(%arg0: i32, %arg1: memref<128x256xf32, #tpu.memory_space<vmem>>, %arg2: memref<128x512xf32, #tpu.memory_space<vmem>>, %arg3: memref<128x512xf32, #tpu.memory_space<vmem>>, %arg4: memref<128x512xf32, #tpu.memory_space<vmem>>, %arg5: memref<128x512xf32, #tpu.memory_space<vmem>>, %arg6: memref<1x512xf32, #tpu.memory_space<vmem>>, %arg7: memref<1024x128xf32, #tpu.memory_space<vmem>>, %arg8: memref<512x64xf32, #tpu.memory_space<vmem>>, %arg9: memref<256x32xf32, #tpu.memory_space<vmem>>, %arg10: memref<128x16xf32, #tpu.memory_space<vmem>>, %arg11: memref<64x8xf32, #tpu.memory_space<vmem>>, %arg12: memref<128x1xf32, #tpu.memory_space<vmem>>, %arg13: memref<128x1xf32, #tpu.memory_space<vmem>>, %arg14: memref<128x1xf32, #tpu.memory_space<vmem>>, %arg15: memref<128x1xf32, #tpu.memory_space<vmem>>, %arg16: memref<1x1xf32, #tpu.memory_space<vmem>>, %arg17: memref<64x64xf32, #tpu.memory_space<vmem>>, %arg18: memref<32x32xf32, #tpu.memory_space<vmem>>, %arg19: memref<16x16xf32, #tpu.memory_space<vmem>>, %arg20: memref<1x1x8xf32, #tpu.memory_space<vmem>>) attributes {dimension_semantics = [#tpu.dimension_semantics<parallel>], iteration_bounds = array<i64: 2>, scalar_prefetch = 0 : i64, scratch_operands = 0 : i64, tpu.core_type = #tpu.core_type<tc>, window_params = [{transform_indices = @transform_0, window_bounds = array<i64: 128, 256>}, {pipeline_mode = #tpu.pipeline_mode<synchronous>, transform_indices = @transform_1, window_bounds = array<i64: 128, 512>}, {pipeline_mode = #tpu.pipeline_mode<synchronous>, transform_indices = @transform_2, window_bounds = array<i64: 128, 512>}, {pipeline_mode = #tpu.pipeline_mode<synchronous>, transform_indices = @transform_3, window_bounds = array<i64: 128, 512>}, {pipeline_mode = #tpu.pipeline_mode<synchronous>, transform_indices = @transform_4, window_bounds = array<i64: 128, 512>}, {pipeline_mode = #tpu.pipeline_mode<synchronous>, transform_indices = @transform_5, window_bounds = array<i64: 1, 512>}, {pipeline_mode = #tpu.pipeline_mode<synchronous>, transform_indices = @transform_6, window_bounds = array<i64: 1024, 128>}, {pipeline_mode = #tpu.pipeline_mode<synchronous>, transform_indices = @transform_7, window_bounds = array<i64: 512, 64>}, {pipeline_mode = #tpu.pipeline_mode<synchronous>, transform_indices = @transform_8, window_bounds = array<i64: 256, 32>}, {pipeline_mode = #tpu.pipeline_mode<synchronous>, transform_indices = @transform_9, window_bounds = array<i64: 128, 16>}, {pipeline_mode = #tpu.pipeline_mode<synchronous>, transform_indices = @transform_10, window_bounds = array<i64: 64, 8>}, {pipeline_mode = #tpu.pipeline_mode<synchronous>, transform_indices = @transform_11, window_bounds = array<i64: 128, 1>}, {pipeline_mode = #tpu.pipeline_mode<synchronous>, transform_indices = @transform_12, window_bounds = array<i64: 128, 1>}, {pipeline_mode = #tpu.pipeline_mode<synchronous>, transform_indices = @transform_13, window_bounds = array<i64: 128, 1>}, {pipeline_mode = #tpu.pipeline_mode<synchronous>, transform_indices = @transform_14, window_bounds = array<i64: 128, 1>}, {pipeline_mode = #tpu.pipeline_mode<synchronous>, transform_indices = @transform_15, window_bounds = array<i64: 1, 1>}, {pipeline_mode = #tpu.pipeline_mode<synchronous>, transform_indices = @transform_16, window_bounds = array<i64: 64, 64>}, {pipeline_mode = #tpu.pipeline_mode<synchronous>, transform_indices = @transform_17, window_bounds = array<i64: 32, 32>}, {pipeline_mode = #tpu.pipeline_mode<synchronous>, transform_indices = @transform_18, window_bounds = array<i64: 16, 16>}, {transform_indices = @transform_19, window_bounds = array<i64: 1, 1, 8>}]} {
    %c0 = arith.constant 0 : index
    %c0_0 = arith.constant 0 : index
    %0 = vector.load %arg1[%c0, %c0_0] : memref<128x256xf32, #tpu.memory_space<vmem>>, vector<128x256xf32>
    %c0_1 = arith.constant 0 : index
    %c0_2 = arith.constant 0 : index
    %1 = vector.load %arg7[%c0_1, %c0_2] : memref<1024x128xf32, #tpu.memory_space<vmem>>, vector<256x128xf32>
    %cst = arith.constant dense<0.000000e+00> : vector<128x128xf32>
    %2 = tpu.matmul %0, %1, %cst {dimension_numbers = #tpu.dot_dimension_numbers<[1], [0], [0], [1], [0, 0, 1, 1], [], []>} : vector<128x256xf32>, vector<256x128xf32>, vector<128x128xf32> -> vector<128x128xf32>
    %c0_3 = arith.constant 0 : index
    %c0_4 = arith.constant 0 : index
    %3 = vector.load %arg2[%c0_3, %c0_4] : memref<128x512xf32, #tpu.memory_space<vmem>>, vector<128x128xf32>
    %cst_5 = arith.constant dense<0.000000e+00> : vector<128x128xf32>
    %4 = tpu.matmul %3, %2, %cst_5 {dimension_numbers = #tpu.dot_dimension_numbers<[1], [0], [0], [1], [0, 0, 1, 1], [], []>} : vector<128x128xf32>, vector<128x128xf32>, vector<128x128xf32> -> vector<128x128xf32>
    %c256 = arith.constant 256 : index
    %c0_6 = arith.constant 0 : index
    %5 = vector.load %arg7[%c256, %c0_6] : memref<1024x128xf32, #tpu.memory_space<vmem>>, vector<256x128xf32>
    %cst_7 = arith.constant dense<0.000000e+00> : vector<128x128xf32>
    %6 = tpu.matmul %0, %5, %cst_7 {dimension_numbers = #tpu.dot_dimension_numbers<[1], [0], [0], [1], [0, 0, 1, 1], [], []>} : vector<128x256xf32>, vector<256x128xf32>, vector<128x128xf32> -> vector<128x128xf32>
    %c0_8 = arith.constant 0 : index
    %c128 = arith.constant 128 : index
    %7 = vector.load %arg2[%c0_8, %c128] : memref<128x512xf32, #tpu.memory_space<vmem>>, vector<128x128xf32>
    %cst_9 = arith.constant dense<0.000000e+00> : vector<128x128xf32>
    %8 = tpu.matmul %7, %6, %cst_9 {dimension_numbers = #tpu.dot_dimension_numbers<[1], [0], [0], [1], [0, 0, 1, 1], [], []>} : vector<128x128xf32>, vector<128x128xf32>, vector<128x128xf32> -> vector<128x128xf32>
    %9 = arith.addf %4, %8 : vector<128x128xf32>
    %c512 = arith.constant 512 : index
    %c0_10 = arith.constant 0 : index
    %10 = vector.load %arg7[%c512, %c0_10] : memref<1024x128xf32, #tpu.memory_space<vmem>>, vector<256x128xf32>
    %cst_11 = arith.constant dense<0.000000e+00> : vector<128x128xf32>
    %11 = tpu.matmul %0, %10, %cst_11 {dimension_numbers = #tpu.dot_dimension_numbers<[1], [0], [0], [1], [0, 0, 1, 1], [], []>} : vector<128x256xf32>, vector<256x128xf32>, vector<128x128xf32> -> vector<128x128xf32>
    %c0_12 = arith.constant 0 : index
    %c256_13 = arith.constant 256 : index
    %12 = vector.load %arg2[%c0_12, %c256_13] : memref<128x512xf32, #tpu.memory_space<vmem>>, vector<128x128xf32>
    %cst_14 = arith.constant dense<0.000000e+00> : vector<128x128xf32>
    %13 = tpu.matmul %12, %11, %cst_14 {dimension_numbers = #tpu.dot_dimension_numbers<[1], [0], [0], [1], [0, 0, 1, 1], [], []>} : vector<128x128xf32>, vector<128x128xf32>, vector<128x128xf32> -> vector<128x128xf32>
    %14 = arith.addf %9, %13 : vector<128x128xf32>
    %c768 = arith.constant 768 : index
    %c0_15 = arith.constant 0 : index
    %15 = vector.load %arg7[%c768, %c0_15] : memref<1024x128xf32, #tpu.memory_space<vmem>>, vector<256x128xf32>
    %cst_16 = arith.constant dense<0.000000e+00> : vector<128x128xf32>
    %16 = tpu.matmul %0, %15, %cst_16 {dimension_numbers = #tpu.dot_dimension_numbers<[1], [0], [0], [1], [0, 0, 1, 1], [], []>} : vector<128x256xf32>, vector<256x128xf32>, vector<128x128xf32> -> vector<128x128xf32>
    %c0_17 = arith.constant 0 : index
    %c384 = arith.constant 384 : index
    %17 = vector.load %arg2[%c0_17, %c384] : memref<128x512xf32, #tpu.memory_space<vmem>>, vector<128x128xf32>
    %cst_18 = arith.constant dense<0.000000e+00> : vector<128x128xf32>
    %18 = tpu.matmul %17, %16, %cst_18 {dimension_numbers = #tpu.dot_dimension_numbers<[1], [0], [0], [1], [0, 0, 1, 1], [], []>} : vector<128x128xf32>, vector<128x128xf32>, vector<128x128xf32> -> vector<128x128xf32>
    %19 = arith.addf %14, %18 : vector<128x128xf32>
    %c0_19 = arith.constant 0 : index
    %c0_20 = arith.constant 0 : index
    %20 = vector.load %arg12[%c0_19, %c0_20] : memref<128x1xf32, #tpu.memory_space<vmem>>, vector<128x1xf32>
    %21 = vector.broadcast %20 : vector<128x1xf32> to vector<128x128xf32>
    %22 = arith.addf %19, %21 : vector<128x128xf32>
    %cst_21 = arith.constant 0.000000e+00 : f32
    %23 = vector.broadcast %cst_21 : f32 to vector<128x128xf32>
    %24 = arith.cmpf oge, %22, %23 : vector<128x128xf32>
    %cst_22 = arith.constant 2.000000e-01 : f32
    %25 = vector.broadcast %cst_22 : f32 to vector<128x128xf32>
    %26 = arith.mulf %25, %22 : vector<128x128xf32>
    %27 = arith.select %24, %22, %26 : vector<128x128xi1>, vector<128x128xf32>
    %c0_23 = arith.constant 0 : index
    %c0_24 = arith.constant 0 : index
    %28 = vector.load %arg8[%c0_23, %c0_24] : memref<512x64xf32, #tpu.memory_space<vmem>>, vector<128x64xf32>
    %cst_25 = arith.constant dense<0.000000e+00> : vector<128x64xf32>
    %29 = tpu.matmul %27, %28, %cst_25 {dimension_numbers = #tpu.dot_dimension_numbers<[1], [0], [0], [1], [0, 0, 1, 1], [], []>} : vector<128x128xf32>, vector<128x64xf32>, vector<128x64xf32> -> vector<128x64xf32>
    %c0_26 = arith.constant 0 : index
    %c0_27 = arith.constant 0 : index
    %30 = vector.load %arg3[%c0_26, %c0_27] : memref<128x512xf32, #tpu.memory_space<vmem>>, vector<128x128xf32>
    %cst_28 = arith.constant dense<0.000000e+00> : vector<128x64xf32>
    %31 = tpu.matmul %30, %29, %cst_28 {dimension_numbers = #tpu.dot_dimension_numbers<[1], [0], [0], [1], [0, 0, 1, 1], [], []>} : vector<128x128xf32>, vector<128x64xf32>, vector<128x64xf32> -> vector<128x64xf32>
    %c128_29 = arith.constant 128 : index
    %c0_30 = arith.constant 0 : index
    %32 = vector.load %arg8[%c128_29, %c0_30] : memref<512x64xf32, #tpu.memory_space<vmem>>, vector<128x64xf32>
    %cst_31 = arith.constant dense<0.000000e+00> : vector<128x64xf32>
    %33 = tpu.matmul %27, %32, %cst_31 {dimension_numbers = #tpu.dot_dimension_numbers<[1], [0], [0], [1], [0, 0, 1, 1], [], []>} : vector<128x128xf32>, vector<128x64xf32>, vector<128x64xf32> -> vector<128x64xf32>
    %c0_32 = arith.constant 0 : index
    %c128_33 = arith.constant 128 : index
    %34 = vector.load %arg3[%c0_32, %c128_33] : memref<128x512xf32, #tpu.memory_space<vmem>>, vector<128x128xf32>
    %cst_34 = arith.constant dense<0.000000e+00> : vector<128x64xf32>
    %35 = tpu.matmul %34, %33, %cst_34 {dimension_numbers = #tpu.dot_dimension_numbers<[1], [0], [0], [1], [0, 0, 1, 1], [], []>} : vector<128x128xf32>, vector<128x64xf32>, vector<128x64xf32> -> vector<128x64xf32>
    %36 = arith.addf %31, %35 : vector<128x64xf32>
    %c256_35 = arith.constant 256 : index
    %c0_36 = arith.constant 0 : index
    %37 = vector.load %arg8[%c256_35, %c0_36] : memref<512x64xf32, #tpu.memory_space<vmem>>, vector<128x64xf32>
    %cst_37 = arith.constant dense<0.000000e+00> : vector<128x64xf32>
    %38 = tpu.matmul %27, %37, %cst_37 {dimension_numbers = #tpu.dot_dimension_numbers<[1], [0], [0], [1], [0, 0, 1, 1], [], []>} : vector<128x128xf32>, vector<128x64xf32>, vector<128x64xf32> -> vector<128x64xf32>
    %c0_38 = arith.constant 0 : index
    %c256_39 = arith.constant 256 : index
    %39 = vector.load %arg3[%c0_38, %c256_39] : memref<128x512xf32, #tpu.memory_space<vmem>>, vector<128x128xf32>
    %cst_40 = arith.constant dense<0.000000e+00> : vector<128x64xf32>
    %40 = tpu.matmul %39, %38, %cst_40 {dimension_numbers = #tpu.dot_dimension_numbers<[1], [0], [0], [1], [0, 0, 1, 1], [], []>} : vector<128x128xf32>, vector<128x64xf32>, vector<128x64xf32> -> vector<128x64xf32>
    %41 = arith.addf %36, %40 : vector<128x64xf32>
    %c384_41 = arith.constant 384 : index
    %c0_42 = arith.constant 0 : index
    %42 = vector.load %arg8[%c384_41, %c0_42] : memref<512x64xf32, #tpu.memory_space<vmem>>, vector<128x64xf32>
    %cst_43 = arith.constant dense<0.000000e+00> : vector<128x64xf32>
    %43 = tpu.matmul %27, %42, %cst_43 {dimension_numbers = #tpu.dot_dimension_numbers<[1], [0], [0], [1], [0, 0, 1, 1], [], []>} : vector<128x128xf32>, vector<128x64xf32>, vector<128x64xf32> -> vector<128x64xf32>
    %c0_44 = arith.constant 0 : index
    %c384_45 = arith.constant 384 : index
    %44 = vector.load %arg3[%c0_44, %c384_45] : memref<128x512xf32, #tpu.memory_space<vmem>>, vector<128x128xf32>
    %cst_46 = arith.constant dense<0.000000e+00> : vector<128x64xf32>
    %45 = tpu.matmul %44, %43, %cst_46 {dimension_numbers = #tpu.dot_dimension_numbers<[1], [0], [0], [1], [0, 0, 1, 1], [], []>} : vector<128x128xf32>, vector<128x64xf32>, vector<128x64xf32> -> vector<128x64xf32>
    %46 = arith.addf %41, %45 : vector<128x64xf32>
    %c0_47 = arith.constant 0 : index
    %c0_48 = arith.constant 0 : index
    %47 = vector.load %arg13[%c0_47, %c0_48] : memref<128x1xf32, #tpu.memory_space<vmem>>, vector<128x1xf32>
    %48 = vector.broadcast %47 : vector<128x1xf32> to vector<128x64xf32>
    %49 = arith.addf %46, %48 : vector<128x64xf32>
    %c0_49 = arith.constant 0 : index
    %c0_50 = arith.constant 0 : index
    %50 = vector.load %arg17[%c0_49, %c0_50] : memref<64x64xf32, #tpu.memory_space<vmem>>, vector<64x64xf32>
    %51 = vector.shape_cast %49 : vector<128x64xf32> to vector<8x16x64xf32>
    %cst_51 = arith.constant dense<0.000000e+00> : vector<16x64xf32>
    %52 = vector.multi_reduction <add>, %51, %cst_51 [0] : vector<8x16x64xf32> to vector<16x64xf32>
    %cst_52 = arith.constant dense<0.000000e+00> : vector<16x64xf32>
    %53 = tpu.matmul %52, %50, %cst_52 {dimension_numbers = #tpu.dot_dimension_numbers<[1], [0], [0], [1], [0, 0, 1, 1], [], []>} : vector<16x64xf32>, vector<64x64xf32>, vector<16x64xf32> -> vector<16x64xf32>
    %54 = vector.shape_cast %53 : vector<16x64xf32> to vector<1x16x64xf32>
    %55 = vector.broadcast %54 : vector<1x16x64xf32> to vector<8x16x64xf32>
    %56 = arith.subf %51, %55 : vector<8x16x64xf32>
    %57 = arith.mulf %56, %56 : vector<8x16x64xf32>
    %cst_53 = arith.constant dense<0.000000e+00> : vector<16x64xf32>
    %58 = vector.multi_reduction <add>, %57, %cst_53 [0] : vector<8x16x64xf32> to vector<16x64xf32>
    %cst_54 = arith.constant dense<0.000000e+00> : vector<16x64xf32>
    %59 = tpu.matmul %58, %50, %cst_54 {dimension_numbers = #tpu.dot_dimension_numbers<[1], [0], [0], [1], [0, 0, 1, 1], [], []>} : vector<16x64xf32>, vector<64x64xf32>, vector<16x64xf32> -> vector<16x64xf32>
    %cst_55 = arith.constant 9.99999974E-6 : f32
    %60 = vector.broadcast %cst_55 : f32 to vector<16x64xf32>
    %61 = arith.addf %59, %60 : vector<16x64xf32>
    %62 = math.rsqrt %61 : vector<16x64xf32>
    %63 = vector.shape_cast %62 : vector<16x64xf32> to vector<1x16x64xf32>
    %64 = vector.broadcast %63 : vector<1x16x64xf32> to vector<8x16x64xf32>
    %65 = arith.mulf %56, %64 : vector<8x16x64xf32>
    %66 = vector.shape_cast %65 : vector<8x16x64xf32> to vector<128x64xf32>
    %cst_56 = arith.constant 0.000000e+00 : f32
    %67 = vector.broadcast %cst_56 : f32 to vector<128x64xf32>
    %68 = arith.cmpf oge, %66, %67 : vector<128x64xf32>
    %cst_57 = arith.constant 2.000000e-01 : f32
    %69 = vector.broadcast %cst_57 : f32 to vector<128x64xf32>
    %70 = arith.mulf %69, %66 : vector<128x64xf32>
    %71 = arith.select %68, %66, %70 : vector<128x64xi1>, vector<128x64xf32>
    %c0_58 = arith.constant 0 : index
    %c0_59 = arith.constant 0 : index
    %72 = vector.load %arg9[%c0_58, %c0_59] : memref<256x32xf32, #tpu.memory_space<vmem>>, vector<64x32xf32>
    %cst_60 = arith.constant dense<0.000000e+00> : vector<128x32xf32>
    %73 = tpu.matmul %71, %72, %cst_60 {dimension_numbers = #tpu.dot_dimension_numbers<[1], [0], [0], [1], [0, 0, 1, 1], [], []>} : vector<128x64xf32>, vector<64x32xf32>, vector<128x32xf32> -> vector<128x32xf32>
    %c0_61 = arith.constant 0 : index
    %c0_62 = arith.constant 0 : index
    %74 = vector.load %arg4[%c0_61, %c0_62] : memref<128x512xf32, #tpu.memory_space<vmem>>, vector<128x128xf32>
    %cst_63 = arith.constant dense<0.000000e+00> : vector<128x32xf32>
    %75 = tpu.matmul %74, %73, %cst_63 {dimension_numbers = #tpu.dot_dimension_numbers<[1], [0], [0], [1], [0, 0, 1, 1], [], []>} : vector<128x128xf32>, vector<128x32xf32>, vector<128x32xf32> -> vector<128x32xf32>
    %c64 = arith.constant 64 : index
    %c0_64 = arith.constant 0 : index
    %76 = vector.load %arg9[%c64, %c0_64] : memref<256x32xf32, #tpu.memory_space<vmem>>, vector<64x32xf32>
    %cst_65 = arith.constant dense<0.000000e+00> : vector<128x32xf32>
    %77 = tpu.matmul %71, %76, %cst_65 {dimension_numbers = #tpu.dot_dimension_numbers<[1], [0], [0], [1], [0, 0, 1, 1], [], []>} : vector<128x64xf32>, vector<64x32xf32>, vector<128x32xf32> -> vector<128x32xf32>
    %c0_66 = arith.constant 0 : index
    %c128_67 = arith.constant 128 : index
    %78 = vector.load %arg4[%c0_66, %c128_67] : memref<128x512xf32, #tpu.memory_space<vmem>>, vector<128x128xf32>
    %cst_68 = arith.constant dense<0.000000e+00> : vector<128x32xf32>
    %79 = tpu.matmul %78, %77, %cst_68 {dimension_numbers = #tpu.dot_dimension_numbers<[1], [0], [0], [1], [0, 0, 1, 1], [], []>} : vector<128x128xf32>, vector<128x32xf32>, vector<128x32xf32> -> vector<128x32xf32>
    %80 = arith.addf %75, %79 : vector<128x32xf32>
    %c128_69 = arith.constant 128 : index
    %c0_70 = arith.constant 0 : index
    %81 = vector.load %arg9[%c128_69, %c0_70] : memref<256x32xf32, #tpu.memory_space<vmem>>, vector<64x32xf32>
    %cst_71 = arith.constant dense<0.000000e+00> : vector<128x32xf32>
    %82 = tpu.matmul %71, %81, %cst_71 {dimension_numbers = #tpu.dot_dimension_numbers<[1], [0], [0], [1], [0, 0, 1, 1], [], []>} : vector<128x64xf32>, vector<64x32xf32>, vector<128x32xf32> -> vector<128x32xf32>
    %c0_72 = arith.constant 0 : index
    %c256_73 = arith.constant 256 : index
    %83 = vector.load %arg4[%c0_72, %c256_73] : memref<128x512xf32, #tpu.memory_space<vmem>>, vector<128x128xf32>
    %cst_74 = arith.constant dense<0.000000e+00> : vector<128x32xf32>
    %84 = tpu.matmul %83, %82, %cst_74 {dimension_numbers = #tpu.dot_dimension_numbers<[1], [0], [0], [1], [0, 0, 1, 1], [], []>} : vector<128x128xf32>, vector<128x32xf32>, vector<128x32xf32> -> vector<128x32xf32>
    %85 = arith.addf %80, %84 : vector<128x32xf32>
    %c192 = arith.constant 192 : index
    %c0_75 = arith.constant 0 : index
    %86 = vector.load %arg9[%c192, %c0_75] : memref<256x32xf32, #tpu.memory_space<vmem>>, vector<64x32xf32>
    %cst_76 = arith.constant dense<0.000000e+00> : vector<128x32xf32>
    %87 = tpu.matmul %71, %86, %cst_76 {dimension_numbers = #tpu.dot_dimension_numbers<[1], [0], [0], [1], [0, 0, 1, 1], [], []>} : vector<128x64xf32>, vector<64x32xf32>, vector<128x32xf32> -> vector<128x32xf32>
    %c0_77 = arith.constant 0 : index
    %c384_78 = arith.constant 384 : index
    %88 = vector.load %arg4[%c0_77, %c384_78] : memref<128x512xf32, #tpu.memory_space<vmem>>, vector<128x128xf32>
    %cst_79 = arith.constant dense<0.000000e+00> : vector<128x32xf32>
    %89 = tpu.matmul %88, %87, %cst_79 {dimension_numbers = #tpu.dot_dimension_numbers<[1], [0], [0], [1], [0, 0, 1, 1], [], []>} : vector<128x128xf32>, vector<128x32xf32>, vector<128x32xf32> -> vector<128x32xf32>
    %90 = arith.addf %85, %89 : vector<128x32xf32>
    %c0_80 = arith.constant 0 : index
    %c0_81 = arith.constant 0 : index
    %91 = vector.load %arg14[%c0_80, %c0_81] : memref<128x1xf32, #tpu.memory_space<vmem>>, vector<128x1xf32>
    %92 = vector.broadcast %91 : vector<128x1xf32> to vector<128x32xf32>
    %93 = arith.addf %90, %92 : vector<128x32xf32>
    %c0_82 = arith.constant 0 : index
    %c0_83 = arith.constant 0 : index
    %94 = vector.load %arg18[%c0_82, %c0_83] : memref<32x32xf32, #tpu.memory_space<vmem>>, vector<32x32xf32>
    %95 = vector.shape_cast %93 : vector<128x32xf32> to vector<4x32x32xf32>
    %cst_84 = arith.constant dense<0.000000e+00> : vector<32x32xf32>
    %96 = vector.multi_reduction <add>, %95, %cst_84 [0] : vector<4x32x32xf32> to vector<32x32xf32>
    %cst_85 = arith.constant dense<0.000000e+00> : vector<32x32xf32>
    %97 = tpu.matmul %96, %94, %cst_85 {dimension_numbers = #tpu.dot_dimension_numbers<[1], [0], [0], [1], [0, 0, 1, 1], [], []>} : vector<32x32xf32>, vector<32x32xf32>, vector<32x32xf32> -> vector<32x32xf32>
    %98 = vector.shape_cast %97 : vector<32x32xf32> to vector<1x32x32xf32>
    %99 = vector.broadcast %98 : vector<1x32x32xf32> to vector<4x32x32xf32>
    %100 = arith.subf %95, %99 : vector<4x32x32xf32>
    %101 = arith.mulf %100, %100 : vector<4x32x32xf32>
    %cst_86 = arith.constant dense<0.000000e+00> : vector<32x32xf32>
    %102 = vector.multi_reduction <add>, %101, %cst_86 [0] : vector<4x32x32xf32> to vector<32x32xf32>
    %cst_87 = arith.constant dense<0.000000e+00> : vector<32x32xf32>
    %103 = tpu.matmul %102, %94, %cst_87 {dimension_numbers = #tpu.dot_dimension_numbers<[1], [0], [0], [1], [0, 0, 1, 1], [], []>} : vector<32x32xf32>, vector<32x32xf32>, vector<32x32xf32> -> vector<32x32xf32>
    %cst_88 = arith.constant 9.99999974E-6 : f32
    %104 = vector.broadcast %cst_88 : f32 to vector<32x32xf32>
    %105 = arith.addf %103, %104 : vector<32x32xf32>
    %106 = math.rsqrt %105 : vector<32x32xf32>
    %107 = vector.shape_cast %106 : vector<32x32xf32> to vector<1x32x32xf32>
    %108 = vector.broadcast %107 : vector<1x32x32xf32> to vector<4x32x32xf32>
    %109 = arith.mulf %100, %108 : vector<4x32x32xf32>
    %110 = vector.shape_cast %109 : vector<4x32x32xf32> to vector<128x32xf32>
    %cst_89 = arith.constant 0.000000e+00 : f32
    %111 = vector.broadcast %cst_89 : f32 to vector<128x32xf32>
    %112 = arith.cmpf oge, %110, %111 : vector<128x32xf32>
    %cst_90 = arith.constant 2.000000e-01 : f32
    %113 = vector.broadcast %cst_90 : f32 to vector<128x32xf32>
    %114 = arith.mulf %113, %110 : vector<128x32xf32>
    %115 = arith.select %112, %110, %114 : vector<128x32xi1>, vector<128x32xf32>
    %c0_91 = arith.constant 0 : index
    %c0_92 = arith.constant 0 : index
    %116 = vector.load %arg10[%c0_91, %c0_92] : memref<128x16xf32, #tpu.memory_space<vmem>>, vector<32x16xf32>
    %cst_93 = arith.constant dense<0.000000e+00> : vector<128x16xf32>
    %117 = tpu.matmul %115, %116, %cst_93 {dimension_numbers = #tpu.dot_dimension_numbers<[1], [0], [0], [1], [0, 0, 1, 1], [], []>} : vector<128x32xf32>, vector<32x16xf32>, vector<128x16xf32> -> vector<128x16xf32>
    %c0_94 = arith.constant 0 : index
    %c0_95 = arith.constant 0 : index
    %118 = vector.load %arg5[%c0_94, %c0_95] : memref<128x512xf32, #tpu.memory_space<vmem>>, vector<128x128xf32>
    %cst_96 = arith.constant dense<0.000000e+00> : vector<128x16xf32>
    %119 = tpu.matmul %118, %117, %cst_96 {dimension_numbers = #tpu.dot_dimension_numbers<[1], [0], [0], [1], [0, 0, 1, 1], [], []>} : vector<128x128xf32>, vector<128x16xf32>, vector<128x16xf32> -> vector<128x16xf32>
    %c32 = arith.constant 32 : index
    %c0_97 = arith.constant 0 : index
    %120 = vector.load %arg10[%c32, %c0_97] : memref<128x16xf32, #tpu.memory_space<vmem>>, vector<32x16xf32>
    %cst_98 = arith.constant dense<0.000000e+00> : vector<128x16xf32>
    %121 = tpu.matmul %115, %120, %cst_98 {dimension_numbers = #tpu.dot_dimension_numbers<[1], [0], [0], [1], [0, 0, 1, 1], [], []>} : vector<128x32xf32>, vector<32x16xf32>, vector<128x16xf32> -> vector<128x16xf32>
    %c0_99 = arith.constant 0 : index
    %c128_100 = arith.constant 128 : index
    %122 = vector.load %arg5[%c0_99, %c128_100] : memref<128x512xf32, #tpu.memory_space<vmem>>, vector<128x128xf32>
    %cst_101 = arith.constant dense<0.000000e+00> : vector<128x16xf32>
    %123 = tpu.matmul %122, %121, %cst_101 {dimension_numbers = #tpu.dot_dimension_numbers<[1], [0], [0], [1], [0, 0, 1, 1], [], []>} : vector<128x128xf32>, vector<128x16xf32>, vector<128x16xf32> -> vector<128x16xf32>
    %124 = arith.addf %119, %123 : vector<128x16xf32>
    %c64_102 = arith.constant 64 : index
    %c0_103 = arith.constant 0 : index
    %125 = vector.load %arg10[%c64_102, %c0_103] : memref<128x16xf32, #tpu.memory_space<vmem>>, vector<32x16xf32>
    %cst_104 = arith.constant dense<0.000000e+00> : vector<128x16xf32>
    %126 = tpu.matmul %115, %125, %cst_104 {dimension_numbers = #tpu.dot_dimension_numbers<[1], [0], [0], [1], [0, 0, 1, 1], [], []>} : vector<128x32xf32>, vector<32x16xf32>, vector<128x16xf32> -> vector<128x16xf32>
    %c0_105 = arith.constant 0 : index
    %c256_106 = arith.constant 256 : index
    %127 = vector.load %arg5[%c0_105, %c256_106] : memref<128x512xf32, #tpu.memory_space<vmem>>, vector<128x128xf32>
    %cst_107 = arith.constant dense<0.000000e+00> : vector<128x16xf32>
    %128 = tpu.matmul %127, %126, %cst_107 {dimension_numbers = #tpu.dot_dimension_numbers<[1], [0], [0], [1], [0, 0, 1, 1], [], []>} : vector<128x128xf32>, vector<128x16xf32>, vector<128x16xf32> -> vector<128x16xf32>
    %129 = arith.addf %124, %128 : vector<128x16xf32>
    %c96 = arith.constant 96 : index
    %c0_108 = arith.constant 0 : index
    %130 = vector.load %arg10[%c96, %c0_108] : memref<128x16xf32, #tpu.memory_space<vmem>>, vector<32x16xf32>
    %cst_109 = arith.constant dense<0.000000e+00> : vector<128x16xf32>
    %131 = tpu.matmul %115, %130, %cst_109 {dimension_numbers = #tpu.dot_dimension_numbers<[1], [0], [0], [1], [0, 0, 1, 1], [], []>} : vector<128x32xf32>, vector<32x16xf32>, vector<128x16xf32> -> vector<128x16xf32>
    %c0_110 = arith.constant 0 : index
    %c384_111 = arith.constant 384 : index
    %132 = vector.load %arg5[%c0_110, %c384_111] : memref<128x512xf32, #tpu.memory_space<vmem>>, vector<128x128xf32>
    %cst_112 = arith.constant dense<0.000000e+00> : vector<128x16xf32>
    %133 = tpu.matmul %132, %131, %cst_112 {dimension_numbers = #tpu.dot_dimension_numbers<[1], [0], [0], [1], [0, 0, 1, 1], [], []>} : vector<128x128xf32>, vector<128x16xf32>, vector<128x16xf32> -> vector<128x16xf32>
    %134 = arith.addf %129, %133 : vector<128x16xf32>
    %c0_113 = arith.constant 0 : index
    %c0_114 = arith.constant 0 : index
    %135 = vector.load %arg15[%c0_113, %c0_114] : memref<128x1xf32, #tpu.memory_space<vmem>>, vector<128x1xf32>
    %136 = vector.broadcast %135 : vector<128x1xf32> to vector<128x16xf32>
    %137 = arith.addf %134, %136 : vector<128x16xf32>
    %c0_115 = arith.constant 0 : index
    %c0_116 = arith.constant 0 : index
    %138 = vector.load %arg19[%c0_115, %c0_116] : memref<16x16xf32, #tpu.memory_space<vmem>>, vector<16x16xf32>
    %139 = vector.shape_cast %137 : vector<128x16xf32> to vector<2x64x16xf32>
    %cst_117 = arith.constant dense<0.000000e+00> : vector<64x16xf32>
    %140 = vector.multi_reduction <add>, %139, %cst_117 [0] : vector<2x64x16xf32> to vector<64x16xf32>
    %cst_118 = arith.constant dense<0.000000e+00> : vector<64x16xf32>
    %141 = tpu.matmul %140, %138, %cst_118 {dimension_numbers = #tpu.dot_dimension_numbers<[1], [0], [0], [1], [0, 0, 1, 1], [], []>} : vector<64x16xf32>, vector<16x16xf32>, vector<64x16xf32> -> vector<64x16xf32>
    %142 = vector.shape_cast %141 : vector<64x16xf32> to vector<1x64x16xf32>
    %143 = vector.broadcast %142 : vector<1x64x16xf32> to vector<2x64x16xf32>
    %144 = arith.subf %139, %143 : vector<2x64x16xf32>
    %145 = arith.mulf %144, %144 : vector<2x64x16xf32>
    %cst_119 = arith.constant dense<0.000000e+00> : vector<64x16xf32>
    %146 = vector.multi_reduction <add>, %145, %cst_119 [0] : vector<2x64x16xf32> to vector<64x16xf32>
    %cst_120 = arith.constant dense<0.000000e+00> : vector<64x16xf32>
    %147 = tpu.matmul %146, %138, %cst_120 {dimension_numbers = #tpu.dot_dimension_numbers<[1], [0], [0], [1], [0, 0, 1, 1], [], []>} : vector<64x16xf32>, vector<16x16xf32>, vector<64x16xf32> -> vector<64x16xf32>
    %cst_121 = arith.constant 9.99999974E-6 : f32
    %148 = vector.broadcast %cst_121 : f32 to vector<64x16xf32>
    %149 = arith.addf %147, %148 : vector<64x16xf32>
    %150 = math.rsqrt %149 : vector<64x16xf32>
    %151 = vector.shape_cast %150 : vector<64x16xf32> to vector<1x64x16xf32>
    %152 = vector.broadcast %151 : vector<1x64x16xf32> to vector<2x64x16xf32>
    %153 = arith.mulf %144, %152 : vector<2x64x16xf32>
    %154 = vector.shape_cast %153 : vector<2x64x16xf32> to vector<128x16xf32>
    %cst_122 = arith.constant 0.000000e+00 : f32
    %155 = vector.broadcast %cst_122 : f32 to vector<128x16xf32>
    %156 = arith.cmpf oge, %154, %155 : vector<128x16xf32>
    %cst_123 = arith.constant 2.000000e-01 : f32
    %157 = vector.broadcast %cst_123 : f32 to vector<128x16xf32>
    %158 = arith.mulf %157, %154 : vector<128x16xf32>
    %159 = arith.select %156, %154, %158 : vector<128x16xi1>, vector<128x16xf32>
    %c0_124 = arith.constant 0 : index
    %c0_125 = arith.constant 0 : index
    %160 = vector.load %arg11[%c0_124, %c0_125] : memref<64x8xf32, #tpu.memory_space<vmem>>, vector<16x8xf32>
    %cst_126 = arith.constant dense<0.000000e+00> : vector<128x8xf32>
    %161 = tpu.matmul %159, %160, %cst_126 {dimension_numbers = #tpu.dot_dimension_numbers<[1], [0], [0], [1], [0, 0, 1, 1], [], []>} : vector<128x16xf32>, vector<16x8xf32>, vector<128x8xf32> -> vector<128x8xf32>
    %c0_127 = arith.constant 0 : index
    %c0_128 = arith.constant 0 : index
    %162 = vector.load %arg6[%c0_127, %c0_128] : memref<1x512xf32, #tpu.memory_space<vmem>>, vector<1x128xf32>
    %cst_129 = arith.constant dense<0.000000e+00> : vector<1x8xf32>
    %163 = tpu.matmul %162, %161, %cst_129 {dimension_numbers = #tpu.dot_dimension_numbers<[1], [0], [0], [1], [0, 0, 1, 1], [], []>} : vector<1x128xf32>, vector<128x8xf32>, vector<1x8xf32> -> vector<1x8xf32>
    %c16 = arith.constant 16 : index
    %c0_130 = arith.constant 0 : index
    %164 = vector.load %arg11[%c16, %c0_130] : memref<64x8xf32, #tpu.memory_space<vmem>>, vector<16x8xf32>
    %cst_131 = arith.constant dense<0.000000e+00> : vector<128x8xf32>
    %165 = tpu.matmul %159, %164, %cst_131 {dimension_numbers = #tpu.dot_dimension_numbers<[1], [0], [0], [1], [0, 0, 1, 1], [], []>} : vector<128x16xf32>, vector<16x8xf32>, vector<128x8xf32> -> vector<128x8xf32>
    %c0_132 = arith.constant 0 : index
    %c128_133 = arith.constant 128 : index
    %166 = vector.load %arg6[%c0_132, %c128_133] : memref<1x512xf32, #tpu.memory_space<vmem>>, vector<1x128xf32>
    %cst_134 = arith.constant dense<0.000000e+00> : vector<1x8xf32>
    %167 = tpu.matmul %166, %165, %cst_134 {dimension_numbers = #tpu.dot_dimension_numbers<[1], [0], [0], [1], [0, 0, 1, 1], [], []>} : vector<1x128xf32>, vector<128x8xf32>, vector<1x8xf32> -> vector<1x8xf32>
    %168 = arith.addf %163, %167 : vector<1x8xf32>
    %c32_135 = arith.constant 32 : index
    %c0_136 = arith.constant 0 : index
    %169 = vector.load %arg11[%c32_135, %c0_136] : memref<64x8xf32, #tpu.memory_space<vmem>>, vector<16x8xf32>
    %cst_137 = arith.constant dense<0.000000e+00> : vector<128x8xf32>
    %170 = tpu.matmul %159, %169, %cst_137 {dimension_numbers = #tpu.dot_dimension_numbers<[1], [0], [0], [1], [0, 0, 1, 1], [], []>} : vector<128x16xf32>, vector<16x8xf32>, vector<128x8xf32> -> vector<128x8xf32>
    %c0_138 = arith.constant 0 : index
    %c256_139 = arith.constant 256 : index
    %171 = vector.load %arg6[%c0_138, %c256_139] : memref<1x512xf32, #tpu.memory_space<vmem>>, vector<1x128xf32>
    %cst_140 = arith.constant dense<0.000000e+00> : vector<1x8xf32>
    %172 = tpu.matmul %171, %170, %cst_140 {dimension_numbers = #tpu.dot_dimension_numbers<[1], [0], [0], [1], [0, 0, 1, 1], [], []>} : vector<1x128xf32>, vector<128x8xf32>, vector<1x8xf32> -> vector<1x8xf32>
    %173 = arith.addf %168, %172 : vector<1x8xf32>
    %c48 = arith.constant 48 : index
    %c0_141 = arith.constant 0 : index
    %174 = vector.load %arg11[%c48, %c0_141] : memref<64x8xf32, #tpu.memory_space<vmem>>, vector<16x8xf32>
    %cst_142 = arith.constant dense<0.000000e+00> : vector<128x8xf32>
    %175 = tpu.matmul %159, %174, %cst_142 {dimension_numbers = #tpu.dot_dimension_numbers<[1], [0], [0], [1], [0, 0, 1, 1], [], []>} : vector<128x16xf32>, vector<16x8xf32>, vector<128x8xf32> -> vector<128x8xf32>
    %c0_143 = arith.constant 0 : index
    %c384_144 = arith.constant 384 : index
    %176 = vector.load %arg6[%c0_143, %c384_144] : memref<1x512xf32, #tpu.memory_space<vmem>>, vector<1x128xf32>
    %cst_145 = arith.constant dense<0.000000e+00> : vector<1x8xf32>
    %177 = tpu.matmul %176, %175, %cst_145 {dimension_numbers = #tpu.dot_dimension_numbers<[1], [0], [0], [1], [0, 0, 1, 1], [], []>} : vector<1x128xf32>, vector<128x8xf32>, vector<1x8xf32> -> vector<1x8xf32>
    %178 = arith.addf %173, %177 : vector<1x8xf32>
    %c0_146 = arith.constant 0 : index
    %c0_147 = arith.constant 0 : index
    %179 = vector.load %arg16[%c0_146, %c0_147] : memref<1x1xf32, #tpu.memory_space<vmem>>, vector<1x1xf32>
    %180 = vector.broadcast %179 : vector<1x1xf32> to vector<1x8xf32>
    %181 = arith.addf %178, %180 : vector<1x8xf32>
    %182 = arith.negf %181 : vector<1x8xf32>
    %183 = math.exp %182 : vector<1x8xf32>
    %cst_148 = arith.constant 1.000000e+00 : f32
    %184 = vector.broadcast %cst_148 : f32 to vector<1x8xf32>
    %185 = arith.addf %184, %183 : vector<1x8xf32>
    %186 = arith.divf %184, %185 : vector<1x8xf32>
    %c0_149 = arith.constant 0 : index
    %c0_150 = arith.constant 0 : index
    %c0_151 = arith.constant 0 : index
    %187 = vector.load %arg20[%c0_149, %c0_150, %c0_151] : memref<1x1x8xf32, #tpu.memory_space<vmem>>, vector<1x1x8xf32>
    %188 = vector.shape_cast %187 : vector<1x1x8xf32> to vector<1x8xf32>
    %189 = vector.shape_cast %186 : vector<1x8xf32> to vector<1x1x8xf32>
    tpu.vector_store %arg20[%c0_149, %c0_150, %c0_151], %189 {strides = array<i32>} : memref<1x1x8xf32, #tpu.memory_space<vmem>>, vector<1x1x8xf32>,
    return
  }
  func.func @transform_0(%arg0: i32) -> (i32, i32) {
    %c0_i32 = arith.constant 0 : i32
    %c0_i32_0 = arith.constant 0 : i32
    return %c0_i32, %arg0 : i32, i32
  }
  func.func @transform_1(%arg0: i32) -> (i32, i32) {
    %c0_i32 = arith.constant 0 : i32
    %c0_i32_0 = arith.constant 0 : i32
    %c0_i32_1 = arith.constant 0 : i32
    return %c0_i32, %c0_i32_0 : i32, i32
  }
  func.func @transform_2(%arg0: i32) -> (i32, i32) {
    %c0_i32 = arith.constant 0 : i32
    %c0_i32_0 = arith.constant 0 : i32
    %c0_i32_1 = arith.constant 0 : i32
    return %c0_i32, %c0_i32_0 : i32, i32
  }
  func.func @transform_3(%arg0: i32) -> (i32, i32) {
    %c0_i32 = arith.constant 0 : i32
    %c0_i32_0 = arith.constant 0 : i32
    %c0_i32_1 = arith.constant 0 : i32
    return %c0_i32, %c0_i32_0 : i32, i32
  }
  func.func @transform_4(%arg0: i32) -> (i32, i32) {
    %c0_i32 = arith.constant 0 : i32
    %c0_i32_0 = arith.constant 0 : i32
    %c0_i32_1 = arith.constant 0 : i32
    return %c0_i32, %c0_i32_0 : i32, i32
  }
  func.func @transform_5(%arg0: i32) -> (i32, i32) {
    %c0_i32 = arith.constant 0 : i32
    %c0_i32_0 = arith.constant 0 : i32
    %c0_i32_1 = arith.constant 0 : i32
    return %c0_i32, %c0_i32_0 : i32, i32
  }
  func.func @transform_6(%arg0: i32) -> (i32, i32) {
    %c0_i32 = arith.constant 0 : i32
    %c0_i32_0 = arith.constant 0 : i32
    %c0_i32_1 = arith.constant 0 : i32
    return %c0_i32, %c0_i32_0 : i32, i32
  }
  func.func @transform_7(%arg0: i32) -> (i32, i32) {
    %c0_i32 = arith.constant 0 : i32
    %c0_i32_0 = arith.constant 0 : i32
    %c0_i32_1 = arith.constant 0 : i32
    return %c0_i32, %c0_i32_0 : i32, i32
  }
  func.func @transform_8(%arg0: i32) -> (i32, i32) {
    %c0_i32 = arith.constant 0 : i32
    %c0_i32_0 = arith.constant 0 : i32
    %c0_i32_1 = arith.constant 0 : i32
    return %c0_i32, %c0_i32_0 : i32, i32
  }
  func.func @transform_9(%arg0: i32) -> (i32, i32) {
    %c0_i32 = arith.constant 0 : i32
    %c0_i32_0 = arith.constant 0 : i32
    %c0_i32_1 = arith.constant 0 : i32
    return %c0_i32, %c0_i32_0 : i32, i32
  }
  func.func @transform_10(%arg0: i32) -> (i32, i32) {
    %c0_i32 = arith.constant 0 : i32
    %c0_i32_0 = arith.constant 0 : i32
    %c0_i32_1 = arith.constant 0 : i32
    return %c0_i32, %c0_i32_0 : i32, i32
  }
  func.func @transform_11(%arg0: i32) -> (i32, i32) {
    %c0_i32 = arith.constant 0 : i32
    %c0_i32_0 = arith.constant 0 : i32
    %c0_i32_1 = arith.constant 0 : i32
    return %c0_i32, %c0_i32_0 : i32, i32
  }
  func.func @transform_12(%arg0: i32) -> (i32, i32) {
    %c0_i32 = arith.constant 0 : i32
    %c0_i32_0 = arith.constant 0 : i32
    %c0_i32_1 = arith.constant 0 : i32
    return %c0_i32, %c0_i32_0 : i32, i32
  }
  func.func @transform_13(%arg0: i32) -> (i32, i32) {
    %c0_i32 = arith.constant 0 : i32
    %c0_i32_0 = arith.constant 0 : i32
    %c0_i32_1 = arith.constant 0 : i32
    return %c0_i32, %c0_i32_0 : i32, i32
  }
  func.func @transform_14(%arg0: i32) -> (i32, i32) {
    %c0_i32 = arith.constant 0 : i32
    %c0_i32_0 = arith.constant 0 : i32
    %c0_i32_1 = arith.constant 0 : i32
    return %c0_i32, %c0_i32_0 : i32, i32
  }
  func.func @transform_15(%arg0: i32) -> (i32, i32) {
    %c0_i32 = arith.constant 0 : i32
    %c0_i32_0 = arith.constant 0 : i32
    %c0_i32_1 = arith.constant 0 : i32
    return %c0_i32, %c0_i32_0 : i32, i32
  }
  func.func @transform_16(%arg0: i32) -> (i32, i32) {
    %c0_i32 = arith.constant 0 : i32
    %c0_i32_0 = arith.constant 0 : i32
    %c0_i32_1 = arith.constant 0 : i32
    return %c0_i32, %c0_i32_0 : i32, i32
  }
  func.func @transform_17(%arg0: i32) -> (i32, i32) {
    %c0_i32 = arith.constant 0 : i32
    %c0_i32_0 = arith.constant 0 : i32
    %c0_i32_1 = arith.constant 0 : i32
    return %c0_i32, %c0_i32_0 : i32, i32
  }
  func.func @transform_18(%arg0: i32) -> (i32, i32) {
    %c0_i32 = arith.constant 0 : i32
    %c0_i32_0 = arith.constant 0 : i32
    %c0_i32_1 = arith.constant 0 : i32
    return %c0_i32, %c0_i32_0 : i32, i32
  }
  func.func @transform_19(%arg0: i32) -> (i32, i32, i32) {
    %c0_i32 = arith.constant 0 : i32
    %c0_i32_0 = arith.constant 0 : i32
    %c0_i32_1 = arith.constant 0 : i32
    return %arg0, %c0_i32, %c0_i32_0 : i32, i32, i32
  }
}

</mosaic_0001>

<llo_original>
// kernel: tile.18
$region0: #{tile.18}
  #allocation0 [shape = 's32[1]{0}', space=sflag, size = 0x4, scoped, tag = 'scoped memory for tile.18']
  %s0 = inlined_call_operand.vmem [shape: f32[8], index: 0, kind: input, shape index: {}]
  %s1 = inlined_call_operand.vmem [shape: f32[16,1,1,8], index: 1, kind: output, shape index: {}]
  // Predicated region
  $region2: #{tile.18} parent=0 // pred_check
    _
  $region3: #{tile.18} parent=0 // pred_check_branch
    %3 = sbr.rel (0) target = $region5
  $region4: #{tile.18} parent=0 // pred_region
    _
  $region5: #{tile.18} parent=0 // pred_fallthru
    _
  %v4 = vld [vmem:[%s0] ss:$0 sm:$0xff]
  %5 = vst [vmem:[%s1] sm:$0xff] %v4
  %s6 = scalar_lea.vmem %s1, 8
  %7 = vst [vmem:[%s6] sm:$0xff] %v4

// kernel: tile.0
$region0: #{tile.0}
  %s0 = inlined_call_operand.vmem [shape: f32[16,1,1,8], index: 0, kind: input, shape index: {}]
  %s1 = inlined_call_operand.vmem [shape: f32[128,1], index: 1, kind: output, shape index: {}]
  %v2 = vld [vmem:[%s0] sm:$0xff]
  %vm3 = vcmask 7168
  %4 = vst.msk [vmem:[%s1] ss:$8 sm:$0xf] %vm3, %v2
  %5 = vst.msk [vmem:[%s1] ss:$8 sm:$0xf0] %vm3, %v2
  %s6 = scalar_lea.vmem %s0, 8
  %v7 = vld [vmem:[%s6] sm:$0xff]
  %vm8 = vcmask 7168
  %s9 = scalar_lea.vmem %s1, 64
  %10 = vst.msk [vmem:[%s9] ss:$8 sm:$0xf] %vm8, %v7
  %s11 = scalar_lea.vmem %s1, 64
  %12 = vst.msk [vmem:[%s11] ss:$8 sm:$0xf0] %vm8, %v7
  %v13 = vld [vmem:[%s0] sm:$0xff]
  %14 = vrot.lane.b32.xlu0 %v13, 127
  %v15 = vpop.permute.xlu0 %14
  %vm16 = vcmask 7168
  %s17 = scalar_lea.vmem %s1, 1
  %18 = vst.msk [vmem:[%s17] ss:$8 sm:$0xf] %vm16, %v15
  %s19 = scalar_lea.vmem %s1, 1
  %20 = vst.msk [vmem:[%s19] ss:$8 sm:$0xf0] %vm16, %v15
  %s21 = scalar_lea.vmem %s0, 8
  %v22 = vld [vmem:[%s21] sm:$0xff]
  %23 = vrot.lane.b32.xlu0 %v22, 127
  %v24 = vpop.permute.xlu0 %23
  %vm25 = vcmask 7168
  %s26 = scalar_lea.vmem %s1, 65
  %27 = vst.msk [vmem:[%s26] ss:$8 sm:$0xf] %vm25, %v24
  %s28 = scalar_lea.vmem %s1, 65
  %29 = vst.msk [vmem:[%s28] ss:$8 sm:$0xf0] %vm25, %v24
  %v30 = vld [vmem:[%s0] sm:$0xff]
  %31 = vrot.lane.b32.xlu0 %v30, 126
  %v32 = vpop.permute.xlu0 %31
  %vm33 = vcmask 7168
  %s34 = scalar_lea.vmem %s1, 2
  %35 = vst.msk [vmem:[%s34] ss:$8 sm:$0xf] %vm33, %v32
  %s36 = scalar_lea.vmem %s1, 2
  %37 = vst.msk [vmem:[%s36] ss:$8 sm:$0xf0] %vm33, %v32
  %s38 = scalar_lea.vmem %s0, 8
  %v39 = vld [vmem:[%s38] sm:$0xff]
  %40 = vrot.lane.b32.xlu0 %v39, 126
  %v41 = vpop.permute.xlu0 %40
  %vm42 = vcmask 7168
  %s43 = scalar_lea.vmem %s1, 66
  %44 = vst.msk [vmem:[%s43] ss:$8 sm:$0xf] %vm42, %v41
  %s45 = scalar_lea.vmem %s1, 66
  %46 = vst.msk [vmem:[%s45] ss:$8 sm:$0xf0] %vm42, %v41
  %v47 = vld [vmem:[%s0] sm:$0xff]
  %48 = vrot.lane.b32.xlu0 %v47, 125
  %v49 = vpop.permute.xlu0 %48
  %vm50 = vcmask 7168
  %s51 = scalar_lea.vmem %s1, 3
  %52 = vst.msk [vmem:[%s51] ss:$8 sm:$0xf] %vm50, %v49
  %s53 = scalar_lea.vmem %s1, 3
  %54 = vst.msk [vmem:[%s53] ss:$8 sm:$0xf0] %vm50, %v49
  %s55 = scalar_lea.vmem %s0, 8
  %v56 = vld [vmem:[%s55] sm:$0xff]
  %57 = vrot.lane.b32.xlu0 %v56, 125
  %v58 = vpop.permute.xlu0 %57
  %vm59 = vcmask 7168
  %s60 = scalar_lea.vmem %s1, 67
  %61 = vst.msk [vmem:[%s60] ss:$8 sm:$0xf] %vm59, %v58
  %s62 = scalar_lea.vmem %s1, 67
  %63 = vst.msk [vmem:[%s62] ss:$8 sm:$0xf0] %vm59, %v58
  %v64 = vld [vmem:[%s0] sm:$0xff]
  %65 = vrot.lane.b32.xlu0 %v64, 124
  %v66 = vpop.permute.xlu0 %65
  %vm67 = vcmask 7168
  %s68 = scalar_lea.vmem %s1, 4
  %69 = vst.msk [vmem:[%s68] ss:$8 sm:$0xf] %vm67, %v66
  %s70 = scalar_lea.vmem %s1, 4
  %71 = vst.msk [vmem:[%s70] ss:$8 sm:$0xf0] %vm67, %v66
  %s72 = scalar_lea.vmem %s0, 8
  %v73 = vld [vmem:[%s72] sm:$0xff]
  %74 = vrot.lane.b32.xlu0 %v73, 124
  %v75 = vpop.permute.xlu0 %74
  %vm76 = vcmask 7168
  %s77 = scalar_lea.vmem %s1, 68
  %78 = vst.msk [vmem:[%s77] ss:$8 sm:$0xf] %vm76, %v75
  %s79 = scalar_lea.vmem %s1, 68
  %80 = vst.msk [vmem:[%s79] ss:$8 sm:$0xf0] %vm76, %v75
  %v81 = vld [vmem:[%s0] sm:$0xff]
  %82 = vrot.lane.b32.xlu0 %v81, 123
  %v83 = vpop.permute.xlu0 %82
  %vm84 = vcmask 7168
  %s85 = scalar_lea.vmem %s1, 5
  %86 = vst.msk [vmem:[%s85] ss:$8 sm:$0xf] %vm84, %v83
  %s87 = scalar_lea.vmem %s1, 5
  %88 = vst.msk [vmem:[%s87] ss:$8 sm:$0xf0] %vm84, %v83
  %s89 = scalar_lea.vmem %s0, 8
  %v90 = vld [vmem:[%s89] sm:$0xff]
  %91 = vrot.lane.b32.xlu0 %v90, 123
  %v92 = vpop.permute.xlu0 %91
  %vm93 = vcmask 7168
  %s94 = scalar_lea.vmem %s1, 69
  %95 = vst.msk [vmem:[%s94] ss:$8 sm:$0xf] %vm93, %v92
  %s96 = scalar_lea.vmem %s1, 69
  %97 = vst.msk [vmem:[%s96] ss:$8 sm:$0xf0] %vm93, %v92
  %v98 = vld [vmem:[%s0] sm:$0xff]
  %99 = vrot.lane.b32.xlu0 %v98, 122
  %v100 = vpop.permute.xlu0 %99
  %vm101 = vcmask 7168
  %s102 = scalar_lea.vmem %s1, 6
  %103 = vst.msk [vmem:[%s102] ss:$8 sm:$0xf] %vm101, %v100
  %s104 = scalar_lea.vmem %s1, 6
  %105 = vst.msk [vmem:[%s104] ss:$8 sm:$0xf0] %vm101, %v100
  %s106 = scalar_lea.vmem %s0, 8
  %v107 = vld [vmem:[%s106] sm:$0xff]
  %108 = vrot.lane.b32.xlu0 %v107, 122
  %v109 = vpop.permute.xlu0 %108
  %vm110 = vcmask 7168
  %s111 = scalar_lea.vmem %s1, 70
  %112 = vst.msk [vmem:[%s111] ss:$8 sm:$0xf] %vm110, %v109
  %s113 = scalar_lea.vmem %s1, 70
  %114 = vst.msk [vmem:[%s113] ss:$8 sm:$0xf0] %vm110, %v109
  %v115 = vld [vmem:[%s0] sm:$0xff]
  %116 = vrot.lane.b32.xlu0 %v115, 121
  %v117 = vpop.permute.xlu0 %116
  %vm118 = vcmask 7168
  %s119 = scalar_lea.vmem %s1, 7
  %120 = vst.msk [vmem:[%s119] ss:$8 sm:$0xf] %vm118, %v117
  %s121 = scalar_lea.vmem %s1, 7
  %122 = vst.msk [vmem:[%s121] ss:$8 sm:$0xf0] %vm118, %v117
  %s123 = scalar_lea.vmem %s0, 8
  %v124 = vld [vmem:[%s123] sm:$0xff]
  %125 = vrot.lane.b32.xlu0 %v124, 121
  %v126 = vpop.permute.xlu0 %125
  %vm127 = vcmask 7168
  %s128 = scalar_lea.vmem %s1, 71
  %129 = vst.msk [vmem:[%s128] ss:$8 sm:$0xf] %vm127, %v126
  %s130 = scalar_lea.vmem %s1, 71
  %131 = vst.msk [vmem:[%s130] ss:$8 sm:$0xf0] %vm127, %v126

// kernel: tile.22
$region0: #{tile.22}
  #allocation0 [shape = 's32[1]{0}', space=sflag, size = 0x4, scoped, tag = 'scoped memory for tile.22']
  %s0 = inlined_call_operand.vmem [shape: f32[16], index: 0, kind: input, shape index: {}]
  %s1 = inlined_call_operand.vmem [shape: f32[8,1,1,16], index: 1, kind: output, shape index: {}]
  // Predicated region
  $region2: #{tile.22} parent=0 // pred_check
    _
  $region3: #{tile.22} parent=0 // pred_check_branch
    %3 = sbr.rel (0) target = $region5
  $region4: #{tile.22} parent=0 // pred_region
    _
  $region5: #{tile.22} parent=0 // pred_fallthru
    _
  %v4 = vld [vmem:[%s0] ss:$0 sm:$0xff]
  %5 = vst [vmem:[%s1] sm:$0xff] %v4

// kernel: tile.1
$region0: #{tile.1}
  %s0 = inlined_call_operand.vmem [shape: f32[8,1,1,16], index: 0, kind: input, shape index: {}]
  %s1 = inlined_call_operand.vmem [shape: f32[128,1], index: 1, kind: output, shape index: {}]
  %v2 = vld [vmem:[%s0] sm:$0xff]
  %vm3 = vcmask 7168
  %4 = vst.msk [vmem:[%s1] ss:$16 sm:$0x3] %vm3, %v2
  %5 = vst.msk [vmem:[%s1] ss:$16 sm:$0xc] %vm3, %v2
  %6 = vst.msk [vmem:[%s1] ss:$16 sm:$0x30] %vm3, %v2
  %7 = vst.msk [vmem:[%s1] ss:$16 sm:$0xc0] %vm3, %v2
  %v8 = vld [vmem:[%s0] sm:$0xff]
  %9 = vrot.lane.b32.xlu0 %v8, 127
  %v10 = vpop.permute.xlu0 %9
  %vm11 = vcmask 7168
  %s12 = scalar_lea.vmem %s1, 1
  %13 = vst.msk [vmem:[%s12] ss:$16 sm:$0x3] %vm11, %v10
  %s14 = scalar_lea.vmem %s1, 1
  %15 = vst.msk [vmem:[%s14] ss:$16 sm:$0xc] %vm11, %v10
  %s16 = scalar_lea.vmem %s1, 1
  %17 = vst.msk [vmem:[%s16] ss:$16 sm:$0x30] %vm11, %v10
  %s18 = scalar_lea.vmem %s1, 1
  %19 = vst.msk [vmem:[%s18] ss:$16 sm:$0xc0] %vm11, %v10
  %v20 = vld [vmem:[%s0] sm:$0xff]
  %21 = vrot.lane.b32.xlu0 %v20, 126
  %v22 = vpop.permute.xlu0 %21
  %vm23 = vcmask 7168
  %s24 = scalar_lea.vmem %s1, 2
  %25 = vst.msk [vmem:[%s24] ss:$16 sm:$0x3] %vm23, %v22
  %s26 = scalar_lea.vmem %s1, 2
  %27 = vst.msk [vmem:[%s26] ss:$16 sm:$0xc] %vm23, %v22
  %s28 = scalar_lea.vmem %s1, 2
  %29 = vst.msk [vmem:[%s28] ss:$16 sm:$0x30] %vm23, %v22
  %s30 = scalar_lea.vmem %s1, 2
  %31 = vst.msk [vmem:[%s30] ss:$16 sm:$0xc0] %vm23, %v22
  %v32 = vld [vmem:[%s0] sm:$0xff]
  %33 = vrot.lane.b32.xlu0 %v32, 125
  %v34 = vpop.permute.xlu0 %33
  %vm35 = vcmask 7168
  %s36 = scalar_lea.vmem %s1, 3
  %37 = vst.msk [vmem:[%s36] ss:$16 sm:$0x3] %vm35, %v34
  %s38 = scalar_lea.vmem %s1, 3
  %39 = vst.msk [vmem:[%s38] ss:$16 sm:$0xc] %vm35, %v34
  %s40 = scalar_lea.vmem %s1, 3
  %41 = vst.msk [vmem:[%s40] ss:$16 sm:$0x30] %vm35, %v34
  %s42 = scalar_lea.vmem %s1, 3
  %43 = vst.msk [vmem:[%s42] ss:$16 sm:$0xc0] %vm35, %v34
  %v44 = vld [vmem:[%s0] sm:$0xff]
  %45 = vrot.lane.b32.xlu0 %v44, 124
  %v46 = vpop.permute.xlu0 %45
  %vm47 = vcmask 7168
  %s48 = scalar_lea.vmem %s1, 4
  %49 = vst.msk [vmem:[%s48] ss:$16 sm:$0x3] %vm47, %v46
  %s50 = scalar_lea.vmem %s1, 4
  %51 = vst.msk [vmem:[%s50] ss:$16 sm:$0xc] %vm47, %v46
  %s52 = scalar_lea.vmem %s1, 4
  %53 = vst.msk [vmem:[%s52] ss:$16 sm:$0x30] %vm47, %v46
  %s54 = scalar_lea.vmem %s1, 4
  %55 = vst.msk [vmem:[%s54] ss:$16 sm:$0xc0] %vm47, %v46
  %v56 = vld [vmem:[%s0] sm:$0xff]
  %57 = vrot.lane.b32.xlu0 %v56, 123
  %v58 = vpop.permute.xlu0 %57
  %vm59 = vcmask 7168
  %s60 = scalar_lea.vmem %s1, 5
  %61 = vst.msk [vmem:[%s60] ss:$16 sm:$0x3] %vm59, %v58
  %s62 = scalar_lea.vmem %s1, 5
  %63 = vst.msk [vmem:[%s62] ss:$16 sm:$0xc] %vm59, %v58
  %s64 = scalar_lea.vmem %s1, 5
  %65 = vst.msk [vmem:[%s64] ss:$16 sm:$0x30] %vm59, %v58
  %s66 = scalar_lea.vmem %s1, 5
  %67 = vst.msk [vmem:[%s66] ss:$16 sm:$0xc0] %vm59, %v58
  %v68 = vld [vmem:[%s0] sm:$0xff]
  %69 = vrot.lane.b32.xlu0 %v68, 122
  %v70 = vpop.permute.xlu0 %69
  %vm71 = vcmask 7168
  %s72 = scalar_lea.vmem %s1, 6
  %73 = vst.msk [vmem:[%s72] ss:$16 sm:$0x3] %vm71, %v70
  %s74 = scalar_lea.vmem %s1, 6
  %75 = vst.msk [vmem:[%s74] ss:$16 sm:$0xc] %vm71, %v70
  %s76 = scalar_lea.vmem %s1, 6
  %77 = vst.msk [vmem:[%s76] ss:$16 sm:$0x30] %vm71, %v70
  %s78 = scalar_lea.vmem %s1, 6
  %79 = vst.msk [vmem:[%s78] ss:$16 sm:$0xc0] %vm71, %v70
  %v80 = vld [vmem:[%s0] sm:$0xff]
  %81 = vrot.lane.b32.xlu0 %v80, 121
  %v82 = vpop.permute.xlu0 %81
  %vm83 = vcmask 7168
  %s84 = scalar_lea.vmem %s1, 7
  %85 = vst.msk [vmem:[%s84] ss:$16 sm:$0x3] %vm83, %v82
  %s86 = scalar_lea.vmem %s1, 7
  %87 = vst.msk [vmem:[%s86] ss:$16 sm:$0xc] %vm83, %v82
  %s88 = scalar_lea.vmem %s1, 7
  %89 = vst.msk [vmem:[%s88] ss:$16 sm:$0x30] %vm83, %v82
  %s90 = scalar_lea.vmem %s1, 7
  %91 = vst.msk [vmem:[%s90] ss:$16 sm:$0xc0] %vm83, %v82
  %v92 = vld [vmem:[%s0] sm:$0xff]
  %93 = vrot.lane.b32.xlu0 %v92, 120
  %v94 = vpop.permute.xlu0 %93
  %vm95 = vcmask 7168
  %s96 = scalar_lea.vmem %s1, 8
  %97 = vst.msk [vmem:[%s96] ss:$16 sm:$0x3] %vm95, %v94
  %s98 = scalar_lea.vmem %s1, 8
  %99 = vst.msk [vmem:[%s98] ss:$16 sm:$0xc] %vm95, %v94
  %s100 = scalar_lea.vmem %s1, 8
  %101 = vst.msk [vmem:[%s100] ss:$16 sm:$0x30] %vm95, %v94
  %s102 = scalar_lea.vmem %s1, 8
  %103 = vst.msk [vmem:[%s102] ss:$16 sm:$0xc0] %vm95, %v94
  %v104 = vld [vmem:[%s0] sm:$0xff]
  %105 = vrot.lane.b32.xlu0 %v104, 119
  %v106 = vpop.permute.xlu0 %105
  %vm107 = vcmask 7168
  %s108 = scalar_lea.vmem %s1, 9
  %109 = vst.msk [vmem:[%s108] ss:$16 sm:$0x3] %vm107, %v106
  %s110 = scalar_lea.vmem %s1, 9
  %111 = vst.msk [vmem:[%s110] ss:$16 sm:$0xc] %vm107, %v106
  %s112 = scalar_lea.vmem %s1, 9
  %113 = vst.msk [vmem:[%s112] ss:$16 sm:$0x30] %vm107, %v106
  %s114 = scalar_lea.vmem %s1, 9
  %115 = vst.msk [vmem:[%s114] ss:$16 sm:$0xc0] %vm107, %v106
  %v116 = vld [vmem:[%s0] sm:$0xff]
  %117 = vrot.lane.b32.xlu0 %v116, 118
  %v118 = vpop.permute.xlu0 %117
  %vm119 = vcmask 7168
  %s120 = scalar_lea.vmem %s1, 10
  %121 = vst.msk [vmem:[%s120] ss:$16 sm:$0x3] %vm119, %v118
  %s122 = scalar_lea.vmem %s1, 10
  %123 = vst.msk [vmem:[%s122] ss:$16 sm:$0xc] %vm119, %v118
  %s124 = scalar_lea.vmem %s1, 10
  %125 = vst.msk [vmem:[%s124] ss:$16 sm:$0x30] %vm119, %v118
  %s126 = scalar_lea.vmem %s1, 10
  %127 = vst.msk [vmem:[%s126] ss:$16 sm:$0xc0] %vm119, %v118
  %v128 = vld [vmem:[%s0] sm:$0xff]
  %129 = vrot.lane.b32.xlu0 %v128, 117
  %v130 = vpop.permute.xlu0 %129
  %vm131 = vcmask 7168
  %s132 = scalar_lea.vmem %s1, 11
  %133 = vst.msk [vmem:[%s132] ss:$16 sm:$0x3] %vm131, %v130
  %s134 = scalar_lea.vmem %s1, 11
  %135 = vst.msk [vmem:[%s134] ss:$16 sm:$0xc] %vm131, %v130
  %s136 = scalar_lea.vmem %s1, 11
  %137 = vst.msk [vmem:[%s136] ss:$16 sm:$0x30] %vm131, %v130
  %s138 = scalar_lea.vmem %s1, 11
  %139 = vst.msk [vmem:[%s138] ss:$16 sm:$0xc0] %vm131, %v130
  %v140 = vld [vmem:[%s0] sm:$0xff]
  %141 = vrot.lane.b32.xlu0 %v140, 116
  %v142 = vpop.permute.xlu0 %141
  %vm143 = vcmask 7168
  %s144 = scalar_lea.vmem %s1, 12
  %145 = vst.msk [vmem:[%s144] ss:$16 sm:$0x3] %vm143, %v142
  %s146 = scalar_lea.vmem %s1, 12
  %147 = vst.msk [vmem:[%s146] ss:$16 sm:$0xc] %vm143, %v142
  %s148 = scalar_lea.vmem %s1, 12
  %149 = vst.msk [vmem:[%s148] ss:$16 sm:$0x30] %vm143, %v142
  %s150 = scalar_lea.vmem %s1, 12
  %151 = vst.msk [vmem:[%s150] ss:$16 sm:$0xc0] %vm143, %v142
  %v152 = vld [vmem:[%s0] sm:$0xff]
  %153 = vrot.lane.b32.xlu0 %v152, 115
  %v154 = vpop.permute.xlu0 %153
  %vm155 = vcmask 7168
  %s156 = scalar_lea.vmem %s1, 13
  %157 = vst.msk [vmem:[%s156] ss:$16 sm:$0x3] %vm155, %v154
  %s158 = scalar_lea.vmem %s1, 13
  %159 = vst.msk [vmem:[%s158] ss:$16 sm:$0xc] %vm155, %v154
  %s160 = scalar_lea.vmem %s1, 13
  %161 = vst.msk [vmem:[%s160] ss:$16 sm:$0x30] %vm155, %v154
  %s162 = scalar_lea.vmem %s1, 13
  %163 = vst.msk [vmem:[%s162] ss:$16 sm:$0xc0] %vm155, %v154
  %v164 = vld [vmem:[%s0] sm:$0xff]
  %165 = vrot.lane.b32.xlu0 %v164, 114
  %v166 = vpop.permute.xlu0 %165
  %vm167 = vcmask 7168
  %s168 = scalar_lea.vmem %s1, 14
  %169 = vst.msk [vmem:[%s168] ss:$16 sm:$0x3] %vm167, %v166
  %s170 = scalar_lea.vmem %s1, 14
  %171 = vst.msk [vmem:[%s170] ss:$16 sm:$0xc] %vm167, %v166
  %s172 = scalar_lea.vmem %s1, 14
  %173 = vst.msk [vmem:[%s172] ss:$16 sm:$0x30] %vm167, %v166
  %s174 = scalar_lea.vmem %s1, 14
  %175 = vst.msk [vmem:[%s174] ss:$16 sm:$0xc0] %vm167, %v166
  %v176 = vld [vmem:[%s0] sm:$0xff]
  %177 = vrot.lane.b32.xlu0 %v176, 113
  %v178 = vpop.permute.xlu0 %177
  %vm179 = vcmask 7168
  %s180 = scalar_lea.vmem %s1, 15
  %181 = vst.msk [vmem:[%s180] ss:$16 sm:$0x3] %vm179, %v178
  %s182 = scalar_lea.vmem %s1, 15
  %183 = vst.msk [vmem:[%s182] ss:$16 sm:$0xc] %vm179, %v178
  %s184 = scalar_lea.vmem %s1, 15
  %185 = vst.msk [vmem:[%s184] ss:$16 sm:$0x30] %vm179, %v178
  %s186 = scalar_lea.vmem %s1, 15
  %187 = vst.msk [vmem:[%s186] ss:$16 sm:$0xc0] %vm179, %v178

// kernel: tile.26
$region0: #{tile.26}
  #allocation0 [shape = 's32[1]{0}', space=sflag, size = 0x4, scoped, tag = 'scoped memory for tile.26']
  %s0 = inlined_call_operand.vmem [shape: f32[32], index: 0, kind: input, shape index: {}]
  %s1 = inlined_call_operand.vmem [shape: f32[4,1,1,32], index: 1, kind: output, shape index: {}]
  // Predicated region
  $region2: #{tile.26} parent=0 // pred_check
    _
  $region3: #{tile.26} parent=0 // pred_check_branch
    %3 = sbr.rel (0) target = $region5
  $region4: #{tile.26} parent=0 // pred_region
    _
  $region5: #{tile.26} parent=0 // pred_fallthru
    _
  %v4 = vld [vmem:[%s0] ss:$0 sm:$0xff]
  %5 = vst [vmem:[%s1] sm:$0xf] %v4

// kernel: tile.2
$region0: #{tile.2}
  %s0 = inlined_call_operand.vmem [shape: f32[4,1,1,32], index: 0, kind: input, shape index: {}]
  %s1 = inlined_call_operand.vmem [shape: f32[128,1], index: 1, kind: output, shape index: {}]
  $region1: #{tile.2} parent=0
    #allocation0 [shape = 'u8[4096]{0}', space=vmem, size = 0x1000, scoped, tag = 'scoped mem for input reshape']
    %s3 = sshll.u32 1, 4
    %s4 = ssub.s32 %s3, 1
    %v5 = vld [vmem:[%s0] sm:%s4]
    %6 = vst [vmem:[#allocation0] sm:%s4] %v5
    %v7 = vld [vmem:[#allocation0] sm:$0xf]
    %vm8 = vcmask 7168
    %9 = vst.msk [vmem:[%s1] sm:$0x1] %vm8, %v7
    %s10 = scalar_lea.vmem %s1, 31
    %11 = vst.msk [vmem:[%s10] sm:$0x2] %vm8, %v7
    %s12 = scalar_lea.vmem %s1, 62
    %13 = vst.msk [vmem:[%s12] sm:$0x4] %vm8, %v7
    %s14 = scalar_lea.vmem %s1, 93
    %15 = vst.msk [vmem:[%s14] sm:$0x8] %vm8, %v7
    %v16 = vld [vmem:[#allocation0] sm:$0xf]
    %17 = vrot.lane.b32.xlu0 %v16, 127
    %v18 = vpop.permute.xlu0 %17
    %vm19 = vcmask 7168
    %s20 = scalar_lea.vmem %s1, 1
    %21 = vst.msk [vmem:[%s20] sm:$0x1] %vm19, %v18
    %s22 = scalar_lea.vmem %s1, 32
    %23 = vst.msk [vmem:[%s22] sm:$0x2] %vm19, %v18
    %s24 = scalar_lea.vmem %s1, 63
    %25 = vst.msk [vmem:[%s24] sm:$0x4] %vm19, %v18
    %s26 = scalar_lea.vmem %s1, 94
    %27 = vst.msk [vmem:[%s26] sm:$0x8] %vm19, %v18
    %v28 = vld [vmem:[#allocation0] sm:$0xf]
    %29 = vrot.lane.b32.xlu0 %v28, 126
    %v30 = vpop.permute.xlu0 %29
    %vm31 = vcmask 7168
    %s32 = scalar_lea.vmem %s1, 2
    %33 = vst.msk [vmem:[%s32] sm:$0x1] %vm31, %v30
    %s34 = scalar_lea.vmem %s1, 33
    %35 = vst.msk [vmem:[%s34] sm:$0x2] %vm31, %v30
    %s36 = scalar_lea.vmem %s1, 64
    %37 = vst.msk [vmem:[%s36] sm:$0x4] %vm31, %v30
    %s38 = scalar_lea.vmem %s1, 95
    %39 = vst.msk [vmem:[%s38] sm:$0x8] %vm31, %v30
    %v40 = vld [vmem:[#allocation0] sm:$0xf]
    %41 = vrot.lane.b32.xlu0 %v40, 125
    %v42 = vpop.permute.xlu0 %41
    %vm43 = vcmask 7168
    %s44 = scalar_lea.vmem %s1, 3
    %45 = vst.msk [vmem:[%s44] sm:$0x1] %vm43, %v42
    %s46 = scalar_lea.vmem %s1, 34
    %47 = vst.msk [vmem:[%s46] sm:$0x2] %vm43, %v42
    %s48 = scalar_lea.vmem %s1, 65
    %49 = vst.msk [vmem:[%s48] sm:$0x4] %vm43, %v42
    %s50 = scalar_lea.vmem %s1, 96
    %51 = vst.msk [vmem:[%s50] sm:$0x8] %vm43, %v42
    %v52 = vld [vmem:[#allocation0] sm:$0xf]
    %53 = vrot.lane.b32.xlu0 %v52, 124
    %v54 = vpop.permute.xlu0 %53
    %vm55 = vcmask 7168
    %s56 = scalar_lea.vmem %s1, 4
    %57 = vst.msk [vmem:[%s56] sm:$0x1] %vm55, %v54
    %s58 = scalar_lea.vmem %s1, 35
    %59 = vst.msk [vmem:[%s58] sm:$0x2] %vm55, %v54
    %s60 = scalar_lea.vmem %s1, 66
    %61 = vst.msk [vmem:[%s60] sm:$0x4] %vm55, %v54
    %s62 = scalar_lea.vmem %s1, 97
    %63 = vst.msk [vmem:[%s62] sm:$0x8] %vm55, %v54
    %v64 = vld [vmem:[#allocation0] sm:$0xf]
    %65 = vrot.lane.b32.xlu0 %v64, 123
    %v66 = vpop.permute.xlu0 %65
    %vm67 = vcmask 7168
    %s68 = scalar_lea.vmem %s1, 5
    %69 = vst.msk [vmem:[%s68] sm:$0x1] %vm67, %v66
    %s70 = scalar_lea.vmem %s1, 36
    %71 = vst.msk [vmem:[%s70] sm:$0x2] %vm67, %v66
    %s72 = scalar_lea.vmem %s1, 67
    %73 = vst.msk [vmem:[%s72] sm:$0x4] %vm67, %v66
    %s74 = scalar_lea.vmem %s1, 98
    %75 = vst.msk [vmem:[%s74] sm:$0x8] %vm67, %v66
    %v76 = vld [vmem:[#allocation0] sm:$0xf]
    %77 = vrot.lane.b32.xlu0 %v76, 122
    %v78 = vpop.permute.xlu0 %77
    %vm79 = vcmask 7168
    %s80 = scalar_lea.vmem %s1, 6
    %81 = vst.msk [vmem:[%s80] sm:$0x1] %vm79, %v78
    %s82 = scalar_lea.vmem %s1, 37
    %83 = vst.msk [vmem:[%s82] sm:$0x2] %vm79, %v78
    %s84 = scalar_lea.vmem %s1, 68
    %85 = vst.msk [vmem:[%s84] sm:$0x4] %vm79, %v78
    %s86 = scalar_lea.vmem %s1, 99
    %87 = vst.msk [vmem:[%s86] sm:$0x8] %vm79, %v78
    %v88 = vld [vmem:[#allocation0] sm:$0xf]
    %89 = vrot.lane.b32.xlu0 %v88, 121
    %v90 = vpop.permute.xlu0 %89
    %vm91 = vcmask 7168
    %s92 = scalar_lea.vmem %s1, 7
    %93 = vst.msk [vmem:[%s92] sm:$0x1] %vm91, %v90
    %s94 = scalar_lea.vmem %s1, 38
    %95 = vst.msk [vmem:[%s94] sm:$0x2] %vm91, %v90
    %s96 = scalar_lea.vmem %s1, 69
    %97 = vst.msk [vmem:[%s96] sm:$0x4] %vm91, %v90
    %s98 = scalar_lea.vmem %s1, 100
    %99 = vst.msk [vmem:[%s98] sm:$0x8] %vm91, %v90
    %v100 = vld [vmem:[#allocation0] sm:$0xf]
    %101 = vrot.lane.b32.xlu0 %v100, 120
    %v102 = vpop.permute.xlu0 %101
    %vm103 = vcmask 7168
    %s104 = scalar_lea.vmem %s1, 8
    %105 = vst.msk [vmem:[%s104] sm:$0x1] %vm103, %v102
    %s106 = scalar_lea.vmem %s1, 39
    %107 = vst.msk [vmem:[%s106] sm:$0x2] %vm103, %v102
    %s108 = scalar_lea.vmem %s1, 70
    %109 = vst.msk [vmem:[%s108] sm:$0x4] %vm103, %v102
    %s110 = scalar_lea.vmem %s1, 101
    %111 = vst.msk [vmem:[%s110] sm:$0x8] %vm103, %v102
    %v112 = vld [vmem:[#allocation0] sm:$0xf]
    %113 = vrot.lane.b32.xlu0 %v112, 119
    %v114 = vpop.permute.xlu0 %113
    %vm115 = vcmask 7168
    %s116 = scalar_lea.vmem %s1, 9
    %117 = vst.msk [vmem:[%s116] sm:$0x1] %vm115, %v114
    %s118 = scalar_lea.vmem %s1, 40
    %119 = vst.msk [vmem:[%s118] sm:$0x2] %vm115, %v114
    %s120 = scalar_lea.vmem %s1, 71
    %121 = vst.msk [vmem:[%s120] sm:$0x4] %vm115, %v114
    %s122 = scalar_lea.vmem %s1, 102
    %123 = vst.msk [vmem:[%s122] sm:$0x8] %vm115, %v114
    %v124 = vld [vmem:[#allocation0] sm:$0xf]
    %125 = vrot.lane.b32.xlu0 %v124, 118
    %v126 = vpop.permute.xlu0 %125
    %vm127 = vcmask 7168
    %s128 = scalar_lea.vmem %s1, 10
    %129 = vst.msk [vmem:[%s128] sm:$0x1] %vm127, %v126
    %s130 = scalar_lea.vmem %s1, 41
    %131 = vst.msk [vmem:[%s130] sm:$0x2] %vm127, %v126
    %s132 = scalar_lea.vmem %s1, 72
    %133 = vst.msk [vmem:[%s132] sm:$0x4] %vm127, %v126
    %s134 = scalar_lea.vmem %s1, 103
    %135 = vst.msk [vmem:[%s134] sm:$0x8] %vm127, %v126
    %v136 = vld [vmem:[#allocation0] sm:$0xf]
    %137 = vrot.lane.b32.xlu0 %v136, 117
    %v138 = vpop.permute.xlu0 %137
    %vm139 = vcmask 7168
    %s140 = scalar_lea.vmem %s1, 11
    %141 = vst.msk [vmem:[%s140] sm:$0x1] %vm139, %v138
    %s142 = scalar_lea.vmem %s1, 42
    %143 = vst.msk [vmem:[%s142] sm:$0x2] %vm139, %v138
    %s144 = scalar_lea.vmem %s1, 73
    %145 = vst.msk [vmem:[%s144] sm:$0x4] %vm139, %v138
    %s146 = scalar_lea.vmem %s1, 104
    %147 = vst.msk [vmem:[%s146] sm:$0x8] %vm139, %v138
    %v148 = vld [vmem:[#allocation0] sm:$0xf]
    %149 = vrot.lane.b32.xlu0 %v148, 116
    %v150 = vpop.permute.xlu0 %149
    %vm151 = vcmask 7168
    %s152 = scalar_lea.vmem %s1, 12
    %153 = vst.msk [vmem:[%s152] sm:$0x1] %vm151, %v150
    %s154 = scalar_lea.vmem %s1, 43
    %155 = vst.msk [vmem:[%s154] sm:$0x2] %vm151, %v150
    %s156 = scalar_lea.vmem %s1, 74
    %157 = vst.msk [vmem:[%s156] sm:$0x4] %vm151, %v150
    %s158 = scalar_lea.vmem %s1, 105
    %159 = vst.msk [vmem:[%s158] sm:$0x8] %vm151, %v150
    %v160 = vld [vmem:[#allocation0] sm:$0xf]
    %161 = vrot.lane.b32.xlu0 %v160, 115
    %v162 = vpop.permute.xlu0 %161
    %vm163 = vcmask 7168
    %s164 = scalar_lea.vmem %s1, 13
    %165 = vst.msk [vmem:[%s164] sm:$0x1] %vm163, %v162
    %s166 = scalar_lea.vmem %s1, 44
    %167 = vst.msk [vmem:[%s166] sm:$0x2] %vm163, %v162
    %s168 = scalar_lea.vmem %s1, 75
    %169 = vst.msk [vmem:[%s168] sm:$0x4] %vm163, %v162
    %s170 = scalar_lea.vmem %s1, 106
    %171 = vst.msk [vmem:[%s170] sm:$0x8] %vm163, %v162
    %v172 = vld [vmem:[#allocation0] sm:$0xf]
    %173 = vrot.lane.b32.xlu0 %v172, 114
    %v174 = vpop.permute.xlu0 %173
    %vm175 = vcmask 7168
    %s176 = scalar_lea.vmem %s1, 14
    %177 = vst.msk [vmem:[%s176] sm:$0x1] %vm175, %v174
    %s178 = scalar_lea.vmem %s1, 45
    %179 = vst.msk [vmem:[%s178] sm:$0x2] %vm175, %v174
    %s180 = scalar_lea.vmem %s1, 76
    %181 = vst.msk [vmem:[%s180] sm:$0x4] %vm175, %v174
    %s182 = scalar_lea.vmem %s1, 107
    %183 = vst.msk [vmem:[%s182] sm:$0x8] %vm175, %v174
    %v184 = vld [vmem:[#allocation0] sm:$0xf]
    %185 = vrot.lane.b32.xlu0 %v184, 113
    %v186 = vpop.permute.xlu0 %185
    %vm187 = vcmask 7168
    %s188 = scalar_lea.vmem %s1, 15
    %189 = vst.msk [vmem:[%s188] sm:$0x1] %vm187, %v186
    %s190 = scalar_lea.vmem %s1, 46
    %191 = vst.msk [vmem:[%s190] sm:$0x2] %vm187, %v186
    %s192 = scalar_lea.vmem %s1, 77
    %193 = vst.msk [vmem:[%s192] sm:$0x4] %vm187, %v186
    %s194 = scalar_lea.vmem %s1, 108
    %195 = vst.msk [vmem:[%s194] sm:$0x8] %vm187, %v186
    %v196 = vld [vmem:[#allocation0] sm:$0xf]
    %197 = vrot.lane.b32.xlu0 %v196, 112
    %v198 = vpop.permute.xlu0 %197
    %vm199 = vcmask 7168
    %s200 = scalar_lea.vmem %s1, 16
    %201 = vst.msk [vmem:[%s200] sm:$0x1] %vm199, %v198
    %s202 = scalar_lea.vmem %s1, 47
    %203 = vst.msk [vmem:[%s202] sm:$0x2] %vm199, %v198
    %s204 = scalar_lea.vmem %s1, 78
    %205 = vst.msk [vmem:[%s204] sm:$0x4] %vm199, %v198
    %s206 = scalar_lea.vmem %s1, 109
    %207 = vst.msk [vmem:[%s206] sm:$0x8] %vm199, %v198
    %v208 = vld [vmem:[#allocation0] sm:$0xf]
    %209 = vrot.lane.b32.xlu0 %v208, 111
    %v210 = vpop.permute.xlu0 %209
    %vm211 = vcmask 7168
    %s212 = scalar_lea.vmem %s1, 17
    %213 = vst.msk [vmem:[%s212] sm:$0x1] %vm211, %v210
    %s214 = scalar_lea.vmem %s1, 48
    %215 = vst.msk [vmem:[%s214] sm:$0x2] %vm211, %v210
    %s216 = scalar_lea.vmem %s1, 79
    %217 = vst.msk [vmem:[%s216] sm:$0x4] %vm211, %v210
    %s218 = scalar_lea.vmem %s1, 110
    %219 = vst.msk [vmem:[%s218] sm:$0x8] %vm211, %v210
    %v220 = vld [vmem:[#allocation0] sm:$0xf]
    %221 = vrot.lane.b32.xlu0 %v220, 110
    %v222 = vpop.permute.xlu0 %221
    %vm223 = vcmask 7168
    %s224 = scalar_lea.vmem %s1, 18
    %225 = vst.msk [vmem:[%s224] sm:$0x1] %vm223, %v222
    %s226 = scalar_lea.vmem %s1, 49
    %227 = vst.msk [vmem:[%s226] sm:$0x2] %vm223, %v222
    %s228 = scalar_lea.vmem %s1, 80
    %229 = vst.msk [vmem:[%s228] sm:$0x4] %vm223, %v222
    %s230 = scalar_lea.vmem %s1, 111
    %231 = vst.msk [vmem:[%s230] sm:$0x8] %vm223, %v222
    %v232 = vld [vmem:[#allocation0] sm:$0xf]
    %233 = vrot.lane.b32.xlu0 %v232, 109
    %v234 = vpop.permute.xlu0 %233
    %vm235 = vcmask 7168
    %s236 = scalar_lea.vmem %s1, 19
    %237 = vst.msk [vmem:[%s236] sm:$0x1] %vm235, %v234
    %s238 = scalar_lea.vmem %s1, 50
    %239 = vst.msk [vmem:[%s238] sm:$0x2] %vm235, %v234
    %s240 = scalar_lea.vmem %s1, 81
    %241 = vst.msk [vmem:[%s240] sm:$0x4] %vm235, %v234
    %s242 = scalar_lea.vmem %s1, 112
    %243 = vst.msk [vmem:[%s242] sm:$0x8] %vm235, %v234
    %v244 = vld [vmem:[#allocation0] sm:$0xf]
    %245 = vrot.lane.b32.xlu0 %v244, 108
    %v246 = vpop.permute.xlu0 %245
    %vm247 = vcmask 7168
    %s248 = scalar_lea.vmem %s1, 20
    %249 = vst.msk [vmem:[%s248] sm:$0x1] %vm247, %v246
    %s250 = scalar_lea.vmem %s1, 51
    %251 = vst.msk [vmem:[%s250] sm:$0x2] %vm247, %v246
    %s252 = scalar_lea.vmem %s1, 82
    %253 = vst.msk [vmem:[%s252] sm:$0x4] %vm247, %v246
    %s254 = scalar_lea.vmem %s1, 113
    %255 = vst.msk [vmem:[%s254] sm:$0x8] %vm247, %v246
    %v256 = vld [vmem:[#allocation0] sm:$0xf]
    %257 = vrot.lane.b32.xlu0 %v256, 107
    %v258 = vpop.permute.xlu0 %257
    %vm259 = vcmask 7168
    %s260 = scalar_lea.vmem %s1, 21
    %261 = vst.msk [vmem:[%s260] sm:$0x1] %vm259, %v258
    %s262 = scalar_lea.vmem %s1, 52
    %263 = vst.msk [vmem:[%s262] sm:$0x2] %vm259, %v258
    %s264 = scalar_lea.vmem %s1, 83
    %265 = vst.msk [vmem:[%s264] sm:$0x4] %vm259, %v258
    %s266 = scalar_lea.vmem %s1, 114
    %267 = vst.msk [vmem:[%s266] sm:$0x8] %vm259, %v258
    %v268 = vld [vmem:[#allocation0] sm:$0xf]
    %269 = vrot.lane.b32.xlu0 %v268, 106
    %v270 = vpop.permute.xlu0 %269
    %vm271 = vcmask 7168
    %s272 = scalar_lea.vmem %s1, 22
    %273 = vst.msk [vmem:[%s272] sm:$0x1] %vm271, %v270
    %s274 = scalar_lea.vmem %s1, 53
    %275 = vst.msk [vmem:[%s274] sm:$0x2] %vm271, %v270
    %s276 = scalar_lea.vmem %s1, 84
    %277 = vst.msk [vmem:[%s276] sm:$0x4] %vm271, %v270
    %s278 = scalar_lea.vmem %s1, 115
    %279 = vst.msk [vmem:[%s278] sm:$0x8] %vm271, %v270
    %v280 = vld [vmem:[#allocation0] sm:$0xf]
    %281 = vrot.lane.b32.xlu0 %v280, 105
    %v282 = vpop.permute.xlu0 %281
    %vm283 = vcmask 7168
    %s284 = scalar_lea.vmem %s1, 23
    %285 = vst.msk [vmem:[%s284] sm:$0x1] %vm283, %v282
    %s286 = scalar_lea.vmem %s1, 54
    %287 = vst.msk [vmem:[%s286] sm:$0x2] %vm283, %v282
    %s288 = scalar_lea.vmem %s1, 85
    %289 = vst.msk [vmem:[%s288] sm:$0x4] %vm283, %v282
    %s290 = scalar_lea.vmem %s1, 116
    %291 = vst.msk [vmem:[%s290] sm:$0x8] %vm283, %v282
    %v292 = vld [vmem:[#allocation0] sm:$0xf]
    %293 = vrot.lane.b32.xlu0 %v292, 104
    %v294 = vpop.permute.xlu0 %293
    %vm295 = vcmask 7168
    %s296 = scalar_lea.vmem %s1, 24
    %297 = vst.msk [vmem:[%s296] sm:$0x1] %vm295, %v294
    %s298 = scalar_lea.vmem %s1, 55
    %299 = vst.msk [vmem:[%s298] sm:$0x2] %vm295, %v294
    %s300 = scalar_lea.vmem %s1, 86
    %301 = vst.msk [vmem:[%s300] sm:$0x4] %vm295, %v294
    %s302 = scalar_lea.vmem %s1, 117
    %303 = vst.msk [vmem:[%s302] sm:$0x8] %vm295, %v294
    %v304 = vld [vmem:[#allocation0] sm:$0xf]
    %305 = vrot.lane.b32.xlu0 %v304, 103
    %v306 = vpop.permute.xlu0 %305
    %vm307 = vcmask 7168
    %s308 = scalar_lea.vmem %s1, 25
    %309 = vst.msk [vmem:[%s308] sm:$0x1] %vm307, %v306
    %s310 = scalar_lea.vmem %s1, 56
    %311 = vst.msk [vmem:[%s310] sm:$0x2] %vm307, %v306
    %s312 = scalar_lea.vmem %s1, 87
    %313 = vst.msk [vmem:[%s312] sm:$0x4] %vm307, %v306
    %s314 = scalar_lea.vmem %s1, 118
    %315 = vst.msk [vmem:[%s314] sm:$0x8] %vm307, %v306
    %v316 = vld [vmem:[#allocation0] sm:$0xf]
    %317 = vrot.lane.b32.xlu0 %v316, 102
    %v318 = vpop.permute.xlu0 %317
    %vm319 = vcmask 7168
    %s320 = scalar_lea.vmem %s1, 26
    %321 = vst.msk [vmem:[%s320] sm:$0x1] %vm319, %v318
    %s322 = scalar_lea.vmem %s1, 57
    %323 = vst.msk [vmem:[%s322] sm:$0x2] %vm319, %v318
    %s324 = scalar_lea.vmem %s1, 88
    %325 = vst.msk [vmem:[%s324] sm:$0x4] %vm319, %v318
    %s326 = scalar_lea.vmem %s1, 119
    %327 = vst.msk [vmem:[%s326] sm:$0x8] %vm319, %v318
    %v328 = vld [vmem:[#allocation0] sm:$0xf]
    %329 = vrot.lane.b32.xlu0 %v328, 101
    %v330 = vpop.permute.xlu0 %329
    %vm331 = vcmask 7168
    %s332 = scalar_lea.vmem %s1, 27
    %333 = vst.msk [vmem:[%s332] sm:$0x1] %vm331, %v330
    %s334 = scalar_lea.vmem %s1, 58
    %335 = vst.msk [vmem:[%s334] sm:$0x2] %vm331, %v330
    %s336 = scalar_lea.vmem %s1, 89
    %337 = vst.msk [vmem:[%s336] sm:$0x4] %vm331, %v330
    %s338 = scalar_lea.vmem %s1, 120
    %339 = vst.msk [vmem:[%s338] sm:$0x8] %vm331, %v330
    %v340 = vld [vmem:[#allocation0] sm:$0xf]
    %341 = vrot.lane.b32.xlu0 %v340, 100
    %v342 = vpop.permute.xlu0 %341
    %vm343 = vcmask 7168
    %s344 = scalar_lea.vmem %s1, 28
    %345 = vst.msk [vmem:[%s344] sm:$0x1] %vm343, %v342
    %s346 = scalar_lea.vmem %s1, 59
    %347 = vst.msk [vmem:[%s346] sm:$0x2] %vm343, %v342
    %s348 = scalar_lea.vmem %s1, 90
    %349 = vst.msk [vmem:[%s348] sm:$0x4] %vm343, %v342
    %s350 = scalar_lea.vmem %s1, 121
    %351 = vst.msk [vmem:[%s350] sm:$0x8] %vm343, %v342
    %v352 = vld [vmem:[#allocation0] sm:$0xf]
    %353 = vrot.lane.b32.xlu0 %v352, 99
    %v354 = vpop.permute.xlu0 %353
    %vm355 = vcmask 7168
    %s356 = scalar_lea.vmem %s1, 29
    %357 = vst.msk [vmem:[%s356] sm:$0x1] %vm355, %v354
    %s358 = scalar_lea.vmem %s1, 60
    %359 = vst.msk [vmem:[%s358] sm:$0x2] %vm355, %v354
    %s360 = scalar_lea.vmem %s1, 91
    %361 = vst.msk [vmem:[%s360] sm:$0x4] %vm355, %v354
    %s362 = scalar_lea.vmem %s1, 122
    %363 = vst.msk [vmem:[%s362] sm:$0x8] %vm355, %v354
    %v364 = vld [vmem:[#allocation0] sm:$0xf]
    %365 = vrot.lane.b32.xlu0 %v364, 98
    %v366 = vpop.permute.xlu0 %365
    %vm367 = vcmask 7168
    %s368 = scalar_lea.vmem %s1, 30
    %369 = vst.msk [vmem:[%s368] sm:$0x1] %vm367, %v366
    %s370 = scalar_lea.vmem %s1, 61
    %371 = vst.msk [vmem:[%s370] sm:$0x2] %vm367, %v366
    %s372 = scalar_lea.vmem %s1, 92
    %373 = vst.msk [vmem:[%s372] sm:$0x4] %vm367, %v366
    %s374 = scalar_lea.vmem %s1, 123
    %375 = vst.msk [vmem:[%s374] sm:$0x8] %vm367, %v366
    %v376 = vld [vmem:[#allocation0] sm:$0xf]
    %377 = vrot.lane.b32.xlu0 %v376, 97
    %v378 = vpop.permute.xlu0 %377
    %vm379 = vcmask 7168
    %s380 = scalar_lea.vmem %s1, 31
    %381 = vst.msk [vmem:[%s380] sm:$0x1] %vm379, %v378
    %s382 = scalar_lea.vmem %s1, 62
    %383 = vst.msk [vmem:[%s382] sm:$0x2] %vm379, %v378
    %s384 = scalar_lea.vmem %s1, 93
    %385 = vst.msk [vmem:[%s384] sm:$0x4] %vm379, %v378
    %s386 = scalar_lea.vmem %s1, 124
    %387 = vst.msk [vmem:[%s386] sm:$0x8] %vm379, %v378

// kernel: tile.30
$region0: #{tile.30}
  #allocation0 [shape = 's32[1]{0}', space=sflag, size = 0x4, scoped, tag = 'scoped memory for tile.30']
  %s0 = inlined_call_operand.vmem [shape: f32[64], index: 0, kind: input, shape index: {}]
  %s1 = inlined_call_operand.vmem [shape: f32[2,1,1,64], index: 1, kind: output, shape index: {}]
  // Predicated region
  $region2: #{tile.30} parent=0 // pred_check
    _
  $region3: #{tile.30} parent=0 // pred_check_branch
    %3 = sbr.rel (0) target = $region5
  $region4: #{tile.30} parent=0 // pred_region
    _
  $region5: #{tile.30} parent=0 // pred_fallthru
    _
  %v4 = vld [vmem:[%s0] ss:$0 sm:$0xff]
  %5 = vst [vmem:[%s1] sm:$0x3] %v4

// kernel: tile.3
$region0: #{tile.3}
  %s0 = inlined_call_operand.vmem [shape: f32[2,1,1,64], index: 0, kind: input, shape index: {}]
  %s1 = inlined_call_operand.vmem [shape: f32[128,1], index: 1, kind: output, shape index: {}]
  $region1: #{tile.3} parent=0
    #allocation0 [shape = 'u8[4096]{0}', space=vmem, size = 0x1000, scoped, tag = 'scoped mem for input reshape']
    %s3 = sshll.u32 1, 2
    %s4 = ssub.s32 %s3, 1
    %v5 = vld [vmem:[%s0] sm:%s4]
    %6 = vst [vmem:[#allocation0] sm:%s4] %v5
    %v7 = vld [vmem:[#allocation0] sm:$0x3]
    %vm8 = vcmask 7168
    %9 = vst.msk [vmem:[%s1] sm:$0x1] %vm8, %v7
    %s10 = scalar_lea.vmem %s1, 63
    %11 = vst.msk [vmem:[%s10] sm:$0x2] %vm8, %v7
    %v12 = vld [vmem:[#allocation0] sm:$0x3]
    %13 = vrot.lane.b32.xlu0 %v12, 127
    %v14 = vpop.permute.xlu0 %13
    %vm15 = vcmask 7168
    %s16 = scalar_lea.vmem %s1, 1
    %17 = vst.msk [vmem:[%s16] sm:$0x1] %vm15, %v14
    %s18 = scalar_lea.vmem %s1, 64
    %19 = vst.msk [vmem:[%s18] sm:$0x2] %vm15, %v14
    %v20 = vld [vmem:[#allocation0] sm:$0x3]
    %21 = vrot.lane.b32.xlu0 %v20, 126
    %v22 = vpop.permute.xlu0 %21
    %vm23 = vcmask 7168
    %s24 = scalar_lea.vmem %s1, 2
    %25 = vst.msk [vmem:[%s24] sm:$0x1] %vm23, %v22
    %s26 = scalar_lea.vmem %s1, 65
    %27 = vst.msk [vmem:[%s26] sm:$0x2] %vm23, %v22
    %v28 = vld [vmem:[#allocation0] sm:$0x3]
    %29 = vrot.lane.b32.xlu0 %v28, 125
    %v30 = vpop.permute.xlu0 %29
    %vm31 = vcmask 7168
    %s32 = scalar_lea.vmem %s1, 3
    %33 = vst.msk [vmem:[%s32] sm:$0x1] %vm31, %v30
    %s34 = scalar_lea.vmem %s1, 66
    %35 = vst.msk [vmem:[%s34] sm:$0x2] %vm31, %v30
    %v36 = vld [vmem:[#allocation0] sm:$0x3]
    %37 = vrot.lane.b32.xlu0 %v36, 124
    %v38 = vpop.permute.xlu0 %37
    %vm39 = vcmask 7168
    %s40 = scalar_lea.vmem %s1, 4
    %41 = vst.msk [vmem:[%s40] sm:$0x1] %vm39, %v38
    %s42 = scalar_lea.vmem %s1, 67
    %43 = vst.msk [vmem:[%s42] sm:$0x2] %vm39, %v38
    %v44 = vld [vmem:[#allocation0] sm:$0x3]
    %45 = vrot.lane.b32.xlu0 %v44, 123
    %v46 = vpop.permute.xlu0 %45
    %vm47 = vcmask 7168
    %s48 = scalar_lea.vmem %s1, 5
    %49 = vst.msk [vmem:[%s48] sm:$0x1] %vm47, %v46
    %s50 = scalar_lea.vmem %s1, 68
    %51 = vst.msk [vmem:[%s50] sm:$0x2] %vm47, %v46
    %v52 = vld [vmem:[#allocation0] sm:$0x3]
    %53 = vrot.lane.b32.xlu0 %v52, 122
    %v54 = vpop.permute.xlu0 %53
    %vm55 = vcmask 7168
    %s56 = scalar_lea.vmem %s1, 6
    %57 = vst.msk [vmem:[%s56] sm:$0x1] %vm55, %v54
    %s58 = scalar_lea.vmem %s1, 69
    %59 = vst.msk [vmem:[%s58] sm:$0x2] %vm55, %v54
    %v60 = vld [vmem:[#allocation0] sm:$0x3]
    %61 = vrot.lane.b32.xlu0 %v60, 121
    %v62 = vpop.permute.xlu0 %61
    %vm63 = vcmask 7168
    %s64 = scalar_lea.vmem %s1, 7
    %65 = vst.msk [vmem:[%s64] sm:$0x1] %vm63, %v62
    %s66 = scalar_lea.vmem %s1, 70
    %67 = vst.msk [vmem:[%s66] sm:$0x2] %vm63, %v62
    %v68 = vld [vmem:[#allocation0] sm:$0x3]
    %69 = vrot.lane.b32.xlu0 %v68, 120
    %v70 = vpop.permute.xlu0 %69
    %vm71 = vcmask 7168
    %s72 = scalar_lea.vmem %s1, 8
    %73 = vst.msk [vmem:[%s72] sm:$0x1] %vm71, %v70
    %s74 = scalar_lea.vmem %s1, 71
    %75 = vst.msk [vmem:[%s74] sm:$0x2] %vm71, %v70
    %v76 = vld [vmem:[#allocation0] sm:$0x3]
    %77 = vrot.lane.b32.xlu0 %v76, 119
    %v78 = vpop.permute.xlu0 %77
    %vm79 = vcmask 7168
    %s80 = scalar_lea.vmem %s1, 9
    %81 = vst.msk [vmem:[%s80] sm:$0x1] %vm79, %v78
    %s82 = scalar_lea.vmem %s1, 72
    %83 = vst.msk [vmem:[%s82] sm:$0x2] %vm79, %v78
    %v84 = vld [vmem:[#allocation0] sm:$0x3]
    %85 = vrot.lane.b32.xlu0 %v84, 118
    %v86 = vpop.permute.xlu0 %85
    %vm87 = vcmask 7168
    %s88 = scalar_lea.vmem %s1, 10
    %89 = vst.msk [vmem:[%s88] sm:$0x1] %vm87, %v86
    %s90 = scalar_lea.vmem %s1, 73
    %91 = vst.msk [vmem:[%s90] sm:$0x2] %vm87, %v86
    %v92 = vld [vmem:[#allocation0] sm:$0x3]
    %93 = vrot.lane.b32.xlu0 %v92, 117
    %v94 = vpop.permute.xlu0 %93
    %vm95 = vcmask 7168
    %s96 = scalar_lea.vmem %s1, 11
    %97 = vst.msk [vmem:[%s96] sm:$0x1] %vm95, %v94
    %s98 = scalar_lea.vmem %s1, 74
    %99 = vst.msk [vmem:[%s98] sm:$0x2] %vm95, %v94
    %v100 = vld [vmem:[#allocation0] sm:$0x3]
    %101 = vrot.lane.b32.xlu0 %v100, 116
    %v102 = vpop.permute.xlu0 %101
    %vm103 = vcmask 7168
    %s104 = scalar_lea.vmem %s1, 12
    %105 = vst.msk [vmem:[%s104] sm:$0x1] %vm103, %v102
    %s106 = scalar_lea.vmem %s1, 75
    %107 = vst.msk [vmem:[%s106] sm:$0x2] %vm103, %v102
    %v108 = vld [vmem:[#allocation0] sm:$0x3]
    %109 = vrot.lane.b32.xlu0 %v108, 115
    %v110 = vpop.permute.xlu0 %109
    %vm111 = vcmask 7168
    %s112 = scalar_lea.vmem %s1, 13
    %113 = vst.msk [vmem:[%s112] sm:$0x1] %vm111, %v110
    %s114 = scalar_lea.vmem %s1, 76
    %115 = vst.msk [vmem:[%s114] sm:$0x2] %vm111, %v110
    %v116 = vld [vmem:[#allocation0] sm:$0x3]
    %117 = vrot.lane.b32.xlu0 %v116, 114
    %v118 = vpop.permute.xlu0 %117
    %vm119 = vcmask 7168
    %s120 = scalar_lea.vmem %s1, 14
    %121 = vst.msk [vmem:[%s120] sm:$0x1] %vm119, %v118
    %s122 = scalar_lea.vmem %s1, 77
    %123 = vst.msk [vmem:[%s122] sm:$0x2] %vm119, %v118
    %v124 = vld [vmem:[#allocation0] sm:$0x3]
    %125 = vrot.lane.b32.xlu0 %v124, 113
    %v126 = vpop.permute.xlu0 %125
    %vm127 = vcmask 7168
    %s128 = scalar_lea.vmem %s1, 15
    %129 = vst.msk [vmem:[%s128] sm:$0x1] %vm127, %v126
    %s130 = scalar_lea.vmem %s1, 78
    %131 = vst.msk [vmem:[%s130] sm:$0x2] %vm127, %v126
    %v132 = vld [vmem:[#allocation0] sm:$0x3]
    %133 = vrot.lane.b32.xlu0 %v132, 112
    %v134 = vpop.permute.xlu0 %133
    %vm135 = vcmask 7168
    %s136 = scalar_lea.vmem %s1, 16
    %137 = vst.msk [vmem:[%s136] sm:$0x1] %vm135, %v134
    %s138 = scalar_lea.vmem %s1, 79
    %139 = vst.msk [vmem:[%s138] sm:$0x2] %vm135, %v134
    %v140 = vld [vmem:[#allocation0] sm:$0x3]
    %141 = vrot.lane.b32.xlu0 %v140, 111
    %v142 = vpop.permute.xlu0 %141
    %vm143 = vcmask 7168
    %s144 = scalar_lea.vmem %s1, 17
    %145 = vst.msk [vmem:[%s144] sm:$0x1] %vm143, %v142
    %s146 = scalar_lea.vmem %s1, 80
    %147 = vst.msk [vmem:[%s146] sm:$0x2] %vm143, %v142
    %v148 = vld [vmem:[#allocation0] sm:$0x3]
    %149 = vrot.lane.b32.xlu0 %v148, 110
    %v150 = vpop.permute.xlu0 %149
    %vm151 = vcmask 7168
    %s152 = scalar_lea.vmem %s1, 18
    %153 = vst.msk [vmem:[%s152] sm:$0x1] %vm151, %v150
    %s154 = scalar_lea.vmem %s1, 81
    %155 = vst.msk [vmem:[%s154] sm:$0x2] %vm151, %v150
    %v156 = vld [vmem:[#allocation0] sm:$0x3]
    %157 = vrot.lane.b32.xlu0 %v156, 109
    %v158 = vpop.permute.xlu0 %157
    %vm159 = vcmask 7168
    %s160 = scalar_lea.vmem %s1, 19
    %161 = vst.msk [vmem:[%s160] sm:$0x1] %vm159, %v158
    %s162 = scalar_lea.vmem %s1, 82
    %163 = vst.msk [vmem:[%s162] sm:$0x2] %vm159, %v158
    %v164 = vld [vmem:[#allocation0] sm:$0x3]
    %165 = vrot.lane.b32.xlu0 %v164, 108
    %v166 = vpop.permute.xlu0 %165
    %vm167 = vcmask 7168
    %s168 = scalar_lea.vmem %s1, 20
    %169 = vst.msk [vmem:[%s168] sm:$0x1] %vm167, %v166
    %s170 = scalar_lea.vmem %s1, 83
    %171 = vst.msk [vmem:[%s170] sm:$0x2] %vm167, %v166
    %v172 = vld [vmem:[#allocation0] sm:$0x3]
    %173 = vrot.lane.b32.xlu0 %v172, 107
    %v174 = vpop.permute.xlu0 %173
    %vm175 = vcmask 7168
    %s176 = scalar_lea.vmem %s1, 21
    %177 = vst.msk [vmem:[%s176] sm:$0x1] %vm175, %v174
    %s178 = scalar_lea.vmem %s1, 84
    %179 = vst.msk [vmem:[%s178] sm:$0x2] %vm175, %v174
    %v180 = vld [vmem:[#allocation0] sm:$0x3]
    %181 = vrot.lane.b32.xlu0 %v180, 106
    %v182 = vpop.permute.xlu0 %181
    %vm183 = vcmask 7168
    %s184 = scalar_lea.vmem %s1, 22
    %185 = vst.msk [vmem:[%s184] sm:$0x1] %vm183, %v182
    %s186 = scalar_lea.vmem %s1, 85
    %187 = vst.msk [vmem:[%s186] sm:$0x2] %vm183, %v182
    %v188 = vld [vmem:[#allocation0] sm:$0x3]
    %189 = vrot.lane.b32.xlu0 %v188, 105
    %v190 = vpop.permute.xlu0 %189
    %vm191 = vcmask 7168
    %s192 = scalar_lea.vmem %s1, 23
    %193 = vst.msk [vmem:[%s192] sm:$0x1] %vm191, %v190
    %s194 = scalar_lea.vmem %s1, 86
    %195 = vst.msk [vmem:[%s194] sm:$0x2] %vm191, %v190
    %v196 = vld [vmem:[#allocation0] sm:$0x3]
    %197 = vrot.lane.b32.xlu0 %v196, 104
    %v198 = vpop.permute.xlu0 %197
    %vm199 = vcmask 7168
    %s200 = scalar_lea.vmem %s1, 24
    %201 = vst.msk [vmem:[%s200] sm:$0x1] %vm199, %v198
    %s202 = scalar_lea.vmem %s1, 87
    %203 = vst.msk [vmem:[%s202] sm:$0x2] %vm199, %v198
    %v204 = vld [vmem:[#allocation0] sm:$0x3]
    %205 = vrot.lane.b32.xlu0 %v204, 103
    %v206 = vpop.permute.xlu0 %205
    %vm207 = vcmask 7168
    %s208 = scalar_lea.vmem %s1, 25
    %209 = vst.msk [vmem:[%s208] sm:$0x1] %vm207, %v206
    %s210 = scalar_lea.vmem %s1, 88
    %211 = vst.msk [vmem:[%s210] sm:$0x2] %vm207, %v206
    %v212 = vld [vmem:[#allocation0] sm:$0x3]
    %213 = vrot.lane.b32.xlu0 %v212, 102
    %v214 = vpop.permute.xlu0 %213
    %vm215 = vcmask 7168
    %s216 = scalar_lea.vmem %s1, 26
    %217 = vst.msk [vmem:[%s216] sm:$0x1] %vm215, %v214
    %s218 = scalar_lea.vmem %s1, 89
    %219 = vst.msk [vmem:[%s218] sm:$0x2] %vm215, %v214
    %v220 = vld [vmem:[#allocation0] sm:$0x3]
    %221 = vrot.lane.b32.xlu0 %v220, 101
    %v222 = vpop.permute.xlu0 %221
    %vm223 = vcmask 7168
    %s224 = scalar_lea.vmem %s1, 27
    %225 = vst.msk [vmem:[%s224] sm:$0x1] %vm223, %v222
    %s226 = scalar_lea.vmem %s1, 90
    %227 = vst.msk [vmem:[%s226] sm:$0x2] %vm223, %v222
    %v228 = vld [vmem:[#allocation0] sm:$0x3]
    %229 = vrot.lane.b32.xlu0 %v228, 100
    %v230 = vpop.permute.xlu0 %229
    %vm231 = vcmask 7168
    %s232 = scalar_lea.vmem %s1, 28
    %233 = vst.msk [vmem:[%s232] sm:$0x1] %vm231, %v230
    %s234 = scalar_lea.vmem %s1, 91
    %235 = vst.msk [vmem:[%s234] sm:$0x2] %vm231, %v230
    %v236 = vld [vmem:[#allocation0] sm:$0x3]
    %237 = vrot.lane.b32.xlu0 %v236, 99
    %v238 = vpop.permute.xlu0 %237
    %vm239 = vcmask 7168
    %s240 = scalar_lea.vmem %s1, 29
    %241 = vst.msk [vmem:[%s240] sm:$0x1] %vm239, %v238
    %s242 = scalar_lea.vmem %s1, 92
    %243 = vst.msk [vmem:[%s242] sm:$0x2] %vm239, %v238
    %v244 = vld [vmem:[#allocation0] sm:$0x3]
    %245 = vrot.lane.b32.xlu0 %v244, 98
    %v246 = vpop.permute.xlu0 %245
    %vm247 = vcmask 7168
    %s248 = scalar_lea.vmem %s1, 30
    %249 = vst.msk [vmem:[%s248] sm:$0x1] %vm247, %v246
    %s250 = scalar_lea.vmem %s1, 93
    %251 = vst.msk [vmem:[%s250] sm:$0x2] %vm247, %v246
    %v252 = vld [vmem:[#allocation0] sm:$0x3]
    %253 = vrot.lane.b32.xlu0 %v252, 97
    %v254 = vpop.permute.xlu0 %253
    %vm255 = vcmask 7168
    %s256 = scalar_lea.vmem %s1, 31
    %257 = vst.msk [vmem:[%s256] sm:$0x1] %vm255, %v254
    %s258 = scalar_lea.vmem %s1, 94
    %259 = vst.msk [vmem:[%s258] sm:$0x2] %vm255, %v254
    %v260 = vld [vmem:[#allocation0] sm:$0x3]
    %261 = vrot.lane.b32.xlu0 %v260, 96
    %v262 = vpop.permute.xlu0 %261
    %vm263 = vcmask 7168
    %s264 = scalar_lea.vmem %s1, 32
    %265 = vst.msk [vmem:[%s264] sm:$0x1] %vm263, %v262
    %s266 = scalar_lea.vmem %s1, 95
    %267 = vst.msk [vmem:[%s266] sm:$0x2] %vm263, %v262
    %v268 = vld [vmem:[#allocation0] sm:$0x3]
    %269 = vrot.lane.b32.xlu0 %v268, 95
    %v270 = vpop.permute.xlu0 %269
    %vm271 = vcmask 7168
    %s272 = scalar_lea.vmem %s1, 33
    %273 = vst.msk [vmem:[%s272] sm:$0x1] %vm271, %v270
    %s274 = scalar_lea.vmem %s1, 96
    %275 = vst.msk [vmem:[%s274] sm:$0x2] %vm271, %v270
    %v276 = vld [vmem:[#allocation0] sm:$0x3]
    %277 = vrot.lane.b32.xlu0 %v276, 94
    %v278 = vpop.permute.xlu0 %277
    %vm279 = vcmask 7168
    %s280 = scalar_lea.vmem %s1, 34
    %281 = vst.msk [vmem:[%s280] sm:$0x1] %vm279, %v278
    %s282 = scalar_lea.vmem %s1, 97
    %283 = vst.msk [vmem:[%s282] sm:$0x2] %vm279, %v278
    %v284 = vld [vmem:[#allocation0] sm:$0x3]
    %285 = vrot.lane.b32.xlu0 %v284, 93
    %v286 = vpop.permute.xlu0 %285
    %vm287 = vcmask 7168
    %s288 = scalar_lea.vmem %s1, 35
    %289 = vst.msk [vmem:[%s288] sm:$0x1] %vm287, %v286
    %s290 = scalar_lea.vmem %s1, 98
    %291 = vst.msk [vmem:[%s290] sm:$0x2] %vm287, %v286
    %v292 = vld [vmem:[#allocation0] sm:$0x3]
    %293 = vrot.lane.b32.xlu0 %v292, 92
    %v294 = vpop.permute.xlu0 %293
    %vm295 = vcmask 7168
    %s296 = scalar_lea.vmem %s1, 36
    %297 = vst.msk [vmem:[%s296] sm:$0x1] %vm295, %v294
    %s298 = scalar_lea.vmem %s1, 99
    %299 = vst.msk [vmem:[%s298] sm:$0x2] %vm295, %v294
    %v300 = vld [vmem:[#allocation0] sm:$0x3]
    %301 = vrot.lane.b32.xlu0 %v300, 91
    %v302 = vpop.permute.xlu0 %301
    %vm303 = vcmask 7168
    %s304 = scalar_lea.vmem %s1, 37
    %305 = vst.msk [vmem:[%s304] sm:$0x1] %vm303, %v302
    %s306 = scalar_lea.vmem %s1, 100
    %307 = vst.msk [vmem:[%s306] sm:$0x2] %vm303, %v302
    %v308 = vld [vmem:[#allocation0] sm:$0x3]
    %309 = vrot.lane.b32.xlu0 %v308, 90
    %v310 = vpop.permute.xlu0 %309
    %vm311 = vcmask 7168
    %s312 = scalar_lea.vmem %s1, 38
    %313 = vst.msk [vmem:[%s312] sm:$0x1] %vm311, %v310
    %s314 = scalar_lea.vmem %s1, 101
    %315 = vst.msk [vmem:[%s314] sm:$0x2] %vm311, %v310
    %v316 = vld [vmem:[#allocation0] sm:$0x3]
    %317 = vrot.lane.b32.xlu0 %v316, 89
    %v318 = vpop.permute.xlu0 %317
    %vm319 = vcmask 7168
    %s320 = scalar_lea.vmem %s1, 39
    %321 = vst.msk [vmem:[%s320] sm:$0x1] %vm319, %v318
    %s322 = scalar_lea.vmem %s1, 102
    %323 = vst.msk [vmem:[%s322] sm:$0x2] %vm319, %v318
    %v324 = vld [vmem:[#allocation0] sm:$0x3]
    %325 = vrot.lane.b32.xlu0 %v324, 88
    %v326 = vpop.permute.xlu0 %325
    %vm327 = vcmask 7168
    %s328 = scalar_lea.vmem %s1, 40
    %329 = vst.msk [vmem:[%s328] sm:$0x1] %vm327, %v326
    %s330 = scalar_lea.vmem %s1, 103
    %331 = vst.msk [vmem:[%s330] sm:$0x2] %vm327, %v326
    %v332 = vld [vmem:[#allocation0] sm:$0x3]
    %333 = vrot.lane.b32.xlu0 %v332, 87
    %v334 = vpop.permute.xlu0 %333
    %vm335 = vcmask 7168
    %s336 = scalar_lea.vmem %s1, 41
    %337 = vst.msk [vmem:[%s336] sm:$0x1] %vm335, %v334
    %s338 = scalar_lea.vmem %s1, 104
    %339 = vst.msk [vmem:[%s338] sm:$0x2] %vm335, %v334
    %v340 = vld [vmem:[#allocation0] sm:$0x3]
    %341 = vrot.lane.b32.xlu0 %v340, 86
    %v342 = vpop.permute.xlu0 %341
    %vm343 = vcmask 7168
    %s344 = scalar_lea.vmem %s1, 42
    %345 = vst.msk [vmem:[%s344] sm:$0x1] %vm343, %v342
    %s346 = scalar_lea.vmem %s1, 105
    %347 = vst.msk [vmem:[%s346] sm:$0x2] %vm343, %v342
    %v348 = vld [vmem:[#allocation0] sm:$0x3]
    %349 = vrot.lane.b32.xlu0 %v348, 85
    %v350 = vpop.permute.xlu0 %349
    %vm351 = vcmask 7168
    %s352 = scalar_lea.vmem %s1, 43
    %353 = vst.msk [vmem:[%s352] sm:$0x1] %vm351, %v350
    %s354 = scalar_lea.vmem %s1, 106
    %355 = vst.msk [vmem:[%s354] sm:$0x2] %vm351, %v350
    %v356 = vld [vmem:[#allocation0] sm:$0x3]
    %357 = vrot.lane.b32.xlu0 %v356, 84
    %v358 = vpop.permute.xlu0 %357
    %vm359 = vcmask 7168
    %s360 = scalar_lea.vmem %s1, 44
    %361 = vst.msk [vmem:[%s360] sm:$0x1] %vm359, %v358
    %s362 = scalar_lea.vmem %s1, 107
    %363 = vst.msk [vmem:[%s362] sm:$0x2] %vm359, %v358
    %v364 = vld [vmem:[#allocation0] sm:$0x3]
    %365 = vrot.lane.b32.xlu0 %v364, 83
    %v366 = vpop.permute.xlu0 %365
    %vm367 = vcmask 7168
    %s368 = scalar_lea.vmem %s1, 45
    %369 = vst.msk [vmem:[%s368] sm:$0x1] %vm367, %v366
    %s370 = scalar_lea.vmem %s1, 108
    %371 = vst.msk [vmem:[%s370] sm:$0x2] %vm367, %v366
    %v372 = vld [vmem:[#allocation0] sm:$0x3]
    %373 = vrot.lane.b32.xlu0 %v372, 82
    %v374 = vpop.permute.xlu0 %373
    %vm375 = vcmask 7168
    %s376 = scalar_lea.vmem %s1, 46
    %377 = vst.msk [vmem:[%s376] sm:$0x1] %vm375, %v374
    %s378 = scalar_lea.vmem %s1, 109
    %379 = vst.msk [vmem:[%s378] sm:$0x2] %vm375, %v374
    %v380 = vld [vmem:[#allocation0] sm:$0x3]
    %381 = vrot.lane.b32.xlu0 %v380, 81
    %v382 = vpop.permute.xlu0 %381
    %vm383 = vcmask 7168
    %s384 = scalar_lea.vmem %s1, 47
    %385 = vst.msk [vmem:[%s384] sm:$0x1] %vm383, %v382
    %s386 = scalar_lea.vmem %s1, 110
    %387 = vst.msk [vmem:[%s386] sm:$0x2] %vm383, %v382
    %v388 = vld [vmem:[#allocation0] sm:$0x3]
    %389 = vrot.lane.b32.xlu0 %v388, 80
    %v390 = vpop.permute.xlu0 %389
    %vm391 = vcmask 7168
    %s392 = scalar_lea.vmem %s1, 48
    %393 = vst.msk [vmem:[%s392] sm:$0x1] %vm391, %v390
    %s394 = scalar_lea.vmem %s1, 111
    %395 = vst.msk [vmem:[%s394] sm:$0x2] %vm391, %v390
    %v396 = vld [vmem:[#allocation0] sm:$0x3]
    %397 = vrot.lane.b32.xlu0 %v396, 79
    %v398 = vpop.permute.xlu0 %397
    %vm399 = vcmask 7168
    %s400 = scalar_lea.vmem %s1, 49
    %401 = vst.msk [vmem:[%s400] sm:$0x1] %vm399, %v398
    %s402 = scalar_lea.vmem %s1, 112
    %403 = vst.msk [vmem:[%s402] sm:$0x2] %vm399, %v398
    %v404 = vld [vmem:[#allocation0] sm:$0x3]
    %405 = vrot.lane.b32.xlu0 %v404, 78
    %v406 = vpop.permute.xlu0 %405
    %vm407 = vcmask 7168
    %s408 = scalar_lea.vmem %s1, 50
    %409 = vst.msk [vmem:[%s408] sm:$0x1] %vm407, %v406
    %s410 = scalar_lea.vmem %s1, 113
    %411 = vst.msk [vmem:[%s410] sm:$0x2] %vm407, %v406
    %v412 = vld [vmem:[#allocation0] sm:$0x3]
    %413 = vrot.lane.b32.xlu0 %v412, 77
    %v414 = vpop.permute.xlu0 %413
    %vm415 = vcmask 7168
    %s416 = scalar_lea.vmem %s1, 51
    %417 = vst.msk [vmem:[%s416] sm:$0x1] %vm415, %v414
    %s418 = scalar_lea.vmem %s1, 114
    %419 = vst.msk [vmem:[%s418] sm:$0x2] %vm415, %v414
    %v420 = vld [vmem:[#allocation0] sm:$0x3]
    %421 = vrot.lane.b32.xlu0 %v420, 76
    %v422 = vpop.permute.xlu0 %421
    %vm423 = vcmask 7168
    %s424 = scalar_lea.vmem %s1, 52
    %425 = vst.msk [vmem:[%s424] sm:$0x1] %vm423, %v422
    %s426 = scalar_lea.vmem %s1, 115
    %427 = vst.msk [vmem:[%s426] sm:$0x2] %vm423, %v422
    %v428 = vld [vmem:[#allocation0] sm:$0x3]
    %429 = vrot.lane.b32.xlu0 %v428, 75
    %v430 = vpop.permute.xlu0 %429
    %vm431 = vcmask 7168
    %s432 = scalar_lea.vmem %s1, 53
    %433 = vst.msk [vmem:[%s432] sm:$0x1] %vm431, %v430
    %s434 = scalar_lea.vmem %s1, 116
    %435 = vst.msk [vmem:[%s434] sm:$0x2] %vm431, %v430
    %v436 = vld [vmem:[#allocation0] sm:$0x3]
    %437 = vrot.lane.b32.xlu0 %v436, 74
    %v438 = vpop.permute.xlu0 %437
    %vm439 = vcmask 7168
    %s440 = scalar_lea.vmem %s1, 54
    %441 = vst.msk [vmem:[%s440] sm:$0x1] %vm439, %v438
    %s442 = scalar_lea.vmem %s1, 117
    %443 = vst.msk [vmem:[%s442] sm:$0x2] %vm439, %v438
    %v444 = vld [vmem:[#allocation0] sm:$0x3]
    %445 = vrot.lane.b32.xlu0 %v444, 73
    %v446 = vpop.permute.xlu0 %445
    %vm447 = vcmask 7168
    %s448 = scalar_lea.vmem %s1, 55
    %449 = vst.msk [vmem:[%s448] sm:$0x1] %vm447, %v446
    %s450 = scalar_lea.vmem %s1, 118
    %451 = vst.msk [vmem:[%s450] sm:$0x2] %vm447, %v446
    %v452 = vld [vmem:[#allocation0] sm:$0x3]
    %453 = vrot.lane.b32.xlu0 %v452, 72
    %v454 = vpop.permute.xlu0 %453
    %vm455 = vcmask 7168
    %s456 = scalar_lea.vmem %s1, 56
    %457 = vst.msk [vmem:[%s456] sm:$0x1] %vm455, %v454
    %s458 = scalar_lea.vmem %s1, 119
    %459 = vst.msk [vmem:[%s458] sm:$0x2] %vm455, %v454
    %v460 = vld [vmem:[#allocation0] sm:$0x3]
    %461 = vrot.lane.b32.xlu0 %v460, 71
    %v462 = vpop.permute.xlu0 %461
    %vm463 = vcmask 7168
    %s464 = scalar_lea.vmem %s1, 57
    %465 = vst.msk [vmem:[%s464] sm:$0x1] %vm463, %v462
    %s466 = scalar_lea.vmem %s1, 120
    %467 = vst.msk [vmem:[%s466] sm:$0x2] %vm463, %v462
    %v468 = vld [vmem:[#allocation0] sm:$0x3]
    %469 = vrot.lane.b32.xlu0 %v468, 70
    %v470 = vpop.permute.xlu0 %469
    %vm471 = vcmask 7168
    %s472 = scalar_lea.vmem %s1, 58
    %473 = vst.msk [vmem:[%s472] sm:$0x1] %vm471, %v470
    %s474 = scalar_lea.vmem %s1, 121
    %475 = vst.msk [vmem:[%s474] sm:$0x2] %vm471, %v470
    %v476 = vld [vmem:[#allocation0] sm:$0x3]
    %477 = vrot.lane.b32.xlu0 %v476, 69
    %v478 = vpop.permute.xlu0 %477
    %vm479 = vcmask 7168
    %s480 = scalar_lea.vmem %s1, 59
    %481 = vst.msk [vmem:[%s480] sm:$0x1] %vm479, %v478
    %s482 = scalar_lea.vmem %s1, 122
    %483 = vst.msk [vmem:[%s482] sm:$0x2] %vm479, %v478
    %v484 = vld [vmem:[#allocation0] sm:$0x3]
    %485 = vrot.lane.b32.xlu0 %v484, 68
    %v486 = vpop.permute.xlu0 %485
    %vm487 = vcmask 7168
    %s488 = scalar_lea.vmem %s1, 60
    %489 = vst.msk [vmem:[%s488] sm:$0x1] %vm487, %v486
    %s490 = scalar_lea.vmem %s1, 123
    %491 = vst.msk [vmem:[%s490] sm:$0x2] %vm487, %v486
    %v492 = vld [vmem:[#allocation0] sm:$0x3]
    %493 = vrot.lane.b32.xlu0 %v492, 67
    %v494 = vpop.permute.xlu0 %493
    %vm495 = vcmask 7168
    %s496 = scalar_lea.vmem %s1, 61
    %497 = vst.msk [vmem:[%s496] sm:$0x1] %vm495, %v494
    %s498 = scalar_lea.vmem %s1, 124
    %499 = vst.msk [vmem:[%s498] sm:$0x2] %vm495, %v494
    %v500 = vld [vmem:[#allocation0] sm:$0x3]
    %501 = vrot.lane.b32.xlu0 %v500, 66
    %v502 = vpop.permute.xlu0 %501
    %vm503 = vcmask 7168
    %s504 = scalar_lea.vmem %s1, 62
    %505 = vst.msk [vmem:[%s504] sm:$0x1] %vm503, %v502
    %s506 = scalar_lea.vmem %s1, 125
    %507 = vst.msk [vmem:[%s506] sm:$0x2] %vm503, %v502
    %v508 = vld [vmem:[#allocation0] sm:$0x3]
    %509 = vrot.lane.b32.xlu0 %v508, 65
    %v510 = vpop.permute.xlu0 %509
    %vm511 = vcmask 7168
    %s512 = scalar_lea.vmem %s1, 63
    %513 = vst.msk [vmem:[%s512] sm:$0x1] %vm511, %v510
    %s514 = scalar_lea.vmem %s1, 126
    %515 = vst.msk [vmem:[%s514] sm:$0x2] %vm511, %v510

// kernel: discriminator_forward.1
$region0: #{discriminator_forward.1}
  #allocation0 [shape = 'u32[]', space=smem, size = 0x4, offset = 0x4, fixed_abs, tag = 'smem constant byte address 0x4 - core index']
  #allocation1 [shape = 'u32[144,128]{1,0:T(1,128)}', space=vmem, size = 0x12000, scoped, tag = 'internal scratch']
  #allocation2 [shape = 'f32[1,1]{1,0:T(1,128)S(1)}', space=vmem, size = 0x200, scoped, tag = 'scoped memory for discriminator_forward.1']
  %s0 = inlined_call_operand.vmem [shape: f32[128,512], index: 0, kind: input, shape index: {}]
  %s1 = inlined_call_operand.vmem [shape: f32[128,512], index: 1, kind: input, shape index: {}]
  %s2 = inlined_call_operand.vmem [shape: f32[128,512], index: 2, kind: input, shape index: {}]
  %s3 = inlined_call_operand.vmem [shape: f32[128,512], index: 3, kind: input, shape index: {}]
  %s4 = inlined_call_operand.vmem [shape: f32[128,512], index: 4, kind: input, shape index: {}]
  %s5 = inlined_call_operand.vmem [shape: f32[1,512], index: 5, kind: input, shape index: {}]
  %s6 = inlined_call_operand.vmem [shape: f32[1024,128], index: 6, kind: input, shape index: {}]
  %s7 = inlined_call_operand.vmem [shape: f32[512,64], index: 7, kind: input, shape index: {}]
  %s8 = inlined_call_operand.vmem [shape: f32[256,32], index: 8, kind: input, shape index: {}]
  %s9 = inlined_call_operand.vmem [shape: f32[128,16], index: 9, kind: input, shape index: {}]
  %s10 = inlined_call_operand.vmem [shape: f32[64,8], index: 10, kind: input, shape index: {}]
  %s11 = inlined_call_operand.vmem [shape: f32[128,1], index: 11, kind: input, shape index: {}]
  %s12 = inlined_call_operand.vmem [shape: f32[128,1], index: 12, kind: input, shape index: {}]
  %s13 = inlined_call_operand.vmem [shape: f32[128,1], index: 13, kind: input, shape index: {}]
  %s14 = inlined_call_operand.vmem [shape: f32[128,1], index: 14, kind: input, shape index: {}]
  %s15 = inlined_call_operand.<no memory space> [shape: f32[1,1], index: 15, kind: input, shape index: {}]
  %s16 = inlined_call_operand.vmem [shape: f32[64,64], index: 16, kind: input, shape index: {}]
  %s17 = inlined_call_operand.vmem [shape: f32[32,32], index: 17, kind: input, shape index: {}]
  %s18 = inlined_call_operand.vmem [shape: f32[16,16], index: 18, kind: input, shape index: {}]
  %s19 = inlined_call_operand.vmem [shape: f32[2,1,8], index: 19, kind: output, shape index: {}]
  %s20 = sld [smem:[#allocation0]]
  $region132: #{discriminator_forward.1} parent=0
    _
  %s22 = ssub.s32 1, %s20
  %s23 = scalar_select 0, %s22, %s20
  %v24 = vstv %s15
  %25 = vst [vmem:[#allocation2] sm:$0x1] %v24
  $region1: #{discriminator_forward.1} parent=0
    #allocation3 [shape = 'u8[262144]{0}', space=vmem, size = 0x40000, scoped, tag = 'input window, operand 0']
    loop: start=0, step=1, limit=4
    $region2: #{discriminator_forward.1} parent=1 // loop_pre_header
      _
    $region3: #{discriminator_forward.1} parent=1 // loop_header
      %s27 = sphi 0, %s31
      %p28 = scmp.ge.s32.totalorder %s27, 4
      %s37 = sphi 0, %s39
      %s40 = sphi 0, %s37
      %s41 = sphi 0, %s40
      %s57 = sphi 0, %s41
      %s61 = sphi 0, %s61
      %s63 = sphi 0, %s61
      %s64 = sphi 0, %s63
      %s78 = sphi 0, %s64
      %s82 = sphi 0, %s82
      %s84 = sphi 0, %s82
      %s85 = sphi 0, %s84
      %s99 = sphi 0, %s85
      %s103 = sphi 0, %s103
      %s105 = sphi 0, %s103
      %s106 = sphi 0, %s105
      %s120 = sphi 0, %s106
      %s124 = sphi 0, %s124
      %s126 = sphi 0, %s124
      %s127 = sphi 0, %s126
      %s141 = sphi 0, %s127
      %s145 = sphi 0, %s145
      %s147 = sphi 0, %s145
      %s148 = sphi 0, %s147
      %s162 = sphi 0, %s148
      %s166 = sphi 0, %s166
      %s168 = sphi 0, %s166
      %s169 = sphi 0, %s168
      %s183 = sphi 0, %s169
      %s187 = sphi 0, %s187
      %s189 = sphi 0, %s187
      %s190 = sphi 0, %s189
      %s204 = sphi 0, %s190
      %s208 = sphi 0, %s208
      %s210 = sphi 0, %s208
      %s211 = sphi 0, %s210
      %s225 = sphi 0, %s211
      %s229 = sphi 0, %s229
      %s231 = sphi 0, %s229
      %s232 = sphi 0, %s231
      %s246 = sphi 0, %s232
      %s250 = sphi 0, %s250
      %s252 = sphi 0, %s250
      %s253 = sphi 0, %s252
      %s267 = sphi 0, %s253
      %s271 = sphi 0, %s271
      %s273 = sphi 0, %s271
      %s274 = sphi 0, %s273
      %s288 = sphi 0, %s274
      %s292 = sphi 0, %s292
      %s294 = sphi 0, %s292
      %s295 = sphi 0, %s294
      %s309 = sphi 0, %s295
      %s313 = sphi 0, %s313
      %s315 = sphi 0, %s313
      %s316 = sphi 0, %s315
      %s330 = sphi 0, %s316
      %s334 = sphi 0, %s334
      %s336 = sphi 0, %s334
      %s337 = sphi 0, %s336
      %s351 = sphi 0, %s337
      %s355 = sphi 0, %s355
      %s357 = sphi 0, %s355
      %s358 = sphi 0, %s357
      %s372 = sphi 0, %s358
      %s376 = sphi 0, %s376
      %s378 = sphi 0, %s376
      %s379 = sphi 0, %s378
      %s393 = sphi 0, %s379
      %s397 = sphi 0, %s397
      %s399 = sphi 0, %s397
      %s400 = sphi 0, %s399
      %s414 = sphi 0, %s400
      %s418 = sphi 0, %s418
      %s420 = sphi 0, %s418
      %s421 = sphi 0, %s420
      %s435 = sphi 0, %s421
      %s441 = sphi 0, %s443
      %s444 = sphi 0, %s441
      %s445 = sphi 0, %s444
      %s461 = sphi 0, %s445
    $region4: #{discriminator_forward.1} parent=1 // loop_header_branch
      %30 = sbr.rel (%p28) target = $region8
    $region5: #{discriminator_forward.1} parent=1 // loop_body
      %s32 = ssub.s32 %s27, 1
      %s33 = ssub.s32 %s27, 2
      %s34 = sadd.s32 %s27, 1
      %s35 = ssub.s32 %s27, %s34
      %p36 = scmp.eq.s32.totalorder %s35, 0
      %s38 = sadd.s32 %s37, 1
      %s39 = scalar_select %p36, %s37, %s38
      %p42 = pneg %p36
      %p43 = scmp.eq.s32.totalorder %s27, 1
      %p44 = por %p42, %p43
      %p45 = scmp.ne.s32.totalorder %s37, %s40
      %p46 = scmp.eq.s32.totalorder %s27, 0
      %p47 = por %p45, %p46
      %p48 = scmp.ne.s32.totalorder %s37, %s40
      %p49 = scmp.eq.s32.totalorder %s32, 1
      %p50 = por %p48, %p49
      %p51 = scmp.ne.s32.totalorder %s40, %s41
      %p52 = scmp.eq.s32.totalorder %s32, 0
      %p53 = por %p51, %p52
      %p54 = scmp.ne.s32.totalorder %s40, %s41
      %p55 = scmp.eq.s32.totalorder %s33, 1
      %p56 = por %p54, %p55
      %p58 = scmp.ne.s32.totalorder %s41, %s57
      %p59 = scmp.eq.s32.totalorder %s33, 0
      %p60 = por %p58, %p59
      %s62 = sadd.s32 %s61, 1
      %p65 = scmp.eq.s32.totalorder %s27, 1
      %p66 = scmp.ne.s32.totalorder %s61, %s63
      %p67 = scmp.eq.s32.totalorder %s27, 0
      %p68 = por %p66, %p67
      %p69 = scmp.ne.s32.totalorder %s61, %s63
      %p70 = scmp.eq.s32.totalorder %s32, 1
      %p71 = por %p69, %p70
      %p72 = scmp.ne.s32.totalorder %s63, %s64
      %p73 = scmp.eq.s32.totalorder %s32, 0
      %p74 = por %p72, %p73
      %p75 = scmp.ne.s32.totalorder %s63, %s64
      %p76 = scmp.eq.s32.totalorder %s33, 1
      %p77 = por %p75, %p76
      %p79 = scmp.ne.s32.totalorder %s64, %s78
      %p80 = scmp.eq.s32.totalorder %s33, 0
      %p81 = por %p79, %p80
      %s83 = sadd.s32 %s82, 1
      %p86 = scmp.eq.s32.totalorder %s27, 1
      %p87 = scmp.ne.s32.totalorder %s82, %s84
      %p88 = scmp.eq.s32.totalorder %s27, 0
      %p89 = por %p87, %p88
      %p90 = scmp.ne.s32.totalorder %s82, %s84
      %p91 = scmp.eq.s32.totalorder %s32, 1
      %p92 = por %p90, %p91
      %p93 = scmp.ne.s32.totalorder %s84, %s85
      %p94 = scmp.eq.s32.totalorder %s32, 0
      %p95 = por %p93, %p94
      %p96 = scmp.ne.s32.totalorder %s84, %s85
      %p97 = scmp.eq.s32.totalorder %s33, 1
      %p98 = por %p96, %p97
      %p100 = scmp.ne.s32.totalorder %s85, %s99
      %p101 = scmp.eq.s32.totalorder %s33, 0
      %p102 = por %p100, %p101
      %s104 = sadd.s32 %s103, 1
      %p107 = scmp.eq.s32.totalorder %s27, 1
      %p108 = scmp.ne.s32.totalorder %s103, %s105
      %p109 = scmp.eq.s32.totalorder %s27, 0
      %p110 = por %p108, %p109
      %p111 = scmp.ne.s32.totalorder %s103, %s105
      %p112 = scmp.eq.s32.totalorder %s32, 1
      %p113 = por %p111, %p112
      %p114 = scmp.ne.s32.totalorder %s105, %s106
      %p115 = scmp.eq.s32.totalorder %s32, 0
      %p116 = por %p114, %p115
      %p117 = scmp.ne.s32.totalorder %s105, %s106
      %p118 = scmp.eq.s32.totalorder %s33, 1
      %p119 = por %p117, %p118
      %p121 = scmp.ne.s32.totalorder %s106, %s120
      %p122 = scmp.eq.s32.totalorder %s33, 0
      %p123 = por %p121, %p122
      %s125 = sadd.s32 %s124, 1
      %p128 = scmp.eq.s32.totalorder %s27, 1
      %p129 = scmp.ne.s32.totalorder %s124, %s126
      %p130 = scmp.eq.s32.totalorder %s27, 0
      %p131 = por %p129, %p130
      %p132 = scmp.ne.s32.totalorder %s124, %s126
      %p133 = scmp.eq.s32.totalorder %s32, 1
      %p134 = por %p132, %p133
      %p135 = scmp.ne.s32.totalorder %s126, %s127
      %p136 = scmp.eq.s32.totalorder %s32, 0
      %p137 = por %p135, %p136
      %p138 = scmp.ne.s32.totalorder %s126, %s127
      %p139 = scmp.eq.s32.totalorder %s33, 1
      %p140 = por %p138, %p139
      %p142 = scmp.ne.s32.totalorder %s127, %s141
      %p143 = scmp.eq.s32.totalorder %s33, 0
      %p144 = por %p142, %p143
      %s146 = sadd.s32 %s145, 1
      %p149 = scmp.eq.s32.totalorder %s27, 1
      %p150 = scmp.ne.s32.totalorder %s145, %s147
      %p151 = scmp.eq.s32.totalorder %s27, 0
      %p152 = por %p150, %p151
      %p153 = scmp.ne.s32.totalorder %s145, %s147
      %p154 = scmp.eq.s32.totalorder %s32, 1
      %p155 = por %p153, %p154
      %p156 = scmp.ne.s32.totalorder %s147, %s148
      %p157 = scmp.eq.s32.totalorder %s32, 0
      %p158 = por %p156, %p157
      %p159 = scmp.ne.s32.totalorder %s147, %s148
      %p160 = scmp.eq.s32.totalorder %s33, 1
      %p161 = por %p159, %p160
      %p163 = scmp.ne.s32.totalorder %s148, %s162
      %p164 = scmp.eq.s32.totalorder %s33, 0
      %p165 = por %p163, %p164
      %s167 = sadd.s32 %s166, 1
      %p170 = scmp.eq.s32.totalorder %s27, 1
      %p171 = scmp.ne.s32.totalorder %s166, %s168
      %p172 = scmp.eq.s32.totalorder %s27, 0
      %p173 = por %p171, %p172
      %p174 = scmp.ne.s32.totalorder %s166, %s168
      %p175 = scmp.eq.s32.totalorder %s32, 1
      %p176 = por %p174, %p175
      %p177 = scmp.ne.s32.totalorder %s168, %s169
      %p178 = scmp.eq.s32.totalorder %s32, 0
      %p179 = por %p177, %p178
      %p180 = scmp.ne.s32.totalorder %s168, %s169
      %p181 = scmp.eq.s32.totalorder %s33, 1
      %p182 = por %p180, %p181
      %p184 = scmp.ne.s32.totalorder %s169, %s183
      %p185 = scmp.eq.s32.totalorder %s33, 0
      %p186 = por %p184, %p185
      %s188 = sadd.s32 %s187, 1
      %p191 = scmp.eq.s32.totalorder %s27, 1
      %p192 = scmp.ne.s32.totalorder %s187, %s189
      %p193 = scmp.eq.s32.totalorder %s27, 0
      %p194 = por %p192, %p193
      %p195 = scmp.ne.s32.totalorder %s187, %s189
      %p196 = scmp.eq.s32.totalorder %s32, 1
      %p197 = por %p195, %p196
      %p198 = scmp.ne.s32.totalorder %s189, %s190
      %p199 = scmp.eq.s32.totalorder %s32, 0
      %p200 = por %p198, %p199
      %p201 = scmp.ne.s32.totalorder %s189, %s190
      %p202 = scmp.eq.s32.totalorder %s33, 1
      %p203 = por %p201, %p202
      %p205 = scmp.ne.s32.totalorder %s190, %s204
      %p206 = scmp.eq.s32.totalorder %s33, 0
      %p207 = por %p205, %p206
      %s209 = sadd.s32 %s208, 1
      %p212 = scmp.eq.s32.totalorder %s27, 1
      %p213 = scmp.ne.s32.totalorder %s208, %s210
      %p214 = scmp.eq.s32.totalorder %s27, 0
      %p215 = por %p213, %p214
      %p216 = scmp.ne.s32.totalorder %s208, %s210
      %p217 = scmp.eq.s32.totalorder %s32, 1
      %p218 = por %p216, %p217
      %p219 = scmp.ne.s32.totalorder %s210, %s211
      %p220 = scmp.eq.s32.totalorder %s32, 0
      %p221 = por %p219, %p220
      %p222 = scmp.ne.s32.totalorder %s210, %s211
      %p223 = scmp.eq.s32.totalorder %s33, 1
      %p224 = por %p222, %p223
      %p226 = scmp.ne.s32.totalorder %s211, %s225
      %p227 = scmp.eq.s32.totalorder %s33, 0
      %p228 = por %p226, %p227
      %s230 = sadd.s32 %s229, 1
      %p233 = scmp.eq.s32.totalorder %s27, 1
      %p234 = scmp.ne.s32.totalorder %s229, %s231
      %p235 = scmp.eq.s32.totalorder %s27, 0
      %p236 = por %p234, %p235
      %p237 = scmp.ne.s32.totalorder %s229, %s231
      %p238 = scmp.eq.s32.totalorder %s32, 1
      %p239 = por %p237, %p238
      %p240 = scmp.ne.s32.totalorder %s231, %s232
      %p241 = scmp.eq.s32.totalorder %s32, 0
      %p242 = por %p240, %p241
      %p243 = scmp.ne.s32.totalorder %s231, %s232
      %p244 = scmp.eq.s32.totalorder %s33, 1
      %p245 = por %p243, %p244
      %p247 = scmp.ne.s32.totalorder %s232, %s246
      %p248 = scmp.eq.s32.totalorder %s33, 0
      %p249 = por %p247, %p248
      %s251 = sadd.s32 %s250, 1
      %p254 = scmp.eq.s32.totalorder %s27, 1
      %p255 = scmp.ne.s32.totalorder %s250, %s252
      %p256 = scmp.eq.s32.totalorder %s27, 0
      %p257 = por %p255, %p256
      %p258 = scmp.ne.s32.totalorder %s250, %s252
      %p259 = scmp.eq.s32.totalorder %s32, 1
      %p260 = por %p258, %p259
      %p261 = scmp.ne.s32.totalorder %s252, %s253
      %p262 = scmp.eq.s32.totalorder %s32, 0
      %p263 = por %p261, %p262
      %p264 = scmp.ne.s32.totalorder %s252, %s253
      %p265 = scmp.eq.s32.totalorder %s33, 1
      %p266 = por %p264, %p265
      %p268 = scmp.ne.s32.totalorder %s253, %s267
      %p269 = scmp.eq.s32.totalorder %s33, 0
      %p270 = por %p268, %p269
      %s272 = sadd.s32 %s271, 1
      %p275 = scmp.eq.s32.totalorder %s27, 1
      %p276 = scmp.ne.s32.totalorder %s271, %s273
      %p277 = scmp.eq.s32.totalorder %s27, 0
      %p278 = por %p276, %p277
      %p279 = scmp.ne.s32.totalorder %s271, %s273
      %p280 = scmp.eq.s32.totalorder %s32, 1
      %p281 = por %p279, %p280
      %p282 = scmp.ne.s32.totalorder %s273, %s274
      %p283 = scmp.eq.s32.totalorder %s32, 0
      %p284 = por %p282, %p283
      %p285 = scmp.ne.s32.totalorder %s273, %s274
      %p286 = scmp.eq.s32.totalorder %s33, 1
      %p287 = por %p285, %p286
      %p289 = scmp.ne.s32.totalorder %s274, %s288
      %p290 = scmp.eq.s32.totalorder %s33, 0
      %p291 = por %p289, %p290
      %s293 = sadd.s32 %s292, 1
      %p296 = scmp.eq.s32.totalorder %s27, 1
      %p297 = scmp.ne.s32.totalorder %s292, %s294
      %p298 = scmp.eq.s32.totalorder %s27, 0
      %p299 = por %p297, %p298
      %p300 = scmp.ne.s32.totalorder %s292, %s294
      %p301 = scmp.eq.s32.totalorder %s32, 1
      %p302 = por %p300, %p301
      %p303 = scmp.ne.s32.totalorder %s294, %s295
      %p304 = scmp.eq.s32.totalorder %s32, 0
      %p305 = por %p303, %p304
      %p306 = scmp.ne.s32.totalorder %s294, %s295
      %p307 = scmp.eq.s32.totalorder %s33, 1
      %p308 = por %p306, %p307
      %p310 = scmp.ne.s32.totalorder %s295, %s309
      %p311 = scmp.eq.s32.totalorder %s33, 0
      %p312 = por %p310, %p311
      %s314 = sadd.s32 %s313, 1
      %p317 = scmp.eq.s32.totalorder %s27, 1
      %p318 = scmp.ne.s32.totalorder %s313, %s315
      %p319 = scmp.eq.s32.totalorder %s27, 0
      %p320 = por %p318, %p319
      %p321 = scmp.ne.s32.totalorder %s313, %s315
      %p322 = scmp.eq.s32.totalorder %s32, 1
      %p323 = por %p321, %p322
      %p324 = scmp.ne.s32.totalorder %s315, %s316
      %p325 = scmp.eq.s32.totalorder %s32, 0
      %p326 = por %p324, %p325
      %p327 = scmp.ne.s32.totalorder %s315, %s316
      %p328 = scmp.eq.s32.totalorder %s33, 1
      %p329 = por %p327, %p328
      %p331 = scmp.ne.s32.totalorder %s316, %s330
      %p332 = scmp.eq.s32.totalorder %s33, 0
      %p333 = por %p331, %p332
      %s335 = sadd.s32 %s334, 1
      %p338 = scmp.eq.s32.totalorder %s27, 1
      %p339 = scmp.ne.s32.totalorder %s334, %s336
      %p340 = scmp.eq.s32.totalorder %s27, 0
      %p341 = por %p339, %p340
      %p342 = scmp.ne.s32.totalorder %s334, %s336
      %p343 = scmp.eq.s32.totalorder %s32, 1
      %p344 = por %p342, %p343
      %p345 = scmp.ne.s32.totalorder %s336, %s337
      %p346 = scmp.eq.s32.totalorder %s32, 0
      %p347 = por %p345, %p346
      %p348 = scmp.ne.s32.totalorder %s336, %s337
      %p349 = scmp.eq.s32.totalorder %s33, 1
      %p350 = por %p348, %p349
      %p352 = scmp.ne.s32.totalorder %s337, %s351
      %p353 = scmp.eq.s32.totalorder %s33, 0
      %p354 = por %p352, %p353
      %s356 = sadd.s32 %s355, 1
      %p359 = scmp.eq.s32.totalorder %s27, 1
      %p360 = scmp.ne.s32.totalorder %s355, %s357
      %p361 = scmp.eq.s32.totalorder %s27, 0
      %p362 = por %p360, %p361
      %p363 = scmp.ne.s32.totalorder %s355, %s357
      %p364 = scmp.eq.s32.totalorder %s32, 1
      %p365 = por %p363, %p364
      %p366 = scmp.ne.s32.totalorder %s357, %s358
      %p367 = scmp.eq.s32.totalorder %s32, 0
      %p368 = por %p366, %p367
      %p369 = scmp.ne.s32.totalorder %s357, %s358
      %p370 = scmp.eq.s32.totalorder %s33, 1
      %p371 = por %p369, %p370
      %p373 = scmp.ne.s32.totalorder %s358, %s372
      %p374 = scmp.eq.s32.totalorder %s33, 0
      %p375 = por %p373, %p374
      %s377 = sadd.s32 %s376, 1
      %p380 = scmp.eq.s32.totalorder %s27, 1
      %p381 = scmp.ne.s32.totalorder %s376, %s378
      %p382 = scmp.eq.s32.totalorder %s27, 0
      %p383 = por %p381, %p382
      %p384 = scmp.ne.s32.totalorder %s376, %s378
      %p385 = scmp.eq.s32.totalorder %s32, 1
      %p386 = por %p384, %p385
      %p387 = scmp.ne.s32.totalorder %s378, %s379
      %p388 = scmp.eq.s32.totalorder %s32, 0
      %p389 = por %p387, %p388
      %p390 = scmp.ne.s32.totalorder %s378, %s379
      %p391 = scmp.eq.s32.totalorder %s33, 1
      %p392 = por %p390, %p391
      %p394 = scmp.ne.s32.totalorder %s379, %s393
      %p395 = scmp.eq.s32.totalorder %s33, 0
      %p396 = por %p394, %p395
      %s398 = sadd.s32 %s397, 1
      %p401 = scmp.eq.s32.totalorder %s27, 1
      %p402 = scmp.ne.s32.totalorder %s397, %s399
      %p403 = scmp.eq.s32.totalorder %s27, 0
      %p404 = por %p402, %p403
      %p405 = scmp.ne.s32.totalorder %s397, %s399
      %p406 = scmp.eq.s32.totalorder %s32, 1
      %p407 = por %p405, %p406
      %p408 = scmp.ne.s32.totalorder %s399, %s400
      %p409 = scmp.eq.s32.totalorder %s32, 0
      %p410 = por %p408, %p409
      %p411 = scmp.ne.s32.totalorder %s399, %s400
      %p412 = scmp.eq.s32.totalorder %s33, 1
      %p413 = por %p411, %p412
      %p415 = scmp.ne.s32.totalorder %s400, %s414
      %p416 = scmp.eq.s32.totalorder %s33, 0
      %p417 = por %p415, %p416
      %s419 = sadd.s32 %s418, 1
      %p422 = scmp.eq.s32.totalorder %s27, 1
      %p423 = scmp.ne.s32.totalorder %s418, %s420
      %p424 = scmp.eq.s32.totalorder %s27, 0
      %p425 = por %p423, %p424
      %p426 = scmp.ne.s32.totalorder %s418, %s420
      %p427 = scmp.eq.s32.totalorder %s32, 1
      %p428 = por %p426, %p427
      %p429 = scmp.ne.s32.totalorder %s420, %s421
      %p430 = scmp.eq.s32.totalorder %s32, 0
      %p431 = por %p429, %p430
      %p432 = scmp.ne.s32.totalorder %s420, %s421
      %p433 = scmp.eq.s32.totalorder %s33, 1
      %p434 = por %p432, %p433
      %p436 = scmp.ne.s32.totalorder %s421, %s435
      %p437 = scmp.eq.s32.totalorder %s33, 0
      %p438 = por %p436, %p437
      %s439 = ssub.s32 %s27, %s34
      %p440 = scmp.eq.s32.totalorder %s439, 0
      %s442 = sadd.s32 %s441, 1
      %s443 = scalar_select %p440, %s441, %s442
      %p446 = pneg %p440
      %p447 = scmp.eq.s32.totalorder %s27, 1
      %p448 = por %p446, %p447
      %p449 = scmp.ne.s32.totalorder %s441, %s444
      %p450 = scmp.eq.s32.totalorder %s27, 0
      %p451 = por %p449, %p450
      %p452 = scmp.ne.s32.totalorder %s441, %s444
      %p453 = scmp.eq.s32.totalorder %s32, 1
      %p454 = por %p452, %p453
      %p455 = scmp.ne.s32.totalorder %s444, %s445
      %p456 = scmp.eq.s32.totalorder %s32, 0
      %p457 = por %p455, %p456
      %p458 = scmp.ne.s32.totalorder %s444, %s445
      %p459 = scmp.eq.s32.totalorder %s33, 1
      %p460 = por %p458, %p459
      %p462 = scmp.ne.s32.totalorder %s445, %s461
      %p463 = scmp.eq.s32.totalorder %s33, 0
      %p464 = por %p462, %p463
      %p465 = scmp.le.s32.totalorder 1, %s27
      %p466 = scmp.lt.s32.totalorder %s27, 3
      %p467 = pnand %p465, %p466
      %p468 = pneg %p467
      // Predicated region
      $region9: #{discriminator_forward.1} parent=5 // pred_check
        _
      $region10: #{discriminator_forward.1} parent=5 // pred_check_branch
        %470 = sbr.rel (%p467) target = $region12
      $region11: #{discriminator_forward.1} parent=5 // pred_region
        %s471 = ssub.s32 %s27, 1
        // Predicated region
        $region13: #{discriminator_forward.1} parent=11 // pred_check
          %p472 = pneg %p74
        $region14: #{discriminator_forward.1} parent=11 // pred_check_branch
          %474 = sbr.rel (%p472) target = $region16
        $region15: #{discriminator_forward.1} parent=11 // pred_region
          _
        $region16: #{discriminator_forward.1} parent=11 // pred_fallthru
          _
        // Predicated region
        $region17: #{discriminator_forward.1} parent=11 // pred_check
          %p475 = pneg %p95
        $region18: #{discriminator_forward.1} parent=11 // pred_check_branch
          %477 = sbr.rel (%p475) target = $region20
        $region19: #{discriminator_forward.1} parent=11 // pred_region
          _
        $region20: #{discriminator_forward.1} parent=11 // pred_fallthru
          _
        // Predicated region
        $region21: #{discriminator_forward.1} parent=11 // pred_check
          %p478 = pneg %p116
        $region22: #{discriminator_forward.1} parent=11 // pred_check_branch
          %480 = sbr.rel (%p478) target = $region24
        $region23: #{discriminator_forward.1} parent=11 // pred_region
          _
        $region24: #{discriminator_forward.1} parent=11 // pred_fallthru
          _
        // Predicated region
        $region25: #{discriminator_forward.1} parent=11 // pred_check
          %p481 = pneg %p137
        $region26: #{discriminator_forward.1} parent=11 // pred_check_branch
          %483 = sbr.rel (%p481) target = $region28
        $region27: #{discriminator_forward.1} parent=11 // pred_region
          _
        $region28: #{discriminator_forward.1} parent=11 // pred_fallthru
          _
        // Predicated region
        $region29: #{discriminator_forward.1} parent=11 // pred_check
          %p484 = pneg %p158
        $region30: #{discriminator_forward.1} parent=11 // pred_check_branch
          %486 = sbr.rel (%p484) target = $region32
        $region31: #{discriminator_forward.1} parent=11 // pred_region
          _
        $region32: #{discriminator_forward.1} parent=11 // pred_fallthru
          _
        // Predicated region
        $region33: #{discriminator_forward.1} parent=11 // pred_check
          %p487 = pneg %p179
        $region34: #{discriminator_forward.1} parent=11 // pred_check_branch
          %489 = sbr.rel (%p487) target = $region36
        $region35: #{discriminator_forward.1} parent=11 // pred_region
          _
        $region36: #{discriminator_forward.1} parent=11 // pred_fallthru
          _
        // Predicated region
        $region37: #{discriminator_forward.1} parent=11 // pred_check
          %p490 = pneg %p200
        $region38: #{discriminator_forward.1} parent=11 // pred_check_branch
          %492 = sbr.rel (%p490) target = $region40
        $region39: #{discriminator_forward.1} parent=11 // pred_region
          _
        $region40: #{discriminator_forward.1} parent=11 // pred_fallthru
          _
        // Predicated region
        $region41: #{discriminator_forward.1} parent=11 // pred_check
          %p493 = pneg %p221
        $region42: #{discriminator_forward.1} parent=11 // pred_check_branch
          %495 = sbr.rel (%p493) target = $region44
        $region43: #{discriminator_forward.1} parent=11 // pred_region
          _
        $region44: #{discriminator_forward.1} parent=11 // pred_fallthru
          _
        // Predicated region
        $region45: #{discriminator_forward.1} parent=11 // pred_check
          %p496 = pneg %p242
        $region46: #{discriminator_forward.1} parent=11 // pred_check_branch
          %498 = sbr.rel (%p496) target = $region48
        $region47: #{discriminator_forward.1} parent=11 // pred_region
          _
        $region48: #{discriminator_forward.1} parent=11 // pred_fallthru
          _
        // Predicated region
        $region49: #{discriminator_forward.1} parent=11 // pred_check
          %p499 = pneg %p263
        $region50: #{discriminator_forward.1} parent=11 // pred_check_branch
          %501 = sbr.rel (%p499) target = $region52
        $region51: #{discriminator_forward.1} parent=11 // pred_region
          _
        $region52: #{discriminator_forward.1} parent=11 // pred_fallthru
          _
        // Predicated region
        $region53: #{discriminator_forward.1} parent=11 // pred_check
          %p502 = pneg %p284
        $region54: #{discriminator_forward.1} parent=11 // pred_check_branch
          %504 = sbr.rel (%p502) target = $region56
        $region55: #{discriminator_forward.1} parent=11 // pred_region
          _
        $region56: #{discriminator_forward.1} parent=11 // pred_fallthru
          _
        // Predicated region
        $region57: #{discriminator_forward.1} parent=11 // pred_check
          %p505 = pneg %p305
        $region58: #{discriminator_forward.1} parent=11 // pred_check_branch
          %507 = sbr.rel (%p505) target = $region60
        $region59: #{discriminator_forward.1} parent=11 // pred_region
          _
        $region60: #{discriminator_forward.1} parent=11 // pred_fallthru
          _
        // Predicated region
        $region61: #{discriminator_forward.1} parent=11 // pred_check
          %p508 = pneg %p326
        $region62: #{discriminator_forward.1} parent=11 // pred_check_branch
          %510 = sbr.rel (%p508) target = $region64
        $region63: #{discriminator_forward.1} parent=11 // pred_region
          _
        $region64: #{discriminator_forward.1} parent=11 // pred_fallthru
          _
        // Predicated region
        $region65: #{discriminator_forward.1} parent=11 // pred_check
          %p511 = pneg %p347
        $region66: #{discriminator_forward.1} parent=11 // pred_check_branch
          %513 = sbr.rel (%p511) target = $region68
        $region67: #{discriminator_forward.1} parent=11 // pred_region
          _
        $region68: #{discriminator_forward.1} parent=11 // pred_fallthru
          _
        // Predicated region
        $region69: #{discriminator_forward.1} parent=11 // pred_check
          %p514 = pneg %p368
        $region70: #{discriminator_forward.1} parent=11 // pred_check_branch
          %516 = sbr.rel (%p514) target = $region72
        $region71: #{discriminator_forward.1} parent=11 // pred_region
          _
        $region72: #{discriminator_forward.1} parent=11 // pred_fallthru
          _
        // Predicated region
        $region73: #{discriminator_forward.1} parent=11 // pred_check
          %p517 = pneg %p389
        $region74: #{discriminator_forward.1} parent=11 // pred_check_branch
          %519 = sbr.rel (%p517) target = $region76
        $region75: #{discriminator_forward.1} parent=11 // pred_region
          _
        $region76: #{discriminator_forward.1} parent=11 // pred_fallthru
          _
        // Predicated region
        $region77: #{discriminator_forward.1} parent=11 // pred_check
          %p520 = pneg %p410
        $region78: #{discriminator_forward.1} parent=11 // pred_check_branch
          %522 = sbr.rel (%p520) target = $region80
        $region79: #{discriminator_forward.1} parent=11 // pred_region
          _
        $region80: #{discriminator_forward.1} parent=11 // pred_fallthru
          _
        // Predicated region
        $region81: #{discriminator_forward.1} parent=11 // pred_check
          %p523 = pneg %p431
        $region82: #{discriminator_forward.1} parent=11 // pred_check_branch
          %525 = sbr.rel (%p523) target = $region84
        $region83: #{discriminator_forward.1} parent=11 // pred_region
          _
        $region84: #{discriminator_forward.1} parent=11 // pred_fallthru
          _
      $region12: #{discriminator_forward.1} parent=5 // pred_fallthru
        _
      %p526 = scmp.lt.s32.totalorder %s27, 2
      // Predicated region
      $region85: #{discriminator_forward.1} parent=5 // pred_check
        %p527 = pneg %p526
      $region86: #{discriminator_forward.1} parent=5 // pred_check_branch
        %529 = sbr.rel (%p527) target = $region88
      $region87: #{discriminator_forward.1} parent=5 // pred_region
        // Predicated region
        $region89: #{discriminator_forward.1} parent=87 // pred_check
          %p530 = pneg %p47
        $region90: #{discriminator_forward.1} parent=87 // pred_check_branch
          %532 = sbr.rel (%p530) target = $region92
        $region91: #{discriminator_forward.1} parent=87 // pred_region
          %s533 = sand.u32 %s37, 1
          %s534 = sand.u32 %s37, 1
          %s535 = smul.addr %s534, 256
          %s536 = scalar_lea.vmem [#allocation3], %s535
          %s537 = smul.u32 2, %s27
          %s538 = smul.addr %s537, 8
          %s539 = scalar_lea.vmem %s0, %s538
          // Predicated region
          $region93: #{discriminator_forward.1} parent=91 // pred_check
            _
          $region94: #{discriminator_forward.1} parent=91 // pred_check_branch
            %541 = sbr.rel (0) target = $region96
          $region95: #{discriminator_forward.1} parent=91 // pred_region
            // Predicated region
            $region97: #{discriminator_forward.1} parent=95 // pred_check
              _
            $region98: #{discriminator_forward.1} parent=95 // pred_check_branch
              %543 = sbr.rel (0) target = $region100
            $region99: #{discriminator_forward.1} parent=95 // pred_region
              loop: start=0, step=1, limit=1
              $region101: #{discriminator_forward.1} parent=99 // loop_pre_header
                _
              $region102: #{discriminator_forward.1} parent=99 // loop_header
                %s545 = sphi 0, %s549
                %p546 = scmp.ge.s32.totalorder %s545, 1
                %s550 = sphi %s539, %s539
                %s551 = sphi %s536, %s536
              $region103: #{discriminator_forward.1} parent=99 // loop_header_branch
                %548 = sbr.rel (%p546) target = $region107
              $region104: #{discriminator_forward.1} parent=99 // loop_body
                %v552 = vld [vmem:[%s550] sm:$0xff]
                %553 = vst [vmem:[%s551] sm:$0xff] %v552
                %v554 = vld [vmem:[%s550 + $0x8] sm:$0xff]
                %555 = vst [vmem:[%s551 + $0x8] sm:$0xff] %v554
                %v556 = vld [vmem:[%s550 + $0x20] sm:$0xff]
                %557 = vst [vmem:[%s551 + $0x10] sm:$0xff] %v556
                %v558 = vld [vmem:[%s550 + $0x28] sm:$0xff]
                %559 = vst [vmem:[%s551 + $0x18] sm:$0xff] %v558
                %v560 = vld [vmem:[%s550 + $0x40] sm:$0xff]
                %561 = vst [vmem:[%s551 + $0x20] sm:$0xff] %v560
                %v562 = vld [vmem:[%s550 + $0x48] sm:$0xff]
                %563 = vst [vmem:[%s551 + $0x28] sm:$0xff] %v562
                %v564 = vld [vmem:[%s550 + $0x60] sm:$0xff]
                %565 = vst [vmem:[%s551 + $0x30] sm:$0xff] %v564
                %v566 = vld [vmem:[%s550 + $0x68] sm:$0xff]
                %567 = vst [vmem:[%s551 + $0x38] sm:$0xff] %v566
                %v568 = vld [vmem:[%s550 + $0x80] sm:$0xff]
                %569 = vst [vmem:[%s551 + $0x40] sm:$0xff] %v568
                %v570 = vld [vmem:[%s550 + $0x88] sm:$0xff]
                %571 = vst [vmem:[%s551 + $0x48] sm:$0xff] %v570
                %v572 = vld [vmem:[%s550 + $0xa0] sm:$0xff]
                %573 = vst [vmem:[%s551 + $0x50] sm:$0xff] %v572
                %v574 = vld [vmem:[%s550 + $0xa8] sm:$0xff]
                %575 = vst [vmem:[%s551 + $0x58] sm:$0xff] %v574
                %v576 = vld [vmem:[%s550 + $0xc0] sm:$0xff]
                %577 = vst [vmem:[%s551 + $0x60] sm:$0xff] %v576
                %v578 = vld [vmem:[%s550 + $0xc8] sm:$0xff]
                %579 = vst [vmem:[%s551 + $0x68] sm:$0xff] %v578
                %v580 = vld [vmem:[%s550 + $0xe0] sm:$0xff]
                %581 = vst [vmem:[%s551 + $0x70] sm:$0xff] %v580
                %v582 = vld [vmem:[%s550 + $0xe8] sm:$0xff]
                %583 = vst [vmem:[%s551 + $0x78] sm:$0xff] %v582
                %v584 = vld [vmem:[%s550 + $0x100] sm:$0xff]
                %585 = vst [vmem:[%s551 + $0x80] sm:$0xff] %v584
                %v586 = vld [vmem:[%s550 + $0x108] sm:$0xff]
                %587 = vst [vmem:[%s551 + $0x88] sm:$0xff] %v586
                %v588 = vld [vmem:[%s550 + $0x120] sm:$0xff]
                %589 = vst [vmem:[%s551 + $0x90] sm:$0xff] %v588
                %v590 = vld [vmem:[%s550 + $0x128] sm:$0xff]
                %591 = vst [vmem:[%s551 + $0x98] sm:$0xff] %v590
                %v592 = vld [vmem:[%s550 + $0x140] sm:$0xff]
                %593 = vst [vmem:[%s551 + $0xa0] sm:$0xff] %v592
                %v594 = vld [vmem:[%s550 + $0x148] sm:$0xff]
                %595 = vst [vmem:[%s551 + $0xa8] sm:$0xff] %v594
                %v596 = vld [vmem:[%s550 + $0x160] sm:$0xff]
                %597 = vst [vmem:[%s551 + $0xb0] sm:$0xff] %v596
                %v598 = vld [vmem:[%s550 + $0x168] sm:$0xff]
                %599 = vst [vmem:[%s551 + $0xb8] sm:$0xff] %v598
                %v600 = vld [vmem:[%s550 + $0x180] sm:$0xff]
                %601 = vst [vmem:[%s551 + $0xc0] sm:$0xff] %v600
                %v602 = vld [vmem:[%s550 + $0x188] sm:$0xff]
                %603 = vst [vmem:[%s551 + $0xc8] sm:$0xff] %v602
                %v604 = vld [vmem:[%s550 + $0x1a0] sm:$0xff]
                %605 = vst [vmem:[%s551 + $0xd0] sm:$0xff] %v604
                %v606 = vld [vmem:[%s550 + $0x1a8] sm:$0xff]
                %607 = vst [vmem:[%s551 + $0xd8] sm:$0xff] %v606
                %v608 = vld [vmem:[%s550 + $0x1c0] sm:$0xff]
                %609 = vst [vmem:[%s551 + $0xe0] sm:$0xff] %v608
                %v610 = vld [vmem:[%s550 + $0x1c8] sm:$0xff]
                %611 = vst [vmem:[%s551 + $0xe8] sm:$0xff] %v610
                %v612 = vld [vmem:[%s550 + $0x1e0] sm:$0xff]
                %613 = vst [vmem:[%s551 + $0xf0] sm:$0xff] %v612
                %v614 = vld [vmem:[%s550 + $0x1e8] sm:$0xff]
                %615 = vst [vmem:[%s551 + $0xf8] sm:$0xff] %v614
              $region105: #{discriminator_forward.1} parent=99 // loop_footer
                %s549 = sadd.s32 1, %s545
              $region106: #{discriminator_forward.1} parent=99 // loop_footer_branch
                %544 = sbr.rel target = $region102
              $region107: #{discriminator_forward.1} parent=99 // loop_exit
                _
            $region100: #{discriminator_forward.1} parent=95 // pred_fallthru
              _
            // Predicated region
            $region108: #{discriminator_forward.1} parent=95 // pred_check
              _
            $region109: #{discriminator_forward.1} parent=95 // pred_check_branch
              %617 = sbr.rel target = $region111
            $region110: #{discriminator_forward.1} parent=95 // pred_region
              _
            $region111: #{discriminator_forward.1} parent=95 // pred_fallthru
              _
          $region96: #{discriminator_forward.1} parent=91 // pred_fallthru
            _
          %618 = vnop
        $region92: #{discriminator_forward.1} parent=87 // pred_fallthru
          _
      $region88: #{discriminator_forward.1} parent=5 // pred_fallthru
        _
      %p619 = scmp.le.s32.totalorder 1, %s27
      %p620 = scmp.lt.s32.totalorder %s27, 3
      %p621 = pnand %p619, %p620
      %p622 = pneg %p621
      // Predicated region
      $region112: #{discriminator_forward.1} parent=5 // pred_check
        _
      $region113: #{discriminator_forward.1} parent=5 // pred_check_branch
        %624 = sbr.rel (%p621) target = $region115
      $region114: #{discriminator_forward.1} parent=5 // pred_region
        %s625 = ssub.s32 %s27, 1
        %s626 = sand.u32 %s40, 1
        %s627 = sand.u32 %s40, 1
        %s628 = smul.addr %s627, 256
        %s629 = scalar_lea.vmem [#allocation3], %s628
        // Predicated region
        $region116: #{discriminator_forward.1} parent=114 // pred_check
          %p630 = pneg %p53
        $region117: #{discriminator_forward.1} parent=114 // pred_check_branch
          %632 = sbr.rel (%p630) target = $region119
        $region118: #{discriminator_forward.1} parent=114 // pred_region
          _
        $region119: #{discriminator_forward.1} parent=114 // pred_fallthru
          _
        %s633 = sand.u32 %s40, 1
        %s634 = sand.u32 %s40, 1
        %s635 = smul.addr %s634, 256
        %s636 = scalar_lea.vmem [#allocation3], %s635
        %p637 = pneg %p53
        %p638 = pneg %p50
        %p639 = pneg %p74
        %p640 = pneg %p71
        %p641 = pneg %p95
        %p642 = pneg %p92
        %p643 = pneg %p116
        %p644 = pneg %p113
        %p645 = pneg %p137
        %p646 = pneg %p134
        %p647 = pneg %p158
        %p648 = pneg %p155
        %p649 = pneg %p179
        %p650 = pneg %p176
        %p651 = pneg %p200
        %p652 = pneg %p197
        %p653 = pneg %p221
        %p654 = pneg %p218
        %p655 = pneg %p242
        %p656 = pneg %p239
        %p657 = pneg %p263
        %p658 = pneg %p260
        %p659 = pneg %p284
        %p660 = pneg %p281
        %p661 = pneg %p305
        %p662 = pneg %p302
        %p663 = pneg %p326
        %p664 = pneg %p323
        %p665 = pneg %p347
        %p666 = pneg %p344
        %p667 = pneg %p368
        %p668 = pneg %p365
        %p669 = pneg %p389
        %p670 = pneg %p386
        %p671 = pneg %p410
        %p672 = pneg %p407
        %p673 = pneg %p431
        %p674 = pneg %p428
        %p675 = pneg %p457
        %p676 = pneg %p454
        %p677 = scmp.lt.s32.totalorder %s32, 1
        %s678 = scalar_select %p677, %s32, 1
        %s679 = scalar_lea.vmem %s19, %s678
        %s680 = smul.u32 2, %s32
        %p681 = scmp.lt.s32.totalorder %s32, 1
        %s682 = scalar_select %p681, %s32, 1
        %s683 = scalar_lea.vmem %s19, %s682
        %v684 = vld [vmem:[%s629] sm:$0xff]
        %v685 = vld [vmem:[%s629 + $0x8] sm:$0xff]
        %v686 = vld [vmem:[%s629 + $0x10] sm:$0xff]
        %v687 = vld [vmem:[%s629 + $0x18] sm:$0xff]
        %v688 = vld [vmem:[%s629 + $0x20] sm:$0xff]
        %v689 = vld [vmem:[%s629 + $0x28] sm:$0xff]
        %v690 = vld [vmem:[%s629 + $0x30] sm:$0xff]
        %v691 = vld [vmem:[%s629 + $0x38] sm:$0xff]
        %v692 = vld [vmem:[%s629 + $0x40] sm:$0xff]
        %v693 = vld [vmem:[%s629 + $0x48] sm:$0xff]
        %v694 = vld [vmem:[%s629 + $0x50] sm:$0xff]
        %v695 = vld [vmem:[%s629 + $0x58] sm:$0xff]
        %v696 = vld [vmem:[%s629 + $0x60] sm:$0xff]
        %v697 = vld [vmem:[%s629 + $0x68] sm:$0xff]
        %v698 = vld [vmem:[%s629 + $0x70] sm:$0xff]
        %v699 = vld [vmem:[%s629 + $0x78] sm:$0xff]
        %v700 = vld [vmem:[%s629 + $0x80] sm:$0xff]
        %v701 = vld [vmem:[%s629 + $0x88] sm:$0xff]
        %v702 = vld [vmem:[%s629 + $0x90] sm:$0xff]
        %v703 = vld [vmem:[%s629 + $0x98] sm:$0xff]
        %v704 = vld [vmem:[%s629 + $0xa0] sm:$0xff]
        %v705 = vld [vmem:[%s629 + $0xa8] sm:$0xff]
        %v706 = vld [vmem:[%s629 + $0xb0] sm:$0xff]
        %v707 = vld [vmem:[%s629 + $0xb8] sm:$0xff]
        %v708 = vld [vmem:[%s629 + $0xc0] sm:$0xff]
        %v709 = vld [vmem:[%s629 + $0xc8] sm:$0xff]
        %v710 = vld [vmem:[%s629 + $0xd0] sm:$0xff]
        %v711 = vld [vmem:[%s629 + $0xd8] sm:$0xff]
        %v712 = vld [vmem:[%s629 + $0xe0] sm:$0xff]
        %v713 = vld [vmem:[%s629 + $0xe8] sm:$0xff]
        %v714 = vld [vmem:[%s629 + $0xf0] sm:$0xff]
        %v715 = vld [vmem:[%s629 + $0xf8] sm:$0xff]
        %v716 = vld [vmem:[%s6] sm:$0xff]
        %v717 = vld [vmem:[%s6 + $0x8] sm:$0xff]
        %v718 = vld [vmem:[%s6 + $0x10] sm:$0xff]
        %v719 = vld [vmem:[%s6 + $0x18] sm:$0xff]
        %v720 = vld [vmem:[%s6 + $0x20] sm:$0xff]
        %v721 = vld [vmem:[%s6 + $0x28] sm:$0xff]
        %v722 = vld [vmem:[%s6 + $0x30] sm:$0xff]
        %v723 = vld [vmem:[%s6 + $0x38] sm:$0xff]
        %v724 = vld [vmem:[%s6 + $0x40] sm:$0xff]
        %v725 = vld [vmem:[%s6 + $0x48] sm:$0xff]
        %v726 = vld [vmem:[%s6 + $0x50] sm:$0xff]
        %v727 = vld [vmem:[%s6 + $0x58] sm:$0xff]
        %v728 = vld [vmem:[%s6 + $0x60] sm:$0xff]
        %v729 = vld [vmem:[%s6 + $0x68] sm:$0xff]
        %v730 = vld [vmem:[%s6 + $0x70] sm:$0xff]
        %v731 = vld [vmem:[%s6 + $0x78] sm:$0xff]
        %v732 = vld [vmem:[%s6 + $0x80] sm:$0xff]
        %v733 = vld [vmem:[%s6 + $0x88] sm:$0xff]
        %v734 = vld [vmem:[%s6 + $0x90] sm:$0xff]
        %v735 = vld [vmem:[%s6 + $0x98] sm:$0xff]
        %v736 = vld [vmem:[%s6 + $0xa0] sm:$0xff]
        %v737 = vld [vmem:[%s6 + $0xa8] sm:$0xff]
        %v738 = vld [vmem:[%s6 + $0xb0] sm:$0xff]
        %v739 = vld [vmem:[%s6 + $0xb8] sm:$0xff]
        %v740 = vld [vmem:[%s6 + $0xc0] sm:$0xff]
        %v741 = vld [vmem:[%s6 + $0xc8] sm:$0xff]
        %v742 = vld [vmem:[%s6 + $0xd0] sm:$0xff]
        %v743 = vld [vmem:[%s6 + $0xd8] sm:$0xff]
        %v744 = vld [vmem:[%s6 + $0xe0] sm:$0xff]
        %v745 = vld [vmem:[%s6 + $0xe8] sm:$0xff]
        %v746 = vld [vmem:[%s6 + $0xf0] sm:$0xff]
        %v747 = vld [vmem:[%s6 + $0xf8] sm:$0xff]
        %748 = vmatprep.subr.mxu0 0.0
        %749 = vmatpush1.msra.mxu0 %v731
        %750 = vmatprep.subr.mxu0 0.0
        %751 = vmatpush1.msra.mxu0 %v730
        %752 = vmatprep.subr.mxu0 0.0
        %753 = vmatpush1.msra.mxu0 %v729
        %754 = vmatprep.subr.mxu0 0.0
        %755 = vmatpush1.msra.mxu0 %v728
        %756 = vmatprep.subr.mxu0 0.0
        %757 = vmatpush1.msra.mxu0 %v727
        %758 = vmatprep.subr.mxu0 0.0
        %759 = vmatpush1.msra.mxu0 %v726
        %760 = vmatprep.subr.mxu0 0.0
        %761 = vmatpush1.msra.mxu0 %v725
        %762 = vmatprep.subr.mxu0 0.0
        %763 = vmatpush1.msra.mxu0 %v724
        %764 = vmatprep.subr.mxu0 0.0
        %765 = vmatpush1.msra.mxu0 %v723
        %766 = vmatprep.subr.mxu0 0.0
        %767 = vmatpush1.msra.mxu0 %v722
        %768 = vmatprep.subr.mxu0 0.0
        %769 = vmatpush1.msra.mxu0 %v721
        %770 = vmatprep.subr.mxu0 0.0
        %771 = vmatpush1.msra.mxu0 %v720
        %772 = vmatprep.subr.mxu0 0.0
        %773 = vmatpush1.msra.mxu0 %v719
        %774 = vmatprep.subr.mxu0 0.0
        %775 = vmatpush1.msra.mxu0 %v718
        %776 = vmatprep.subr.mxu0 0.0
        %777 = vmatpush1.msra.mxu0 %v717
        %778 = vmatprep.subr.mxu0 0.0
        %779 = vmatpush1.msra.mxu0 %v716
        %780 = vmatprep.subr.mxu0 0.0
        %781 = vmatpush2.msra.mxu0 %v747
        %782 = vmatprep.subr.mxu0 0.0
        %783 = vmatpush2.msra.mxu0 %v746
        %784 = vmatprep.subr.mxu0 0.0
        %785 = vmatpush2.msra.mxu0 %v745
        %786 = vmatprep.subr.mxu0 0.0
        %787 = vmatpush2.msra.mxu0 %v744
        %788 = vmatprep.subr.mxu0 0.0
        %789 = vmatpush2.msra.mxu0 %v743
        %790 = vmatprep.subr.mxu0 0.0
        %791 = vmatpush2.msra.mxu0 %v742
        %792 = vmatprep.subr.mxu0 0.0
        %793 = vmatpush2.msra.mxu0 %v741
        %794 = vmatprep.subr.mxu0 0.0
        %795 = vmatpush2.msra.mxu0 %v740
        %796 = vmatprep.subr.mxu0 0.0
        %797 = vmatpush2.msra.mxu0 %v739
        %798 = vmatprep.subr.mxu0 0.0
        %799 = vmatpush2.msra.mxu0 %v738
        %800 = vmatprep.subr.mxu0 0.0
        %801 = vmatpush2.msra.mxu0 %v737
        %802 = vmatprep.subr.mxu0 0.0
        %803 = vmatpush2.msra.mxu0 %v736
        %804 = vmatprep.subr.mxu0 0.0
        %805 = vmatpush2.msra.mxu0 %v735
        %806 = vmatprep.subr.mxu0 0.0
        %807 = vmatpush2.msra.mxu0 %v734
        %808 = vmatprep.subr.mxu0 0.0
        %809 = vmatpush2.msra.mxu0 %v733
        %810 = vmatprep.subr.mxu0 0.0
        %811 = vmatpush2.msra.mxu0 %v732
        %812 = vmatprep.mubr.f32.mxu0 %v685
        %813 = vmatmul.mubr.f32.gmra.mxu0 %v684
        %v814 = vpop.f32.mrf.mxu0
        %v815 = vadd.f32 0.0, %v814
        %v816 = vpop.f32.mrf.mxu0
        %817 = vmatprep.mubr.f32.mxu0 %v687
        %818 = vmatmul.mubr.f32.gmra.mxu0 %v686
        %v819 = vpop.f32.mrf.mxu0
        %v820 = vadd.f32 0.0, %v819
        %v821 = vpop.f32.mrf.mxu0
        %822 = vmatprep.mubr.f32.mxu0 %v689
        %823 = vmatmul.mubr.f32.gmra.mxu0 %v688
        %v824 = vpop.f32.mrf.mxu0
        %v825 = vadd.f32 0.0, %v824
        %v826 = vpop.f32.mrf.mxu0
        %827 = vmatprep.mubr.f32.mxu0 %v691
        %828 = vmatmul.mubr.f32.gmra.mxu0 %v690
        %v829 = vpop.f32.mrf.mxu0
        %v830 = vadd.f32 0.0, %v829
        %v831 = vpop.f32.mrf.mxu0
        %832 = vmatprep.mubr.f32.mxu0 %v693
        %833 = vmatmul.mubr.f32.gmra.mxu0 %v692
        %v834 = vpop.f32.mrf.mxu0
        %v835 = vadd.f32 0.0, %v834
        %v836 = vpop.f32.mrf.mxu0
        %837 = vmatprep.mubr.f32.mxu0 %v695
        %838 = vmatmul.mubr.f32.gmra.mxu0 %v694
        %v839 = vpop.f32.mrf.mxu0
        %v840 = vadd.f32 0.0, %v839
        %v841 = vpop.f32.mrf.mxu0
        %842 = vmatprep.mubr.f32.mxu0 %v697
        %843 = vmatmul.mubr.f32.gmra.mxu0 %v696
        %v844 = vpop.f32.mrf.mxu0
        %v845 = vadd.f32 0.0, %v844
        %v846 = vpop.f32.mrf.mxu0
        %847 = vmatprep.mubr.f32.mxu0 %v699
        %848 = vmatmul.mubr.f32.gmra.mxu0 %v698
        %v849 = vpop.f32.mrf.mxu0
        %v850 = vadd.f32 0.0, %v849
        %v851 = vpop.f32.mrf.mxu0
        %852 = vmatprep.mubr.f32.mxu0 %v701
        %853 = vmatmul.mubr.f32.gmra.mxu0 %v700
        %v854 = vpop.f32.mrf.mxu0
        %v855 = vadd.f32 0.0, %v854
        %v856 = vpop.f32.mrf.mxu0
        %857 = vmatprep.mubr.f32.mxu0 %v703
        %858 = vmatmul.mubr.f32.gmra.mxu0 %v702
        %v859 = vpop.f32.mrf.mxu0
        %v860 = vadd.f32 0.0, %v859
        %v861 = vpop.f32.mrf.mxu0
        %862 = vmatprep.mubr.f32.mxu0 %v705
        %863 = vmatmul.mubr.f32.gmra.mxu0 %v704
        %v864 = vpop.f32.mrf.mxu0
        %v865 = vadd.f32 0.0, %v864
        %v866 = vpop.f32.mrf.mxu0
        %867 = vmatprep.mubr.f32.mxu0 %v707
        %868 = vmatmul.mubr.f32.gmra.mxu0 %v706
        %v869 = vpop.f32.mrf.mxu0
        %v870 = vadd.f32 0.0, %v869
        %v871 = vpop.f32.mrf.mxu0
        %872 = vmatprep.mubr.f32.mxu0 %v709
        %873 = vmatmul.mubr.f32.gmra.mxu0 %v708
        %v874 = vpop.f32.mrf.mxu0
        %v875 = vadd.f32 0.0, %v874
        %v876 = vpop.f32.mrf.mxu0
        %877 = vmatprep.mubr.f32.mxu0 %v711
        %878 = vmatmul.mubr.f32.gmra.mxu0 %v710
        %v879 = vpop.f32.mrf.mxu0
        %v880 = vadd.f32 0.0, %v879
        %v881 = vpop.f32.mrf.mxu0
        %882 = vmatprep.mubr.f32.mxu0 %v713
        %883 = vmatmul.mubr.f32.gmra.mxu0 %v712
        %v884 = vpop.f32.mrf.mxu0
        %v885 = vadd.f32 0.0, %v884
        %v886 = vpop.f32.mrf.mxu0
        %887 = vmatprep.mubr.f32.mxu0 %v715
        %888 = vmatmul.mubr.f32.gmra.mxu0 %v714
        %v889 = vpop.f32.mrf.mxu0
        %v890 = vadd.f32 0.0, %v889
        %v891 = vpop.f32.mrf.mxu0
        %892 = vdwg.mxu0
        %v893 = vld [vmem:[%s1] sm:$0xff]
        %v894 = vld [vmem:[%s1 + $0x20] sm:$0xff]
        %v895 = vld [vmem:[%s1 + $0x40] sm:$0xff]
        %v896 = vld [vmem:[%s1 + $0x60] sm:$0xff]
        %v897 = vld [vmem:[%s1 + $0x80] sm:$0xff]
        %v898 = vld [vmem:[%s1 + $0xa0] sm:$0xff]
        %v899 = vld [vmem:[%s1 + $0xc0] sm:$0xff]
        %v900 = vld [vmem:[%s1 + $0xe0] sm:$0xff]
        %v901 = vld [vmem:[%s1 + $0x100] sm:$0xff]
        %v902 = vld [vmem:[%s1 + $0x120] sm:$0xff]
        %v903 = vld [vmem:[%s1 + $0x140] sm:$0xff]
        %v904 = vld [vmem:[%s1 + $0x160] sm:$0xff]
        %v905 = vld [vmem:[%s1 + $0x180] sm:$0xff]
        %v906 = vld [vmem:[%s1 + $0x1a0] sm:$0xff]
        %v907 = vld [vmem:[%s1 + $0x1c0] sm:$0xff]
        %v908 = vld [vmem:[%s1 + $0x1e0] sm:$0xff]
        %v909 = vld [vmem:[%s6 + $0x100] sm:$0xff]
        %v910 = vld [vmem:[%s6 + $0x108] sm:$0xff]
        %v911 = vld [vmem:[%s6 + $0x110] sm:$0xff]
        %v912 = vld [vmem:[%s6 + $0x118] sm:$0xff]
        %v913 = vld [vmem:[%s6 + $0x120] sm:$0xff]
        %v914 = vld [vmem:[%s6 + $0x128] sm:$0xff]
        %v915 = vld [vmem:[%s6 + $0x130] sm:$0xff]
        %v916 = vld [vmem:[%s6 + $0x138] sm:$0xff]
        %v917 = vld [vmem:[%s6 + $0x140] sm:$0xff]
        %v918 = vld [vmem:[%s6 + $0x148] sm:$0xff]
        %v919 = vld [vmem:[%s6 + $0x150] sm:$0xff]
        %v920 = vld [vmem:[%s6 + $0x158] sm:$0xff]
        %v921 = vld [vmem:[%s6 + $0x160] sm:$0xff]
        %v922 = vld [vmem:[%s6 + $0x168] sm:$0xff]
        %v923 = vld [vmem:[%s6 + $0x170] sm:$0xff]
        %v924 = vld [vmem:[%s6 + $0x178] sm:$0xff]
        %v925 = vld [vmem:[%s6 + $0x180] sm:$0xff]
        %v926 = vld [vmem:[%s6 + $0x188] sm:$0xff]
        %v927 = vld [vmem:[%s6 + $0x190] sm:$0xff]
        %v928 = vld [vmem:[%s6 + $0x198] sm:$0xff]
        %v929 = vld [vmem:[%s6 + $0x1a0] sm:$0xff]
        %v930 = vld [vmem:[%s6 + $0x1a8] sm:$0xff]
        %v931 = vld [vmem:[%s6 + $0x1b0] sm:$0xff]
        %v932 = vld [vmem:[%s6 + $0x1b8] sm:$0xff]
        %v933 = vld [vmem:[%s6 + $0x1c0] sm:$0xff]
        %v934 = vld [vmem:[%s6 + $0x1c8] sm:$0xff]
        %v935 = vld [vmem:[%s6 + $0x1d0] sm:$0xff]
        %v936 = vld [vmem:[%s6 + $0x1d8] sm:$0xff]
        %v937 = vld [vmem:[%s6 + $0x1e0] sm:$0xff]
        %v938 = vld [vmem:[%s6 + $0x1e8] sm:$0xff]
        %v939 = vld [vmem:[%s6 + $0x1f0] sm:$0xff]
        %v940 = vld [vmem:[%s6 + $0x1f8] sm:$0xff]
        %941 = vmatprep.subr.mxu0 0.0
        %942 = vmatpush1.msra.mxu0 %v924
        %943 = vmatprep.subr.mxu0 0.0
        %944 = vmatpush1.msra.mxu0 %v923
        %945 = vmatprep.subr.mxu0 0.0
        %946 = vmatpush1.msra.mxu0 %v922
        %947 = vmatprep.subr.mxu0 0.0
        %948 = vmatpush1.msra.mxu0 %v921
        %949 = vmatprep.subr.mxu0 0.0
        %950 = vmatpush1.msra.mxu0 %v920
        %951 = vmatprep.subr.mxu0 0.0
        %952 = vmatpush1.msra.mxu0 %v919
        %953 = vmatprep.subr.mxu0 0.0
        %954 = vmatpush1.msra.mxu0 %v918
        %955 = vmatprep.subr.mxu0 0.0
        %956 = vmatpush1.msra.mxu0 %v917
        %957 = vmatprep.subr.mxu0 0.0
        %958 = vmatpush1.msra.mxu0 %v916
        %959 = vmatprep.subr.mxu0 0.0
        %960 = vmatpush1.msra.mxu0 %v915
        %961 = vmatprep.subr.mxu0 0.0
        %962 = vmatpush1.msra.mxu0 %v914
        %963 = vmatprep.subr.mxu0 0.0
        %964 = vmatpush1.msra.mxu0 %v913
        %965 = vmatprep.subr.mxu0 0.0
        %966 = vmatpush1.msra.mxu0 %v912
        %967 = vmatprep.subr.mxu0 0.0
        %968 = vmatpush1.msra.mxu0 %v911
        %969 = vmatprep.subr.mxu0 0.0
        %970 = vmatpush1.msra.mxu0 %v910
        %971 = vmatprep.subr.mxu0 0.0
        %972 = vmatpush1.msra.mxu0 %v909
        %973 = vmatprep.subr.mxu0 0.0
        %974 = vmatpush2.msra.mxu0 %v940
        %975 = vmatprep.subr.mxu0 0.0
        %976 = vmatpush2.msra.mxu0 %v939
        %977 = vmatprep.subr.mxu0 0.0
        %978 = vmatpush2.msra.mxu0 %v938
        %979 = vmatprep.subr.mxu0 0.0
        %980 = vmatpush2.msra.mxu0 %v937
        %981 = vmatprep.subr.mxu0 0.0
        %982 = vmatpush2.msra.mxu0 %v936
        %983 = vmatprep.subr.mxu0 0.0
        %984 = vmatpush2.msra.mxu0 %v935
        %985 = vmatprep.subr.mxu0 0.0
        %986 = vmatpush2.msra.mxu0 %v934
        %987 = vmatprep.subr.mxu0 0.0
        %988 = vmatpush2.msra.mxu0 %v933
        %989 = vmatprep.subr.mxu0 0.0
        %990 = vmatpush2.msra.mxu0 %v932
        %991 = vmatprep.subr.mxu0 0.0
        %992 = vmatpush2.msra.mxu0 %v931
        %993 = vmatprep.subr.mxu0 0.0
        %994 = vmatpush2.msra.mxu0 %v930
        %995 = vmatprep.subr.mxu0 0.0
        %996 = vmatpush2.msra.mxu0 %v929
        %997 = vmatprep.subr.mxu0 0.0
        %998 = vmatpush2.msra.mxu0 %v928
        %999 = vmatprep.subr.mxu0 0.0
        %1000 = vmatpush2.msra.mxu0 %v927
        %1001 = vmatprep.subr.mxu0 0.0
        %1002 = vmatpush2.msra.mxu0 %v926
        %1003 = vmatprep.subr.mxu0 0.0
        %1004 = vmatpush2.msra.mxu0 %v925
        %1005 = vmatprep.mubr.f32.mxu0 %v685
        %1006 = vmatmul.mubr.f32.gmra.mxu0 %v684
        %v1007 = vpop.f32.mrf.mxu0
        %v1008 = vadd.f32 0.0, %v1007
        %v1009 = vpop.f32.mrf.mxu0
        %1010 = vmatprep.mubr.f32.mxu0 %v687
        %1011 = vmatmul.mubr.f32.gmra.mxu0 %v686
        %v1012 = vpop.f32.mrf.mxu0
        %v1013 = vadd.f32 0.0, %v1012
        %v1014 = vpop.f32.mrf.mxu0
        %1015 = vmatprep.mubr.f32.mxu0 %v689
        %1016 = vmatmul.mubr.f32.gmra.mxu0 %v688
        %v1017 = vpop.f32.mrf.mxu0
        %v1018 = vadd.f32 0.0, %v1017
        %v1019 = vpop.f32.mrf.mxu0
        %1020 = vmatprep.mubr.f32.mxu0 %v691
        %1021 = vmatmul.mubr.f32.gmra.mxu0 %v690
        %v1022 = vpop.f32.mrf.mxu0
        %v1023 = vadd.f32 0.0, %v1022
        %v1024 = vpop.f32.mrf.mxu0
        %1025 = vmatprep.mubr.f32.mxu0 %v693
        %1026 = vmatmul.mubr.f32.gmra.mxu0 %v692
        %v1027 = vpop.f32.mrf.mxu0
        %v1028 = vadd.f32 0.0, %v1027
        %v1029 = vpop.f32.mrf.mxu0
        %1030 = vmatprep.mubr.f32.mxu0 %v695
        %1031 = vmatmul.mubr.f32.gmra.mxu0 %v694
        %v1032 = vpop.f32.mrf.mxu0
        %v1033 = vadd.f32 0.0, %v1032
        %v1034 = vpop.f32.mrf.mxu0
        %1035 = vmatprep.mubr.f32.mxu0 %v697
        %1036 = vmatmul.mubr.f32.gmra.mxu0 %v696
        %v1037 = vpop.f32.mrf.mxu0
        %v1038 = vadd.f32 0.0, %v1037
        %v1039 = vpop.f32.mrf.mxu0
        %1040 = vmatprep.mubr.f32.mxu0 %v699
        %1041 = vmatmul.mubr.f32.gmra.mxu0 %v698
        %v1042 = vpop.f32.mrf.mxu0
        %v1043 = vadd.f32 0.0, %v1042
        %v1044 = vpop.f32.mrf.mxu0
        %1045 = vmatprep.mubr.f32.mxu0 %v701
        %1046 = vmatmul.mubr.f32.gmra.mxu0 %v700
        %v1047 = vpop.f32.mrf.mxu0
        %v1048 = vadd.f32 0.0, %v1047
        %v1049 = vpop.f32.mrf.mxu0
        %1050 = vmatprep.mubr.f32.mxu0 %v703
        %1051 = vmatmul.mubr.f32.gmra.mxu0 %v702
        %v1052 = vpop.f32.mrf.mxu0
        %v1053 = vadd.f32 0.0, %v1052
        %v1054 = vpop.f32.mrf.mxu0
        %1055 = vmatprep.mubr.f32.mxu0 %v705
        %1056 = vmatmul.mubr.f32.gmra.mxu0 %v704
        %v1057 = vpop.f32.mrf.mxu0
        %v1058 = vadd.f32 0.0, %v1057
        %v1059 = vpop.f32.mrf.mxu0
        %1060 = vmatprep.mubr.f32.mxu0 %v707
        %1061 = vmatmul.mubr.f32.gmra.mxu0 %v706
        %v1062 = vpop.f32.mrf.mxu0
        %v1063 = vadd.f32 0.0, %v1062
        %v1064 = vpop.f32.mrf.mxu0
        %1065 = vmatprep.mubr.f32.mxu0 %v709
        %1066 = vmatmul.mubr.f32.gmra.mxu0 %v708
        %v1067 = vpop.f32.mrf.mxu0
        %v1068 = vadd.f32 0.0, %v1067
        %v1069 = vpop.f32.mrf.mxu0
        %1070 = vmatprep.mubr.f32.mxu0 %v711
        %1071 = vmatmul.mubr.f32.gmra.mxu0 %v710
        %v1072 = vpop.f32.mrf.mxu0
        %v1073 = vadd.f32 0.0, %v1072
        %v1074 = vpop.f32.mrf.mxu0
        %1075 = vmatprep.mubr.f32.mxu0 %v713
        %1076 = vmatmul.mubr.f32.gmra.mxu0 %v712
        %v1077 = vpop.f32.mrf.mxu0
        %v1078 = vadd.f32 0.0, %v1077
        %v1079 = vpop.f32.mrf.mxu0
        %1080 = vmatprep.mubr.f32.mxu0 %v715
        %1081 = vmatmul.mubr.f32.gmra.mxu0 %v714
        %v1082 = vpop.f32.mrf.mxu0
        %v1083 = vadd.f32 0.0, %v1082
        %v1084 = vpop.f32.mrf.mxu0
        %1085 = vdwg.mxu0
        %v1086 = vld [vmem:[%s1 + $0x8] sm:$0xff]
        %v1087 = vld [vmem:[%s1 + $0x28] sm:$0xff]
        %v1088 = vld [vmem:[%s1 + $0x48] sm:$0xff]
        %v1089 = vld [vmem:[%s1 + $0x68] sm:$0xff]
        %v1090 = vld [vmem:[%s1 + $0x88] sm:$0xff]
        %v1091 = vld [vmem:[%s1 + $0xa8] sm:$0xff]
        %v1092 = vld [vmem:[%s1 + $0xc8] sm:$0xff]
        %v1093 = vld [vmem:[%s1 + $0xe8] sm:$0xff]
        %v1094 = vld [vmem:[%s1 + $0x108] sm:$0xff]
        %v1095 = vld [vmem:[%s1 + $0x128] sm:$0xff]
        %v1096 = vld [vmem:[%s1 + $0x148] sm:$0xff]
        %v1097 = vld [vmem:[%s1 + $0x168] sm:$0xff]
        %v1098 = vld [vmem:[%s1 + $0x188] sm:$0xff]
        %v1099 = vld [vmem:[%s1 + $0x1a8] sm:$0xff]
        %v1100 = vld [vmem:[%s1 + $0x1c8] sm:$0xff]
        %v1101 = vld [vmem:[%s1 + $0x1e8] sm:$0xff]
        %1102 = vmatprep.subr.mxu0 0.0
        %1103 = vmatpush1.msra.mxu0 %v1083
        %1104 = vmatprep.subr.mxu0 0.0
        %1105 = vmatpush1.msra.mxu0 %v1078
        %1106 = vmatprep.subr.mxu0 0.0
        %1107 = vmatpush1.msra.mxu0 %v1073
        %1108 = vmatprep.subr.mxu0 0.0
        %1109 = vmatpush1.msra.mxu0 %v1068
        %1110 = vmatprep.subr.mxu0 0.0
        %1111 = vmatpush1.msra.mxu0 %v1063
        %1112 = vmatprep.subr.mxu0 0.0
        %1113 = vmatpush1.msra.mxu0 %v1058
        %1114 = vmatprep.subr.mxu0 0.0
        %1115 = vmatpush1.msra.mxu0 %v1053
        %1116 = vmatprep.subr.mxu0 0.0
        %1117 = vmatpush1.msra.mxu0 %v1048
        %1118 = vmatprep.subr.mxu0 0.0
        %1119 = vmatpush1.msra.mxu0 %v1043
        %1120 = vmatprep.subr.mxu0 0.0
        %1121 = vmatpush1.msra.mxu0 %v1038
        %1122 = vmatprep.subr.mxu0 0.0
        %1123 = vmatpush1.msra.mxu0 %v1033
        %1124 = vmatprep.subr.mxu0 0.0
        %1125 = vmatpush1.msra.mxu0 %v1028
        %1126 = vmatprep.subr.mxu0 0.0
        %1127 = vmatpush1.msra.mxu0 %v1023
        %1128 = vmatprep.subr.mxu0 0.0
        %1129 = vmatpush1.msra.mxu0 %v1018
        %1130 = vmatprep.subr.mxu0 0.0
        %1131 = vmatpush1.msra.mxu0 %v1013
        %1132 = vmatprep.subr.mxu0 0.0
        %1133 = vmatpush1.msra.mxu0 %v1008
        %1134 = vmatprep.subr.mxu0 0.0
        %1135 = vmatpush2.msra.mxu0 0.0
        %1136 = vmatprep.subr.mxu0 0.0
        %1137 = vmatpush2.msra.mxu0 0.0
        %1138 = vmatprep.subr.mxu0 0.0
        %1139 = vmatpush2.msra.mxu0 0.0
        %1140 = vmatprep.subr.mxu0 0.0
        %1141 = vmatpush2.msra.mxu0 0.0
        %1142 = vmatprep.subr.mxu0 0.0
        %1143 = vmatpush2.msra.mxu0 0.0
        %1144 = vmatprep.subr.mxu0 0.0
        %1145 = vmatpush2.msra.mxu0 0.0
        %1146 = vmatprep.subr.mxu0 0.0
        %1147 = vmatpush2.msra.mxu0 0.0
        %1148 = vmatprep.subr.mxu0 0.0
        %1149 = vmatpush2.msra.mxu0 0.0
        %1150 = vmatprep.subr.mxu0 0.0
        %1151 = vmatpush2.msra.mxu0 0.0
        %1152 = vmatprep.subr.mxu0 0.0
        %1153 = vmatpush2.msra.mxu0 0.0
        %1154 = vmatprep.subr.mxu0 0.0
        %1155 = vmatpush2.msra.mxu0 0.0
        %1156 = vmatprep.subr.mxu0 0.0
        %1157 = vmatpush2.msra.mxu0 0.0
        %1158 = vmatprep.subr.mxu0 0.0
        %1159 = vmatpush2.msra.mxu0 0.0
        %1160 = vmatprep.subr.mxu0 0.0
        %1161 = vmatpush2.msra.mxu0 0.0
        %1162 = vmatprep.subr.mxu0 0.0
        %1163 = vmatpush2.msra.mxu0 0.0
        %1164 = vmatprep.subr.mxu0 0.0
        %1165 = vmatpush2.msra.mxu0 0.0
        %1166 = vmatprep.mubr.f32.mxu0 0.0
        %1167 = vmatmul.mubr.f32.gmra.mxu0 %v1086
        %v1168 = vpop.f32.mrf.mxu0
        %v1169 = vadd.f32 0.0, %v1168
        %v1170 = vpop.f32.mrf.mxu0
        %1171 = vmatprep.mubr.f32.mxu0 0.0
        %1172 = vmatmul.mubr.f32.gmra.mxu0 %v1087
        %v1173 = vpop.f32.mrf.mxu0
        %v1174 = vadd.f32 0.0, %v1173
        %v1175 = vpop.f32.mrf.mxu0
        %1176 = vmatprep.mubr.f32.mxu0 0.0
        %1177 = vmatmul.mubr.f32.gmra.mxu0 %v1088
        %v1178 = vpop.f32.mrf.mxu0
        %v1179 = vadd.f32 0.0, %v1178
        %v1180 = vpop.f32.mrf.mxu0
        %1181 = vmatprep.mubr.f32.mxu0 0.0
        %1182 = vmatmul.mubr.f32.gmra.mxu0 %v1089
        %v1183 = vpop.f32.mrf.mxu0
        %v1184 = vadd.f32 0.0, %v1183
        %v1185 = vpop.f32.mrf.mxu0
        %1186 = vmatprep.mubr.f32.mxu0 0.0
        %1187 = vmatmul.mubr.f32.gmra.mxu0 %v1090
        %v1188 = vpop.f32.mrf.mxu0
        %v1189 = vadd.f32 0.0, %v1188
        %v1190 = vpop.f32.mrf.mxu0
        %1191 = vmatprep.mubr.f32.mxu0 0.0
        %1192 = vmatmul.mubr.f32.gmra.mxu0 %v1091
        %v1193 = vpop.f32.mrf.mxu0
        %v1194 = vadd.f32 0.0, %v1193
        %v1195 = vpop.f32.mrf.mxu0
        %1196 = vmatprep.mubr.f32.mxu0 0.0
        %1197 = vmatmul.mubr.f32.gmra.mxu0 %v1092
        %v1198 = vpop.f32.mrf.mxu0
        %v1199 = vadd.f32 0.0, %v1198
        %v1200 = vpop.f32.mrf.mxu0
        %1201 = vmatprep.mubr.f32.mxu0 0.0
        %1202 = vmatmul.mubr.f32.gmra.mxu0 %v1093
        %v1203 = vpop.f32.mrf.mxu0
        %v1204 = vadd.f32 0.0, %v1203
        %v1205 = vpop.f32.mrf.mxu0
        %1206 = vmatprep.mubr.f32.mxu0 0.0
        %1207 = vmatmul.mubr.f32.gmra.mxu0 %v1094
        %v1208 = vpop.f32.mrf.mxu0
        %v1209 = vadd.f32 0.0, %v1208
        %v1210 = vpop.f32.mrf.mxu0
        %1211 = vmatprep.mubr.f32.mxu0 0.0
        %1212 = vmatmul.mubr.f32.gmra.mxu0 %v1095
        %v1213 = vpop.f32.mrf.mxu0
        %v1214 = vadd.f32 0.0, %v1213
        %v1215 = vpop.f32.mrf.mxu0
        %1216 = vmatprep.mubr.f32.mxu0 0.0
        %1217 = vmatmul.mubr.f32.gmra.mxu0 %v1096
        %v1218 = vpop.f32.mrf.mxu0
        %v1219 = vadd.f32 0.0, %v1218
        %v1220 = vpop.f32.mrf.mxu0
        %1221 = vmatprep.mubr.f32.mxu0 0.0
        %1222 = vmatmul.mubr.f32.gmra.mxu0 %v1097
        %v1223 = vpop.f32.mrf.mxu0
        %v1224 = vadd.f32 0.0, %v1223
        %v1225 = vpop.f32.mrf.mxu0
        %1226 = vmatprep.mubr.f32.mxu0 0.0
        %1227 = vmatmul.mubr.f32.gmra.mxu0 %v1098
        %v1228 = vpop.f32.mrf.mxu0
        %v1229 = vadd.f32 0.0, %v1228
        %v1230 = vpop.f32.mrf.mxu0
        %1231 = vmatprep.mubr.f32.mxu0 0.0
        %1232 = vmatmul.mubr.f32.gmra.mxu0 %v1099
        %v1233 = vpop.f32.mrf.mxu0
        %v1234 = vadd.f32 0.0, %v1233
        %v1235 = vpop.f32.mrf.mxu0
        %1236 = vmatprep.mubr.f32.mxu0 0.0
        %1237 = vmatmul.mubr.f32.gmra.mxu0 %v1100
        %v1238 = vpop.f32.mrf.mxu0
        %v1239 = vadd.f32 0.0, %v1238
        %v1240 = vpop.f32.mrf.mxu0
        %1241 = vmatprep.mubr.f32.mxu0 0.0
        %1242 = vmatmul.mubr.f32.gmra.mxu0 %v1101
        %v1243 = vpop.f32.mrf.mxu0
        %v1244 = vadd.f32 0.0, %v1243
        %v1245 = vpop.f32.mrf.mxu0
        %1246 = vdwg.mxu0
        %1247 = vmatprep.subr.mxu0 0.0
        %1248 = vmatpush1.msra.mxu0 %v890
        %1249 = vmatprep.subr.mxu0 0.0
        %1250 = vmatpush1.msra.mxu0 %v885
        %1251 = vmatprep.subr.mxu0 0.0
        %1252 = vmatpush1.msra.mxu0 %v880
        %1253 = vmatprep.subr.mxu0 0.0
        %1254 = vmatpush1.msra.mxu0 %v875
        %1255 = vmatprep.subr.mxu0 0.0
        %1256 = vmatpush1.msra.mxu0 %v870
        %1257 = vmatprep.subr.mxu0 0.0
        %1258 = vmatpush1.msra.mxu0 %v865
        %1259 = vmatprep.subr.mxu0 0.0
        %1260 = vmatpush1.msra.mxu0 %v860
        %1261 = vmatprep.subr.mxu0 0.0
        %1262 = vmatpush1.msra.mxu0 %v855
        %1263 = vmatprep.subr.mxu0 0.0
        %1264 = vmatpush1.msra.mxu0 %v850
        %1265 = vmatprep.subr.mxu0 0.0
        %1266 = vmatpush1.msra.mxu0 %v845
        %1267 = vmatprep.subr.mxu0 0.0
        %1268 = vmatpush1.msra.mxu0 %v840
        %1269 = vmatprep.subr.mxu0 0.0
        %1270 = vmatpush1.msra.mxu0 %v835
        %1271 = vmatprep.subr.mxu0 0.0
        %1272 = vmatpush1.msra.mxu0 %v830
        %1273 = vmatprep.subr.mxu0 0.0
        %1274 = vmatpush1.msra.mxu0 %v825
        %1275 = vmatprep.subr.mxu0 0.0
        %1276 = vmatpush1.msra.mxu0 %v820
        %1277 = vmatprep.subr.mxu0 0.0
        %1278 = vmatpush1.msra.mxu0 %v815
        %1279 = vmatprep.subr.mxu0 0.0
        %1280 = vmatpush2.msra.mxu0 0.0
        %1281 = vmatprep.subr.mxu0 0.0
        %1282 = vmatpush2.msra.mxu0 0.0
        %1283 = vmatprep.subr.mxu0 0.0
        %1284 = vmatpush2.msra.mxu0 0.0
        %1285 = vmatprep.subr.mxu0 0.0
        %1286 = vmatpush2.msra.mxu0 0.0
        %1287 = vmatprep.subr.mxu0 0.0
        %1288 = vmatpush2.msra.mxu0 0.0
        %1289 = vmatprep.subr.mxu0 0.0
        %1290 = vmatpush2.msra.mxu0 0.0
        %1291 = vmatprep.subr.mxu0 0.0
        %1292 = vmatpush2.msra.mxu0 0.0
        %1293 = vmatprep.subr.mxu0 0.0
        %1294 = vmatpush2.msra.mxu0 0.0
        %1295 = vmatprep.subr.mxu0 0.0
        %1296 = vmatpush2.msra.mxu0 0.0
        %1297 = vmatprep.subr.mxu0 0.0
        %1298 = vmatpush2.msra.mxu0 0.0
        %1299 = vmatprep.subr.mxu0 0.0
        %1300 = vmatpush2.msra.mxu0 0.0
        %1301 = vmatprep.subr.mxu0 0.0
        %1302 = vmatpush2.msra.mxu0 0.0
        %1303 = vmatprep.subr.mxu0 0.0
        %1304 = vmatpush2.msra.mxu0 0.0
        %1305 = vmatprep.subr.mxu0 0.0
        %1306 = vmatpush2.msra.mxu0 0.0
        %1307 = vmatprep.subr.mxu0 0.0
        %1308 = vmatpush2.msra.mxu0 0.0
        %1309 = vmatprep.subr.mxu0 0.0
        %1310 = vmatpush2.msra.mxu0 0.0
        %1311 = vmatprep.mubr.f32.mxu0 0.0
        %1312 = vmatmul.mubr.f32.gmra.mxu0 %v893
        %v1313 = vpop.f32.mrf.mxu0
        %v1314 = vadd.f32 %v1169, %v1313
        %v1315 = vpop.f32.mrf.mxu0
        %1316 = vmatprep.mubr.f32.mxu0 0.0
        %1317 = vmatmul.mubr.f32.gmra.mxu0 %v894
        %v1318 = vpop.f32.mrf.mxu0
        %v1319 = vadd.f32 %v1174, %v1318
        %v1320 = vpop.f32.mrf.mxu0
        %1321 = vmatprep.mubr.f32.mxu0 0.0
        %1322 = vmatmul.mubr.f32.gmra.mxu0 %v895
        %v1323 = vpop.f32.mrf.mxu0
        %v1324 = vadd.f32 %v1179, %v1323
        %v1325 = vpop.f32.mrf.mxu0
        %1326 = vmatprep.mubr.f32.mxu0 0.0
        %1327 = vmatmul.mubr.f32.gmra.mxu0 %v896
        %v1328 = vpop.f32.mrf.mxu0
        %v1329 = vadd.f32 %v1184, %v1328
        %v1330 = vpop.f32.mrf.mxu0
        %1331 = vmatprep.mubr.f32.mxu0 0.0
        %1332 = vmatmul.mubr.f32.gmra.mxu0 %v897
        %v1333 = vpop.f32.mrf.mxu0
        %v1334 = vadd.f32 %v1189, %v1333
        %v1335 = vpop.f32.mrf.mxu0
        %1336 = vmatprep.mubr.f32.mxu0 0.0
        %1337 = vmatmul.mubr.f32.gmra.mxu0 %v898
        %v1338 = vpop.f32.mrf.mxu0
        %v1339 = vadd.f32 %v1194, %v1338
        %v1340 = vpop.f32.mrf.mxu0
        %1341 = vmatprep.mubr.f32.mxu0 0.0
        %1342 = vmatmul.mubr.f32.gmra.mxu0 %v899
        %v1343 = vpop.f32.mrf.mxu0
        %v1344 = vadd.f32 %v1199, %v1343
        %v1345 = vpop.f32.mrf.mxu0
        %1346 = vmatprep.mubr.f32.mxu0 0.0
        %1347 = vmatmul.mubr.f32.gmra.mxu0 %v900
        %v1348 = vpop.f32.mrf.mxu0
        %v1349 = vadd.f32 %v1204, %v1348
        %v1350 = vpop.f32.mrf.mxu0
        %1351 = vmatprep.mubr.f32.mxu0 0.0
        %1352 = vmatmul.mubr.f32.gmra.mxu0 %v901
        %v1353 = vpop.f32.mrf.mxu0
        %v1354 = vadd.f32 %v1209, %v1353
        %v1355 = vpop.f32.mrf.mxu0
        %1356 = vmatprep.mubr.f32.mxu0 0.0
        %1357 = vmatmul.mubr.f32.gmra.mxu0 %v902
        %v1358 = vpop.f32.mrf.mxu0
        %v1359 = vadd.f32 %v1214, %v1358
        %v1360 = vpop.f32.mrf.mxu0
        %1361 = vmatprep.mubr.f32.mxu0 0.0
        %1362 = vmatmul.mubr.f32.gmra.mxu0 %v903
        %v1363 = vpop.f32.mrf.mxu0
        %v1364 = vadd.f32 %v1219, %v1363
        %v1365 = vpop.f32.mrf.mxu0
        %1366 = vmatprep.mubr.f32.mxu0 0.0
        %1367 = vmatmul.mubr.f32.gmra.mxu0 %v904
        %v1368 = vpop.f32.mrf.mxu0
        %v1369 = vadd.f32 %v1224, %v1368
        %v1370 = vpop.f32.mrf.mxu0
        %1371 = vmatprep.mubr.f32.mxu0 0.0
        %1372 = vmatmul.mubr.f32.gmra.mxu0 %v905
        %v1373 = vpop.f32.mrf.mxu0
        %v1374 = vadd.f32 %v1229, %v1373
        %v1375 = vpop.f32.mrf.mxu0
        %1376 = vmatprep.mubr.f32.mxu0 0.0
        %1377 = vmatmul.mubr.f32.gmra.mxu0 %v906
        %v1378 = vpop.f32.mrf.mxu0
        %v1379 = vadd.f32 %v1234, %v1378
        %v1380 = vpop.f32.mrf.mxu0
        %1381 = vmatprep.mubr.f32.mxu0 0.0
        %1382 = vmatmul.mubr.f32.gmra.mxu0 %v907
        %v1383 = vpop.f32.mrf.mxu0
        %v1384 = vadd.f32 %v1239, %v1383
        %v1385 = vpop.f32.mrf.mxu0
        %1386 = vmatprep.mubr.f32.mxu0 0.0
        %1387 = vmatmul.mubr.f32.gmra.mxu0 %v908
        %v1388 = vpop.f32.mrf.mxu0
        %v1389 = vadd.f32 %v1244, %v1388
        %v1390 = vpop.f32.mrf.mxu0
        %1391 = vdwg.mxu0
        %v1392 = vld [vmem:[%s6 + $0x200] sm:$0xff]
        %v1393 = vld [vmem:[%s6 + $0x208] sm:$0xff]
        %v1394 = vld [vmem:[%s6 + $0x210] sm:$0xff]
        %v1395 = vld [vmem:[%s6 + $0x218] sm:$0xff]
        %v1396 = vld [vmem:[%s6 + $0x220] sm:$0xff]
        %v1397 = vld [vmem:[%s6 + $0x228] sm:$0xff]
        %v1398 = vld [vmem:[%s6 + $0x230] sm:$0xff]
        %v1399 = vld [vmem:[%s6 + $0x238] sm:$0xff]
        %v1400 = vld [vmem:[%s6 + $0x240] sm:$0xff]
        %v1401 = vld [vmem:[%s6 + $0x248] sm:$0xff]
        %v1402 = vld [vmem:[%s6 + $0x250] sm:$0xff]
        %v1403 = vld [vmem:[%s6 + $0x258] sm:$0xff]
        %v1404 = vld [vmem:[%s6 + $0x260] sm:$0xff]
        %v1405 = vld [vmem:[%s6 + $0x268] sm:$0xff]
        %v1406 = vld [vmem:[%s6 + $0x270] sm:$0xff]
        %v1407 = vld [vmem:[%s6 + $0x278] sm:$0xff]
        %v1408 = vld [vmem:[%s6 + $0x280] sm:$0xff]
        %v1409 = vld [vmem:[%s6 + $0x288] sm:$0xff]
        %v1410 = vld [vmem:[%s6 + $0x290] sm:$0xff]
        %v1411 = vld [vmem:[%s6 + $0x298] sm:$0xff]
        %v1412 = vld [vmem:[%s6 + $0x2a0] sm:$0xff]
        %v1413 = vld [vmem:[%s6 + $0x2a8] sm:$0xff]
        %v1414 = vld [vmem:[%s6 + $0x2b0] sm:$0xff]
        %v1415 = vld [vmem:[%s6 + $0x2b8] sm:$0xff]
        %v1416 = vld [vmem:[%s6 + $0x2c0] sm:$0xff]
        %v1417 = vld [vmem:[%s6 + $0x2c8] sm:$0xff]
        %v1418 = vld [vmem:[%s6 + $0x2d0] sm:$0xff]
        %v1419 = vld [vmem:[%s6 + $0x2d8] sm:$0xff]
        %v1420 = vld [vmem:[%s6 + $0x2e0] sm:$0xff]
        %v1421 = vld [vmem:[%s6 + $0x2e8] sm:$0xff]
        %v1422 = vld [vmem:[%s6 + $0x2f0] sm:$0xff]
        %v1423 = vld [vmem:[%s6 + $0x2f8] sm:$0xff]
        %1424 = vmatprep.subr.mxu0 0.0
        %1425 = vmatpush1.msra.mxu0 %v1407
        %1426 = vmatprep.subr.mxu0 0.0
        %1427 = vmatpush1.msra.mxu0 %v1406
        %1428 = vmatprep.subr.mxu0 0.0
        %1429 = vmatpush1.msra.mxu0 %v1405
        %1430 = vmatprep.subr.mxu0 0.0
        %1431 = vmatpush1.msra.mxu0 %v1404
        %1432 = vmatprep.subr.mxu0 0.0
        %1433 = vmatpush1.msra.mxu0 %v1403
        %1434 = vmatprep.subr.mxu0 0.0
        %1435 = vmatpush1.msra.mxu0 %v1402
        %1436 = vmatprep.subr.mxu0 0.0
        %1437 = vmatpush1.msra.mxu0 %v1401
        %1438 = vmatprep.subr.mxu0 0.0
        %1439 = vmatpush1.msra.mxu0 %v1400
        %1440 = vmatprep.subr.mxu0 0.0
        %1441 = vmatpush1.msra.mxu0 %v1399
        %1442 = vmatprep.subr.mxu0 0.0
        %1443 = vmatpush1.msra.mxu0 %v1398
        %1444 = vmatprep.subr.mxu0 0.0
        %1445 = vmatpush1.msra.mxu0 %v1397
        %1446 = vmatprep.subr.mxu0 0.0
        %1447 = vmatpush1.msra.mxu0 %v1396
        %1448 = vmatprep.subr.mxu0 0.0
        %1449 = vmatpush1.msra.mxu0 %v1395
        %1450 = vmatprep.subr.mxu0 0.0
        %1451 = vmatpush1.msra.mxu0 %v1394
        %1452 = vmatprep.subr.mxu0 0.0
        %1453 = vmatpush1.msra.mxu0 %v1393
        %1454 = vmatprep.subr.mxu0 0.0
        %1455 = vmatpush1.msra.mxu0 %v1392
        %1456 = vmatprep.subr.mxu0 0.0
        %1457 = vmatpush2.msra.mxu0 %v1423
        %1458 = vmatprep.subr.mxu0 0.0
        %1459 = vmatpush2.msra.mxu0 %v1422
        %1460 = vmatprep.subr.mxu0 0.0
        %1461 = vmatpush2.msra.mxu0 %v1421
        %1462 = vmatprep.subr.mxu0 0.0
        %1463 = vmatpush2.msra.mxu0 %v1420
        %1464 = vmatprep.subr.mxu0 0.0
        %1465 = vmatpush2.msra.mxu0 %v1419
        %1466 = vmatprep.subr.mxu0 0.0
        %1467 = vmatpush2.msra.mxu0 %v1418
        %1468 = vmatprep.subr.mxu0 0.0
        %1469 = vmatpush2.msra.mxu0 %v1417
        %1470 = vmatprep.subr.mxu0 0.0
        %1471 = vmatpush2.msra.mxu0 %v1416
        %1472 = vmatprep.subr.mxu0 0.0
        %1473 = vmatpush2.msra.mxu0 %v1415
        %1474 = vmatprep.subr.mxu0 0.0
        %1475 = vmatpush2.msra.mxu0 %v1414
        %1476 = vmatprep.subr.mxu0 0.0
        %1477 = vmatpush2.msra.mxu0 %v1413
        %1478 = vmatprep.subr.mxu0 0.0
        %1479 = vmatpush2.msra.mxu0 %v1412
        %1480 = vmatprep.subr.mxu0 0.0
        %1481 = vmatpush2.msra.mxu0 %v1411
        %1482 = vmatprep.subr.mxu0 0.0
        %1483 = vmatpush2.msra.mxu0 %v1410
        %1484 = vmatprep.subr.mxu0 0.0
        %1485 = vmatpush2.msra.mxu0 %v1409
        %1486 = vmatprep.subr.mxu0 0.0
        %1487 = vmatpush2.msra.mxu0 %v1408
        %1488 = vmatprep.mubr.f32.mxu0 %v685
        %1489 = vmatmul.mubr.f32.gmra.mxu0 %v684
        %v1490 = vpop.f32.mrf.mxu0
        %v1491 = vadd.f32 0.0, %v1490
        %v1492 = vpop.f32.mrf.mxu0
        %1493 = vmatprep.mubr.f32.mxu0 %v687
        %1494 = vmatmul.mubr.f32.gmra.mxu0 %v686
        %v1495 = vpop.f32.mrf.mxu0
        %v1496 = vadd.f32 0.0, %v1495
        %v1497 = vpop.f32.mrf.mxu0
        %1498 = vmatprep.mubr.f32.mxu0 %v689
        %1499 = vmatmul.mubr.f32.gmra.mxu0 %v688
        %v1500 = vpop.f32.mrf.mxu0
        %v1501 = vadd.f32 0.0, %v1500
        %v1502 = vpop.f32.mrf.mxu0
        %1503 = vmatprep.mubr.f32.mxu0 %v691
        %1504 = vmatmul.mubr.f32.gmra.mxu0 %v690
        %v1505 = vpop.f32.mrf.mxu0
        %v1506 = vadd.f32 0.0, %v1505
        %v1507 = vpop.f32.mrf.mxu0
        %1508 = vmatprep.mubr.f32.mxu0 %v693
        %1509 = vmatmul.mubr.f32.gmra.mxu0 %v692
        %v1510 = vpop.f32.mrf.mxu0
        %v1511 = vadd.f32 0.0, %v1510
        %v1512 = vpop.f32.mrf.mxu0
        %1513 = vmatprep.mubr.f32.mxu0 %v695
        %1514 = vmatmul.mubr.f32.gmra.mxu0 %v694
        %v1515 = vpop.f32.mrf.mxu0
        %v1516 = vadd.f32 0.0, %v1515
        %v1517 = vpop.f32.mrf.mxu0
        %1518 = vmatprep.mubr.f32.mxu0 %v697
        %1519 = vmatmul.mubr.f32.gmra.mxu0 %v696
        %v1520 = vpop.f32.mrf.mxu0
        %v1521 = vadd.f32 0.0, %v1520
        %v1522 = vpop.f32.mrf.mxu0
        %1523 = vmatprep.mubr.f32.mxu0 %v699
        %1524 = vmatmul.mubr.f32.gmra.mxu0 %v698
        %v1525 = vpop.f32.mrf.mxu0
        %v1526 = vadd.f32 0.0, %v1525
        %v1527 = vpop.f32.mrf.mxu0
        %1528 = vmatprep.mubr.f32.mxu0 %v701
        %1529 = vmatmul.mubr.f32.gmra.mxu0 %v700
        %v1530 = vpop.f32.mrf.mxu0
        %v1531 = vadd.f32 0.0, %v1530
        %v1532 = vpop.f32.mrf.mxu0
        %1533 = vmatprep.mubr.f32.mxu0 %v703
        %1534 = vmatmul.mubr.f32.gmra.mxu0 %v702
        %v1535 = vpop.f32.mrf.mxu0
        %v1536 = vadd.f32 0.0, %v1535
        %v1537 = vpop.f32.mrf.mxu0
        %1538 = vmatprep.mubr.f32.mxu0 %v705
        %1539 = vmatmul.mubr.f32.gmra.mxu0 %v704
        %v1540 = vpop.f32.mrf.mxu0
        %v1541 = vadd.f32 0.0, %v1540
        %v1542 = vpop.f32.mrf.mxu0
        %1543 = vmatprep.mubr.f32.mxu0 %v707
        %1544 = vmatmul.mubr.f32.gmra.mxu0 %v706
        %v1545 = vpop.f32.mrf.mxu0
        %v1546 = vadd.f32 0.0, %v1545
        %v1547 = vpop.f32.mrf.mxu0
        %1548 = vmatprep.mubr.f32.mxu0 %v709
        %1549 = vmatmul.mubr.f32.gmra.mxu0 %v708
        %v1550 = vpop.f32.mrf.mxu0
        %v1551 = vadd.f32 0.0, %v1550
        %v1552 = vpop.f32.mrf.mxu0
        %1553 = vmatprep.mubr.f32.mxu0 %v711
        %1554 = vmatmul.mubr.f32.gmra.mxu0 %v710
        %v1555 = vpop.f32.mrf.mxu0
        %v1556 = vadd.f32 0.0, %v1555
        %v1557 = vpop.f32.mrf.mxu0
        %1558 = vmatprep.mubr.f32.mxu0 %v713
        %1559 = vmatmul.mubr.f32.gmra.mxu0 %v712
        %v1560 = vpop.f32.mrf.mxu0
        %v1561 = vadd.f32 0.0, %v1560
        %v1562 = vpop.f32.mrf.mxu0
        %1563 = vmatprep.mubr.f32.mxu0 %v715
        %1564 = vmatmul.mubr.f32.gmra.mxu0 %v714
        %v1565 = vpop.f32.mrf.mxu0
        %v1566 = vadd.f32 0.0, %v1565
        %v1567 = vpop.f32.mrf.mxu0
        %1568 = vdwg.mxu0
        %v1569 = vld [vmem:[%s1 + $0x10] sm:$0xff]
        %v1570 = vld [vmem:[%s1 + $0x30] sm:$0xff]
        %v1571 = vld [vmem:[%s1 + $0x50] sm:$0xff]
        %v1572 = vld [vmem:[%s1 + $0x70] sm:$0xff]
        %v1573 = vld [vmem:[%s1 + $0x90] sm:$0xff]
        %v1574 = vld [vmem:[%s1 + $0xb0] sm:$0xff]
        %v1575 = vld [vmem:[%s1 + $0xd0] sm:$0xff]
        %v1576 = vld [vmem:[%s1 + $0xf0] sm:$0xff]
        %v1577 = vld [vmem:[%s1 + $0x110] sm:$0xff]
        %v1578 = vld [vmem:[%s1 + $0x130] sm:$0xff]
        %v1579 = vld [vmem:[%s1 + $0x150] sm:$0xff]
        %v1580 = vld [vmem:[%s1 + $0x170] sm:$0xff]
        %v1581 = vld [vmem:[%s1 + $0x190] sm:$0xff]
        %v1582 = vld [vmem:[%s1 + $0x1b0] sm:$0xff]
        %v1583 = vld [vmem:[%s1 + $0x1d0] sm:$0xff]
        %v1584 = vld [vmem:[%s1 + $0x1f0] sm:$0xff]
        %1585 = vmatprep.subr.mxu0 0.0
        %1586 = vmatpush1.msra.mxu0 %v1566
        %1587 = vmatprep.subr.mxu0 0.0
        %1588 = vmatpush1.msra.mxu0 %v1561
        %1589 = vmatprep.subr.mxu0 0.0
        %1590 = vmatpush1.msra.mxu0 %v1556
        %1591 = vmatprep.subr.mxu0 0.0
        %1592 = vmatpush1.msra.mxu0 %v1551
        %1593 = vmatprep.subr.mxu0 0.0
        %1594 = vmatpush1.msra.mxu0 %v1546
        %1595 = vmatprep.subr.mxu0 0.0
        %1596 = vmatpush1.msra.mxu0 %v1541
        %1597 = vmatprep.subr.mxu0 0.0
        %1598 = vmatpush1.msra.mxu0 %v1536
        %1599 = vmatprep.subr.mxu0 0.0
        %1600 = vmatpush1.msra.mxu0 %v1531
        %1601 = vmatprep.subr.mxu0 0.0
        %1602 = vmatpush1.msra.mxu0 %v1526
        %1603 = vmatprep.subr.mxu0 0.0
        %1604 = vmatpush1.msra.mxu0 %v1521
        %1605 = vmatprep.subr.mxu0 0.0
        %1606 = vmatpush1.msra.mxu0 %v1516
        %1607 = vmatprep.subr.mxu0 0.0
        %1608 = vmatpush1.msra.mxu0 %v1511
        %1609 = vmatprep.subr.mxu0 0.0
        %1610 = vmatpush1.msra.mxu0 %v1506
        %1611 = vmatprep.subr.mxu0 0.0
        %1612 = vmatpush1.msra.mxu0 %v1501
        %1613 = vmatprep.subr.mxu0 0.0
        %1614 = vmatpush1.msra.mxu0 %v1496
        %1615 = vmatprep.subr.mxu0 0.0
        %1616 = vmatpush1.msra.mxu0 %v1491
        %1617 = vmatprep.subr.mxu0 0.0
        %1618 = vmatpush2.msra.mxu0 0.0
        %1619 = vmatprep.subr.mxu0 0.0
        %1620 = vmatpush2.msra.mxu0 0.0
        %1621 = vmatprep.subr.mxu0 0.0
        %1622 = vmatpush2.msra.mxu0 0.0
        %1623 = vmatprep.subr.mxu0 0.0
        %1624 = vmatpush2.msra.mxu0 0.0
        %1625 = vmatprep.subr.mxu0 0.0
        %1626 = vmatpush2.msra.mxu0 0.0
        %1627 = vmatprep.subr.mxu0 0.0
        %1628 = vmatpush2.msra.mxu0 0.0
        %1629 = vmatprep.subr.mxu0 0.0
        %1630 = vmatpush2.msra.mxu0 0.0
        %1631 = vmatprep.subr.mxu0 0.0
        %1632 = vmatpush2.msra.mxu0 0.0
        %1633 = vmatprep.subr.mxu0 0.0
        %1634 = vmatpush2.msra.mxu0 0.0
        %1635 = vmatprep.subr.mxu0 0.0
        %1636 = vmatpush2.msra.mxu0 0.0
        %1637 = vmatprep.subr.mxu0 0.0
        %1638 = vmatpush2.msra.mxu0 0.0
        %1639 = vmatprep.subr.mxu0 0.0
        %1640 = vmatpush2.msra.mxu0 0.0
        %1641 = vmatprep.subr.mxu0 0.0
        %1642 = vmatpush2.msra.mxu0 0.0
        %1643 = vmatprep.subr.mxu0 0.0
        %1644 = vmatpush2.msra.mxu0 0.0
        %1645 = vmatprep.subr.mxu0 0.0
        %1646 = vmatpush2.msra.mxu0 0.0
        %1647 = vmatprep.subr.mxu0 0.0
        %1648 = vmatpush2.msra.mxu0 0.0
        %1649 = vmatprep.mubr.f32.mxu0 0.0
        %1650 = vmatmul.mubr.f32.gmra.mxu0 %v1569
        %v1651 = vpop.f32.mrf.mxu0
        %v1652 = vadd.f32 0.0, %v1651
        %v1653 = vpop.f32.mrf.mxu0
        %1654 = vmatprep.mubr.f32.mxu0 0.0
        %1655 = vmatmul.mubr.f32.gmra.mxu0 %v1570
        %v1656 = vpop.f32.mrf.mxu0
        %v1657 = vadd.f32 0.0, %v1656
        %v1658 = vpop.f32.mrf.mxu0
        %1659 = vmatprep.mubr.f32.mxu0 0.0
        %1660 = vmatmul.mubr.f32.gmra.mxu0 %v1571
        %v1661 = vpop.f32.mrf.mxu0
        %v1662 = vadd.f32 0.0, %v1661
        %v1663 = vpop.f32.mrf.mxu0
        %1664 = vmatprep.mubr.f32.mxu0 0.0
        %1665 = vmatmul.mubr.f32.gmra.mxu0 %v1572
        %v1666 = vpop.f32.mrf.mxu0
        %v1667 = vadd.f32 0.0, %v1666
        %v1668 = vpop.f32.mrf.mxu0
        %1669 = vmatprep.mubr.f32.mxu0 0.0
        %1670 = vmatmul.mubr.f32.gmra.mxu0 %v1573
        %v1671 = vpop.f32.mrf.mxu0
        %v1672 = vadd.f32 0.0, %v1671
        %v1673 = vpop.f32.mrf.mxu0
        %1674 = vmatprep.mubr.f32.mxu0 0.0
        %1675 = vmatmul.mubr.f32.gmra.mxu0 %v1574
        %v1676 = vpop.f32.mrf.mxu0
        %v1677 = vadd.f32 0.0, %v1676
        %v1678 = vpop.f32.mrf.mxu0
        %1679 = vmatprep.mubr.f32.mxu0 0.0
        %1680 = vmatmul.mubr.f32.gmra.mxu0 %v1575
        %v1681 = vpop.f32.mrf.mxu0
        %v1682 = vadd.f32 0.0, %v1681
        %v1683 = vpop.f32.mrf.mxu0
        %1684 = vmatprep.mubr.f32.mxu0 0.0
        %1685 = vmatmul.mubr.f32.gmra.mxu0 %v1576
        %v1686 = vpop.f32.mrf.mxu0
        %v1687 = vadd.f32 0.0, %v1686
        %v1688 = vpop.f32.mrf.mxu0
        %1689 = vmatprep.mubr.f32.mxu0 0.0
        %1690 = vmatmul.mubr.f32.gmra.mxu0 %v1577
        %v1691 = vpop.f32.mrf.mxu0
        %v1692 = vadd.f32 0.0, %v1691
        %v1693 = vpop.f32.mrf.mxu0
        %1694 = vmatprep.mubr.f32.mxu0 0.0
        %1695 = vmatmul.mubr.f32.gmra.mxu0 %v1578
        %v1696 = vpop.f32.mrf.mxu0
        %v1697 = vadd.f32 0.0, %v1696
        %v1698 = vpop.f32.mrf.mxu0
        %1699 = vmatprep.mubr.f32.mxu0 0.0
        %1700 = vmatmul.mubr.f32.gmra.mxu0 %v1579
        %v1701 = vpop.f32.mrf.mxu0
        %v1702 = vadd.f32 0.0, %v1701
        %v1703 = vpop.f32.mrf.mxu0
        %1704 = vmatprep.mubr.f32.mxu0 0.0
        %1705 = vmatmul.mubr.f32.gmra.mxu0 %v1580
        %v1706 = vpop.f32.mrf.mxu0
        %v1707 = vadd.f32 0.0, %v1706
        %v1708 = vpop.f32.mrf.mxu0
        %1709 = vmatprep.mubr.f32.mxu0 0.0
        %1710 = vmatmul.mubr.f32.gmra.mxu0 %v1581
        %v1711 = vpop.f32.mrf.mxu0
        %v1712 = vadd.f32 0.0, %v1711
        %v1713 = vpop.f32.mrf.mxu0
        %1714 = vmatprep.mubr.f32.mxu0 0.0
        %1715 = vmatmul.mubr.f32.gmra.mxu0 %v1582
        %v1716 = vpop.f32.mrf.mxu0
        %v1717 = vadd.f32 0.0, %v1716
        %v1718 = vpop.f32.mrf.mxu0
        %1719 = vmatprep.mubr.f32.mxu0 0.0
        %1720 = vmatmul.mubr.f32.gmra.mxu0 %v1583
        %v1721 = vpop.f32.mrf.mxu0
        %v1722 = vadd.f32 0.0, %v1721
        %v1723 = vpop.f32.mrf.mxu0
        %1724 = vmatprep.mubr.f32.mxu0 0.0
        %1725 = vmatmul.mubr.f32.gmra.mxu0 %v1584
        %v1726 = vpop.f32.mrf.mxu0
        %v1727 = vadd.f32 0.0, %v1726
        %v1728 = vpop.f32.mrf.mxu0
        %1729 = vdwg.mxu0
        %v1730 = vadd.f32 %v1314, %v1652
        %v1731 = vadd.f32 %v1319, %v1657
        %v1732 = vadd.f32 %v1324, %v1662
        %v1733 = vadd.f32 %v1329, %v1667
        %v1734 = vadd.f32 %v1334, %v1672
        %v1735 = vadd.f32 %v1339, %v1677
        %v1736 = vadd.f32 %v1344, %v1682
        %v1737 = vadd.f32 %v1349, %v1687
        %v1738 = vadd.f32 %v1354, %v1692
        %v1739 = vadd.f32 %v1359, %v1697
        %v1740 = vadd.f32 %v1364, %v1702
        %v1741 = vadd.f32 %v1369, %v1707
        %v1742 = vadd.f32 %v1374, %v1712
        %v1743 = vadd.f32 %v1379, %v1717
        %v1744 = vadd.f32 %v1384, %v1722
        %v1745 = vadd.f32 %v1389, %v1727
        %v1746 = vld [vmem:[%s6 + $0x300] sm:$0xff]
        %v1747 = vld [vmem:[%s6 + $0x308] sm:$0xff]
        %v1748 = vld [vmem:[%s6 + $0x310] sm:$0xff]
        %v1749 = vld [vmem:[%s6 + $0x318] sm:$0xff]
        %v1750 = vld [vmem:[%s6 + $0x320] sm:$0xff]
        %v1751 = vld [vmem:[%s6 + $0x328] sm:$0xff]
        %v1752 = vld [vmem:[%s6 + $0x330] sm:$0xff]
        %v1753 = vld [vmem:[%s6 + $0x338] sm:$0xff]
        %v1754 = vld [vmem:[%s6 + $0x340] sm:$0xff]
        %v1755 = vld [vmem:[%s6 + $0x348] sm:$0xff]
        %v1756 = vld [vmem:[%s6 + $0x350] sm:$0xff]
        %v1757 = vld [vmem:[%s6 + $0x358] sm:$0xff]
        %v1758 = vld [vmem:[%s6 + $0x360] sm:$0xff]
        %v1759 = vld [vmem:[%s6 + $0x368] sm:$0xff]
        %v1760 = vld [vmem:[%s6 + $0x370] sm:$0xff]
        %v1761 = vld [vmem:[%s6 + $0x378] sm:$0xff]
        %v1762 = vld [vmem:[%s6 + $0x380] sm:$0xff]
        %v1763 = vld [vmem:[%s6 + $0x388] sm:$0xff]
        %v1764 = vld [vmem:[%s6 + $0x390] sm:$0xff]
        %v1765 = vld [vmem:[%s6 + $0x398] sm:$0xff]
        %v1766 = vld [vmem:[%s6 + $0x3a0] sm:$0xff]
        %v1767 = vld [vmem:[%s6 + $0x3a8] sm:$0xff]
        %v1768 = vld [vmem:[%s6 + $0x3b0] sm:$0xff]
        %v1769 = vld [vmem:[%s6 + $0x3b8] sm:$0xff]
        %v1770 = vld [vmem:[%s6 + $0x3c0] sm:$0xff]
        %v1771 = vld [vmem:[%s6 + $0x3c8] sm:$0xff]
        %v1772 = vld [vmem:[%s6 + $0x3d0] sm:$0xff]
        %v1773 = vld [vmem:[%s6 + $0x3d8] sm:$0xff]
        %v1774 = vld [vmem:[%s6 + $0x3e0] sm:$0xff]
        %v1775 = vld [vmem:[%s6 + $0x3e8] sm:$0xff]
        %v1776 = vld [vmem:[%s6 + $0x3f0] sm:$0xff]
        %v1777 = vld [vmem:[%s6 + $0x3f8] sm:$0xff]
        %1778 = vmatprep.subr.mxu0 0.0
        %1779 = vmatpush1.msra.mxu0 %v1761
        %1780 = vmatprep.subr.mxu0 0.0
        %1781 = vmatpush1.msra.mxu0 %v1760
        %1782 = vmatprep.subr.mxu0 0.0
        %1783 = vmatpush1.msra.mxu0 %v1759
        %1784 = vmatprep.subr.mxu0 0.0
        %1785 = vmatpush1.msra.mxu0 %v1758
        %1786 = vmatprep.subr.mxu0 0.0
        %1787 = vmatpush1.msra.mxu0 %v1757
        %1788 = vmatprep.subr.mxu0 0.0
        %1789 = vmatpush1.msra.mxu0 %v1756
        %1790 = vmatprep.subr.mxu0 0.0
        %1791 = vmatpush1.msra.mxu0 %v1755
        %1792 = vmatprep.subr.mxu0 0.0
        %1793 = vmatpush1.msra.mxu0 %v1754
        %1794 = vmatprep.subr.mxu0 0.0
        %1795 = vmatpush1.msra.mxu0 %v1753
        %1796 = vmatprep.subr.mxu0 0.0
        %1797 = vmatpush1.msra.mxu0 %v1752
        %1798 = vmatprep.subr.mxu0 0.0
        %1799 = vmatpush1.msra.mxu0 %v1751
        %1800 = vmatprep.subr.mxu0 0.0
        %1801 = vmatpush1.msra.mxu0 %v1750
        %1802 = vmatprep.subr.mxu0 0.0
        %1803 = vmatpush1.msra.mxu0 %v1749
        %1804 = vmatprep.subr.mxu0 0.0
        %1805 = vmatpush1.msra.mxu0 %v1748
        %1806 = vmatprep.subr.mxu0 0.0
        %1807 = vmatpush1.msra.mxu0 %v1747
        %1808 = vmatprep.subr.mxu0 0.0
        %1809 = vmatpush1.msra.mxu0 %v1746
        %1810 = vmatprep.subr.mxu0 0.0
        %1811 = vmatpush2.msra.mxu0 %v1777
        %1812 = vmatprep.subr.mxu0 0.0
        %1813 = vmatpush2.msra.mxu0 %v1776
        %1814 = vmatprep.subr.mxu0 0.0
        %1815 = vmatpush2.msra.mxu0 %v1775
        %1816 = vmatprep.subr.mxu0 0.0
        %1817 = vmatpush2.msra.mxu0 %v1774
        %1818 = vmatprep.subr.mxu0 0.0
        %1819 = vmatpush2.msra.mxu0 %v1773
        %1820 = vmatprep.subr.mxu0 0.0
        %1821 = vmatpush2.msra.mxu0 %v1772
        %1822 = vmatprep.subr.mxu0 0.0
        %1823 = vmatpush2.msra.mxu0 %v1771
        %1824 = vmatprep.subr.mxu0 0.0
        %1825 = vmatpush2.msra.mxu0 %v1770
        %1826 = vmatprep.subr.mxu0 0.0
        %1827 = vmatpush2.msra.mxu0 %v1769
        %1828 = vmatprep.subr.mxu0 0.0
        %1829 = vmatpush2.msra.mxu0 %v1768
        %1830 = vmatprep.subr.mxu0 0.0
        %1831 = vmatpush2.msra.mxu0 %v1767
        %1832 = vmatprep.subr.mxu0 0.0
        %1833 = vmatpush2.msra.mxu0 %v1766
        %1834 = vmatprep.subr.mxu0 0.0
        %1835 = vmatpush2.msra.mxu0 %v1765
        %1836 = vmatprep.subr.mxu0 0.0
        %1837 = vmatpush2.msra.mxu0 %v1764
        %1838 = vmatprep.subr.mxu0 0.0
        %1839 = vmatpush2.msra.mxu0 %v1763
        %1840 = vmatprep.subr.mxu0 0.0
        %1841 = vmatpush2.msra.mxu0 %v1762
        %1842 = vmatprep.mubr.f32.mxu0 %v685
        %1843 = vmatmul.mubr.f32.gmra.mxu0 %v684
        %v1844 = vpop.f32.mrf.mxu0
        %v1845 = vadd.f32 0.0, %v1844
        %v1846 = vpop.f32.mrf.mxu0
        %1847 = vmatprep.mubr.f32.mxu0 %v687
        %1848 = vmatmul.mubr.f32.gmra.mxu0 %v686
        %v1849 = vpop.f32.mrf.mxu0
        %v1850 = vadd.f32 0.0, %v1849
        %v1851 = vpop.f32.mrf.mxu0
        %1852 = vmatprep.mubr.f32.mxu0 %v689
        %1853 = vmatmul.mubr.f32.gmra.mxu0 %v688
        %v1854 = vpop.f32.mrf.mxu0
        %v1855 = vadd.f32 0.0, %v1854
        %v1856 = vpop.f32.mrf.mxu0
        %1857 = vmatprep.mubr.f32.mxu0 %v691
        %1858 = vmatmul.mubr.f32.gmra.mxu0 %v690
        %v1859 = vpop.f32.mrf.mxu0
        %v1860 = vadd.f32 0.0, %v1859
        %v1861 = vpop.f32.mrf.mxu0
        %1862 = vmatprep.mubr.f32.mxu0 %v693
        %1863 = vmatmul.mubr.f32.gmra.mxu0 %v692
        %v1864 = vpop.f32.mrf.mxu0
        %v1865 = vadd.f32 0.0, %v1864
        %v1866 = vpop.f32.mrf.mxu0
        %1867 = vmatprep.mubr.f32.mxu0 %v695
        %1868 = vmatmul.mubr.f32.gmra.mxu0 %v694
        %v1869 = vpop.f32.mrf.mxu0
        %v1870 = vadd.f32 0.0, %v1869
        %v1871 = vpop.f32.mrf.mxu0
        %1872 = vmatprep.mubr.f32.mxu0 %v697
        %1873 = vmatmul.mubr.f32.gmra.mxu0 %v696
        %v1874 = vpop.f32.mrf.mxu0
        %v1875 = vadd.f32 0.0, %v1874
        %v1876 = vpop.f32.mrf.mxu0
        %1877 = vmatprep.mubr.f32.mxu0 %v699
        %1878 = vmatmul.mubr.f32.gmra.mxu0 %v698
        %v1879 = vpop.f32.mrf.mxu0
        %v1880 = vadd.f32 0.0, %v1879
        %v1881 = vpop.f32.mrf.mxu0
        %1882 = vmatprep.mubr.f32.mxu0 %v701
        %1883 = vmatmul.mubr.f32.gmra.mxu0 %v700
        %v1884 = vpop.f32.mrf.mxu0
        %v1885 = vadd.f32 0.0, %v1884
        %v1886 = vpop.f32.mrf.mxu0
        %1887 = vmatprep.mubr.f32.mxu0 %v703
        %1888 = vmatmul.mubr.f32.gmra.mxu0 %v702
        %v1889 = vpop.f32.mrf.mxu0
        %v1890 = vadd.f32 0.0, %v1889
        %v1891 = vpop.f32.mrf.mxu0
        %1892 = vmatprep.mubr.f32.mxu0 %v705
        %1893 = vmatmul.mubr.f32.gmra.mxu0 %v704
        %v1894 = vpop.f32.mrf.mxu0
        %v1895 = vadd.f32 0.0, %v1894
        %v1896 = vpop.f32.mrf.mxu0
        %1897 = vmatprep.mubr.f32.mxu0 %v707
        %1898 = vmatmul.mubr.f32.gmra.mxu0 %v706
        %v1899 = vpop.f32.mrf.mxu0
        %v1900 = vadd.f32 0.0, %v1899
        %v1901 = vpop.f32.mrf.mxu0
        %1902 = vmatprep.mubr.f32.mxu0 %v709
        %1903 = vmatmul.mubr.f32.gmra.mxu0 %v708
        %v1904 = vpop.f32.mrf.mxu0
        %v1905 = vadd.f32 0.0, %v1904
        %v1906 = vpop.f32.mrf.mxu0
        %1907 = vmatprep.mubr.f32.mxu0 %v711
        %1908 = vmatmul.mubr.f32.gmra.mxu0 %v710
        %v1909 = vpop.f32.mrf.mxu0
        %v1910 = vadd.f32 0.0, %v1909
        %v1911 = vpop.f32.mrf.mxu0
        %1912 = vmatprep.mubr.f32.mxu0 %v713
        %1913 = vmatmul.mubr.f32.gmra.mxu0 %v712
        %v1914 = vpop.f32.mrf.mxu0
        %v1915 = vadd.f32 0.0, %v1914
        %v1916 = vpop.f32.mrf.mxu0
        %1917 = vmatprep.mubr.f32.mxu0 %v715
        %1918 = vmatmul.mubr.f32.gmra.mxu0 %v714
        %v1919 = vpop.f32.mrf.mxu0
        %v1920 = vadd.f32 0.0, %v1919
        %v1921 = vpop.f32.mrf.mxu0
        %1922 = vdwg.mxu0
        %v1923 = vld [vmem:[%s1 + $0x18] sm:$0xff]
        %v1924 = vld [vmem:[%s1 + $0x38] sm:$0xff]
        %v1925 = vld [vmem:[%s1 + $0x58] sm:$0xff]
        %v1926 = vld [vmem:[%s1 + $0x78] sm:$0xff]
        %v1927 = vld [vmem:[%s1 + $0x98] sm:$0xff]
        %v1928 = vld [vmem:[%s1 + $0xb8] sm:$0xff]
        %v1929 = vld [vmem:[%s1 + $0xd8] sm:$0xff]
        %v1930 = vld [vmem:[%s1 + $0xf8] sm:$0xff]
        %v1931 = vld [vmem:[%s1 + $0x118] sm:$0xff]
        %v1932 = vld [vmem:[%s1 + $0x138] sm:$0xff]
        %v1933 = vld [vmem:[%s1 + $0x158] sm:$0xff]
        %v1934 = vld [vmem:[%s1 + $0x178] sm:$0xff]
        %v1935 = vld [vmem:[%s1 + $0x198] sm:$0xff]
        %v1936 = vld [vmem:[%s1 + $0x1b8] sm:$0xff]
        %v1937 = vld [vmem:[%s1 + $0x1d8] sm:$0xff]
        %v1938 = vld [vmem:[%s1 + $0x1f8] sm:$0xff]
        %1939 = vmatprep.subr.mxu0 0.0
        %1940 = vmatpush1.msra.mxu0 %v1920
        %1941 = vmatprep.subr.mxu0 0.0
        %1942 = vmatpush1.msra.mxu0 %v1915
        %1943 = vmatprep.subr.mxu0 0.0
        %1944 = vmatpush1.msra.mxu0 %v1910
        %1945 = vmatprep.subr.mxu0 0.0
        %1946 = vmatpush1.msra.mxu0 %v1905
        %1947 = vmatprep.subr.mxu0 0.0
        %1948 = vmatpush1.msra.mxu0 %v1900
        %1949 = vmatprep.subr.mxu0 0.0
        %1950 = vmatpush1.msra.mxu0 %v1895
        %1951 = vmatprep.subr.mxu0 0.0
        %1952 = vmatpush1.msra.mxu0 %v1890
        %1953 = vmatprep.subr.mxu0 0.0
        %1954 = vmatpush1.msra.mxu0 %v1885
        %1955 = vmatprep.subr.mxu0 0.0
        %1956 = vmatpush1.msra.mxu0 %v1880
        %1957 = vmatprep.subr.mxu0 0.0
        %1958 = vmatpush1.msra.mxu0 %v1875
        %1959 = vmatprep.subr.mxu0 0.0
        %1960 = vmatpush1.msra.mxu0 %v1870
        %1961 = vmatprep.subr.mxu0 0.0
        %1962 = vmatpush1.msra.mxu0 %v1865
        %1963 = vmatprep.subr.mxu0 0.0
        %1964 = vmatpush1.msra.mxu0 %v1860
        %1965 = vmatprep.subr.mxu0 0.0
        %1966 = vmatpush1.msra.mxu0 %v1855
        %1967 = vmatprep.subr.mxu0 0.0
        %1968 = vmatpush1.msra.mxu0 %v1850
        %1969 = vmatprep.subr.mxu0 0.0
        %1970 = vmatpush1.msra.mxu0 %v1845
        %1971 = vmatprep.subr.mxu0 0.0
        %1972 = vmatpush2.msra.mxu0 0.0
        %1973 = vmatprep.subr.mxu0 0.0
        %1974 = vmatpush2.msra.mxu0 0.0
        %1975 = vmatprep.subr.mxu0 0.0
        %1976 = vmatpush2.msra.mxu0 0.0
        %1977 = vmatprep.subr.mxu0 0.0
        %1978 = vmatpush2.msra.mxu0 0.0
        %1979 = vmatprep.subr.mxu0 0.0
        %1980 = vmatpush2.msra.mxu0 0.0
        %1981 = vmatprep.subr.mxu0 0.0
        %1982 = vmatpush2.msra.mxu0 0.0
        %1983 = vmatprep.subr.mxu0 0.0
        %1984 = vmatpush2.msra.mxu0 0.0
        %1985 = vmatprep.subr.mxu0 0.0
        %1986 = vmatpush2.msra.mxu0 0.0
        %1987 = vmatprep.subr.mxu0 0.0
        %1988 = vmatpush2.msra.mxu0 0.0
        %1989 = vmatprep.subr.mxu0 0.0
        %1990 = vmatpush2.msra.mxu0 0.0
        %1991 = vmatprep.subr.mxu0 0.0
        %1992 = vmatpush2.msra.mxu0 0.0
        %1993 = vmatprep.subr.mxu0 0.0
        %1994 = vmatpush2.msra.mxu0 0.0
        %1995 = vmatprep.subr.mxu0 0.0
        %1996 = vmatpush2.msra.mxu0 0.0
        %1997 = vmatprep.subr.mxu0 0.0
        %1998 = vmatpush2.msra.mxu0 0.0
        %1999 = vmatprep.subr.mxu0 0.0
        %2000 = vmatpush2.msra.mxu0 0.0
        %2001 = vmatprep.subr.mxu0 0.0
        %2002 = vmatpush2.msra.mxu0 0.0
        %2003 = vmatprep.mubr.f32.mxu0 0.0
        %2004 = vmatmul.mubr.f32.gmra.mxu0 %v1923
        %v2005 = vpop.f32.mrf.mxu0
        %v2006 = vadd.f32 0.0, %v2005
        %v2007 = vpop.f32.mrf.mxu0
        %2008 = vmatprep.mubr.f32.mxu0 0.0
        %2009 = vmatmul.mubr.f32.gmra.mxu0 %v1924
        %v2010 = vpop.f32.mrf.mxu0
        %v2011 = vadd.f32 0.0, %v2010
        %v2012 = vpop.f32.mrf.mxu0
        %2013 = vmatprep.mubr.f32.mxu0 0.0
        %2014 = vmatmul.mubr.f32.gmra.mxu0 %v1925
        %v2015 = vpop.f32.mrf.mxu0
        %v2016 = vadd.f32 0.0, %v2015
        %v2017 = vpop.f32.mrf.mxu0
        %2018 = vmatprep.mubr.f32.mxu0 0.0
        %2019 = vmatmul.mubr.f32.gmra.mxu0 %v1926
        %v2020 = vpop.f32.mrf.mxu0
        %v2021 = vadd.f32 0.0, %v2020
        %v2022 = vpop.f32.mrf.mxu0
        %2023 = vmatprep.mubr.f32.mxu0 0.0
        %2024 = vmatmul.mubr.f32.gmra.mxu0 %v1927
        %v2025 = vpop.f32.mrf.mxu0
        %v2026 = vadd.f32 0.0, %v2025
        %v2027 = vpop.f32.mrf.mxu0
        %2028 = vmatprep.mubr.f32.mxu0 0.0
        %2029 = vmatmul.mubr.f32.gmra.mxu0 %v1928
        %v2030 = vpop.f32.mrf.mxu0
        %v2031 = vadd.f32 0.0, %v2030
        %v2032 = vpop.f32.mrf.mxu0
        %2033 = vmatprep.mubr.f32.mxu0 0.0
        %2034 = vmatmul.mubr.f32.gmra.mxu0 %v1929
        %v2035 = vpop.f32.mrf.mxu0
        %v2036 = vadd.f32 0.0, %v2035
        %v2037 = vpop.f32.mrf.mxu0
        %2038 = vmatprep.mubr.f32.mxu0 0.0
        %2039 = vmatmul.mubr.f32.gmra.mxu0 %v1930
        %v2040 = vpop.f32.mrf.mxu0
        %v2041 = vadd.f32 0.0, %v2040
        %v2042 = vpop.f32.mrf.mxu0
        %2043 = vmatprep.mubr.f32.mxu0 0.0
        %2044 = vmatmul.mubr.f32.gmra.mxu0 %v1931
        %v2045 = vpop.f32.mrf.mxu0
        %v2046 = vadd.f32 0.0, %v2045
        %v2047 = vpop.f32.mrf.mxu0
        %2048 = vmatprep.mubr.f32.mxu0 0.0
        %2049 = vmatmul.mubr.f32.gmra.mxu0 %v1932
        %v2050 = vpop.f32.mrf.mxu0
        %v2051 = vadd.f32 0.0, %v2050
        %v2052 = vpop.f32.mrf.mxu0
        %2053 = vmatprep.mubr.f32.mxu0 0.0
        %2054 = vmatmul.mubr.f32.gmra.mxu0 %v1933
        %v2055 = vpop.f32.mrf.mxu0
        %v2056 = vadd.f32 0.0, %v2055
        %v2057 = vpop.f32.mrf.mxu0
        %2058 = vmatprep.mubr.f32.mxu0 0.0
        %2059 = vmatmul.mubr.f32.gmra.mxu0 %v1934
        %v2060 = vpop.f32.mrf.mxu0
        %v2061 = vadd.f32 0.0, %v2060
        %v2062 = vpop.f32.mrf.mxu0
        %2063 = vmatprep.mubr.f32.mxu0 0.0
        %2064 = vmatmul.mubr.f32.gmra.mxu0 %v1935
        %v2065 = vpop.f32.mrf.mxu0
        %v2066 = vadd.f32 0.0, %v2065
        %v2067 = vpop.f32.mrf.mxu0
        %2068 = vmatprep.mubr.f32.mxu0 0.0
        %2069 = vmatmul.mubr.f32.gmra.mxu0 %v1936
        %v2070 = vpop.f32.mrf.mxu0
        %v2071 = vadd.f32 0.0, %v2070
        %v2072 = vpop.f32.mrf.mxu0
        %2073 = vmatprep.mubr.f32.mxu0 0.0
        %2074 = vmatmul.mubr.f32.gmra.mxu0 %v1937
        %v2075 = vpop.f32.mrf.mxu0
        %v2076 = vadd.f32 0.0, %v2075
        %v2077 = vpop.f32.mrf.mxu0
        %2078 = vmatprep.mubr.f32.mxu0 0.0
        %2079 = vmatmul.mubr.f32.gmra.mxu0 %v1938
        %v2080 = vpop.f32.mrf.mxu0
        %v2081 = vadd.f32 0.0, %v2080
        %v2082 = vpop.f32.mrf.mxu0
        %2083 = vdwg.mxu0
        %v2084 = vadd.f32 %v1730, %v2006
        %v2085 = vadd.f32 %v1731, %v2011
        %v2086 = vadd.f32 %v1732, %v2016
        %v2087 = vadd.f32 %v1733, %v2021
        %v2088 = vadd.f32 %v1734, %v2026
        %v2089 = vadd.f32 %v1735, %v2031
        %v2090 = vadd.f32 %v1736, %v2036
        %v2091 = vadd.f32 %v1737, %v2041
        %v2092 = vadd.f32 %v1738, %v2046
        %v2093 = vadd.f32 %v1739, %v2051
        %v2094 = vadd.f32 %v1740, %v2056
        %v2095 = vadd.f32 %v1741, %v2061
        %v2096 = vadd.f32 %v1742, %v2066
        %v2097 = vadd.f32 %v1743, %v2071
        %v2098 = vadd.f32 %v1744, %v2076
        %v2099 = vadd.f32 %v1745, %v2081
        %v2100 = vld [vmem:[%s11] sm:$0xff]
        %v2101 = vld [vmem:[%s11 + $0x8] sm:$0xff]
        %v2102 = vld [vmem:[%s11 + $0x10] sm:$0xff]
        %v2103 = vld [vmem:[%s11 + $0x18] sm:$0xff]
        %v2104 = vld [vmem:[%s11 + $0x20] sm:$0xff]
        %v2105 = vld [vmem:[%s11 + $0x28] sm:$0xff]
        %v2106 = vld [vmem:[%s11 + $0x30] sm:$0xff]
        %v2107 = vld [vmem:[%s11 + $0x38] sm:$0xff]
        %v2108 = vld [vmem:[%s11 + $0x40] sm:$0xff]
        %v2109 = vld [vmem:[%s11 + $0x48] sm:$0xff]
        %v2110 = vld [vmem:[%s11 + $0x50] sm:$0xff]
        %v2111 = vld [vmem:[%s11 + $0x58] sm:$0xff]
        %v2112 = vld [vmem:[%s11 + $0x60] sm:$0xff]
        %v2113 = vld [vmem:[%s11 + $0x68] sm:$0xff]
        %v2114 = vld [vmem:[%s11 + $0x70] sm:$0xff]
        %v2115 = vld [vmem:[%s11 + $0x78] sm:$0xff]
        %2117 = vset.pattern.permute.xlu0 0
        %2118 = vperm.xlu0 %2117, %v2100
        %v2119 = vpop.permute.xlu0 %2118
        %2122 = vset.pattern.permute.xlu0 0
        %2123 = vperm.xlu0 %2122, %v2101
        %v2124 = vpop.permute.xlu0 %2123
        %2127 = vset.pattern.permute.xlu0 0
        %2128 = vperm.xlu0 %2127, %v2102
        %v2129 = vpop.permute.xlu0 %2128
        %2132 = vset.pattern.permute.xlu0 0
        %2133 = vperm.xlu0 %2132, %v2103
        %v2134 = vpop.permute.xlu0 %2133
        %2137 = vset.pattern.permute.xlu0 0
        %2138 = vperm.xlu0 %2137, %v2104
        %v2139 = vpop.permute.xlu0 %2138
        %2142 = vset.pattern.permute.xlu0 0
        %2143 = vperm.xlu0 %2142, %v2105
        %v2144 = vpop.permute.xlu0 %2143
        %2147 = vset.pattern.permute.xlu0 0
        %2148 = vperm.xlu0 %2147, %v2106
        %v2149 = vpop.permute.xlu0 %2148
        %2152 = vset.pattern.permute.xlu0 0
        %2153 = vperm.xlu0 %2152, %v2107
        %v2154 = vpop.permute.xlu0 %2153
        %2157 = vset.pattern.permute.xlu0 0
        %2158 = vperm.xlu0 %2157, %v2108
        %v2159 = vpop.permute.xlu0 %2158
        %2162 = vset.pattern.permute.xlu0 0
        %2163 = vperm.xlu0 %2162, %v2109
        %v2164 = vpop.permute.xlu0 %2163
        %2167 = vset.pattern.permute.xlu0 0
        %2168 = vperm.xlu0 %2167, %v2110
        %v2169 = vpop.permute.xlu0 %2168
        %2172 = vset.pattern.permute.xlu0 0
        %2173 = vperm.xlu0 %2172, %v2111
        %v2174 = vpop.permute.xlu0 %2173
        %2177 = vset.pattern.permute.xlu0 0
        %2178 = vperm.xlu0 %2177, %v2112
        %v2179 = vpop.permute.xlu0 %2178
        %2182 = vset.pattern.permute.xlu0 0
        %2183 = vperm.xlu0 %2182, %v2113
        %v2184 = vpop.permute.xlu0 %2183
        %2187 = vset.pattern.permute.xlu0 0
        %2188 = vperm.xlu0 %2187, %v2114
        %v2189 = vpop.permute.xlu0 %2188
        %2192 = vset.pattern.permute.xlu0 0
        %2193 = vperm.xlu0 %2192, %v2115
        %v2194 = vpop.permute.xlu0 %2193
        %v2196 = vadd.f32 %v2084, %v2119
        %v2197 = vadd.f32 %v2085, %v2124
        %v2198 = vadd.f32 %v2086, %v2129
        %v2199 = vadd.f32 %v2087, %v2134
        %v2200 = vadd.f32 %v2088, %v2139
        %v2201 = vadd.f32 %v2089, %v2144
        %v2202 = vadd.f32 %v2090, %v2149
        %v2203 = vadd.f32 %v2091, %v2154
        %v2204 = vadd.f32 %v2092, %v2159
        %v2205 = vadd.f32 %v2093, %v2164
        %v2206 = vadd.f32 %v2094, %v2169
        %v2207 = vadd.f32 %v2095, %v2174
        %v2208 = vadd.f32 %v2096, %v2179
        %v2209 = vadd.f32 %v2097, %v2184
        %v2210 = vadd.f32 %v2098, %v2189
        %v2211 = vadd.f32 %v2099, %v2194
        %vm2212 = vcmp.ge.f32.partialorder %v2196, 0.0
        %vm2213 = vcmp.ge.f32.partialorder %v2197, 0.0
        %vm2214 = vcmp.ge.f32.partialorder %v2198, 0.0
        %vm2215 = vcmp.ge.f32.partialorder %v2199, 0.0
        %vm2216 = vcmp.ge.f32.partialorder %v2200, 0.0
        %vm2217 = vcmp.ge.f32.partialorder %v2201, 0.0
        %vm2218 = vcmp.ge.f32.partialorder %v2202, 0.0
        %vm2219 = vcmp.ge.f32.partialorder %v2203, 0.0
        %vm2220 = vcmp.ge.f32.partialorder %v2204, 0.0
        %vm2221 = vcmp.ge.f32.partialorder %v2205, 0.0
        %vm2222 = vcmp.ge.f32.partialorder %v2206, 0.0
        %vm2223 = vcmp.ge.f32.partialorder %v2207, 0.0
        %vm2224 = vcmp.ge.f32.partialorder %v2208, 0.0
        %vm2225 = vcmp.ge.f32.partialorder %v2209, 0.0
        %vm2226 = vcmp.ge.f32.partialorder %v2210, 0.0
        %vm2227 = vcmp.ge.f32.partialorder %v2211, 0.0
        %v2228 = vmul.f32 %v2196, 0.2
        %v2229 = vmul.f32 %v2197, 0.2
        %v2230 = vmul.f32 %v2198, 0.2
        %v2231 = vmul.f32 %v2199, 0.2
        %v2232 = vmul.f32 %v2200, 0.2
        %v2233 = vmul.f32 %v2201, 0.2
        %v2234 = vmul.f32 %v2202, 0.2
        %v2235 = vmul.f32 %v2203, 0.2
        %v2236 = vmul.f32 %v2204, 0.2
        %v2237 = vmul.f32 %v2205, 0.2
        %v2238 = vmul.f32 %v2206, 0.2
        %v2239 = vmul.f32 %v2207, 0.2
        %v2240 = vmul.f32 %v2208, 0.2
        %v2241 = vmul.f32 %v2209, 0.2
        %v2242 = vmul.f32 %v2210, 0.2
        %v2243 = vmul.f32 %v2211, 0.2
        %v2244 = vsel %vm2212, %v2196, %v2228
        %v2245 = vsel %vm2213, %v2197, %v2229
        %v2246 = vsel %vm2214, %v2198, %v2230
        %v2247 = vsel %vm2215, %v2199, %v2231
        %v2248 = vsel %vm2216, %v2200, %v2232
        %v2249 = vsel %vm2217, %v2201, %v2233
        %v2250 = vsel %vm2218, %v2202, %v2234
        %v2251 = vsel %vm2219, %v2203, %v2235
        %v2252 = vsel %vm2220, %v2204, %v2236
        %v2253 = vsel %vm2221, %v2205, %v2237
        %v2254 = vsel %vm2222, %v2206, %v2238
        %v2255 = vsel %vm2223, %v2207, %v2239
        %v2256 = vsel %vm2224, %v2208, %v2240
        %v2257 = vsel %vm2225, %v2209, %v2241
        %v2258 = vsel %vm2226, %v2210, %v2242
        %v2259 = vsel %vm2227, %v2211, %v2243
        %v2260 = vld [vmem:[%s7] sm:$0xff]
        %v2261 = vld [vmem:[%s7 + $0x8] sm:$0xff]
        %v2262 = vld [vmem:[%s7 + $0x10] sm:$0xff]
        %v2263 = vld [vmem:[%s7 + $0x18] sm:$0xff]
        %v2264 = vld [vmem:[%s7 + $0x20] sm:$0xff]
        %v2265 = vld [vmem:[%s7 + $0x28] sm:$0xff]
        %v2266 = vld [vmem:[%s7 + $0x30] sm:$0xff]
        %v2267 = vld [vmem:[%s7 + $0x38] sm:$0xff]
        %v2268 = vld [vmem:[%s7 + $0x40] sm:$0xff]
        %v2269 = vld [vmem:[%s7 + $0x48] sm:$0xff]
        %v2270 = vld [vmem:[%s7 + $0x50] sm:$0xff]
        %v2271 = vld [vmem:[%s7 + $0x58] sm:$0xff]
        %v2272 = vld [vmem:[%s7 + $0x60] sm:$0xff]
        %v2273 = vld [vmem:[%s7 + $0x68] sm:$0xff]
        %v2274 = vld [vmem:[%s7 + $0x70] sm:$0xff]
        %v2275 = vld [vmem:[%s7 + $0x78] sm:$0xff]
        %2276 = vmatprep.subr.mxu0 0.0
        %2277 = vmatpush1.msra.mxu0 %v2275
        %2278 = vmatprep.subr.mxu0 0.0
        %2279 = vmatpush1.msra.mxu0 %v2274
        %2280 = vmatprep.subr.mxu0 0.0
        %2281 = vmatpush1.msra.mxu0 %v2273
        %2282 = vmatprep.subr.mxu0 0.0
        %2283 = vmatpush1.msra.mxu0 %v2272
        %2284 = vmatprep.subr.mxu0 0.0
        %2285 = vmatpush1.msra.mxu0 %v2271
        %2286 = vmatprep.subr.mxu0 0.0
        %2287 = vmatpush1.msra.mxu0 %v2270
        %2288 = vmatprep.subr.mxu0 0.0
        %2289 = vmatpush1.msra.mxu0 %v2269
        %2290 = vmatprep.subr.mxu0 0.0
        %2291 = vmatpush1.msra.mxu0 %v2268
        %2292 = vmatprep.subr.mxu0 0.0
        %2293 = vmatpush1.msra.mxu0 %v2267
        %2294 = vmatprep.subr.mxu0 0.0
        %2295 = vmatpush1.msra.mxu0 %v2266
        %2296 = vmatprep.subr.mxu0 0.0
        %2297 = vmatpush1.msra.mxu0 %v2265
        %2298 = vmatprep.subr.mxu0 0.0
        %2299 = vmatpush1.msra.mxu0 %v2264
        %2300 = vmatprep.subr.mxu0 0.0
        %2301 = vmatpush1.msra.mxu0 %v2263
        %2302 = vmatprep.subr.mxu0 0.0
        %2303 = vmatpush1.msra.mxu0 %v2262
        %2304 = vmatprep.subr.mxu0 0.0
        %2305 = vmatpush1.msra.mxu0 %v2261
        %2306 = vmatprep.subr.mxu0 0.0
        %2307 = vmatpush1.msra.mxu0 %v2260
        %2308 = vmatprep.subr.mxu0 0.0
        %2309 = vmatpush2.msra.mxu0 0.0
        %2310 = vmatprep.subr.mxu0 0.0
        %2311 = vmatpush2.msra.mxu0 0.0
        %2312 = vmatprep.subr.mxu0 0.0
        %2313 = vmatpush2.msra.mxu0 0.0
        %2314 = vmatprep.subr.mxu0 0.0
        %2315 = vmatpush2.msra.mxu0 0.0
        %2316 = vmatprep.subr.mxu0 0.0
        %2317 = vmatpush2.msra.mxu0 0.0
        %2318 = vmatprep.subr.mxu0 0.0
        %2319 = vmatpush2.msra.mxu0 0.0
        %2320 = vmatprep.subr.mxu0 0.0
        %2321 = vmatpush2.msra.mxu0 0.0
        %2322 = vmatprep.subr.mxu0 0.0
        %2323 = vmatpush2.msra.mxu0 0.0
        %2324 = vmatprep.subr.mxu0 0.0
        %2325 = vmatpush2.msra.mxu0 0.0
        %2326 = vmatprep.subr.mxu0 0.0
        %2327 = vmatpush2.msra.mxu0 0.0
        %2328 = vmatprep.subr.mxu0 0.0
        %2329 = vmatpush2.msra.mxu0 0.0
        %2330 = vmatprep.subr.mxu0 0.0
        %2331 = vmatpush2.msra.mxu0 0.0
        %2332 = vmatprep.subr.mxu0 0.0
        %2333 = vmatpush2.msra.mxu0 0.0
        %2334 = vmatprep.subr.mxu0 0.0
        %2335 = vmatpush2.msra.mxu0 0.0
        %2336 = vmatprep.subr.mxu0 0.0
        %2337 = vmatpush2.msra.mxu0 0.0
        %2338 = vmatprep.subr.mxu0 0.0
        %2339 = vmatpush2.msra.mxu0 0.0
        %2340 = vmatprep.mubr.f32.mxu0 0.0
        %2341 = vmatmul.mubr.f32.gmra.mxu0 %v2244
        %v2342 = vpop.f32.mrf.mxu0
        %v2343 = vadd.f32 0.0, %v2342
        %v2344 = vpop.f32.mrf.mxu0
        %2345 = vmatprep.mubr.f32.mxu0 0.0
        %2346 = vmatmul.mubr.f32.gmra.mxu0 %v2245
        %v2347 = vpop.f32.mrf.mxu0
        %v2348 = vadd.f32 0.0, %v2347
        %v2349 = vpop.f32.mrf.mxu0
        %2350 = vmatprep.mubr.f32.mxu0 0.0
        %2351 = vmatmul.mubr.f32.gmra.mxu0 %v2246
        %v2352 = vpop.f32.mrf.mxu0
        %v2353 = vadd.f32 0.0, %v2352
        %v2354 = vpop.f32.mrf.mxu0
        %2355 = vmatprep.mubr.f32.mxu0 0.0
        %2356 = vmatmul.mubr.f32.gmra.mxu0 %v2247
        %v2357 = vpop.f32.mrf.mxu0
        %v2358 = vadd.f32 0.0, %v2357
        %v2359 = vpop.f32.mrf.mxu0
        %2360 = vmatprep.mubr.f32.mxu0 0.0
        %2361 = vmatmul.mubr.f32.gmra.mxu0 %v2248
        %v2362 = vpop.f32.mrf.mxu0
        %v2363 = vadd.f32 0.0, %v2362
        %v2364 = vpop.f32.mrf.mxu0
        %2365 = vmatprep.mubr.f32.mxu0 0.0
        %2366 = vmatmul.mubr.f32.gmra.mxu0 %v2249
        %v2367 = vpop.f32.mrf.mxu0
        %v2368 = vadd.f32 0.0, %v2367
        %v2369 = vpop.f32.mrf.mxu0
        %2370 = vmatprep.mubr.f32.mxu0 0.0
        %2371 = vmatmul.mubr.f32.gmra.mxu0 %v2250
        %v2372 = vpop.f32.mrf.mxu0
        %v2373 = vadd.f32 0.0, %v2372
        %v2374 = vpop.f32.mrf.mxu0
        %2375 = vmatprep.mubr.f32.mxu0 0.0
        %2376 = vmatmul.mubr.f32.gmra.mxu0 %v2251
        %v2377 = vpop.f32.mrf.mxu0
        %v2378 = vadd.f32 0.0, %v2377
        %v2379 = vpop.f32.mrf.mxu0
        %2380 = vmatprep.mubr.f32.mxu0 0.0
        %2381 = vmatmul.mubr.f32.gmra.mxu0 %v2252
        %v2382 = vpop.f32.mrf.mxu0
        %v2383 = vadd.f32 0.0, %v2382
        %v2384 = vpop.f32.mrf.mxu0
        %2385 = vmatprep.mubr.f32.mxu0 0.0
        %2386 = vmatmul.mubr.f32.gmra.mxu0 %v2253
        %v2387 = vpop.f32.mrf.mxu0
        %v2388 = vadd.f32 0.0, %v2387
        %v2389 = vpop.f32.mrf.mxu0
        %2390 = vmatprep.mubr.f32.mxu0 0.0
        %2391 = vmatmul.mubr.f32.gmra.mxu0 %v2254
        %v2392 = vpop.f32.mrf.mxu0
        %v2393 = vadd.f32 0.0, %v2392
        %v2394 = vpop.f32.mrf.mxu0
        %2395 = vmatprep.mubr.f32.mxu0 0.0
        %2396 = vmatmul.mubr.f32.gmra.mxu0 %v2255
        %v2397 = vpop.f32.mrf.mxu0
        %v2398 = vadd.f32 0.0, %v2397
        %v2399 = vpop.f32.mrf.mxu0
        %2400 = vmatprep.mubr.f32.mxu0 0.0
        %2401 = vmatmul.mubr.f32.gmra.mxu0 %v2256
        %v2402 = vpop.f32.mrf.mxu0
        %v2403 = vadd.f32 0.0, %v2402
        %v2404 = vpop.f32.mrf.mxu0
        %2405 = vmatprep.mubr.f32.mxu0 0.0
        %2406 = vmatmul.mubr.f32.gmra.mxu0 %v2257
        %v2407 = vpop.f32.mrf.mxu0
        %v2408 = vadd.f32 0.0, %v2407
        %v2409 = vpop.f32.mrf.mxu0
        %2410 = vmatprep.mubr.f32.mxu0 0.0
        %2411 = vmatmul.mubr.f32.gmra.mxu0 %v2258
        %v2412 = vpop.f32.mrf.mxu0
        %v2413 = vadd.f32 0.0, %v2412
        %v2414 = vpop.f32.mrf.mxu0
        %2415 = vmatprep.mubr.f32.mxu0 0.0
        %2416 = vmatmul.mubr.f32.gmra.mxu0 %v2259
        %v2417 = vpop.f32.mrf.mxu0
        %v2418 = vadd.f32 0.0, %v2417
        %v2419 = vpop.f32.mrf.mxu0
        %2420 = vdwg.mxu0
        %v2421 = vld [vmem:[%s2] sm:$0xff]
        %v2422 = vld [vmem:[%s2 + $0x20] sm:$0xff]
        %v2423 = vld [vmem:[%s2 + $0x40] sm:$0xff]
        %v2424 = vld [vmem:[%s2 + $0x60] sm:$0xff]
        %v2425 = vld [vmem:[%s2 + $0x80] sm:$0xff]
        %v2426 = vld [vmem:[%s2 + $0xa0] sm:$0xff]
        %v2427 = vld [vmem:[%s2 + $0xc0] sm:$0xff]
        %v2428 = vld [vmem:[%s2 + $0xe0] sm:$0xff]
        %v2429 = vld [vmem:[%s2 + $0x100] sm:$0xff]
        %v2430 = vld [vmem:[%s2 + $0x120] sm:$0xff]
        %v2431 = vld [vmem:[%s2 + $0x140] sm:$0xff]
        %v2432 = vld [vmem:[%s2 + $0x160] sm:$0xff]
        %v2433 = vld [vmem:[%s2 + $0x180] sm:$0xff]
        %v2434 = vld [vmem:[%s2 + $0x1a0] sm:$0xff]
        %v2435 = vld [vmem:[%s2 + $0x1c0] sm:$0xff]
        %v2436 = vld [vmem:[%s2 + $0x1e0] sm:$0xff]
        %v2437 = vld [vmem:[%s7 + $0x80] sm:$0xff]
        %v2438 = vld [vmem:[%s7 + $0x88] sm:$0xff]
        %v2439 = vld [vmem:[%s7 + $0x90] sm:$0xff]
        %v2440 = vld [vmem:[%s7 + $0x98] sm:$0xff]
        %v2441 = vld [vmem:[%s7 + $0xa0] sm:$0xff]
        %v2442 = vld [vmem:[%s7 + $0xa8] sm:$0xff]
        %v2443 = vld [vmem:[%s7 + $0xb0] sm:$0xff]
        %v2444 = vld [vmem:[%s7 + $0xb8] sm:$0xff]
        %v2445 = vld [vmem:[%s7 + $0xc0] sm:$0xff]
        %v2446 = vld [vmem:[%s7 + $0xc8] sm:$0xff]
        %v2447 = vld [vmem:[%s7 + $0xd0] sm:$0xff]
        %v2448 = vld [vmem:[%s7 + $0xd8] sm:$0xff]
        %v2449 = vld [vmem:[%s7 + $0xe0] sm:$0xff]
        %v2450 = vld [vmem:[%s7 + $0xe8] sm:$0xff]
        %v2451 = vld [vmem:[%s7 + $0xf0] sm:$0xff]
        %v2452 = vld [vmem:[%s7 + $0xf8] sm:$0xff]
        %2453 = vmatprep.subr.mxu0 0.0
        %2454 = vmatpush1.msra.mxu0 %v2452
        %2455 = vmatprep.subr.mxu0 0.0
        %2456 = vmatpush1.msra.mxu0 %v2451
        %2457 = vmatprep.subr.mxu0 0.0
        %2458 = vmatpush1.msra.mxu0 %v2450
        %2459 = vmatprep.subr.mxu0 0.0
        %2460 = vmatpush1.msra.mxu0 %v2449
        %2461 = vmatprep.subr.mxu0 0.0
        %2462 = vmatpush1.msra.mxu0 %v2448
        %2463 = vmatprep.subr.mxu0 0.0
        %2464 = vmatpush1.msra.mxu0 %v2447
        %2465 = vmatprep.subr.mxu0 0.0
        %2466 = vmatpush1.msra.mxu0 %v2446
        %2467 = vmatprep.subr.mxu0 0.0
        %2468 = vmatpush1.msra.mxu0 %v2445
        %2469 = vmatprep.subr.mxu0 0.0
        %2470 = vmatpush1.msra.mxu0 %v2444
        %2471 = vmatprep.subr.mxu0 0.0
        %2472 = vmatpush1.msra.mxu0 %v2443
        %2473 = vmatprep.subr.mxu0 0.0
        %2474 = vmatpush1.msra.mxu0 %v2442
        %2475 = vmatprep.subr.mxu0 0.0
        %2476 = vmatpush1.msra.mxu0 %v2441
        %2477 = vmatprep.subr.mxu0 0.0
        %2478 = vmatpush1.msra.mxu0 %v2440
        %2479 = vmatprep.subr.mxu0 0.0
        %2480 = vmatpush1.msra.mxu0 %v2439
        %2481 = vmatprep.subr.mxu0 0.0
        %2482 = vmatpush1.msra.mxu0 %v2438
        %2483 = vmatprep.subr.mxu0 0.0
        %2484 = vmatpush1.msra.mxu0 %v2437
        %2485 = vmatprep.subr.mxu0 0.0
        %2486 = vmatpush2.msra.mxu0 0.0
        %2487 = vmatprep.subr.mxu0 0.0
        %2488 = vmatpush2.msra.mxu0 0.0
        %2489 = vmatprep.subr.mxu0 0.0
        %2490 = vmatpush2.msra.mxu0 0.0
        %2491 = vmatprep.subr.mxu0 0.0
        %2492 = vmatpush2.msra.mxu0 0.0
        %2493 = vmatprep.subr.mxu0 0.0
        %2494 = vmatpush2.msra.mxu0 0.0
        %2495 = vmatprep.subr.mxu0 0.0
        %2496 = vmatpush2.msra.mxu0 0.0
        %2497 = vmatprep.subr.mxu0 0.0
        %2498 = vmatpush2.msra.mxu0 0.0
        %2499 = vmatprep.subr.mxu0 0.0
        %2500 = vmatpush2.msra.mxu0 0.0
        %2501 = vmatprep.subr.mxu0 0.0
        %2502 = vmatpush2.msra.mxu0 0.0
        %2503 = vmatprep.subr.mxu0 0.0
        %2504 = vmatpush2.msra.mxu0 0.0
        %2505 = vmatprep.subr.mxu0 0.0
        %2506 = vmatpush2.msra.mxu0 0.0
        %2507 = vmatprep.subr.mxu0 0.0
        %2508 = vmatpush2.msra.mxu0 0.0
        %2509 = vmatprep.subr.mxu0 0.0
        %2510 = vmatpush2.msra.mxu0 0.0
        %2511 = vmatprep.subr.mxu0 0.0
        %2512 = vmatpush2.msra.mxu0 0.0
        %2513 = vmatprep.subr.mxu0 0.0
        %2514 = vmatpush2.msra.mxu0 0.0
        %2515 = vmatprep.subr.mxu0 0.0
        %2516 = vmatpush2.msra.mxu0 0.0
        %2517 = vmatprep.mubr.f32.mxu0 0.0
        %2518 = vmatmul.mubr.f32.gmra.mxu0 %v2244
        %v2519 = vpop.f32.mrf.mxu0
        %v2520 = vadd.f32 0.0, %v2519
        %v2521 = vpop.f32.mrf.mxu0
        %2522 = vmatprep.mubr.f32.mxu0 0.0
        %2523 = vmatmul.mubr.f32.gmra.mxu0 %v2245
        %v2524 = vpop.f32.mrf.mxu0
        %v2525 = vadd.f32 0.0, %v2524
        %v2526 = vpop.f32.mrf.mxu0
        %2527 = vmatprep.mubr.f32.mxu0 0.0
        %2528 = vmatmul.mubr.f32.gmra.mxu0 %v2246
        %v2529 = vpop.f32.mrf.mxu0
        %v2530 = vadd.f32 0.0, %v2529
        %v2531 = vpop.f32.mrf.mxu0
        %2532 = vmatprep.mubr.f32.mxu0 0.0
        %2533 = vmatmul.mubr.f32.gmra.mxu0 %v2247
        %v2534 = vpop.f32.mrf.mxu0
        %v2535 = vadd.f32 0.0, %v2534
        %v2536 = vpop.f32.mrf.mxu0
        %2537 = vmatprep.mubr.f32.mxu0 0.0
        %2538 = vmatmul.mubr.f32.gmra.mxu0 %v2248
        %v2539 = vpop.f32.mrf.mxu0
        %v2540 = vadd.f32 0.0, %v2539
        %v2541 = vpop.f32.mrf.mxu0
        %2542 = vmatprep.mubr.f32.mxu0 0.0
        %2543 = vmatmul.mubr.f32.gmra.mxu0 %v2249
        %v2544 = vpop.f32.mrf.mxu0
        %v2545 = vadd.f32 0.0, %v2544
        %v2546 = vpop.f32.mrf.mxu0
        %2547 = vmatprep.mubr.f32.mxu0 0.0
        %2548 = vmatmul.mubr.f32.gmra.mxu0 %v2250
        %v2549 = vpop.f32.mrf.mxu0
        %v2550 = vadd.f32 0.0, %v2549
        %v2551 = vpop.f32.mrf.mxu0
        %2552 = vmatprep.mubr.f32.mxu0 0.0
        %2553 = vmatmul.mubr.f32.gmra.mxu0 %v2251
        %v2554 = vpop.f32.mrf.mxu0
        %v2555 = vadd.f32 0.0, %v2554
        %v2556 = vpop.f32.mrf.mxu0
        %2557 = vmatprep.mubr.f32.mxu0 0.0
        %2558 = vmatmul.mubr.f32.gmra.mxu0 %v2252
        %v2559 = vpop.f32.mrf.mxu0
        %v2560 = vadd.f32 0.0, %v2559
        %v2561 = vpop.f32.mrf.mxu0
        %2562 = vmatprep.mubr.f32.mxu0 0.0
        %2563 = vmatmul.mubr.f32.gmra.mxu0 %v2253
        %v2564 = vpop.f32.mrf.mxu0
        %v2565 = vadd.f32 0.0, %v2564
        %v2566 = vpop.f32.mrf.mxu0
        %2567 = vmatprep.mubr.f32.mxu0 0.0
        %2568 = vmatmul.mubr.f32.gmra.mxu0 %v2254
        %v2569 = vpop.f32.mrf.mxu0
        %v2570 = vadd.f32 0.0, %v2569
        %v2571 = vpop.f32.mrf.mxu0
        %2572 = vmatprep.mubr.f32.mxu0 0.0
        %2573 = vmatmul.mubr.f32.gmra.mxu0 %v2255
        %v2574 = vpop.f32.mrf.mxu0
        %v2575 = vadd.f32 0.0, %v2574
        %v2576 = vpop.f32.mrf.mxu0
        %2577 = vmatprep.mubr.f32.mxu0 0.0
        %2578 = vmatmul.mubr.f32.gmra.mxu0 %v2256
        %v2579 = vpop.f32.mrf.mxu0
        %v2580 = vadd.f32 0.0, %v2579
        %v2581 = vpop.f32.mrf.mxu0
        %2582 = vmatprep.mubr.f32.mxu0 0.0
        %2583 = vmatmul.mubr.f32.gmra.mxu0 %v2257
        %v2584 = vpop.f32.mrf.mxu0
        %v2585 = vadd.f32 0.0, %v2584
        %v2586 = vpop.f32.mrf.mxu0
        %2587 = vmatprep.mubr.f32.mxu0 0.0
        %2588 = vmatmul.mubr.f32.gmra.mxu0 %v2258
        %v2589 = vpop.f32.mrf.mxu0
        %v2590 = vadd.f32 0.0, %v2589
        %v2591 = vpop.f32.mrf.mxu0
        %2592 = vmatprep.mubr.f32.mxu0 0.0
        %2593 = vmatmul.mubr.f32.gmra.mxu0 %v2259
        %v2594 = vpop.f32.mrf.mxu0
        %v2595 = vadd.f32 0.0, %v2594
        %v2596 = vpop.f32.mrf.mxu0
        %2597 = vdwg.mxu0
        %v2598 = vld [vmem:[%s2 + $0x8] sm:$0xff]
        %v2599 = vld [vmem:[%s2 + $0x28] sm:$0xff]
        %v2600 = vld [vmem:[%s2 + $0x48] sm:$0xff]
        %v2601 = vld [vmem:[%s2 + $0x68] sm:$0xff]
        %v2602 = vld [vmem:[%s2 + $0x88] sm:$0xff]
        %v2603 = vld [vmem:[%s2 + $0xa8] sm:$0xff]
        %v2604 = vld [vmem:[%s2 + $0xc8] sm:$0xff]
        %v2605 = vld [vmem:[%s2 + $0xe8] sm:$0xff]
        %v2606 = vld [vmem:[%s2 + $0x108] sm:$0xff]
        %v2607 = vld [vmem:[%s2 + $0x128] sm:$0xff]
        %v2608 = vld [vmem:[%s2 + $0x148] sm:$0xff]
        %v2609 = vld [vmem:[%s2 + $0x168] sm:$0xff]
        %v2610 = vld [vmem:[%s2 + $0x188] sm:$0xff]
        %v2611 = vld [vmem:[%s2 + $0x1a8] sm:$0xff]
        %v2612 = vld [vmem:[%s2 + $0x1c8] sm:$0xff]
        %v2613 = vld [vmem:[%s2 + $0x1e8] sm:$0xff]
        %2614 = vmatprep.subr.mxu0 0.0
        %2615 = vmatpush1.msra.mxu0 %v2595
        %2616 = vmatprep.subr.mxu0 0.0
        %2617 = vmatpush1.msra.mxu0 %v2590
        %2618 = vmatprep.subr.mxu0 0.0
        %2619 = vmatpush1.msra.mxu0 %v2585
        %2620 = vmatprep.subr.mxu0 0.0
        %2621 = vmatpush1.msra.mxu0 %v2580
        %2622 = vmatprep.subr.mxu0 0.0
        %2623 = vmatpush1.msra.mxu0 %v2575
        %2624 = vmatprep.subr.mxu0 0.0
        %2625 = vmatpush1.msra.mxu0 %v2570
        %2626 = vmatprep.subr.mxu0 0.0
        %2627 = vmatpush1.msra.mxu0 %v2565
        %2628 = vmatprep.subr.mxu0 0.0
        %2629 = vmatpush1.msra.mxu0 %v2560
        %2630 = vmatprep.subr.mxu0 0.0
        %2631 = vmatpush1.msra.mxu0 %v2555
        %2632 = vmatprep.subr.mxu0 0.0
        %2633 = vmatpush1.msra.mxu0 %v2550
        %2634 = vmatprep.subr.mxu0 0.0
        %2635 = vmatpush1.msra.mxu0 %v2545
        %2636 = vmatprep.subr.mxu0 0.0
        %2637 = vmatpush1.msra.mxu0 %v2540
        %2638 = vmatprep.subr.mxu0 0.0
        %2639 = vmatpush1.msra.mxu0 %v2535
        %2640 = vmatprep.subr.mxu0 0.0
        %2641 = vmatpush1.msra.mxu0 %v2530
        %2642 = vmatprep.subr.mxu0 0.0
        %2643 = vmatpush1.msra.mxu0 %v2525
        %2644 = vmatprep.subr.mxu0 0.0
        %2645 = vmatpush1.msra.mxu0 %v2520
        %2646 = vmatprep.subr.mxu0 0.0
        %2647 = vmatpush2.msra.mxu0 0.0
        %2648 = vmatprep.subr.mxu0 0.0
        %2649 = vmatpush2.msra.mxu0 0.0
        %2650 = vmatprep.subr.mxu0 0.0
        %2651 = vmatpush2.msra.mxu0 0.0
        %2652 = vmatprep.subr.mxu0 0.0
        %2653 = vmatpush2.msra.mxu0 0.0
        %2654 = vmatprep.subr.mxu0 0.0
        %2655 = vmatpush2.msra.mxu0 0.0
        %2656 = vmatprep.subr.mxu0 0.0
        %2657 = vmatpush2.msra.mxu0 0.0
        %2658 = vmatprep.subr.mxu0 0.0
        %2659 = vmatpush2.msra.mxu0 0.0
        %2660 = vmatprep.subr.mxu0 0.0
        %2661 = vmatpush2.msra.mxu0 0.0
        %2662 = vmatprep.subr.mxu0 0.0
        %2663 = vmatpush2.msra.mxu0 0.0
        %2664 = vmatprep.subr.mxu0 0.0
        %2665 = vmatpush2.msra.mxu0 0.0
        %2666 = vmatprep.subr.mxu0 0.0
        %2667 = vmatpush2.msra.mxu0 0.0
        %2668 = vmatprep.subr.mxu0 0.0
        %2669 = vmatpush2.msra.mxu0 0.0
        %2670 = vmatprep.subr.mxu0 0.0
        %2671 = vmatpush2.msra.mxu0 0.0
        %2672 = vmatprep.subr.mxu0 0.0
        %2673 = vmatpush2.msra.mxu0 0.0
        %2674 = vmatprep.subr.mxu0 0.0
        %2675 = vmatpush2.msra.mxu0 0.0
        %2676 = vmatprep.subr.mxu0 0.0
        %2677 = vmatpush2.msra.mxu0 0.0
        %2678 = vmatprep.mubr.f32.mxu0 0.0
        %2679 = vmatmul.mubr.f32.gmra.mxu0 %v2598
        %v2680 = vpop.f32.mrf.mxu0
        %v2681 = vadd.f32 0.0, %v2680
        %v2682 = vpop.f32.mrf.mxu0
        %2683 = vmatprep.mubr.f32.mxu0 0.0
        %2684 = vmatmul.mubr.f32.gmra.mxu0 %v2599
        %v2685 = vpop.f32.mrf.mxu0
        %v2686 = vadd.f32 0.0, %v2685
        %v2687 = vpop.f32.mrf.mxu0
        %2688 = vmatprep.mubr.f32.mxu0 0.0
        %2689 = vmatmul.mubr.f32.gmra.mxu0 %v2600
        %v2690 = vpop.f32.mrf.mxu0
        %v2691 = vadd.f32 0.0, %v2690
        %v2692 = vpop.f32.mrf.mxu0
        %2693 = vmatprep.mubr.f32.mxu0 0.0
        %2694 = vmatmul.mubr.f32.gmra.mxu0 %v2601
        %v2695 = vpop.f32.mrf.mxu0
        %v2696 = vadd.f32 0.0, %v2695
        %v2697 = vpop.f32.mrf.mxu0
        %2698 = vmatprep.mubr.f32.mxu0 0.0
        %2699 = vmatmul.mubr.f32.gmra.mxu0 %v2602
        %v2700 = vpop.f32.mrf.mxu0
        %v2701 = vadd.f32 0.0, %v2700
        %v2702 = vpop.f32.mrf.mxu0
        %2703 = vmatprep.mubr.f32.mxu0 0.0
        %2704 = vmatmul.mubr.f32.gmra.mxu0 %v2603
        %v2705 = vpop.f32.mrf.mxu0
        %v2706 = vadd.f32 0.0, %v2705
        %v2707 = vpop.f32.mrf.mxu0
        %2708 = vmatprep.mubr.f32.mxu0 0.0
        %2709 = vmatmul.mubr.f32.gmra.mxu0 %v2604
        %v2710 = vpop.f32.mrf.mxu0
        %v2711 = vadd.f32 0.0, %v2710
        %v2712 = vpop.f32.mrf.mxu0
        %2713 = vmatprep.mubr.f32.mxu0 0.0
        %2714 = vmatmul.mubr.f32.gmra.mxu0 %v2605
        %v2715 = vpop.f32.mrf.mxu0
        %v2716 = vadd.f32 0.0, %v2715
        %v2717 = vpop.f32.mrf.mxu0
        %2718 = vmatprep.mubr.f32.mxu0 0.0
        %2719 = vmatmul.mubr.f32.gmra.mxu0 %v2606
        %v2720 = vpop.f32.mrf.mxu0
        %v2721 = vadd.f32 0.0, %v2720
        %v2722 = vpop.f32.mrf.mxu0
        %2723 = vmatprep.mubr.f32.mxu0 0.0
        %2724 = vmatmul.mubr.f32.gmra.mxu0 %v2607
        %v2725 = vpop.f32.mrf.mxu0
        %v2726 = vadd.f32 0.0, %v2725
        %v2727 = vpop.f32.mrf.mxu0
        %2728 = vmatprep.mubr.f32.mxu0 0.0
        %2729 = vmatmul.mubr.f32.gmra.mxu0 %v2608
        %v2730 = vpop.f32.mrf.mxu0
        %v2731 = vadd.f32 0.0, %v2730
        %v2732 = vpop.f32.mrf.mxu0
        %2733 = vmatprep.mubr.f32.mxu0 0.0
        %2734 = vmatmul.mubr.f32.gmra.mxu0 %v2609
        %v2735 = vpop.f32.mrf.mxu0
        %v2736 = vadd.f32 0.0, %v2735
        %v2737 = vpop.f32.mrf.mxu0
        %2738 = vmatprep.mubr.f32.mxu0 0.0
        %2739 = vmatmul.mubr.f32.gmra.mxu0 %v2610
        %v2740 = vpop.f32.mrf.mxu0
        %v2741 = vadd.f32 0.0, %v2740
        %v2742 = vpop.f32.mrf.mxu0
        %2743 = vmatprep.mubr.f32.mxu0 0.0
        %2744 = vmatmul.mubr.f32.gmra.mxu0 %v2611
        %v2745 = vpop.f32.mrf.mxu0
        %v2746 = vadd.f32 0.0, %v2745
        %v2747 = vpop.f32.mrf.mxu0
        %2748 = vmatprep.mubr.f32.mxu0 0.0
        %2749 = vmatmul.mubr.f32.gmra.mxu0 %v2612
        %v2750 = vpop.f32.mrf.mxu0
        %v2751 = vadd.f32 0.0, %v2750
        %v2752 = vpop.f32.mrf.mxu0
        %2753 = vmatprep.mubr.f32.mxu0 0.0
        %2754 = vmatmul.mubr.f32.gmra.mxu0 %v2613
        %v2755 = vpop.f32.mrf.mxu0
        %v2756 = vadd.f32 0.0, %v2755
        %v2757 = vpop.f32.mrf.mxu0
        %2758 = vdwg.mxu0
        %2759 = vmatprep.subr.mxu0 0.0
        %2760 = vmatpush1.msra.mxu0 %v2418
        %2761 = vmatprep.subr.mxu0 0.0
        %2762 = vmatpush1.msra.mxu0 %v2413
        %2763 = vmatprep.subr.mxu0 0.0
        %2764 = vmatpush1.msra.mxu0 %v2408
        %2765 = vmatprep.subr.mxu0 0.0
        %2766 = vmatpush1.msra.mxu0 %v2403
        %2767 = vmatprep.subr.mxu0 0.0
        %2768 = vmatpush1.msra.mxu0 %v2398
        %2769 = vmatprep.subr.mxu0 0.0
        %2770 = vmatpush1.msra.mxu0 %v2393
        %2771 = vmatprep.subr.mxu0 0.0
        %2772 = vmatpush1.msra.mxu0 %v2388
        %2773 = vmatprep.subr.mxu0 0.0
        %2774 = vmatpush1.msra.mxu0 %v2383
        %2775 = vmatprep.subr.mxu0 0.0
        %2776 = vmatpush1.msra.mxu0 %v2378
        %2777 = vmatprep.subr.mxu0 0.0
        %2778 = vmatpush1.msra.mxu0 %v2373
        %2779 = vmatprep.subr.mxu0 0.0
        %2780 = vmatpush1.msra.mxu0 %v2368
        %2781 = vmatprep.subr.mxu0 0.0
        %2782 = vmatpush1.msra.mxu0 %v2363
        %2783 = vmatprep.subr.mxu0 0.0
        %2784 = vmatpush1.msra.mxu0 %v2358
        %2785 = vmatprep.subr.mxu0 0.0
        %2786 = vmatpush1.msra.mxu0 %v2353
        %2787 = vmatprep.subr.mxu0 0.0
        %2788 = vmatpush1.msra.mxu0 %v2348
        %2789 = vmatprep.subr.mxu0 0.0
        %2790 = vmatpush1.msra.mxu0 %v2343
        %2791 = vmatprep.subr.mxu0 0.0
        %2792 = vmatpush2.msra.mxu0 0.0
        %2793 = vmatprep.subr.mxu0 0.0
        %2794 = vmatpush2.msra.mxu0 0.0
        %2795 = vmatprep.subr.mxu0 0.0
        %2796 = vmatpush2.msra.mxu0 0.0
        %2797 = vmatprep.subr.mxu0 0.0
        %2798 = vmatpush2.msra.mxu0 0.0
        %2799 = vmatprep.subr.mxu0 0.0
        %2800 = vmatpush2.msra.mxu0 0.0
        %2801 = vmatprep.subr.mxu0 0.0
        %2802 = vmatpush2.msra.mxu0 0.0
        %2803 = vmatprep.subr.mxu0 0.0
        %2804 = vmatpush2.msra.mxu0 0.0
        %2805 = vmatprep.subr.mxu0 0.0
        %2806 = vmatpush2.msra.mxu0 0.0
        %2807 = vmatprep.subr.mxu0 0.0
        %2808 = vmatpush2.msra.mxu0 0.0
        %2809 = vmatprep.subr.mxu0 0.0
        %2810 = vmatpush2.msra.mxu0 0.0
        %2811 = vmatprep.subr.mxu0 0.0
        %2812 = vmatpush2.msra.mxu0 0.0
        %2813 = vmatprep.subr.mxu0 0.0
        %2814 = vmatpush2.msra.mxu0 0.0
        %2815 = vmatprep.subr.mxu0 0.0
        %2816 = vmatpush2.msra.mxu0 0.0
        %2817 = vmatprep.subr.mxu0 0.0
        %2818 = vmatpush2.msra.mxu0 0.0
        %2819 = vmatprep.subr.mxu0 0.0
        %2820 = vmatpush2.msra.mxu0 0.0
        %2821 = vmatprep.subr.mxu0 0.0
        %2822 = vmatpush2.msra.mxu0 0.0
        %2823 = vmatprep.mubr.f32.mxu0 0.0
        %2824 = vmatmul.mubr.f32.gmra.mxu0 %v2421
        %v2825 = vpop.f32.mrf.mxu0
        %v2826 = vadd.f32 %v2681, %v2825
        %v2827 = vpop.f32.mrf.mxu0
        %2828 = vmatprep.mubr.f32.mxu0 0.0
        %2829 = vmatmul.mubr.f32.gmra.mxu0 %v2422
        %v2830 = vpop.f32.mrf.mxu0
        %v2831 = vadd.f32 %v2686, %v2830
        %v2832 = vpop.f32.mrf.mxu0
        %2833 = vmatprep.mubr.f32.mxu0 0.0
        %2834 = vmatmul.mubr.f32.gmra.mxu0 %v2423
        %v2835 = vpop.f32.mrf.mxu0
        %v2836 = vadd.f32 %v2691, %v2835
        %v2837 = vpop.f32.mrf.mxu0
        %2838 = vmatprep.mubr.f32.mxu0 0.0
        %2839 = vmatmul.mubr.f32.gmra.mxu0 %v2424
        %v2840 = vpop.f32.mrf.mxu0
        %v2841 = vadd.f32 %v2696, %v2840
        %v2842 = vpop.f32.mrf.mxu0
        %2843 = vmatprep.mubr.f32.mxu0 0.0
        %2844 = vmatmul.mubr.f32.gmra.mxu0 %v2425
        %v2845 = vpop.f32.mrf.mxu0
        %v2846 = vadd.f32 %v2701, %v2845
        %v2847 = vpop.f32.mrf.mxu0
        %2848 = vmatprep.mubr.f32.mxu0 0.0
        %2849 = vmatmul.mubr.f32.gmra.mxu0 %v2426
        %v2850 = vpop.f32.mrf.mxu0
        %v2851 = vadd.f32 %v2706, %v2850
        %v2852 = vpop.f32.mrf.mxu0
        %2853 = vmatprep.mubr.f32.mxu0 0.0
        %2854 = vmatmul.mubr.f32.gmra.mxu0 %v2427
        %v2855 = vpop.f32.mrf.mxu0
        %v2856 = vadd.f32 %v2711, %v2855
        %v2857 = vpop.f32.mrf.mxu0
        %2858 = vmatprep.mubr.f32.mxu0 0.0
        %2859 = vmatmul.mubr.f32.gmra.mxu0 %v2428
        %v2860 = vpop.f32.mrf.mxu0
        %v2861 = vadd.f32 %v2716, %v2860
        %v2862 = vpop.f32.mrf.mxu0
        %2863 = vmatprep.mubr.f32.mxu0 0.0
        %2864 = vmatmul.mubr.f32.gmra.mxu0 %v2429
        %v2865 = vpop.f32.mrf.mxu0
        %v2866 = vadd.f32 %v2721, %v2865
        %v2867 = vpop.f32.mrf.mxu0
        %2868 = vmatprep.mubr.f32.mxu0 0.0
        %2869 = vmatmul.mubr.f32.gmra.mxu0 %v2430
        %v2870 = vpop.f32.mrf.mxu0
        %v2871 = vadd.f32 %v2726, %v2870
        %v2872 = vpop.f32.mrf.mxu0
        %2873 = vmatprep.mubr.f32.mxu0 0.0
        %2874 = vmatmul.mubr.f32.gmra.mxu0 %v2431
        %v2875 = vpop.f32.mrf.mxu0
        %v2876 = vadd.f32 %v2731, %v2875
        %v2877 = vpop.f32.mrf.mxu0
        %2878 = vmatprep.mubr.f32.mxu0 0.0
        %2879 = vmatmul.mubr.f32.gmra.mxu0 %v2432
        %v2880 = vpop.f32.mrf.mxu0
        %v2881 = vadd.f32 %v2736, %v2880
        %v2882 = vpop.f32.mrf.mxu0
        %2883 = vmatprep.mubr.f32.mxu0 0.0
        %2884 = vmatmul.mubr.f32.gmra.mxu0 %v2433
        %v2885 = vpop.f32.mrf.mxu0
        %v2886 = vadd.f32 %v2741, %v2885
        %v2887 = vpop.f32.mrf.mxu0
        %2888 = vmatprep.mubr.f32.mxu0 0.0
        %2889 = vmatmul.mubr.f32.gmra.mxu0 %v2434
        %v2890 = vpop.f32.mrf.mxu0
        %v2891 = vadd.f32 %v2746, %v2890
        %v2892 = vpop.f32.mrf.mxu0
        %2893 = vmatprep.mubr.f32.mxu0 0.0
        %2894 = vmatmul.mubr.f32.gmra.mxu0 %v2435
        %v2895 = vpop.f32.mrf.mxu0
        %v2896 = vadd.f32 %v2751, %v2895
        %v2897 = vpop.f32.mrf.mxu0
        %2898 = vmatprep.mubr.f32.mxu0 0.0
        %2899 = vmatmul.mubr.f32.gmra.mxu0 %v2436
        %v2900 = vpop.f32.mrf.mxu0
        %v2901 = vadd.f32 %v2756, %v2900
        %v2902 = vpop.f32.mrf.mxu0
        %2903 = vdwg.mxu0
        %v2904 = vld [vmem:[%s7 + $0x100] sm:$0xff]
        %v2905 = vld [vmem:[%s7 + $0x108] sm:$0xff]
        %v2906 = vld [vmem:[%s7 + $0x110] sm:$0xff]
        %v2907 = vld [vmem:[%s7 + $0x118] sm:$0xff]
        %v2908 = vld [vmem:[%s7 + $0x120] sm:$0xff]
        %v2909 = vld [vmem:[%s7 + $0x128] sm:$0xff]
        %v2910 = vld [vmem:[%s7 + $0x130] sm:$0xff]
        %v2911 = vld [vmem:[%s7 + $0x138] sm:$0xff]
        %v2912 = vld [vmem:[%s7 + $0x140] sm:$0xff]
        %v2913 = vld [vmem:[%s7 + $0x148] sm:$0xff]
        %v2914 = vld [vmem:[%s7 + $0x150] sm:$0xff]
        %v2915 = vld [vmem:[%s7 + $0x158] sm:$0xff]
        %v2916 = vld [vmem:[%s7 + $0x160] sm:$0xff]
        %v2917 = vld [vmem:[%s7 + $0x168] sm:$0xff]
        %v2918 = vld [vmem:[%s7 + $0x170] sm:$0xff]
        %v2919 = vld [vmem:[%s7 + $0x178] sm:$0xff]
        %2920 = vmatprep.subr.mxu0 0.0
        %2921 = vmatpush1.msra.mxu0 %v2919
        %2922 = vmatprep.subr.mxu0 0.0
        %2923 = vmatpush1.msra.mxu0 %v2918
        %2924 = vmatprep.subr.mxu0 0.0
        %2925 = vmatpush1.msra.mxu0 %v2917
        %2926 = vmatprep.subr.mxu0 0.0
        %2927 = vmatpush1.msra.mxu0 %v2916
        %2928 = vmatprep.subr.mxu0 0.0
        %2929 = vmatpush1.msra.mxu0 %v2915
        %2930 = vmatprep.subr.mxu0 0.0
        %2931 = vmatpush1.msra.mxu0 %v2914
        %2932 = vmatprep.subr.mxu0 0.0
        %2933 = vmatpush1.msra.mxu0 %v2913
        %2934 = vmatprep.subr.mxu0 0.0
        %2935 = vmatpush1.msra.mxu0 %v2912
        %2936 = vmatprep.subr.mxu0 0.0
        %2937 = vmatpush1.msra.mxu0 %v2911
        %2938 = vmatprep.subr.mxu0 0.0
        %2939 = vmatpush1.msra.mxu0 %v2910
        %2940 = vmatprep.subr.mxu0 0.0
        %2941 = vmatpush1.msra.mxu0 %v2909
        %2942 = vmatprep.subr.mxu0 0.0
        %2943 = vmatpush1.msra.mxu0 %v2908
        %2944 = vmatprep.subr.mxu0 0.0
        %2945 = vmatpush1.msra.mxu0 %v2907
        %2946 = vmatprep.subr.mxu0 0.0
        %2947 = vmatpush1.msra.mxu0 %v2906
        %2948 = vmatprep.subr.mxu0 0.0
        %2949 = vmatpush1.msra.mxu0 %v2905
        %2950 = vmatprep.subr.mxu0 0.0
        %2951 = vmatpush1.msra.mxu0 %v2904
        %2952 = vmatprep.subr.mxu0 0.0
        %2953 = vmatpush2.msra.mxu0 0.0
        %2954 = vmatprep.subr.mxu0 0.0
        %2955 = vmatpush2.msra.mxu0 0.0
        %2956 = vmatprep.subr.mxu0 0.0
        %2957 = vmatpush2.msra.mxu0 0.0
        %2958 = vmatprep.subr.mxu0 0.0
        %2959 = vmatpush2.msra.mxu0 0.0
        %2960 = vmatprep.subr.mxu0 0.0
        %2961 = vmatpush2.msra.mxu0 0.0
        %2962 = vmatprep.subr.mxu0 0.0
        %2963 = vmatpush2.msra.mxu0 0.0
        %2964 = vmatprep.subr.mxu0 0.0
        %2965 = vmatpush2.msra.mxu0 0.0
        %2966 = vmatprep.subr.mxu0 0.0
        %2967 = vmatpush2.msra.mxu0 0.0
        %2968 = vmatprep.subr.mxu0 0.0
        %2969 = vmatpush2.msra.mxu0 0.0
        %2970 = vmatprep.subr.mxu0 0.0
        %2971 = vmatpush2.msra.mxu0 0.0
        %2972 = vmatprep.subr.mxu0 0.0
        %2973 = vmatpush2.msra.mxu0 0.0
        %2974 = vmatprep.subr.mxu0 0.0
        %2975 = vmatpush2.msra.mxu0 0.0
        %2976 = vmatprep.subr.mxu0 0.0
        %2977 = vmatpush2.msra.mxu0 0.0
        %2978 = vmatprep.subr.mxu0 0.0
        %2979 = vmatpush2.msra.mxu0 0.0
        %2980 = vmatprep.subr.mxu0 0.0
        %2981 = vmatpush2.msra.mxu0 0.0
        %2982 = vmatprep.subr.mxu0 0.0
        %2983 = vmatpush2.msra.mxu0 0.0
        %2984 = vmatprep.mubr.f32.mxu0 0.0
        %2985 = vmatmul.mubr.f32.gmra.mxu0 %v2244
        %v2986 = vpop.f32.mrf.mxu0
        %v2987 = vadd.f32 0.0, %v2986
        %v2988 = vpop.f32.mrf.mxu0
        %2989 = vmatprep.mubr.f32.mxu0 0.0
        %2990 = vmatmul.mubr.f32.gmra.mxu0 %v2245
        %v2991 = vpop.f32.mrf.mxu0
        %v2992 = vadd.f32 0.0, %v2991
        %v2993 = vpop.f32.mrf.mxu0
        %2994 = vmatprep.mubr.f32.mxu0 0.0
        %2995 = vmatmul.mubr.f32.gmra.mxu0 %v2246
        %v2996 = vpop.f32.mrf.mxu0
        %v2997 = vadd.f32 0.0, %v2996
        %v2998 = vpop.f32.mrf.mxu0
        %2999 = vmatprep.mubr.f32.mxu0 0.0
        %3000 = vmatmul.mubr.f32.gmra.mxu0 %v2247
        %v3001 = vpop.f32.mrf.mxu0
        %v3002 = vadd.f32 0.0, %v3001
        %v3003 = vpop.f32.mrf.mxu0
        %3004 = vmatprep.mubr.f32.mxu0 0.0
        %3005 = vmatmul.mubr.f32.gmra.mxu0 %v2248
        %v3006 = vpop.f32.mrf.mxu0
        %v3007 = vadd.f32 0.0, %v3006
        %v3008 = vpop.f32.mrf.mxu0
        %3009 = vmatprep.mubr.f32.mxu0 0.0
        %3010 = vmatmul.mubr.f32.gmra.mxu0 %v2249
        %v3011 = vpop.f32.mrf.mxu0
        %v3012 = vadd.f32 0.0, %v3011
        %v3013 = vpop.f32.mrf.mxu0
        %3014 = vmatprep.mubr.f32.mxu0 0.0
        %3015 = vmatmul.mubr.f32.gmra.mxu0 %v2250
        %v3016 = vpop.f32.mrf.mxu0
        %v3017 = vadd.f32 0.0, %v3016
        %v3018 = vpop.f32.mrf.mxu0
        %3019 = vmatprep.mubr.f32.mxu0 0.0
        %3020 = vmatmul.mubr.f32.gmra.mxu0 %v2251
        %v3021 = vpop.f32.mrf.mxu0
        %v3022 = vadd.f32 0.0, %v3021
        %v3023 = vpop.f32.mrf.mxu0
        %3024 = vmatprep.mubr.f32.mxu0 0.0
        %3025 = vmatmul.mubr.f32.gmra.mxu0 %v2252
        %v3026 = vpop.f32.mrf.mxu0
        %v3027 = vadd.f32 0.0, %v3026
        %v3028 = vpop.f32.mrf.mxu0
        %3029 = vmatprep.mubr.f32.mxu0 0.0
        %3030 = vmatmul.mubr.f32.gmra.mxu0 %v2253
        %v3031 = vpop.f32.mrf.mxu0
        %v3032 = vadd.f32 0.0, %v3031
        %v3033 = vpop.f32.mrf.mxu0
        %3034 = vmatprep.mubr.f32.mxu0 0.0
        %3035 = vmatmul.mubr.f32.gmra.mxu0 %v2254
        %v3036 = vpop.f32.mrf.mxu0
        %v3037 = vadd.f32 0.0, %v3036
        %v3038 = vpop.f32.mrf.mxu0
        %3039 = vmatprep.mubr.f32.mxu0 0.0
        %3040 = vmatmul.mubr.f32.gmra.mxu0 %v2255
        %v3041 = vpop.f32.mrf.mxu0
        %v3042 = vadd.f32 0.0, %v3041
        %v3043 = vpop.f32.mrf.mxu0
        %3044 = vmatprep.mubr.f32.mxu0 0.0
        %3045 = vmatmul.mubr.f32.gmra.mxu0 %v2256
        %v3046 = vpop.f32.mrf.mxu0
        %v3047 = vadd.f32 0.0, %v3046
        %v3048 = vpop.f32.mrf.mxu0
        %3049 = vmatprep.mubr.f32.mxu0 0.0
        %3050 = vmatmul.mubr.f32.gmra.mxu0 %v2257
        %v3051 = vpop.f32.mrf.mxu0
        %v3052 = vadd.f32 0.0, %v3051
        %v3053 = vpop.f32.mrf.mxu0
        %3054 = vmatprep.mubr.f32.mxu0 0.0
        %3055 = vmatmul.mubr.f32.gmra.mxu0 %v2258
        %v3056 = vpop.f32.mrf.mxu0
        %v3057 = vadd.f32 0.0, %v3056
        %v3058 = vpop.f32.mrf.mxu0
        %3059 = vmatprep.mubr.f32.mxu0 0.0
        %3060 = vmatmul.mubr.f32.gmra.mxu0 %v2259
        %v3061 = vpop.f32.mrf.mxu0
        %v3062 = vadd.f32 0.0, %v3061
        %v3063 = vpop.f32.mrf.mxu0
        %3064 = vdwg.mxu0
        %v3065 = vld [vmem:[%s2 + $0x10] sm:$0xff]
        %v3066 = vld [vmem:[%s2 + $0x30] sm:$0xff]
        %v3067 = vld [vmem:[%s2 + $0x50] sm:$0xff]
        %v3068 = vld [vmem:[%s2 + $0x70] sm:$0xff]
        %v3069 = vld [vmem:[%s2 + $0x90] sm:$0xff]
        %v3070 = vld [vmem:[%s2 + $0xb0] sm:$0xff]
        %v3071 = vld [vmem:[%s2 + $0xd0] sm:$0xff]
        %v3072 = vld [vmem:[%s2 + $0xf0] sm:$0xff]
        %v3073 = vld [vmem:[%s2 + $0x110] sm:$0xff]
        %v3074 = vld [vmem:[%s2 + $0x130] sm:$0xff]
        %v3075 = vld [vmem:[%s2 + $0x150] sm:$0xff]
        %v3076 = vld [vmem:[%s2 + $0x170] sm:$0xff]
        %v3077 = vld [vmem:[%s2 + $0x190] sm:$0xff]
        %v3078 = vld [vmem:[%s2 + $0x1b0] sm:$0xff]
        %v3079 = vld [vmem:[%s2 + $0x1d0] sm:$0xff]
        %v3080 = vld [vmem:[%s2 + $0x1f0] sm:$0xff]
        %3081 = vmatprep.subr.mxu0 0.0
        %3082 = vmatpush1.msra.mxu0 %v3062
        %3083 = vmatprep.subr.mxu0 0.0
        %3084 = vmatpush1.msra.mxu0 %v3057
        %3085 = vmatprep.subr.mxu0 0.0
        %3086 = vmatpush1.msra.mxu0 %v3052
        %3087 = vmatprep.subr.mxu0 0.0
        %3088 = vmatpush1.msra.mxu0 %v3047
        %3089 = vmatprep.subr.mxu0 0.0
        %3090 = vmatpush1.msra.mxu0 %v3042
        %3091 = vmatprep.subr.mxu0 0.0
        %3092 = vmatpush1.msra.mxu0 %v3037
        %3093 = vmatprep.subr.mxu0 0.0
        %3094 = vmatpush1.msra.mxu0 %v3032
        %3095 = vmatprep.subr.mxu0 0.0
        %3096 = vmatpush1.msra.mxu0 %v3027
        %3097 = vmatprep.subr.mxu0 0.0
        %3098 = vmatpush1.msra.mxu0 %v3022
        %3099 = vmatprep.subr.mxu0 0.0
        %3100 = vmatpush1.msra.mxu0 %v3017
        %3101 = vmatprep.subr.mxu0 0.0
        %3102 = vmatpush1.msra.mxu0 %v3012
        %3103 = vmatprep.subr.mxu0 0.0
        %3104 = vmatpush1.msra.mxu0 %v3007
        %3105 = vmatprep.subr.mxu0 0.0
        %3106 = vmatpush1.msra.mxu0 %v3002
        %3107 = vmatprep.subr.mxu0 0.0
        %3108 = vmatpush1.msra.mxu0 %v2997
        %3109 = vmatprep.subr.mxu0 0.0
        %3110 = vmatpush1.msra.mxu0 %v2992
        %3111 = vmatprep.subr.mxu0 0.0
        %3112 = vmatpush1.msra.mxu0 %v2987
        %3113 = vmatprep.subr.mxu0 0.0
        %3114 = vmatpush2.msra.mxu0 0.0
        %3115 = vmatprep.subr.mxu0 0.0
        %3116 = vmatpush2.msra.mxu0 0.0
        %3117 = vmatprep.subr.mxu0 0.0
        %3118 = vmatpush2.msra.mxu0 0.0
        %3119 = vmatprep.subr.mxu0 0.0
        %3120 = vmatpush2.msra.mxu0 0.0
        %3121 = vmatprep.subr.mxu0 0.0
        %3122 = vmatpush2.msra.mxu0 0.0
        %3123 = vmatprep.subr.mxu0 0.0
        %3124 = vmatpush2.msra.mxu0 0.0
        %3125 = vmatprep.subr.mxu0 0.0
        %3126 = vmatpush2.msra.mxu0 0.0
        %3127 = vmatprep.subr.mxu0 0.0
        %3128 = vmatpush2.msra.mxu0 0.0
        %3129 = vmatprep.subr.mxu0 0.0
        %3130 = vmatpush2.msra.mxu0 0.0
        %3131 = vmatprep.subr.mxu0 0.0
        %3132 = vmatpush2.msra.mxu0 0.0
        %3133 = vmatprep.subr.mxu0 0.0
        %3134 = vmatpush2.msra.mxu0 0.0
        %3135 = vmatprep.subr.mxu0 0.0
        %3136 = vmatpush2.msra.mxu0 0.0
        %3137 = vmatprep.subr.mxu0 0.0
        %3138 = vmatpush2.msra.mxu0 0.0
        %3139 = vmatprep.subr.mxu0 0.0
        %3140 = vmatpush2.msra.mxu0 0.0
        %3141 = vmatprep.subr.mxu0 0.0
        %3142 = vmatpush2.msra.mxu0 0.0
        %3143 = vmatprep.subr.mxu0 0.0
        %3144 = vmatpush2.msra.mxu0 0.0
        %3145 = vmatprep.mubr.f32.mxu0 0.0
        %3146 = vmatmul.mubr.f32.gmra.mxu0 %v3065
        %v3147 = vpop.f32.mrf.mxu0
        %v3148 = vadd.f32 0.0, %v3147
        %v3149 = vpop.f32.mrf.mxu0
        %3150 = vmatprep.mubr.f32.mxu0 0.0
        %3151 = vmatmul.mubr.f32.gmra.mxu0 %v3066
        %v3152 = vpop.f32.mrf.mxu0
        %v3153 = vadd.f32 0.0, %v3152
        %v3154 = vpop.f32.mrf.mxu0
        %3155 = vmatprep.mubr.f32.mxu0 0.0
        %3156 = vmatmul.mubr.f32.gmra.mxu0 %v3067
        %v3157 = vpop.f32.mrf.mxu0
        %v3158 = vadd.f32 0.0, %v3157
        %v3159 = vpop.f32.mrf.mxu0
        %3160 = vmatprep.mubr.f32.mxu0 0.0
        %3161 = vmatmul.mubr.f32.gmra.mxu0 %v3068
        %v3162 = vpop.f32.mrf.mxu0
        %v3163 = vadd.f32 0.0, %v3162
        %v3164 = vpop.f32.mrf.mxu0
        %3165 = vmatprep.mubr.f32.mxu0 0.0
        %3166 = vmatmul.mubr.f32.gmra.mxu0 %v3069
        %v3167 = vpop.f32.mrf.mxu0
        %v3168 = vadd.f32 0.0, %v3167
        %v3169 = vpop.f32.mrf.mxu0
        %3170 = vmatprep.mubr.f32.mxu0 0.0
        %3171 = vmatmul.mubr.f32.gmra.mxu0 %v3070
        %v3172 = vpop.f32.mrf.mxu0
        %v3173 = vadd.f32 0.0, %v3172
        %v3174 = vpop.f32.mrf.mxu0
        %3175 = vmatprep.mubr.f32.mxu0 0.0
        %3176 = vmatmul.mubr.f32.gmra.mxu0 %v3071
        %v3177 = vpop.f32.mrf.mxu0
        %v3178 = vadd.f32 0.0, %v3177
        %v3179 = vpop.f32.mrf.mxu0
        %3180 = vmatprep.mubr.f32.mxu0 0.0
        %3181 = vmatmul.mubr.f32.gmra.mxu0 %v3072
        %v3182 = vpop.f32.mrf.mxu0
        %v3183 = vadd.f32 0.0, %v3182
        %v3184 = vpop.f32.mrf.mxu0
        %3185 = vmatprep.mubr.f32.mxu0 0.0
        %3186 = vmatmul.mubr.f32.gmra.mxu0 %v3073
        %v3187 = vpop.f32.mrf.mxu0
        %v3188 = vadd.f32 0.0, %v3187
        %v3189 = vpop.f32.mrf.mxu0
        %3190 = vmatprep.mubr.f32.mxu0 0.0
        %3191 = vmatmul.mubr.f32.gmra.mxu0 %v3074
        %v3192 = vpop.f32.mrf.mxu0
        %v3193 = vadd.f32 0.0, %v3192
        %v3194 = vpop.f32.mrf.mxu0
        %3195 = vmatprep.mubr.f32.mxu0 0.0
        %3196 = vmatmul.mubr.f32.gmra.mxu0 %v3075
        %v3197 = vpop.f32.mrf.mxu0
        %v3198 = vadd.f32 0.0, %v3197
        %v3199 = vpop.f32.mrf.mxu0
        %3200 = vmatprep.mubr.f32.mxu0 0.0
        %3201 = vmatmul.mubr.f32.gmra.mxu0 %v3076
        %v3202 = vpop.f32.mrf.mxu0
        %v3203 = vadd.f32 0.0, %v3202
        %v3204 = vpop.f32.mrf.mxu0
        %3205 = vmatprep.mubr.f32.mxu0 0.0
        %3206 = vmatmul.mubr.f32.gmra.mxu0 %v3077
        %v3207 = vpop.f32.mrf.mxu0
        %v3208 = vadd.f32 0.0, %v3207
        %v3209 = vpop.f32.mrf.mxu0
        %3210 = vmatprep.mubr.f32.mxu0 0.0
        %3211 = vmatmul.mubr.f32.gmra.mxu0 %v3078
        %v3212 = vpop.f32.mrf.mxu0
        %v3213 = vadd.f32 0.0, %v3212
        %v3214 = vpop.f32.mrf.mxu0
        %3215 = vmatprep.mubr.f32.mxu0 0.0
        %3216 = vmatmul.mubr.f32.gmra.mxu0 %v3079
        %v3217 = vpop.f32.mrf.mxu0
        %v3218 = vadd.f32 0.0, %v3217
        %v3219 = vpop.f32.mrf.mxu0
        %3220 = vmatprep.mubr.f32.mxu0 0.0
        %3221 = vmatmul.mubr.f32.gmra.mxu0 %v3080
        %v3222 = vpop.f32.mrf.mxu0
        %v3223 = vadd.f32 0.0, %v3222
        %v3224 = vpop.f32.mrf.mxu0
        %3225 = vdwg.mxu0
        %v3226 = vadd.f32 %v2826, %v3148
        %v3227 = vadd.f32 %v2831, %v3153
        %v3228 = vadd.f32 %v2836, %v3158
        %v3229 = vadd.f32 %v2841, %v3163
        %v3230 = vadd.f32 %v2846, %v3168
        %v3231 = vadd.f32 %v2851, %v3173
        %v3232 = vadd.f32 %v2856, %v3178
        %v3233 = vadd.f32 %v2861, %v3183
        %v3234 = vadd.f32 %v2866, %v3188
        %v3235 = vadd.f32 %v2871, %v3193
        %v3236 = vadd.f32 %v2876, %v3198
        %v3237 = vadd.f32 %v2881, %v3203
        %v3238 = vadd.f32 %v2886, %v3208
        %v3239 = vadd.f32 %v2891, %v3213
        %v3240 = vadd.f32 %v2896, %v3218
        %v3241 = vadd.f32 %v2901, %v3223
        %v3242 = vld [vmem:[%s7 + $0x180] sm:$0xff]
        %v3243 = vld [vmem:[%s7 + $0x188] sm:$0xff]
        %v3244 = vld [vmem:[%s7 + $0x190] sm:$0xff]
        %v3245 = vld [vmem:[%s7 + $0x198] sm:$0xff]
        %v3246 = vld [vmem:[%s7 + $0x1a0] sm:$0xff]
        %v3247 = vld [vmem:[%s7 + $0x1a8] sm:$0xff]
        %v3248 = vld [vmem:[%s7 + $0x1b0] sm:$0xff]
        %v3249 = vld [vmem:[%s7 + $0x1b8] sm:$0xff]
        %v3250 = vld [vmem:[%s7 + $0x1c0] sm:$0xff]
        %v3251 = vld [vmem:[%s7 + $0x1c8] sm:$0xff]
        %v3252 = vld [vmem:[%s7 + $0x1d0] sm:$0xff]
        %v3253 = vld [vmem:[%s7 + $0x1d8] sm:$0xff]
        %v3254 = vld [vmem:[%s7 + $0x1e0] sm:$0xff]
        %v3255 = vld [vmem:[%s7 + $0x1e8] sm:$0xff]
        %v3256 = vld [vmem:[%s7 + $0x1f0] sm:$0xff]
        %v3257 = vld [vmem:[%s7 + $0x1f8] sm:$0xff]
        %3258 = vmatprep.subr.mxu0 0.0
        %3259 = vmatpush1.msra.mxu0 %v3257
        %3260 = vmatprep.subr.mxu0 0.0
        %3261 = vmatpush1.msra.mxu0 %v3256
        %3262 = vmatprep.subr.mxu0 0.0
        %3263 = vmatpush1.msra.mxu0 %v3255
        %3264 = vmatprep.subr.mxu0 0.0
        %3265 = vmatpush1.msra.mxu0 %v3254
        %3266 = vmatprep.subr.mxu0 0.0
        %3267 = vmatpush1.msra.mxu0 %v3253
        %3268 = vmatprep.subr.mxu0 0.0
        %3269 = vmatpush1.msra.mxu0 %v3252
        %3270 = vmatprep.subr.mxu0 0.0
        %3271 = vmatpush1.msra.mxu0 %v3251
        %3272 = vmatprep.subr.mxu0 0.0
        %3273 = vmatpush1.msra.mxu0 %v3250
        %3274 = vmatprep.subr.mxu0 0.0
        %3275 = vmatpush1.msra.mxu0 %v3249
        %3276 = vmatprep.subr.mxu0 0.0
        %3277 = vmatpush1.msra.mxu0 %v3248
        %3278 = vmatprep.subr.mxu0 0.0
        %3279 = vmatpush1.msra.mxu0 %v3247
        %3280 = vmatprep.subr.mxu0 0.0
        %3281 = vmatpush1.msra.mxu0 %v3246
        %3282 = vmatprep.subr.mxu0 0.0
        %3283 = vmatpush1.msra.mxu0 %v3245
        %3284 = vmatprep.subr.mxu0 0.0
        %3285 = vmatpush1.msra.mxu0 %v3244
        %3286 = vmatprep.subr.mxu0 0.0
        %3287 = vmatpush1.msra.mxu0 %v3243
        %3288 = vmatprep.subr.mxu0 0.0
        %3289 = vmatpush1.msra.mxu0 %v3242
        %3290 = vmatprep.subr.mxu0 0.0
        %3291 = vmatpush2.msra.mxu0 0.0
        %3292 = vmatprep.subr.mxu0 0.0
        %3293 = vmatpush2.msra.mxu0 0.0
        %3294 = vmatprep.subr.mxu0 0.0
        %3295 = vmatpush2.msra.mxu0 0.0
        %3296 = vmatprep.subr.mxu0 0.0
        %3297 = vmatpush2.msra.mxu0 0.0
        %3298 = vmatprep.subr.mxu0 0.0
        %3299 = vmatpush2.msra.mxu0 0.0
        %3300 = vmatprep.subr.mxu0 0.0
        %3301 = vmatpush2.msra.mxu0 0.0
        %3302 = vmatprep.subr.mxu0 0.0
        %3303 = vmatpush2.msra.mxu0 0.0
        %3304 = vmatprep.subr.mxu0 0.0
        %3305 = vmatpush2.msra.mxu0 0.0
        %3306 = vmatprep.subr.mxu0 0.0
        %3307 = vmatpush2.msra.mxu0 0.0
        %3308 = vmatprep.subr.mxu0 0.0
        %3309 = vmatpush2.msra.mxu0 0.0
        %3310 = vmatprep.subr.mxu0 0.0
        %3311 = vmatpush2.msra.mxu0 0.0
        %3312 = vmatprep.subr.mxu0 0.0
        %3313 = vmatpush2.msra.mxu0 0.0
        %3314 = vmatprep.subr.mxu0 0.0
        %3315 = vmatpush2.msra.mxu0 0.0
        %3316 = vmatprep.subr.mxu0 0.0
        %3317 = vmatpush2.msra.mxu0 0.0
        %3318 = vmatprep.subr.mxu0 0.0
        %3319 = vmatpush2.msra.mxu0 0.0
        %3320 = vmatprep.subr.mxu0 0.0
        %3321 = vmatpush2.msra.mxu0 0.0
        %3322 = vmatprep.mubr.f32.mxu0 0.0
        %3323 = vmatmul.mubr.f32.gmra.mxu0 %v2244
        %v3324 = vpop.f32.mrf.mxu0
        %v3325 = vadd.f32 0.0, %v3324
        %v3326 = vpop.f32.mrf.mxu0
        %3327 = vmatprep.mubr.f32.mxu0 0.0
        %3328 = vmatmul.mubr.f32.gmra.mxu0 %v2245
        %v3329 = vpop.f32.mrf.mxu0
        %v3330 = vadd.f32 0.0, %v3329
        %v3331 = vpop.f32.mrf.mxu0
        %3332 = vmatprep.mubr.f32.mxu0 0.0
        %3333 = vmatmul.mubr.f32.gmra.mxu0 %v2246
        %v3334 = vpop.f32.mrf.mxu0
        %v3335 = vadd.f32 0.0, %v3334
        %v3336 = vpop.f32.mrf.mxu0
        %3337 = vmatprep.mubr.f32.mxu0 0.0
        %3338 = vmatmul.mubr.f32.gmra.mxu0 %v2247
        %v3339 = vpop.f32.mrf.mxu0
        %v3340 = vadd.f32 0.0, %v3339
        %v3341 = vpop.f32.mrf.mxu0
        %3342 = vmatprep.mubr.f32.mxu0 0.0
        %3343 = vmatmul.mubr.f32.gmra.mxu0 %v2248
        %v3344 = vpop.f32.mrf.mxu0
        %v3345 = vadd.f32 0.0, %v3344
        %v3346 = vpop.f32.mrf.mxu0
        %3347 = vmatprep.mubr.f32.mxu0 0.0
        %3348 = vmatmul.mubr.f32.gmra.mxu0 %v2249
        %v3349 = vpop.f32.mrf.mxu0
        %v3350 = vadd.f32 0.0, %v3349
        %v3351 = vpop.f32.mrf.mxu0
        %3352 = vmatprep.mubr.f32.mxu0 0.0
        %3353 = vmatmul.mubr.f32.gmra.mxu0 %v2250
        %v3354 = vpop.f32.mrf.mxu0
        %v3355 = vadd.f32 0.0, %v3354
        %v3356 = vpop.f32.mrf.mxu0
        %3357 = vmatprep.mubr.f32.mxu0 0.0
        %3358 = vmatmul.mubr.f32.gmra.mxu0 %v2251
        %v3359 = vpop.f32.mrf.mxu0
        %v3360 = vadd.f32 0.0, %v3359
        %v3361 = vpop.f32.mrf.mxu0
        %3362 = vmatprep.mubr.f32.mxu0 0.0
        %3363 = vmatmul.mubr.f32.gmra.mxu0 %v2252
        %v3364 = vpop.f32.mrf.mxu0
        %v3365 = vadd.f32 0.0, %v3364
        %v3366 = vpop.f32.mrf.mxu0
        %3367 = vmatprep.mubr.f32.mxu0 0.0
        %3368 = vmatmul.mubr.f32.gmra.mxu0 %v2253
        %v3369 = vpop.f32.mrf.mxu0
        %v3370 = vadd.f32 0.0, %v3369
        %v3371 = vpop.f32.mrf.mxu0
        %3372 = vmatprep.mubr.f32.mxu0 0.0
        %3373 = vmatmul.mubr.f32.gmra.mxu0 %v2254
        %v3374 = vpop.f32.mrf.mxu0
        %v3375 = vadd.f32 0.0, %v3374
        %v3376 = vpop.f32.mrf.mxu0
        %3377 = vmatprep.mubr.f32.mxu0 0.0
        %3378 = vmatmul.mubr.f32.gmra.mxu0 %v2255
        %v3379 = vpop.f32.mrf.mxu0
        %v3380 = vadd.f32 0.0, %v3379
        %v3381 = vpop.f32.mrf.mxu0
        %3382 = vmatprep.mubr.f32.mxu0 0.0
        %3383 = vmatmul.mubr.f32.gmra.mxu0 %v2256
        %v3384 = vpop.f32.mrf.mxu0
        %v3385 = vadd.f32 0.0, %v3384
        %v3386 = vpop.f32.mrf.mxu0
        %3387 = vmatprep.mubr.f32.mxu0 0.0
        %3388 = vmatmul.mubr.f32.gmra.mxu0 %v2257
        %v3389 = vpop.f32.mrf.mxu0
        %v3390 = vadd.f32 0.0, %v3389
        %v3391 = vpop.f32.mrf.mxu0
        %3392 = vmatprep.mubr.f32.mxu0 0.0
        %3393 = vmatmul.mubr.f32.gmra.mxu0 %v2258
        %v3394 = vpop.f32.mrf.mxu0
        %v3395 = vadd.f32 0.0, %v3394
        %v3396 = vpop.f32.mrf.mxu0
        %3397 = vmatprep.mubr.f32.mxu0 0.0
        %3398 = vmatmul.mubr.f32.gmra.mxu0 %v2259
        %v3399 = vpop.f32.mrf.mxu0
        %v3400 = vadd.f32 0.0, %v3399
        %v3401 = vpop.f32.mrf.mxu0
        %3402 = vdwg.mxu0
        %v3403 = vld [vmem:[%s2 + $0x18] sm:$0xff]
        %v3404 = vld [vmem:[%s2 + $0x38] sm:$0xff]
        %v3405 = vld [vmem:[%s2 + $0x58] sm:$0xff]
        %v3406 = vld [vmem:[%s2 + $0x78] sm:$0xff]
        %v3407 = vld [vmem:[%s2 + $0x98] sm:$0xff]
        %v3408 = vld [vmem:[%s2 + $0xb8] sm:$0xff]
        %v3409 = vld [vmem:[%s2 + $0xd8] sm:$0xff]
        %v3410 = vld [vmem:[%s2 + $0xf8] sm:$0xff]
        %v3411 = vld [vmem:[%s2 + $0x118] sm:$0xff]
        %v3412 = vld [vmem:[%s2 + $0x138] sm:$0xff]
        %v3413 = vld [vmem:[%s2 + $0x158] sm:$0xff]
        %v3414 = vld [vmem:[%s2 + $0x178] sm:$0xff]
        %v3415 = vld [vmem:[%s2 + $0x198] sm:$0xff]
        %v3416 = vld [vmem:[%s2 + $0x1b8] sm:$0xff]
        %v3417 = vld [vmem:[%s2 + $0x1d8] sm:$0xff]
        %v3418 = vld [vmem:[%s2 + $0x1f8] sm:$0xff]
        %3419 = vmatprep.subr.mxu0 0.0
        %3420 = vmatpush1.msra.mxu0 %v3400
        %3421 = vmatprep.subr.mxu0 0.0
        %3422 = vmatpush1.msra.mxu0 %v3395
        %3423 = vmatprep.subr.mxu0 0.0
        %3424 = vmatpush1.msra.mxu0 %v3390
        %3425 = vmatprep.subr.mxu0 0.0
        %3426 = vmatpush1.msra.mxu0 %v3385
        %3427 = vmatprep.subr.mxu0 0.0
        %3428 = vmatpush1.msra.mxu0 %v3380
        %3429 = vmatprep.subr.mxu0 0.0
        %3430 = vmatpush1.msra.mxu0 %v3375
        %3431 = vmatprep.subr.mxu0 0.0
        %3432 = vmatpush1.msra.mxu0 %v3370
        %3433 = vmatprep.subr.mxu0 0.0
        %3434 = vmatpush1.msra.mxu0 %v3365
        %3435 = vmatprep.subr.mxu0 0.0
        %3436 = vmatpush1.msra.mxu0 %v3360
        %3437 = vmatprep.subr.mxu0 0.0
        %3438 = vmatpush1.msra.mxu0 %v3355
        %3439 = vmatprep.subr.mxu0 0.0
        %3440 = vmatpush1.msra.mxu0 %v3350
        %3441 = vmatprep.subr.mxu0 0.0
        %3442 = vmatpush1.msra.mxu0 %v3345
        %3443 = vmatprep.subr.mxu0 0.0
        %3444 = vmatpush1.msra.mxu0 %v3340
        %3445 = vmatprep.subr.mxu0 0.0
        %3446 = vmatpush1.msra.mxu0 %v3335
        %3447 = vmatprep.subr.mxu0 0.0
        %3448 = vmatpush1.msra.mxu0 %v3330
        %3449 = vmatprep.subr.mxu0 0.0
        %3450 = vmatpush1.msra.mxu0 %v3325
        %3451 = vmatprep.subr.mxu0 0.0
        %3452 = vmatpush2.msra.mxu0 0.0
        %3453 = vmatprep.subr.mxu0 0.0
        %3454 = vmatpush2.msra.mxu0 0.0
        %3455 = vmatprep.subr.mxu0 0.0
        %3456 = vmatpush2.msra.mxu0 0.0
        %3457 = vmatprep.subr.mxu0 0.0
        %3458 = vmatpush2.msra.mxu0 0.0
        %3459 = vmatprep.subr.mxu0 0.0
        %3460 = vmatpush2.msra.mxu0 0.0
        %3461 = vmatprep.subr.mxu0 0.0
        %3462 = vmatpush2.msra.mxu0 0.0
        %3463 = vmatprep.subr.mxu0 0.0
        %3464 = vmatpush2.msra.mxu0 0.0
        %3465 = vmatprep.subr.mxu0 0.0
        %3466 = vmatpush2.msra.mxu0 0.0
        %3467 = vmatprep.subr.mxu0 0.0
        %3468 = vmatpush2.msra.mxu0 0.0
        %3469 = vmatprep.subr.mxu0 0.0
        %3470 = vmatpush2.msra.mxu0 0.0
        %3471 = vmatprep.subr.mxu0 0.0
        %3472 = vmatpush2.msra.mxu0 0.0
        %3473 = vmatprep.subr.mxu0 0.0
        %3474 = vmatpush2.msra.mxu0 0.0
        %3475 = vmatprep.subr.mxu0 0.0
        %3476 = vmatpush2.msra.mxu0 0.0
        %3477 = vmatprep.subr.mxu0 0.0
        %3478 = vmatpush2.msra.mxu0 0.0
        %3479 = vmatprep.subr.mxu0 0.0
        %3480 = vmatpush2.msra.mxu0 0.0
        %3481 = vmatprep.subr.mxu0 0.0
        %3482 = vmatpush2.msra.mxu0 0.0
        %3483 = vmatprep.mubr.f32.mxu0 0.0
        %3484 = vmatmul.mubr.f32.gmra.mxu0 %v3403
        %v3485 = vpop.f32.mrf.mxu0
        %v3486 = vadd.f32 0.0, %v3485
        %v3487 = vpop.f32.mrf.mxu0
        %3488 = vmatprep.mubr.f32.mxu0 0.0
        %3489 = vmatmul.mubr.f32.gmra.mxu0 %v3404
        %v3490 = vpop.f32.mrf.mxu0
        %v3491 = vadd.f32 0.0, %v3490
        %v3492 = vpop.f32.mrf.mxu0
        %3493 = vmatprep.mubr.f32.mxu0 0.0
        %3494 = vmatmul.mubr.f32.gmra.mxu0 %v3405
        %v3495 = vpop.f32.mrf.mxu0
        %v3496 = vadd.f32 0.0, %v3495
        %v3497 = vpop.f32.mrf.mxu0
        %3498 = vmatprep.mubr.f32.mxu0 0.0
        %3499 = vmatmul.mubr.f32.gmra.mxu0 %v3406
        %v3500 = vpop.f32.mrf.mxu0
        %v3501 = vadd.f32 0.0, %v3500
        %v3502 = vpop.f32.mrf.mxu0
        %3503 = vmatprep.mubr.f32.mxu0 0.0
        %3504 = vmatmul.mubr.f32.gmra.mxu0 %v3407
        %v3505 = vpop.f32.mrf.mxu0
        %v3506 = vadd.f32 0.0, %v3505
        %v3507 = vpop.f32.mrf.mxu0
        %3508 = vmatprep.mubr.f32.mxu0 0.0
        %3509 = vmatmul.mubr.f32.gmra.mxu0 %v3408
        %v3510 = vpop.f32.mrf.mxu0
        %v3511 = vadd.f32 0.0, %v3510
        %v3512 = vpop.f32.mrf.mxu0
        %3513 = vmatprep.mubr.f32.mxu0 0.0
        %3514 = vmatmul.mubr.f32.gmra.mxu0 %v3409
        %v3515 = vpop.f32.mrf.mxu0
        %v3516 = vadd.f32 0.0, %v3515
        %v3517 = vpop.f32.mrf.mxu0
        %3518 = vmatprep.mubr.f32.mxu0 0.0
        %3519 = vmatmul.mubr.f32.gmra.mxu0 %v3410
        %v3520 = vpop.f32.mrf.mxu0
        %v3521 = vadd.f32 0.0, %v3520
        %v3522 = vpop.f32.mrf.mxu0
        %3523 = vmatprep.mubr.f32.mxu0 0.0
        %3524 = vmatmul.mubr.f32.gmra.mxu0 %v3411
        %v3525 = vpop.f32.mrf.mxu0
        %v3526 = vadd.f32 0.0, %v3525
        %v3527 = vpop.f32.mrf.mxu0
        %3528 = vmatprep.mubr.f32.mxu0 0.0
        %3529 = vmatmul.mubr.f32.gmra.mxu0 %v3412
        %v3530 = vpop.f32.mrf.mxu0
        %v3531 = vadd.f32 0.0, %v3530
        %v3532 = vpop.f32.mrf.mxu0
        %3533 = vmatprep.mubr.f32.mxu0 0.0
        %3534 = vmatmul.mubr.f32.gmra.mxu0 %v3413
        %v3535 = vpop.f32.mrf.mxu0
        %v3536 = vadd.f32 0.0, %v3535
        %v3537 = vpop.f32.mrf.mxu0
        %3538 = vmatprep.mubr.f32.mxu0 0.0
        %3539 = vmatmul.mubr.f32.gmra.mxu0 %v3414
        %v3540 = vpop.f32.mrf.mxu0
        %v3541 = vadd.f32 0.0, %v3540
        %v3542 = vpop.f32.mrf.mxu0
        %3543 = vmatprep.mubr.f32.mxu0 0.0
        %3544 = vmatmul.mubr.f32.gmra.mxu0 %v3415
        %v3545 = vpop.f32.mrf.mxu0
        %v3546 = vadd.f32 0.0, %v3545
        %v3547 = vpop.f32.mrf.mxu0
        %3548 = vmatprep.mubr.f32.mxu0 0.0
        %3549 = vmatmul.mubr.f32.gmra.mxu0 %v3416
        %v3550 = vpop.f32.mrf.mxu0
        %v3551 = vadd.f32 0.0, %v3550
        %v3552 = vpop.f32.mrf.mxu0
        %3553 = vmatprep.mubr.f32.mxu0 0.0
        %3554 = vmatmul.mubr.f32.gmra.mxu0 %v3417
        %v3555 = vpop.f32.mrf.mxu0
        %v3556 = vadd.f32 0.0, %v3555
        %v3557 = vpop.f32.mrf.mxu0
        %3558 = vmatprep.mubr.f32.mxu0 0.0
        %3559 = vmatmul.mubr.f32.gmra.mxu0 %v3418
        %v3560 = vpop.f32.mrf.mxu0
        %v3561 = vadd.f32 0.0, %v3560
        %v3562 = vpop.f32.mrf.mxu0
        %3563 = vdwg.mxu0
        %v3564 = vadd.f32 %v3226, %v3486
        %v3565 = vadd.f32 %v3227, %v3491
        %v3566 = vadd.f32 %v3228, %v3496
        %v3567 = vadd.f32 %v3229, %v3501
        %v3568 = vadd.f32 %v3230, %v3506
        %v3569 = vadd.f32 %v3231, %v3511
        %v3570 = vadd.f32 %v3232, %v3516
        %v3571 = vadd.f32 %v3233, %v3521
        %v3572 = vadd.f32 %v3234, %v3526
        %v3573 = vadd.f32 %v3235, %v3531
        %v3574 = vadd.f32 %v3236, %v3536
        %v3575 = vadd.f32 %v3237, %v3541
        %v3576 = vadd.f32 %v3238, %v3546
        %v3577 = vadd.f32 %v3239, %v3551
        %v3578 = vadd.f32 %v3240, %v3556
        %v3579 = vadd.f32 %v3241, %v3561
        %v3580 = vld [vmem:[%s12] sm:$0xff]
        %v3581 = vld [vmem:[%s12 + $0x8] sm:$0xff]
        %v3582 = vld [vmem:[%s12 + $0x10] sm:$0xff]
        %v3583 = vld [vmem:[%s12 + $0x18] sm:$0xff]
        %v3584 = vld [vmem:[%s12 + $0x20] sm:$0xff]
        %v3585 = vld [vmem:[%s12 + $0x28] sm:$0xff]
        %v3586 = vld [vmem:[%s12 + $0x30] sm:$0xff]
        %v3587 = vld [vmem:[%s12 + $0x38] sm:$0xff]
        %v3588 = vld [vmem:[%s12 + $0x40] sm:$0xff]
        %v3589 = vld [vmem:[%s12 + $0x48] sm:$0xff]
        %v3590 = vld [vmem:[%s12 + $0x50] sm:$0xff]
        %v3591 = vld [vmem:[%s12 + $0x58] sm:$0xff]
        %v3592 = vld [vmem:[%s12 + $0x60] sm:$0xff]
        %v3593 = vld [vmem:[%s12 + $0x68] sm:$0xff]
        %v3594 = vld [vmem:[%s12 + $0x70] sm:$0xff]
        %v3595 = vld [vmem:[%s12 + $0x78] sm:$0xff]
        %3597 = vset.pattern.permute.xlu0 0
        %3598 = vperm.xlu0 %3597, %v3580
        %v3599 = vpop.permute.xlu0 %3598
        %3602 = vset.pattern.permute.xlu0 0
        %3603 = vperm.xlu0 %3602, %v3581
        %v3604 = vpop.permute.xlu0 %3603
        %3607 = vset.pattern.permute.xlu0 0
        %3608 = vperm.xlu0 %3607, %v3582
        %v3609 = vpop.permute.xlu0 %3608
        %3612 = vset.pattern.permute.xlu0 0
        %3613 = vperm.xlu0 %3612, %v3583
        %v3614 = vpop.permute.xlu0 %3613
        %3617 = vset.pattern.permute.xlu0 0
        %3618 = vperm.xlu0 %3617, %v3584
        %v3619 = vpop.permute.xlu0 %3618
        %3622 = vset.pattern.permute.xlu0 0
        %3623 = vperm.xlu0 %3622, %v3585
        %v3624 = vpop.permute.xlu0 %3623
        %3627 = vset.pattern.permute.xlu0 0
        %3628 = vperm.xlu0 %3627, %v3586
        %v3629 = vpop.permute.xlu0 %3628
        %3632 = vset.pattern.permute.xlu0 0
        %3633 = vperm.xlu0 %3632, %v3587
        %v3634 = vpop.permute.xlu0 %3633
        %3637 = vset.pattern.permute.xlu0 0
        %3638 = vperm.xlu0 %3637, %v3588
        %v3639 = vpop.permute.xlu0 %3638
        %3642 = vset.pattern.permute.xlu0 0
        %3643 = vperm.xlu0 %3642, %v3589
        %v3644 = vpop.permute.xlu0 %3643
        %3647 = vset.pattern.permute.xlu0 0
        %3648 = vperm.xlu0 %3647, %v3590
        %v3649 = vpop.permute.xlu0 %3648
        %3652 = vset.pattern.permute.xlu0 0
        %3653 = vperm.xlu0 %3652, %v3591
        %v3654 = vpop.permute.xlu0 %3653
        %3657 = vset.pattern.permute.xlu0 0
        %3658 = vperm.xlu0 %3657, %v3592
        %v3659 = vpop.permute.xlu0 %3658
        %3662 = vset.pattern.permute.xlu0 0
        %3663 = vperm.xlu0 %3662, %v3593
        %v3664 = vpop.permute.xlu0 %3663
        %3667 = vset.pattern.permute.xlu0 0
        %3668 = vperm.xlu0 %3667, %v3594
        %v3669 = vpop.permute.xlu0 %3668
        %3672 = vset.pattern.permute.xlu0 0
        %3673 = vperm.xlu0 %3672, %v3595
        %v3674 = vpop.permute.xlu0 %3673
        %v3676 = vadd.f32 %v3564, %v3599
        %v3677 = vadd.f32 %v3565, %v3604
        %v3678 = vadd.f32 %v3566, %v3609
        %v3679 = vadd.f32 %v3567, %v3614
        %v3680 = vadd.f32 %v3568, %v3619
        %v3681 = vadd.f32 %v3569, %v3624
        %v3682 = vadd.f32 %v3570, %v3629
        %v3683 = vadd.f32 %v3571, %v3634
        %v3684 = vadd.f32 %v3572, %v3639
        %v3685 = vadd.f32 %v3573, %v3644
        %v3686 = vadd.f32 %v3574, %v3649
        %v3687 = vadd.f32 %v3575, %v3654
        %v3688 = vadd.f32 %v3576, %v3659
        %v3689 = vadd.f32 %v3577, %v3664
        %v3690 = vadd.f32 %v3578, %v3669
        %v3691 = vadd.f32 %v3579, %v3674
        %v3692 = vld [vmem:[%s16] sm:$0xff]
        %v3693 = vld [vmem:[%s16 + $0x8] sm:$0xff]
        %v3694 = vld [vmem:[%s16 + $0x10] sm:$0xff]
        %v3695 = vld [vmem:[%s16 + $0x18] sm:$0xff]
        %v3696 = vld [vmem:[%s16 + $0x20] sm:$0xff]
        %v3697 = vld [vmem:[%s16 + $0x28] sm:$0xff]
        %v3698 = vld [vmem:[%s16 + $0x30] sm:$0xff]
        %v3699 = vld [vmem:[%s16 + $0x38] sm:$0xff]
        %vm3700 = vcmask 523264
        %v3701 = vsel %vm3700, %v3676, 0.0
        %v3702 = vsel %vm3700, %v3678, 0.0
        %v3703 = vadd.f32 %v3701, %v3702
        %v3704 = vsel %vm3700, %v3680, 0.0
        %v3705 = vadd.f32 %v3703, %v3704
        %v3706 = vsel %vm3700, %v3682, 0.0
        %v3707 = vadd.f32 %v3705, %v3706
        %v3708 = vsel %vm3700, %v3684, 0.0
        %v3709 = vadd.f32 %v3707, %v3708
        %v3710 = vsel %vm3700, %v3686, 0.0
        %v3711 = vadd.f32 %v3709, %v3710
        %v3712 = vsel %vm3700, %v3688, 0.0
        %v3713 = vadd.f32 %v3711, %v3712
        %v3714 = vsel %vm3700, %v3690, 0.0
        %v3715 = vadd.f32 %v3713, %v3714
        %v3716 = vsel %vm3700, %v3677, 0.0
        %v3717 = vsel %vm3700, %v3679, 0.0
        %v3718 = vadd.f32 %v3716, %v3717
        %v3719 = vsel %vm3700, %v3681, 0.0
        %v3720 = vadd.f32 %v3718, %v3719
        %v3721 = vsel %vm3700, %v3683, 0.0
        %v3722 = vadd.f32 %v3720, %v3721
        %v3723 = vsel %vm3700, %v3685, 0.0
        %v3724 = vadd.f32 %v3722, %v3723
        %v3725 = vsel %vm3700, %v3687, 0.0
        %v3726 = vadd.f32 %v3724, %v3725
        %v3727 = vsel %vm3700, %v3689, 0.0
        %v3728 = vadd.f32 %v3726, %v3727
        %v3729 = vsel %vm3700, %v3691, 0.0
        %v3730 = vadd.f32 %v3728, %v3729
        %v3732 = vsel %vm3700, %v3715, 0
        %v3735 = vsel %vm3700, %v3730, 0
        %3737 = vmatprep.subr.mxu0 0.0
        %3738 = vmatpush1.msra.mxu0 0.0
        %3739 = vmatprep.subr.mxu0 0.0
        %3740 = vmatpush1.msra.mxu0 0.0
        %3741 = vmatprep.subr.mxu0 0.0
        %3742 = vmatpush1.msra.mxu0 0.0
        %3743 = vmatprep.subr.mxu0 0.0
        %3744 = vmatpush1.msra.mxu0 0.0
        %3745 = vmatprep.subr.mxu0 0.0
        %3746 = vmatpush1.msra.mxu0 0.0
        %3747 = vmatprep.subr.mxu0 0.0
        %3748 = vmatpush1.msra.mxu0 0.0
        %3749 = vmatprep.subr.mxu0 0.0
        %3750 = vmatpush1.msra.mxu0 0.0
        %3751 = vmatprep.subr.mxu0 0.0
        %3752 = vmatpush1.msra.mxu0 0.0
        %3753 = vmatprep.subr.mxu0 0.0
        %3754 = vmatpush1.msra.mxu0 %v3699
        %3755 = vmatprep.subr.mxu0 0.0
        %3756 = vmatpush1.msra.mxu0 %v3698
        %3757 = vmatprep.subr.mxu0 0.0
        %3758 = vmatpush1.msra.mxu0 %v3697
        %3759 = vmatprep.subr.mxu0 0.0
        %3760 = vmatpush1.msra.mxu0 %v3696
        %3761 = vmatprep.subr.mxu0 0.0
        %3762 = vmatpush1.msra.mxu0 %v3695
        %3763 = vmatprep.subr.mxu0 0.0
        %3764 = vmatpush1.msra.mxu0 %v3694
        %3765 = vmatprep.subr.mxu0 0.0
        %3766 = vmatpush1.msra.mxu0 %v3693
        %3767 = vmatprep.subr.mxu0 0.0
        %3768 = vmatpush1.msra.mxu0 %v3692
        %3769 = vmatprep.subr.mxu0 0.0
        %3770 = vmatpush2.msra.mxu0 0.0
        %3771 = vmatprep.subr.mxu0 0.0
        %3772 = vmatpush2.msra.mxu0 0.0
        %3773 = vmatprep.subr.mxu0 0.0
        %3774 = vmatpush2.msra.mxu0 0.0
        %3775 = vmatprep.subr.mxu0 0.0
        %3776 = vmatpush2.msra.mxu0 0.0
        %3777 = vmatprep.subr.mxu0 0.0
        %3778 = vmatpush2.msra.mxu0 0.0
        %3779 = vmatprep.subr.mxu0 0.0
        %3780 = vmatpush2.msra.mxu0 0.0
        %3781 = vmatprep.subr.mxu0 0.0
        %3782 = vmatpush2.msra.mxu0 0.0
        %3783 = vmatprep.subr.mxu0 0.0
        %3784 = vmatpush2.msra.mxu0 0.0
        %3785 = vmatprep.subr.mxu0 0.0
        %3786 = vmatpush2.msra.mxu0 0.0
        %3787 = vmatprep.subr.mxu0 0.0
        %3788 = vmatpush2.msra.mxu0 0.0
        %3789 = vmatprep.subr.mxu0 0.0
        %3790 = vmatpush2.msra.mxu0 0.0
        %3791 = vmatprep.subr.mxu0 0.0
        %3792 = vmatpush2.msra.mxu0 0.0
        %3793 = vmatprep.subr.mxu0 0.0
        %3794 = vmatpush2.msra.mxu0 0.0
        %3795 = vmatprep.subr.mxu0 0.0
        %3796 = vmatpush2.msra.mxu0 0.0
        %3797 = vmatprep.subr.mxu0 0.0
        %3798 = vmatpush2.msra.mxu0 0.0
        %3799 = vmatprep.subr.mxu0 0.0
        %3800 = vmatpush2.msra.mxu0 0.0
        %3801 = vmatprep.mubr.f32.mxu0 0.0
        %3802 = vmatmul.mubr.f32.gmra.mxu0 %v3732
        %v3803 = vpop.f32.mrf.mxu0
        %v3804 = vadd.f32 0.0, %v3803
        %v3805 = vpop.f32.mrf.mxu0
        %3806 = vmatprep.mubr.f32.mxu0 0.0
        %3807 = vmatmul.mubr.f32.gmra.mxu0 %v3735
        %v3808 = vpop.f32.mrf.mxu0
        %v3809 = vadd.f32 0.0, %v3808
        %v3810 = vpop.f32.mrf.mxu0
        %3811 = vdwg.mxu0
        %v3812 = vsub.f32 %v3676, %v3804
        %v3813 = vsub.f32 %v3677, %v3809
        %v3814 = vsub.f32 %v3678, %v3804
        %v3815 = vsub.f32 %v3679, %v3809
        %v3816 = vsub.f32 %v3680, %v3804
        %v3817 = vsub.f32 %v3681, %v3809
        %v3818 = vsub.f32 %v3682, %v3804
        %v3819 = vsub.f32 %v3683, %v3809
        %v3820 = vsub.f32 %v3684, %v3804
        %v3821 = vsub.f32 %v3685, %v3809
        %v3822 = vsub.f32 %v3686, %v3804
        %v3823 = vsub.f32 %v3687, %v3809
        %v3824 = vsub.f32 %v3688, %v3804
        %v3825 = vsub.f32 %v3689, %v3809
        %v3826 = vsub.f32 %v3690, %v3804
        %v3827 = vsub.f32 %v3691, %v3809
        %v3828 = vmul.f32 %v3812, %v3812
        %v3829 = vmul.f32 %v3813, %v3813
        %v3830 = vmul.f32 %v3814, %v3814
        %v3831 = vmul.f32 %v3815, %v3815
        %v3832 = vmul.f32 %v3816, %v3816
        %v3833 = vmul.f32 %v3817, %v3817
        %v3834 = vmul.f32 %v3818, %v3818
        %v3835 = vmul.f32 %v3819, %v3819
        %v3836 = vmul.f32 %v3820, %v3820
        %v3837 = vmul.f32 %v3821, %v3821
        %v3838 = vmul.f32 %v3822, %v3822
        %v3839 = vmul.f32 %v3823, %v3823
        %v3840 = vmul.f32 %v3824, %v3824
        %v3841 = vmul.f32 %v3825, %v3825
        %v3842 = vmul.f32 %v3826, %v3826
        %v3843 = vmul.f32 %v3827, %v3827
        %v3844 = vsel %vm3700, %v3828, 0.0
        %v3845 = vsel %vm3700, %v3830, 0.0
        %v3846 = vadd.f32 %v3844, %v3845
        %v3847 = vsel %vm3700, %v3832, 0.0
        %v3848 = vadd.f32 %v3846, %v3847
        %v3849 = vsel %vm3700, %v3834, 0.0
        %v3850 = vadd.f32 %v3848, %v3849
        %v3851 = vsel %vm3700, %v3836, 0.0
        %v3852 = vadd.f32 %v3850, %v3851
        %v3853 = vsel %vm3700, %v3838, 0.0
        %v3854 = vadd.f32 %v3852, %v3853
        %v3855 = vsel %vm3700, %v3840, 0.0
        %v3856 = vadd.f32 %v3854, %v3855
        %v3857 = vsel %vm3700, %v3842, 0.0
        %v3858 = vadd.f32 %v3856, %v3857
        %v3859 = vsel %vm3700, %v3829, 0.0
        %v3860 = vsel %vm3700, %v3831, 0.0
        %v3861 = vadd.f32 %v3859, %v3860
        %v3862 = vsel %vm3700, %v3833, 0.0
        %v3863 = vadd.f32 %v3861, %v3862
        %v3864 = vsel %vm3700, %v3835, 0.0
        %v3865 = vadd.f32 %v3863, %v3864
        %v3866 = vsel %vm3700, %v3837, 0.0
        %v3867 = vadd.f32 %v3865, %v3866
        %v3868 = vsel %vm3700, %v3839, 0.0
        %v3869 = vadd.f32 %v3867, %v3868
        %v3870 = vsel %vm3700, %v3841, 0.0
        %v3871 = vadd.f32 %v3869, %v3870
        %v3872 = vsel %vm3700, %v3843, 0.0
        %v3873 = vadd.f32 %v3871, %v3872
        %v3875 = vsel %vm3700, %v3858, 0
        %v3878 = vsel %vm3700, %v3873, 0
        %3880 = vmatprep.subr.mxu0 0.0
        %3881 = vmatpush1.msra.mxu0 0.0
        %3882 = vmatprep.subr.mxu0 0.0
        %3883 = vmatpush1.msra.mxu0 0.0
        %3884 = vmatprep.subr.mxu0 0.0
        %3885 = vmatpush1.msra.mxu0 0.0
        %3886 = vmatprep.subr.mxu0 0.0
        %3887 = vmatpush1.msra.mxu0 0.0
        %3888 = vmatprep.subr.mxu0 0.0
        %3889 = vmatpush1.msra.mxu0 0.0
        %3890 = vmatprep.subr.mxu0 0.0
        %3891 = vmatpush1.msra.mxu0 0.0
        %3892 = vmatprep.subr.mxu0 0.0
        %3893 = vmatpush1.msra.mxu0 0.0
        %3894 = vmatprep.subr.mxu0 0.0
        %3895 = vmatpush1.msra.mxu0 0.0
        %3896 = vmatprep.subr.mxu0 0.0
        %3897 = vmatpush1.msra.mxu0 %v3699
        %3898 = vmatprep.subr.mxu0 0.0
        %3899 = vmatpush1.msra.mxu0 %v3698
        %3900 = vmatprep.subr.mxu0 0.0
        %3901 = vmatpush1.msra.mxu0 %v3697
        %3902 = vmatprep.subr.mxu0 0.0
        %3903 = vmatpush1.msra.mxu0 %v3696
        %3904 = vmatprep.subr.mxu0 0.0
        %3905 = vmatpush1.msra.mxu0 %v3695
        %3906 = vmatprep.subr.mxu0 0.0
        %3907 = vmatpush1.msra.mxu0 %v3694
        %3908 = vmatprep.subr.mxu0 0.0
        %3909 = vmatpush1.msra.mxu0 %v3693
        %3910 = vmatprep.subr.mxu0 0.0
        %3911 = vmatpush1.msra.mxu0 %v3692
        %3912 = vmatprep.subr.mxu0 0.0
        %3913 = vmatpush2.msra.mxu0 0.0
        %3914 = vmatprep.subr.mxu0 0.0
        %3915 = vmatpush2.msra.mxu0 0.0
        %3916 = vmatprep.subr.mxu0 0.0
        %3917 = vmatpush2.msra.mxu0 0.0
        %3918 = vmatprep.subr.mxu0 0.0
        %3919 = vmatpush2.msra.mxu0 0.0
        %3920 = vmatprep.subr.mxu0 0.0
        %3921 = vmatpush2.msra.mxu0 0.0
        %3922 = vmatprep.subr.mxu0 0.0
        %3923 = vmatpush2.msra.mxu0 0.0
        %3924 = vmatprep.subr.mxu0 0.0
        %3925 = vmatpush2.msra.mxu0 0.0
        %3926 = vmatprep.subr.mxu0 0.0
        %3927 = vmatpush2.msra.mxu0 0.0
        %3928 = vmatprep.subr.mxu0 0.0
        %3929 = vmatpush2.msra.mxu0 0.0
        %3930 = vmatprep.subr.mxu0 0.0
        %3931 = vmatpush2.msra.mxu0 0.0
        %3932 = vmatprep.subr.mxu0 0.0
        %3933 = vmatpush2.msra.mxu0 0.0
        %3934 = vmatprep.subr.mxu0 0.0
        %3935 = vmatpush2.msra.mxu0 0.0
        %3936 = vmatprep.subr.mxu0 0.0
        %3937 = vmatpush2.msra.mxu0 0.0
        %3938 = vmatprep.subr.mxu0 0.0
        %3939 = vmatpush2.msra.mxu0 0.0
        %3940 = vmatprep.subr.mxu0 0.0
        %3941 = vmatpush2.msra.mxu0 0.0
        %3942 = vmatprep.subr.mxu0 0.0
        %3943 = vmatpush2.msra.mxu0 0.0
        %3944 = vmatprep.mubr.f32.mxu0 0.0
        %3945 = vmatmul.mubr.f32.gmra.mxu0 %v3875
        %v3946 = vpop.f32.mrf.mxu0
        %v3947 = vadd.f32 1e-05, %v3946
        %v3948 = vpop.f32.mrf.mxu0
        %3949 = vmatprep.mubr.f32.mxu0 0.0
        %3950 = vmatmul.mubr.f32.gmra.mxu0 %v3878
        %v3951 = vpop.f32.mrf.mxu0
        %v3952 = vadd.f32 1e-05, %v3951
        %v3953 = vpop.f32.mrf.mxu0
        %3954 = vdwg.mxu0
        %v3955 = vrsqrt.pop %v3947
        %v3956 = vrsqrt.pop %v3952
        %v3957 = vmul.f32 %v3812, %v3955
        %v3958 = vmul.f32 %v3813, %v3956
        %v3959 = vmul.f32 %v3814, %v3955
        %v3960 = vmul.f32 %v3815, %v3956
        %v3961 = vmul.f32 %v3816, %v3955
        %v3962 = vmul.f32 %v3817, %v3956
        %v3963 = vmul.f32 %v3818, %v3955
        %v3964 = vmul.f32 %v3819, %v3956
        %v3965 = vmul.f32 %v3820, %v3955
        %v3966 = vmul.f32 %v3821, %v3956
        %v3967 = vmul.f32 %v3822, %v3955
        %v3968 = vmul.f32 %v3823, %v3956
        %v3969 = vmul.f32 %v3824, %v3955
        %v3970 = vmul.f32 %v3825, %v3956
        %v3971 = vmul.f32 %v3826, %v3955
        %v3972 = vmul.f32 %v3827, %v3956
        %vm3973 = vcmp.ge.f32.partialorder %v3957, 0.0
        %vm3974 = vcmp.ge.f32.partialorder %v3958, 0.0
        %vm3975 = vcmp.ge.f32.partialorder %v3959, 0.0
        %vm3976 = vcmp.ge.f32.partialorder %v3960, 0.0
        %vm3977 = vcmp.ge.f32.partialorder %v3961, 0.0
        %vm3978 = vcmp.ge.f32.partialorder %v3962, 0.0
        %vm3979 = vcmp.ge.f32.partialorder %v3963, 0.0
        %vm3980 = vcmp.ge.f32.partialorder %v3964, 0.0
        %vm3981 = vcmp.ge.f32.partialorder %v3965, 0.0
        %vm3982 = vcmp.ge.f32.partialorder %v3966, 0.0
        %vm3983 = vcmp.ge.f32.partialorder %v3967, 0.0
        %vm3984 = vcmp.ge.f32.partialorder %v3968, 0.0
        %vm3985 = vcmp.ge.f32.partialorder %v3969, 0.0
        %vm3986 = vcmp.ge.f32.partialorder %v3970, 0.0
        %vm3987 = vcmp.ge.f32.partialorder %v3971, 0.0
        %vm3988 = vcmp.ge.f32.partialorder %v3972, 0.0
        %v3989 = vmul.f32 %v3957, 0.2
        %v3990 = vmul.f32 %v3958, 0.2
        %v3991 = vmul.f32 %v3959, 0.2
        %v3992 = vmul.f32 %v3960, 0.2
        %v3993 = vmul.f32 %v3961, 0.2
        %v3994 = vmul.f32 %v3962, 0.2
        %v3995 = vmul.f32 %v3963, 0.2
        %v3996 = vmul.f32 %v3964, 0.2
        %v3997 = vmul.f32 %v3965, 0.2
        %v3998 = vmul.f32 %v3966, 0.2
        %v3999 = vmul.f32 %v3967, 0.2
        %v4000 = vmul.f32 %v3968, 0.2
        %v4001 = vmul.f32 %v3969, 0.2
        %v4002 = vmul.f32 %v3970, 0.2
        %v4003 = vmul.f32 %v3971, 0.2
        %v4004 = vmul.f32 %v3972, 0.2
        %v4005 = vsel %vm3973, %v3957, %v3989
        %v4006 = vsel %vm3974, %v3958, %v3990
        %v4007 = vsel %vm3975, %v3959, %v3991
        %v4008 = vsel %vm3976, %v3960, %v3992
        %v4009 = vsel %vm3977, %v3961, %v3993
        %v4010 = vsel %vm3978, %v3962, %v3994
        %v4011 = vsel %vm3979, %v3963, %v3995
        %v4012 = vsel %vm3980, %v3964, %v3996
        %v4013 = vsel %vm3981, %v3965, %v3997
        %v4014 = vsel %vm3982, %v3966, %v3998
        %v4015 = vsel %vm3983, %v3967, %v3999
        %v4016 = vsel %vm3984, %v3968, %v4000
        %v4017 = vsel %vm3985, %v3969, %v4001
        %v4018 = vsel %vm3986, %v3970, %v4002
        %v4019 = vsel %vm3987, %v3971, %v4003
        %v4020 = vsel %vm3988, %v3972, %v4004
        %v4021 = vld [vmem:[%s8] sm:$0xff]
        %v4022 = vld [vmem:[%s8 + $0x8] sm:$0xff]
        %v4023 = vld [vmem:[%s8 + $0x10] sm:$0xff]
        %v4024 = vld [vmem:[%s8 + $0x18] sm:$0xff]
        %v4025 = vld [vmem:[%s8 + $0x20] sm:$0xff]
        %v4026 = vld [vmem:[%s8 + $0x28] sm:$0xff]
        %v4027 = vld [vmem:[%s8 + $0x30] sm:$0xff]
        %v4028 = vld [vmem:[%s8 + $0x38] sm:$0xff]
        %v4030 = vsel %vm3700, %v4005, 0
        %v4033 = vsel %vm3700, %v4006, 0
        %v4036 = vsel %vm3700, %v4007, 0
        %v4039 = vsel %vm3700, %v4008, 0
        %v4042 = vsel %vm3700, %v4009, 0
        %v4045 = vsel %vm3700, %v4010, 0
        %v4048 = vsel %vm3700, %v4011, 0
        %v4051 = vsel %vm3700, %v4012, 0
        %v4054 = vsel %vm3700, %v4013, 0
        %v4057 = vsel %vm3700, %v4014, 0
        %v4060 = vsel %vm3700, %v4015, 0
        %v4063 = vsel %vm3700, %v4016, 0
        %v4066 = vsel %vm3700, %v4017, 0
        %v4069 = vsel %vm3700, %v4018, 0
        %v4072 = vsel %vm3700, %v4019, 0
        %v4075 = vsel %vm3700, %v4020, 0
        %4077 = vmatprep.subr.mxu0 0.0
        %4078 = vmatpush1.msra.mxu0 0.0
        %4079 = vmatprep.subr.mxu0 0.0
        %4080 = vmatpush1.msra.mxu0 0.0
        %4081 = vmatprep.subr.mxu0 0.0
        %4082 = vmatpush1.msra.mxu0 0.0
        %4083 = vmatprep.subr.mxu0 0.0
        %4084 = vmatpush1.msra.mxu0 0.0
        %4085 = vmatprep.subr.mxu0 0.0
        %4086 = vmatpush1.msra.mxu0 0.0
        %4087 = vmatprep.subr.mxu0 0.0
        %4088 = vmatpush1.msra.mxu0 0.0
        %4089 = vmatprep.subr.mxu0 0.0
        %4090 = vmatpush1.msra.mxu0 0.0
        %4091 = vmatprep.subr.mxu0 0.0
        %4092 = vmatpush1.msra.mxu0 0.0
        %4093 = vmatprep.subr.mxu0 0.0
        %4094 = vmatpush1.msra.mxu0 %v4028
        %4095 = vmatprep.subr.mxu0 0.0
        %4096 = vmatpush1.msra.mxu0 %v4027
        %4097 = vmatprep.subr.mxu0 0.0
        %4098 = vmatpush1.msra.mxu0 %v4026
        %4099 = vmatprep.subr.mxu0 0.0
        %4100 = vmatpush1.msra.mxu0 %v4025
        %4101 = vmatprep.subr.mxu0 0.0
        %4102 = vmatpush1.msra.mxu0 %v4024
        %4103 = vmatprep.subr.mxu0 0.0
        %4104 = vmatpush1.msra.mxu0 %v4023
        %4105 = vmatprep.subr.mxu0 0.0
        %4106 = vmatpush1.msra.mxu0 %v4022
        %4107 = vmatprep.subr.mxu0 0.0
        %4108 = vmatpush1.msra.mxu0 %v4021
        %4109 = vmatprep.subr.mxu0 0.0
        %4110 = vmatpush2.msra.mxu0 0.0
        %4111 = vmatprep.subr.mxu0 0.0
        %4112 = vmatpush2.msra.mxu0 0.0
        %4113 = vmatprep.subr.mxu0 0.0
        %4114 = vmatpush2.msra.mxu0 0.0
        %4115 = vmatprep.subr.mxu0 0.0
        %4116 = vmatpush2.msra.mxu0 0.0
        %4117 = vmatprep.subr.mxu0 0.0
        %4118 = vmatpush2.msra.mxu0 0.0
        %4119 = vmatprep.subr.mxu0 0.0
        %4120 = vmatpush2.msra.mxu0 0.0
        %4121 = vmatprep.subr.mxu0 0.0
        %4122 = vmatpush2.msra.mxu0 0.0
        %4123 = vmatprep.subr.mxu0 0.0
        %4124 = vmatpush2.msra.mxu0 0.0
        %4125 = vmatprep.subr.mxu0 0.0
        %4126 = vmatpush2.msra.mxu0 0.0
        %4127 = vmatprep.subr.mxu0 0.0
        %4128 = vmatpush2.msra.mxu0 0.0
        %4129 = vmatprep.subr.mxu0 0.0
        %4130 = vmatpush2.msra.mxu0 0.0
        %4131 = vmatprep.subr.mxu0 0.0
        %4132 = vmatpush2.msra.mxu0 0.0
        %4133 = vmatprep.subr.mxu0 0.0
        %4134 = vmatpush2.msra.mxu0 0.0
        %4135 = vmatprep.subr.mxu0 0.0
        %4136 = vmatpush2.msra.mxu0 0.0
        %4137 = vmatprep.subr.mxu0 0.0
        %4138 = vmatpush2.msra.mxu0 0.0
        %4139 = vmatprep.subr.mxu0 0.0
        %4140 = vmatpush2.msra.mxu0 0.0
        %4141 = vmatprep.mubr.f32.mxu0 0.0
        %4142 = vmatmul.mubr.f32.gmra.mxu0 %v4030
        %v4143 = vpop.f32.mrf.mxu0
        %v4144 = vadd.f32 0.0, %v4143
        %v4145 = vpop.f32.mrf.mxu0
        %4146 = vmatprep.mubr.f32.mxu0 0.0
        %4147 = vmatmul.mubr.f32.gmra.mxu0 %v4033
        %v4148 = vpop.f32.mrf.mxu0
        %v4149 = vadd.f32 0.0, %v4148
        %v4150 = vpop.f32.mrf.mxu0
        %4151 = vmatprep.mubr.f32.mxu0 0.0
        %4152 = vmatmul.mubr.f32.gmra.mxu0 %v4036
        %v4153 = vpop.f32.mrf.mxu0
        %v4154 = vadd.f32 0.0, %v4153
        %v4155 = vpop.f32.mrf.mxu0
        %4156 = vmatprep.mubr.f32.mxu0 0.0
        %4157 = vmatmul.mubr.f32.gmra.mxu0 %v4039
        %v4158 = vpop.f32.mrf.mxu0
        %v4159 = vadd.f32 0.0, %v4158
        %v4160 = vpop.f32.mrf.mxu0
        %4161 = vmatprep.mubr.f32.mxu0 0.0
        %4162 = vmatmul.mubr.f32.gmra.mxu0 %v4042
        %v4163 = vpop.f32.mrf.mxu0
        %v4164 = vadd.f32 0.0, %v4163
        %v4165 = vpop.f32.mrf.mxu0
        %4166 = vmatprep.mubr.f32.mxu0 0.0
        %4167 = vmatmul.mubr.f32.gmra.mxu0 %v4045
        %v4168 = vpop.f32.mrf.mxu0
        %v4169 = vadd.f32 0.0, %v4168
        %v4170 = vpop.f32.mrf.mxu0
        %4171 = vmatprep.mubr.f32.mxu0 0.0
        %4172 = vmatmul.mubr.f32.gmra.mxu0 %v4048
        %v4173 = vpop.f32.mrf.mxu0
        %v4174 = vadd.f32 0.0, %v4173
        %v4175 = vpop.f32.mrf.mxu0
        %4176 = vmatprep.mubr.f32.mxu0 0.0
        %4177 = vmatmul.mubr.f32.gmra.mxu0 %v4051
        %v4178 = vpop.f32.mrf.mxu0
        %v4179 = vadd.f32 0.0, %v4178
        %v4180 = vpop.f32.mrf.mxu0
        %4181 = vmatprep.mubr.f32.mxu0 0.0
        %4182 = vmatmul.mubr.f32.gmra.mxu0 %v4054
        %v4183 = vpop.f32.mrf.mxu0
        %v4184 = vadd.f32 0.0, %v4183
        %v4185 = vpop.f32.mrf.mxu0
        %4186 = vmatprep.mubr.f32.mxu0 0.0
        %4187 = vmatmul.mubr.f32.gmra.mxu0 %v4057
        %v4188 = vpop.f32.mrf.mxu0
        %v4189 = vadd.f32 0.0, %v4188
        %v4190 = vpop.f32.mrf.mxu0
        %4191 = vmatprep.mubr.f32.mxu0 0.0
        %4192 = vmatmul.mubr.f32.gmra.mxu0 %v4060
        %v4193 = vpop.f32.mrf.mxu0
        %v4194 = vadd.f32 0.0, %v4193
        %v4195 = vpop.f32.mrf.mxu0
        %4196 = vmatprep.mubr.f32.mxu0 0.0
        %4197 = vmatmul.mubr.f32.gmra.mxu0 %v4063
        %v4198 = vpop.f32.mrf.mxu0
        %v4199 = vadd.f32 0.0, %v4198
        %v4200 = vpop.f32.mrf.mxu0
        %4201 = vmatprep.mubr.f32.mxu0 0.0
        %4202 = vmatmul.mubr.f32.gmra.mxu0 %v4066
        %v4203 = vpop.f32.mrf.mxu0
        %v4204 = vadd.f32 0.0, %v4203
        %v4205 = vpop.f32.mrf.mxu0
        %4206 = vmatprep.mubr.f32.mxu0 0.0
        %4207 = vmatmul.mubr.f32.gmra.mxu0 %v4069
        %v4208 = vpop.f32.mrf.mxu0
        %v4209 = vadd.f32 0.0, %v4208
        %v4210 = vpop.f32.mrf.mxu0
        %4211 = vmatprep.mubr.f32.mxu0 0.0
        %4212 = vmatmul.mubr.f32.gmra.mxu0 %v4072
        %v4213 = vpop.f32.mrf.mxu0
        %v4214 = vadd.f32 0.0, %v4213
        %v4215 = vpop.f32.mrf.mxu0
        %4216 = vmatprep.mubr.f32.mxu0 0.0
        %4217 = vmatmul.mubr.f32.gmra.mxu0 %v4075
        %v4218 = vpop.f32.mrf.mxu0
        %v4219 = vadd.f32 0.0, %v4218
        %v4220 = vpop.f32.mrf.mxu0
        %4221 = vdwg.mxu0
        %v4222 = vld [vmem:[%s3] sm:$0xff]
        %v4223 = vld [vmem:[%s3 + $0x20] sm:$0xff]
        %v4224 = vld [vmem:[%s3 + $0x40] sm:$0xff]
        %v4225 = vld [vmem:[%s3 + $0x60] sm:$0xff]
        %v4226 = vld [vmem:[%s3 + $0x80] sm:$0xff]
        %v4227 = vld [vmem:[%s3 + $0xa0] sm:$0xff]
        %v4228 = vld [vmem:[%s3 + $0xc0] sm:$0xff]
        %v4229 = vld [vmem:[%s3 + $0xe0] sm:$0xff]
        %v4230 = vld [vmem:[%s3 + $0x100] sm:$0xff]
        %v4231 = vld [vmem:[%s3 + $0x120] sm:$0xff]
        %v4232 = vld [vmem:[%s3 + $0x140] sm:$0xff]
        %v4233 = vld [vmem:[%s3 + $0x160] sm:$0xff]
        %v4234 = vld [vmem:[%s3 + $0x180] sm:$0xff]
        %v4235 = vld [vmem:[%s3 + $0x1a0] sm:$0xff]
        %v4236 = vld [vmem:[%s3 + $0x1c0] sm:$0xff]
        %v4237 = vld [vmem:[%s3 + $0x1e0] sm:$0xff]
        %v4238 = vld [vmem:[%s8 + $0x40] sm:$0xff]
        %v4239 = vld [vmem:[%s8 + $0x48] sm:$0xff]
        %v4240 = vld [vmem:[%s8 + $0x50] sm:$0xff]
        %v4241 = vld [vmem:[%s8 + $0x58] sm:$0xff]
        %v4242 = vld [vmem:[%s8 + $0x60] sm:$0xff]
        %v4243 = vld [vmem:[%s8 + $0x68] sm:$0xff]
        %v4244 = vld [vmem:[%s8 + $0x70] sm:$0xff]
        %v4245 = vld [vmem:[%s8 + $0x78] sm:$0xff]
        %4246 = vmatprep.subr.mxu0 0.0
        %4247 = vmatpush1.msra.mxu0 0.0
        %4248 = vmatprep.subr.mxu0 0.0
        %4249 = vmatpush1.msra.mxu0 0.0
        %4250 = vmatprep.subr.mxu0 0.0
        %4251 = vmatpush1.msra.mxu0 0.0
        %4252 = vmatprep.subr.mxu0 0.0
        %4253 = vmatpush1.msra.mxu0 0.0
        %4254 = vmatprep.subr.mxu0 0.0
        %4255 = vmatpush1.msra.mxu0 0.0
        %4256 = vmatprep.subr.mxu0 0.0
        %4257 = vmatpush1.msra.mxu0 0.0
        %4258 = vmatprep.subr.mxu0 0.0
        %4259 = vmatpush1.msra.mxu0 0.0
        %4260 = vmatprep.subr.mxu0 0.0
        %4261 = vmatpush1.msra.mxu0 0.0
        %4262 = vmatprep.subr.mxu0 0.0
        %4263 = vmatpush1.msra.mxu0 %v4245
        %4264 = vmatprep.subr.mxu0 0.0
        %4265 = vmatpush1.msra.mxu0 %v4244
        %4266 = vmatprep.subr.mxu0 0.0
        %4267 = vmatpush1.msra.mxu0 %v4243
        %4268 = vmatprep.subr.mxu0 0.0
        %4269 = vmatpush1.msra.mxu0 %v4242
        %4270 = vmatprep.subr.mxu0 0.0
        %4271 = vmatpush1.msra.mxu0 %v4241
        %4272 = vmatprep.subr.mxu0 0.0
        %4273 = vmatpush1.msra.mxu0 %v4240
        %4274 = vmatprep.subr.mxu0 0.0
        %4275 = vmatpush1.msra.mxu0 %v4239
        %4276 = vmatprep.subr.mxu0 0.0
        %4277 = vmatpush1.msra.mxu0 %v4238
        %4278 = vmatprep.subr.mxu0 0.0
        %4279 = vmatpush2.msra.mxu0 0.0
        %4280 = vmatprep.subr.mxu0 0.0
        %4281 = vmatpush2.msra.mxu0 0.0
        %4282 = vmatprep.subr.mxu0 0.0
        %4283 = vmatpush2.msra.mxu0 0.0
        %4284 = vmatprep.subr.mxu0 0.0
        %4285 = vmatpush2.msra.mxu0 0.0
        %4286 = vmatprep.subr.mxu0 0.0
        %4287 = vmatpush2.msra.mxu0 0.0
        %4288 = vmatprep.subr.mxu0 0.0
        %4289 = vmatpush2.msra.mxu0 0.0
        %4290 = vmatprep.subr.mxu0 0.0
        %4291 = vmatpush2.msra.mxu0 0.0
        %4292 = vmatprep.subr.mxu0 0.0
        %4293 = vmatpush2.msra.mxu0 0.0
        %4294 = vmatprep.subr.mxu0 0.0
        %4295 = vmatpush2.msra.mxu0 0.0
        %4296 = vmatprep.subr.mxu0 0.0
        %4297 = vmatpush2.msra.mxu0 0.0
        %4298 = vmatprep.subr.mxu0 0.0
        %4299 = vmatpush2.msra.mxu0 0.0
        %4300 = vmatprep.subr.mxu0 0.0
        %4301 = vmatpush2.msra.mxu0 0.0
        %4302 = vmatprep.subr.mxu0 0.0
        %4303 = vmatpush2.msra.mxu0 0.0
        %4304 = vmatprep.subr.mxu0 0.0
        %4305 = vmatpush2.msra.mxu0 0.0
        %4306 = vmatprep.subr.mxu0 0.0
        %4307 = vmatpush2.msra.mxu0 0.0
        %4308 = vmatprep.subr.mxu0 0.0
        %4309 = vmatpush2.msra.mxu0 0.0
        %4310 = vmatprep.mubr.f32.mxu0 0.0
        %4311 = vmatmul.mubr.f32.gmra.mxu0 %v4030
        %v4312 = vpop.f32.mrf.mxu0
        %v4313 = vadd.f32 0.0, %v4312
        %v4314 = vpop.f32.mrf.mxu0
        %4315 = vmatprep.mubr.f32.mxu0 0.0
        %4316 = vmatmul.mubr.f32.gmra.mxu0 %v4033
        %v4317 = vpop.f32.mrf.mxu0
        %v4318 = vadd.f32 0.0, %v4317
        %v4319 = vpop.f32.mrf.mxu0
        %4320 = vmatprep.mubr.f32.mxu0 0.0
        %4321 = vmatmul.mubr.f32.gmra.mxu0 %v4036
        %v4322 = vpop.f32.mrf.mxu0
        %v4323 = vadd.f32 0.0, %v4322
        %v4324 = vpop.f32.mrf.mxu0
        %4325 = vmatprep.mubr.f32.mxu0 0.0
        %4326 = vmatmul.mubr.f32.gmra.mxu0 %v4039
        %v4327 = vpop.f32.mrf.mxu0
        %v4328 = vadd.f32 0.0, %v4327
        %v4329 = vpop.f32.mrf.mxu0
        %4330 = vmatprep.mubr.f32.mxu0 0.0
        %4331 = vmatmul.mubr.f32.gmra.mxu0 %v4042
        %v4332 = vpop.f32.mrf.mxu0
        %v4333 = vadd.f32 0.0, %v4332
        %v4334 = vpop.f32.mrf.mxu0
        %4335 = vmatprep.mubr.f32.mxu0 0.0
        %4336 = vmatmul.mubr.f32.gmra.mxu0 %v4045
        %v4337 = vpop.f32.mrf.mxu0
        %v4338 = vadd.f32 0.0, %v4337
        %v4339 = vpop.f32.mrf.mxu0
        %4340 = vmatprep.mubr.f32.mxu0 0.0
        %4341 = vmatmul.mubr.f32.gmra.mxu0 %v4048
        %v4342 = vpop.f32.mrf.mxu0
        %v4343 = vadd.f32 0.0, %v4342
        %v4344 = vpop.f32.mrf.mxu0
        %4345 = vmatprep.mubr.f32.mxu0 0.0
        %4346 = vmatmul.mubr.f32.gmra.mxu0 %v4051
        %v4347 = vpop.f32.mrf.mxu0
        %v4348 = vadd.f32 0.0, %v4347
        %v4349 = vpop.f32.mrf.mxu0
        %4350 = vmatprep.mubr.f32.mxu0 0.0
        %4351 = vmatmul.mubr.f32.gmra.mxu0 %v4054
        %v4352 = vpop.f32.mrf.mxu0
        %v4353 = vadd.f32 0.0, %v4352
        %v4354 = vpop.f32.mrf.mxu0
        %4355 = vmatprep.mubr.f32.mxu0 0.0
        %4356 = vmatmul.mubr.f32.gmra.mxu0 %v4057
        %v4357 = vpop.f32.mrf.mxu0
        %v4358 = vadd.f32 0.0, %v4357
        %v4359 = vpop.f32.mrf.mxu0
        %4360 = vmatprep.mubr.f32.mxu0 0.0
        %4361 = vmatmul.mubr.f32.gmra.mxu0 %v4060
        %v4362 = vpop.f32.mrf.mxu0
        %v4363 = vadd.f32 0.0, %v4362
        %v4364 = vpop.f32.mrf.mxu0
        %4365 = vmatprep.mubr.f32.mxu0 0.0
        %4366 = vmatmul.mubr.f32.gmra.mxu0 %v4063
        %v4367 = vpop.f32.mrf.mxu0
        %v4368 = vadd.f32 0.0, %v4367
        %v4369 = vpop.f32.mrf.mxu0
        %4370 = vmatprep.mubr.f32.mxu0 0.0
        %4371 = vmatmul.mubr.f32.gmra.mxu0 %v4066
        %v4372 = vpop.f32.mrf.mxu0
        %v4373 = vadd.f32 0.0, %v4372
        %v4374 = vpop.f32.mrf.mxu0
        %4375 = vmatprep.mubr.f32.mxu0 0.0
        %4376 = vmatmul.mubr.f32.gmra.mxu0 %v4069
        %v4377 = vpop.f32.mrf.mxu0
        %v4378 = vadd.f32 0.0, %v4377
        %v4379 = vpop.f32.mrf.mxu0
        %4380 = vmatprep.mubr.f32.mxu0 0.0
        %4381 = vmatmul.mubr.f32.gmra.mxu0 %v4072
        %v4382 = vpop.f32.mrf.mxu0
        %v4383 = vadd.f32 0.0, %v4382
        %v4384 = vpop.f32.mrf.mxu0
        %4385 = vmatprep.mubr.f32.mxu0 0.0
        %4386 = vmatmul.mubr.f32.gmra.mxu0 %v4075
        %v4387 = vpop.f32.mrf.mxu0
        %v4388 = vadd.f32 0.0, %v4387
        %v4389 = vpop.f32.mrf.mxu0
        %4390 = vdwg.mxu0
        %v4391 = vld [vmem:[%s3 + $0x8] sm:$0xff]
        %v4392 = vld [vmem:[%s3 + $0x28] sm:$0xff]
        %v4393 = vld [vmem:[%s3 + $0x48] sm:$0xff]
        %v4394 = vld [vmem:[%s3 + $0x68] sm:$0xff]
        %v4395 = vld [vmem:[%s3 + $0x88] sm:$0xff]
        %v4396 = vld [vmem:[%s3 + $0xa8] sm:$0xff]
        %v4397 = vld [vmem:[%s3 + $0xc8] sm:$0xff]
        %v4398 = vld [vmem:[%s3 + $0xe8] sm:$0xff]
        %v4399 = vld [vmem:[%s3 + $0x108] sm:$0xff]
        %v4400 = vld [vmem:[%s3 + $0x128] sm:$0xff]
        %v4401 = vld [vmem:[%s3 + $0x148] sm:$0xff]
        %v4402 = vld [vmem:[%s3 + $0x168] sm:$0xff]
        %v4403 = vld [vmem:[%s3 + $0x188] sm:$0xff]
        %v4404 = vld [vmem:[%s3 + $0x1a8] sm:$0xff]
        %v4405 = vld [vmem:[%s3 + $0x1c8] sm:$0xff]
        %v4406 = vld [vmem:[%s3 + $0x1e8] sm:$0xff]
        %4407 = vmatprep.subr.mxu0 0.0
        %4408 = vmatpush1.msra.mxu0 %v4388
        %4409 = vmatprep.subr.mxu0 0.0
        %4410 = vmatpush1.msra.mxu0 %v4383
        %4411 = vmatprep.subr.mxu0 0.0
        %4412 = vmatpush1.msra.mxu0 %v4378
        %4413 = vmatprep.subr.mxu0 0.0
        %4414 = vmatpush1.msra.mxu0 %v4373
        %4415 = vmatprep.subr.mxu0 0.0
        %4416 = vmatpush1.msra.mxu0 %v4368
        %4417 = vmatprep.subr.mxu0 0.0
        %4418 = vmatpush1.msra.mxu0 %v4363
        %4419 = vmatprep.subr.mxu0 0.0
        %4420 = vmatpush1.msra.mxu0 %v4358
        %4421 = vmatprep.subr.mxu0 0.0
        %4422 = vmatpush1.msra.mxu0 %v4353
        %4423 = vmatprep.subr.mxu0 0.0
        %4424 = vmatpush1.msra.mxu0 %v4348
        %4425 = vmatprep.subr.mxu0 0.0
        %4426 = vmatpush1.msra.mxu0 %v4343
        %4427 = vmatprep.subr.mxu0 0.0
        %4428 = vmatpush1.msra.mxu0 %v4338
        %4429 = vmatprep.subr.mxu0 0.0
        %4430 = vmatpush1.msra.mxu0 %v4333
        %4431 = vmatprep.subr.mxu0 0.0
        %4432 = vmatpush1.msra.mxu0 %v4328
        %4433 = vmatprep.subr.mxu0 0.0
        %4434 = vmatpush1.msra.mxu0 %v4323
        %4435 = vmatprep.subr.mxu0 0.0
        %4436 = vmatpush1.msra.mxu0 %v4318
        %4437 = vmatprep.subr.mxu0 0.0
        %4438 = vmatpush1.msra.mxu0 %v4313
        %4439 = vmatprep.subr.mxu0 0.0
        %4440 = vmatpush2.msra.mxu0 0.0
        %4441 = vmatprep.subr.mxu0 0.0
        %4442 = vmatpush2.msra.mxu0 0.0
        %4443 = vmatprep.subr.mxu0 0.0
        %4444 = vmatpush2.msra.mxu0 0.0
        %4445 = vmatprep.subr.mxu0 0.0
        %4446 = vmatpush2.msra.mxu0 0.0
        %4447 = vmatprep.subr.mxu0 0.0
        %4448 = vmatpush2.msra.mxu0 0.0
        %4449 = vmatprep.subr.mxu0 0.0
        %4450 = vmatpush2.msra.mxu0 0.0
        %4451 = vmatprep.subr.mxu0 0.0
        %4452 = vmatpush2.msra.mxu0 0.0
        %4453 = vmatprep.subr.mxu0 0.0
        %4454 = vmatpush2.msra.mxu0 0.0
        %4455 = vmatprep.subr.mxu0 0.0
        %4456 = vmatpush2.msra.mxu0 0.0
        %4457 = vmatprep.subr.mxu0 0.0
        %4458 = vmatpush2.msra.mxu0 0.0
        %4459 = vmatprep.subr.mxu0 0.0
        %4460 = vmatpush2.msra.mxu0 0.0
        %4461 = vmatprep.subr.mxu0 0.0
        %4462 = vmatpush2.msra.mxu0 0.0
        %4463 = vmatprep.subr.mxu0 0.0
        %4464 = vmatpush2.msra.mxu0 0.0
        %4465 = vmatprep.subr.mxu0 0.0
        %4466 = vmatpush2.msra.mxu0 0.0
        %4467 = vmatprep.subr.mxu0 0.0
        %4468 = vmatpush2.msra.mxu0 0.0
        %4469 = vmatprep.subr.mxu0 0.0
        %4470 = vmatpush2.msra.mxu0 0.0
        %4471 = vmatprep.mubr.f32.mxu0 0.0
        %4472 = vmatmul.mubr.f32.gmra.mxu0 %v4391
        %v4473 = vpop.f32.mrf.mxu0
        %v4474 = vadd.f32 0.0, %v4473
        %v4475 = vpop.f32.mrf.mxu0
        %4476 = vmatprep.mubr.f32.mxu0 0.0
        %4477 = vmatmul.mubr.f32.gmra.mxu0 %v4392
        %v4478 = vpop.f32.mrf.mxu0
        %v4479 = vadd.f32 0.0, %v4478
        %v4480 = vpop.f32.mrf.mxu0
        %4481 = vmatprep.mubr.f32.mxu0 0.0
        %4482 = vmatmul.mubr.f32.gmra.mxu0 %v4393
        %v4483 = vpop.f32.mrf.mxu0
        %v4484 = vadd.f32 0.0, %v4483
        %v4485 = vpop.f32.mrf.mxu0
        %4486 = vmatprep.mubr.f32.mxu0 0.0
        %4487 = vmatmul.mubr.f32.gmra.mxu0 %v4394
        %v4488 = vpop.f32.mrf.mxu0
        %v4489 = vadd.f32 0.0, %v4488
        %v4490 = vpop.f32.mrf.mxu0
        %4491 = vmatprep.mubr.f32.mxu0 0.0
        %4492 = vmatmul.mubr.f32.gmra.mxu0 %v4395
        %v4493 = vpop.f32.mrf.mxu0
        %v4494 = vadd.f32 0.0, %v4493
        %v4495 = vpop.f32.mrf.mxu0
        %4496 = vmatprep.mubr.f32.mxu0 0.0
        %4497 = vmatmul.mubr.f32.gmra.mxu0 %v4396
        %v4498 = vpop.f32.mrf.mxu0
        %v4499 = vadd.f32 0.0, %v4498
        %v4500 = vpop.f32.mrf.mxu0
        %4501 = vmatprep.mubr.f32.mxu0 0.0
        %4502 = vmatmul.mubr.f32.gmra.mxu0 %v4397
        %v4503 = vpop.f32.mrf.mxu0
        %v4504 = vadd.f32 0.0, %v4503
        %v4505 = vpop.f32.mrf.mxu0
        %4506 = vmatprep.mubr.f32.mxu0 0.0
        %4507 = vmatmul.mubr.f32.gmra.mxu0 %v4398
        %v4508 = vpop.f32.mrf.mxu0
        %v4509 = vadd.f32 0.0, %v4508
        %v4510 = vpop.f32.mrf.mxu0
        %4511 = vmatprep.mubr.f32.mxu0 0.0
        %4512 = vmatmul.mubr.f32.gmra.mxu0 %v4399
        %v4513 = vpop.f32.mrf.mxu0
        %v4514 = vadd.f32 0.0, %v4513
        %v4515 = vpop.f32.mrf.mxu0
        %4516 = vmatprep.mubr.f32.mxu0 0.0
        %4517 = vmatmul.mubr.f32.gmra.mxu0 %v4400
        %v4518 = vpop.f32.mrf.mxu0
        %v4519 = vadd.f32 0.0, %v4518
        %v4520 = vpop.f32.mrf.mxu0
        %4521 = vmatprep.mubr.f32.mxu0 0.0
        %4522 = vmatmul.mubr.f32.gmra.mxu0 %v4401
        %v4523 = vpop.f32.mrf.mxu0
        %v4524 = vadd.f32 0.0, %v4523
        %v4525 = vpop.f32.mrf.mxu0
        %4526 = vmatprep.mubr.f32.mxu0 0.0
        %4527 = vmatmul.mubr.f32.gmra.mxu0 %v4402
        %v4528 = vpop.f32.mrf.mxu0
        %v4529 = vadd.f32 0.0, %v4528
        %v4530 = vpop.f32.mrf.mxu0
        %4531 = vmatprep.mubr.f32.mxu0 0.0
        %4532 = vmatmul.mubr.f32.gmra.mxu0 %v4403
        %v4533 = vpop.f32.mrf.mxu0
        %v4534 = vadd.f32 0.0, %v4533
        %v4535 = vpop.f32.mrf.mxu0
        %4536 = vmatprep.mubr.f32.mxu0 0.0
        %4537 = vmatmul.mubr.f32.gmra.mxu0 %v4404
        %v4538 = vpop.f32.mrf.mxu0
        %v4539 = vadd.f32 0.0, %v4538
        %v4540 = vpop.f32.mrf.mxu0
        %4541 = vmatprep.mubr.f32.mxu0 0.0
        %4542 = vmatmul.mubr.f32.gmra.mxu0 %v4405
        %v4543 = vpop.f32.mrf.mxu0
        %v4544 = vadd.f32 0.0, %v4543
        %v4545 = vpop.f32.mrf.mxu0
        %4546 = vmatprep.mubr.f32.mxu0 0.0
        %4547 = vmatmul.mubr.f32.gmra.mxu0 %v4406
        %v4548 = vpop.f32.mrf.mxu0
        %v4549 = vadd.f32 0.0, %v4548
        %v4550 = vpop.f32.mrf.mxu0
        %4551 = vdwg.mxu0
        %4552 = vmatprep.subr.mxu0 0.0
        %4553 = vmatpush1.msra.mxu0 %v4219
        %4554 = vmatprep.subr.mxu0 0.0
        %4555 = vmatpush1.msra.mxu0 %v4214
        %4556 = vmatprep.subr.mxu0 0.0
        %4557 = vmatpush1.msra.mxu0 %v4209
        %4558 = vmatprep.subr.mxu0 0.0
        %4559 = vmatpush1.msra.mxu0 %v4204
        %4560 = vmatprep.subr.mxu0 0.0
        %4561 = vmatpush1.msra.mxu0 %v4199
        %4562 = vmatprep.subr.mxu0 0.0
        %4563 = vmatpush1.msra.mxu0 %v4194
        %4564 = vmatprep.subr.mxu0 0.0
        %4565 = vmatpush1.msra.mxu0 %v4189
        %4566 = vmatprep.subr.mxu0 0.0
        %4567 = vmatpush1.msra.mxu0 %v4184
        %4568 = vmatprep.subr.mxu0 0.0
        %4569 = vmatpush1.msra.mxu0 %v4179
        %4570 = vmatprep.subr.mxu0 0.0
        %4571 = vmatpush1.msra.mxu0 %v4174
        %4572 = vmatprep.subr.mxu0 0.0
        %4573 = vmatpush1.msra.mxu0 %v4169
        %4574 = vmatprep.subr.mxu0 0.0
        %4575 = vmatpush1.msra.mxu0 %v4164
        %4576 = vmatprep.subr.mxu0 0.0
        %4577 = vmatpush1.msra.mxu0 %v4159
        %4578 = vmatprep.subr.mxu0 0.0
        %4579 = vmatpush1.msra.mxu0 %v4154
        %4580 = vmatprep.subr.mxu0 0.0
        %4581 = vmatpush1.msra.mxu0 %v4149
        %4582 = vmatprep.subr.mxu0 0.0
        %4583 = vmatpush1.msra.mxu0 %v4144
        %4584 = vmatprep.subr.mxu0 0.0
        %4585 = vmatpush2.msra.mxu0 0.0
        %4586 = vmatprep.subr.mxu0 0.0
        %4587 = vmatpush2.msra.mxu0 0.0
        %4588 = vmatprep.subr.mxu0 0.0
        %4589 = vmatpush2.msra.mxu0 0.0
        %4590 = vmatprep.subr.mxu0 0.0
        %4591 = vmatpush2.msra.mxu0 0.0
        %4592 = vmatprep.subr.mxu0 0.0
        %4593 = vmatpush2.msra.mxu0 0.0
        %4594 = vmatprep.subr.mxu0 0.0
        %4595 = vmatpush2.msra.mxu0 0.0
        %4596 = vmatprep.subr.mxu0 0.0
        %4597 = vmatpush2.msra.mxu0 0.0
        %4598 = vmatprep.subr.mxu0 0.0
        %4599 = vmatpush2.msra.mxu0 0.0
        %4600 = vmatprep.subr.mxu0 0.0
        %4601 = vmatpush2.msra.mxu0 0.0
        %4602 = vmatprep.subr.mxu0 0.0
        %4603 = vmatpush2.msra.mxu0 0.0
        %4604 = vmatprep.subr.mxu0 0.0
        %4605 = vmatpush2.msra.mxu0 0.0
        %4606 = vmatprep.subr.mxu0 0.0
        %4607 = vmatpush2.msra.mxu0 0.0
        %4608 = vmatprep.subr.mxu0 0.0
        %4609 = vmatpush2.msra.mxu0 0.0
        %4610 = vmatprep.subr.mxu0 0.0
        %4611 = vmatpush2.msra.mxu0 0.0
        %4612 = vmatprep.subr.mxu0 0.0
        %4613 = vmatpush2.msra.mxu0 0.0
        %4614 = vmatprep.subr.mxu0 0.0
        %4615 = vmatpush2.msra.mxu0 0.0
        %4616 = vmatprep.mubr.f32.mxu0 0.0
        %4617 = vmatmul.mubr.f32.gmra.mxu0 %v4222
        %v4618 = vpop.f32.mrf.mxu0
        %v4619 = vadd.f32 %v4474, %v4618
        %v4620 = vpop.f32.mrf.mxu0
        %4621 = vmatprep.mubr.f32.mxu0 0.0
        %4622 = vmatmul.mubr.f32.gmra.mxu0 %v4223
        %v4623 = vpop.f32.mrf.mxu0
        %v4624 = vadd.f32 %v4479, %v4623
        %v4625 = vpop.f32.mrf.mxu0
        %4626 = vmatprep.mubr.f32.mxu0 0.0
        %4627 = vmatmul.mubr.f32.gmra.mxu0 %v4224
        %v4628 = vpop.f32.mrf.mxu0
        %v4629 = vadd.f32 %v4484, %v4628
        %v4630 = vpop.f32.mrf.mxu0
        %4631 = vmatprep.mubr.f32.mxu0 0.0
        %4632 = vmatmul.mubr.f32.gmra.mxu0 %v4225
        %v4633 = vpop.f32.mrf.mxu0
        %v4634 = vadd.f32 %v4489, %v4633
        %v4635 = vpop.f32.mrf.mxu0
        %4636 = vmatprep.mubr.f32.mxu0 0.0
        %4637 = vmatmul.mubr.f32.gmra.mxu0 %v4226
        %v4638 = vpop.f32.mrf.mxu0
        %v4639 = vadd.f32 %v4494, %v4638
        %v4640 = vpop.f32.mrf.mxu0
        %4641 = vmatprep.mubr.f32.mxu0 0.0
        %4642 = vmatmul.mubr.f32.gmra.mxu0 %v4227
        %v4643 = vpop.f32.mrf.mxu0
        %v4644 = vadd.f32 %v4499, %v4643
        %v4645 = vpop.f32.mrf.mxu0
        %4646 = vmatprep.mubr.f32.mxu0 0.0
        %4647 = vmatmul.mubr.f32.gmra.mxu0 %v4228
        %v4648 = vpop.f32.mrf.mxu0
        %v4649 = vadd.f32 %v4504, %v4648
        %v4650 = vpop.f32.mrf.mxu0
        %4651 = vmatprep.mubr.f32.mxu0 0.0
        %4652 = vmatmul.mubr.f32.gmra.mxu0 %v4229
        %v4653 = vpop.f32.mrf.mxu0
        %v4654 = vadd.f32 %v4509, %v4653
        %v4655 = vpop.f32.mrf.mxu0
        %4656 = vmatprep.mubr.f32.mxu0 0.0
        %4657 = vmatmul.mubr.f32.gmra.mxu0 %v4230
        %v4658 = vpop.f32.mrf.mxu0
        %v4659 = vadd.f32 %v4514, %v4658
        %v4660 = vpop.f32.mrf.mxu0
        %4661 = vmatprep.mubr.f32.mxu0 0.0
        %4662 = vmatmul.mubr.f32.gmra.mxu0 %v4231
        %v4663 = vpop.f32.mrf.mxu0
        %v4664 = vadd.f32 %v4519, %v4663
        %v4665 = vpop.f32.mrf.mxu0
        %4666 = vmatprep.mubr.f32.mxu0 0.0
        %4667 = vmatmul.mubr.f32.gmra.mxu0 %v4232
        %v4668 = vpop.f32.mrf.mxu0
        %v4669 = vadd.f32 %v4524, %v4668
        %v4670 = vpop.f32.mrf.mxu0
        %4671 = vmatprep.mubr.f32.mxu0 0.0
        %4672 = vmatmul.mubr.f32.gmra.mxu0 %v4233
        %v4673 = vpop.f32.mrf.mxu0
        %v4674 = vadd.f32 %v4529, %v4673
        %v4675 = vpop.f32.mrf.mxu0
        %4676 = vmatprep.mubr.f32.mxu0 0.0
        %4677 = vmatmul.mubr.f32.gmra.mxu0 %v4234
        %v4678 = vpop.f32.mrf.mxu0
        %v4679 = vadd.f32 %v4534, %v4678
        %v4680 = vpop.f32.mrf.mxu0
        %4681 = vmatprep.mubr.f32.mxu0 0.0
        %4682 = vmatmul.mubr.f32.gmra.mxu0 %v4235
        %v4683 = vpop.f32.mrf.mxu0
        %v4684 = vadd.f32 %v4539, %v4683
        %v4685 = vpop.f32.mrf.mxu0
        %4686 = vmatprep.mubr.f32.mxu0 0.0
        %4687 = vmatmul.mubr.f32.gmra.mxu0 %v4236
        %v4688 = vpop.f32.mrf.mxu0
        %v4689 = vadd.f32 %v4544, %v4688
        %v4690 = vpop.f32.mrf.mxu0
        %4691 = vmatprep.mubr.f32.mxu0 0.0
        %4692 = vmatmul.mubr.f32.gmra.mxu0 %v4237
        %v4693 = vpop.f32.mrf.mxu0
        %v4694 = vadd.f32 %v4549, %v4693
        %v4695 = vpop.f32.mrf.mxu0
        %4696 = vdwg.mxu0
        %v4697 = vld [vmem:[%s8 + $0x80] sm:$0xff]
        %v4698 = vld [vmem:[%s8 + $0x88] sm:$0xff]
        %v4699 = vld [vmem:[%s8 + $0x90] sm:$0xff]
        %v4700 = vld [vmem:[%s8 + $0x98] sm:$0xff]
        %v4701 = vld [vmem:[%s8 + $0xa0] sm:$0xff]
        %v4702 = vld [vmem:[%s8 + $0xa8] sm:$0xff]
        %v4703 = vld [vmem:[%s8 + $0xb0] sm:$0xff]
        %v4704 = vld [vmem:[%s8 + $0xb8] sm:$0xff]
        %4705 = vmatprep.subr.mxu0 0.0
        %4706 = vmatpush1.msra.mxu0 0.0
        %4707 = vmatprep.subr.mxu0 0.0
        %4708 = vmatpush1.msra.mxu0 0.0
        %4709 = vmatprep.subr.mxu0 0.0
        %4710 = vmatpush1.msra.mxu0 0.0
        %4711 = vmatprep.subr.mxu0 0.0
        %4712 = vmatpush1.msra.mxu0 0.0
        %4713 = vmatprep.subr.mxu0 0.0
        %4714 = vmatpush1.msra.mxu0 0.0
        %4715 = vmatprep.subr.mxu0 0.0
        %4716 = vmatpush1.msra.mxu0 0.0
        %4717 = vmatprep.subr.mxu0 0.0
        %4718 = vmatpush1.msra.mxu0 0.0
        %4719 = vmatprep.subr.mxu0 0.0
        %4720 = vmatpush1.msra.mxu0 0.0
        %4721 = vmatprep.subr.mxu0 0.0
        %4722 = vmatpush1.msra.mxu0 %v4704
        %4723 = vmatprep.subr.mxu0 0.0
        %4724 = vmatpush1.msra.mxu0 %v4703
        %4725 = vmatprep.subr.mxu0 0.0
        %4726 = vmatpush1.msra.mxu0 %v4702
        %4727 = vmatprep.subr.mxu0 0.0
        %4728 = vmatpush1.msra.mxu0 %v4701
        %4729 = vmatprep.subr.mxu0 0.0
        %4730 = vmatpush1.msra.mxu0 %v4700
        %4731 = vmatprep.subr.mxu0 0.0
        %4732 = vmatpush1.msra.mxu0 %v4699
        %4733 = vmatprep.subr.mxu0 0.0
        %4734 = vmatpush1.msra.mxu0 %v4698
        %4735 = vmatprep.subr.mxu0 0.0
        %4736 = vmatpush1.msra.mxu0 %v4697
        %4737 = vmatprep.subr.mxu0 0.0
        %4738 = vmatpush2.msra.mxu0 0.0
        %4739 = vmatprep.subr.mxu0 0.0
        %4740 = vmatpush2.msra.mxu0 0.0
        %4741 = vmatprep.subr.mxu0 0.0
        %4742 = vmatpush2.msra.mxu0 0.0
        %4743 = vmatprep.subr.mxu0 0.0
        %4744 = vmatpush2.msra.mxu0 0.0
        %4745 = vmatprep.subr.mxu0 0.0
        %4746 = vmatpush2.msra.mxu0 0.0
        %4747 = vmatprep.subr.mxu0 0.0
        %4748 = vmatpush2.msra.mxu0 0.0
        %4749 = vmatprep.subr.mxu0 0.0
        %4750 = vmatpush2.msra.mxu0 0.0
        %4751 = vmatprep.subr.mxu0 0.0
        %4752 = vmatpush2.msra.mxu0 0.0
        %4753 = vmatprep.subr.mxu0 0.0
        %4754 = vmatpush2.msra.mxu0 0.0
        %4755 = vmatprep.subr.mxu0 0.0
        %4756 = vmatpush2.msra.mxu0 0.0
        %4757 = vmatprep.subr.mxu0 0.0
        %4758 = vmatpush2.msra.mxu0 0.0
        %4759 = vmatprep.subr.mxu0 0.0
        %4760 = vmatpush2.msra.mxu0 0.0
        %4761 = vmatprep.subr.mxu0 0.0
        %4762 = vmatpush2.msra.mxu0 0.0
        %4763 = vmatprep.subr.mxu0 0.0
        %4764 = vmatpush2.msra.mxu0 0.0
        %4765 = vmatprep.subr.mxu0 0.0
        %4766 = vmatpush2.msra.mxu0 0.0
        %4767 = vmatprep.subr.mxu0 0.0
        %4768 = vmatpush2.msra.mxu0 0.0
        %4769 = vmatprep.mubr.f32.mxu0 0.0
        %4770 = vmatmul.mubr.f32.gmra.mxu0 %v4030
        %v4771 = vpop.f32.mrf.mxu0
        %v4772 = vadd.f32 0.0, %v4771
        %v4773 = vpop.f32.mrf.mxu0
        %4774 = vmatprep.mubr.f32.mxu0 0.0
        %4775 = vmatmul.mubr.f32.gmra.mxu0 %v4033
        %v4776 = vpop.f32.mrf.mxu0
        %v4777 = vadd.f32 0.0, %v4776
        %v4778 = vpop.f32.mrf.mxu0
        %4779 = vmatprep.mubr.f32.mxu0 0.0
        %4780 = vmatmul.mubr.f32.gmra.mxu0 %v4036
        %v4781 = vpop.f32.mrf.mxu0
        %v4782 = vadd.f32 0.0, %v4781
        %v4783 = vpop.f32.mrf.mxu0
        %4784 = vmatprep.mubr.f32.mxu0 0.0
        %4785 = vmatmul.mubr.f32.gmra.mxu0 %v4039
        %v4786 = vpop.f32.mrf.mxu0
        %v4787 = vadd.f32 0.0, %v4786
        %v4788 = vpop.f32.mrf.mxu0
        %4789 = vmatprep.mubr.f32.mxu0 0.0
        %4790 = vmatmul.mubr.f32.gmra.mxu0 %v4042
        %v4791 = vpop.f32.mrf.mxu0
        %v4792 = vadd.f32 0.0, %v4791
        %v4793 = vpop.f32.mrf.mxu0
        %4794 = vmatprep.mubr.f32.mxu0 0.0
        %4795 = vmatmul.mubr.f32.gmra.mxu0 %v4045
        %v4796 = vpop.f32.mrf.mxu0
        %v4797 = vadd.f32 0.0, %v4796
        %v4798 = vpop.f32.mrf.mxu0
        %4799 = vmatprep.mubr.f32.mxu0 0.0
        %4800 = vmatmul.mubr.f32.gmra.mxu0 %v4048
        %v4801 = vpop.f32.mrf.mxu0
        %v4802 = vadd.f32 0.0, %v4801
        %v4803 = vpop.f32.mrf.mxu0
        %4804 = vmatprep.mubr.f32.mxu0 0.0
        %4805 = vmatmul.mubr.f32.gmra.mxu0 %v4051
        %v4806 = vpop.f32.mrf.mxu0
        %v4807 = vadd.f32 0.0, %v4806
        %v4808 = vpop.f32.mrf.mxu0
        %4809 = vmatprep.mubr.f32.mxu0 0.0
        %4810 = vmatmul.mubr.f32.gmra.mxu0 %v4054
        %v4811 = vpop.f32.mrf.mxu0
        %v4812 = vadd.f32 0.0, %v4811
        %v4813 = vpop.f32.mrf.mxu0
        %4814 = vmatprep.mubr.f32.mxu0 0.0
        %4815 = vmatmul.mubr.f32.gmra.mxu0 %v4057
        %v4816 = vpop.f32.mrf.mxu0
        %v4817 = vadd.f32 0.0, %v4816
        %v4818 = vpop.f32.mrf.mxu0
        %4819 = vmatprep.mubr.f32.mxu0 0.0
        %4820 = vmatmul.mubr.f32.gmra.mxu0 %v4060
        %v4821 = vpop.f32.mrf.mxu0
        %v4822 = vadd.f32 0.0, %v4821
        %v4823 = vpop.f32.mrf.mxu0
        %4824 = vmatprep.mubr.f32.mxu0 0.0
        %4825 = vmatmul.mubr.f32.gmra.mxu0 %v4063
        %v4826 = vpop.f32.mrf.mxu0
        %v4827 = vadd.f32 0.0, %v4826
        %v4828 = vpop.f32.mrf.mxu0
        %4829 = vmatprep.mubr.f32.mxu0 0.0
        %4830 = vmatmul.mubr.f32.gmra.mxu0 %v4066
        %v4831 = vpop.f32.mrf.mxu0
        %v4832 = vadd.f32 0.0, %v4831
        %v4833 = vpop.f32.mrf.mxu0
        %4834 = vmatprep.mubr.f32.mxu0 0.0
        %4835 = vmatmul.mubr.f32.gmra.mxu0 %v4069
        %v4836 = vpop.f32.mrf.mxu0
        %v4837 = vadd.f32 0.0, %v4836
        %v4838 = vpop.f32.mrf.mxu0
        %4839 = vmatprep.mubr.f32.mxu0 0.0
        %4840 = vmatmul.mubr.f32.gmra.mxu0 %v4072
        %v4841 = vpop.f32.mrf.mxu0
        %v4842 = vadd.f32 0.0, %v4841
        %v4843 = vpop.f32.mrf.mxu0
        %4844 = vmatprep.mubr.f32.mxu0 0.0
        %4845 = vmatmul.mubr.f32.gmra.mxu0 %v4075
        %v4846 = vpop.f32.mrf.mxu0
        %v4847 = vadd.f32 0.0, %v4846
        %v4848 = vpop.f32.mrf.mxu0
        %4849 = vdwg.mxu0
        %v4850 = vld [vmem:[%s3 + $0x10] sm:$0xff]
        %v4851 = vld [vmem:[%s3 + $0x30] sm:$0xff]
        %v4852 = vld [vmem:[%s3 + $0x50] sm:$0xff]
        %v4853 = vld [vmem:[%s3 + $0x70] sm:$0xff]
        %v4854 = vld [vmem:[%s3 + $0x90] sm:$0xff]
        %v4855 = vld [vmem:[%s3 + $0xb0] sm:$0xff]
        %v4856 = vld [vmem:[%s3 + $0xd0] sm:$0xff]
        %v4857 = vld [vmem:[%s3 + $0xf0] sm:$0xff]
        %v4858 = vld [vmem:[%s3 + $0x110] sm:$0xff]
        %v4859 = vld [vmem:[%s3 + $0x130] sm:$0xff]
        %v4860 = vld [vmem:[%s3 + $0x150] sm:$0xff]
        %v4861 = vld [vmem:[%s3 + $0x170] sm:$0xff]
        %v4862 = vld [vmem:[%s3 + $0x190] sm:$0xff]
        %v4863 = vld [vmem:[%s3 + $0x1b0] sm:$0xff]
        %v4864 = vld [vmem:[%s3 + $0x1d0] sm:$0xff]
        %v4865 = vld [vmem:[%s3 + $0x1f0] sm:$0xff]
        %4866 = vmatprep.subr.mxu0 0.0
        %4867 = vmatpush1.msra.mxu0 %v4847
        %4868 = vmatprep.subr.mxu0 0.0
        %4869 = vmatpush1.msra.mxu0 %v4842
        %4870 = vmatprep.subr.mxu0 0.0
        %4871 = vmatpush1.msra.mxu0 %v4837
        %4872 = vmatprep.subr.mxu0 0.0
        %4873 = vmatpush1.msra.mxu0 %v4832
        %4874 = vmatprep.subr.mxu0 0.0
        %4875 = vmatpush1.msra.mxu0 %v4827
        %4876 = vmatprep.subr.mxu0 0.0
        %4877 = vmatpush1.msra.mxu0 %v4822
        %4878 = vmatprep.subr.mxu0 0.0
        %4879 = vmatpush1.msra.mxu0 %v4817
        %4880 = vmatprep.subr.mxu0 0.0
        %4881 = vmatpush1.msra.mxu0 %v4812
        %4882 = vmatprep.subr.mxu0 0.0
        %4883 = vmatpush1.msra.mxu0 %v4807
        %4884 = vmatprep.subr.mxu0 0.0
        %4885 = vmatpush1.msra.mxu0 %v4802
        %4886 = vmatprep.subr.mxu0 0.0
        %4887 = vmatpush1.msra.mxu0 %v4797
        %4888 = vmatprep.subr.mxu0 0.0
        %4889 = vmatpush1.msra.mxu0 %v4792
        %4890 = vmatprep.subr.mxu0 0.0
        %4891 = vmatpush1.msra.mxu0 %v4787
        %4892 = vmatprep.subr.mxu0 0.0
        %4893 = vmatpush1.msra.mxu0 %v4782
        %4894 = vmatprep.subr.mxu0 0.0
        %4895 = vmatpush1.msra.mxu0 %v4777
        %4896 = vmatprep.subr.mxu0 0.0
        %4897 = vmatpush1.msra.mxu0 %v4772
        %4898 = vmatprep.subr.mxu0 0.0
        %4899 = vmatpush2.msra.mxu0 0.0
        %4900 = vmatprep.subr.mxu0 0.0
        %4901 = vmatpush2.msra.mxu0 0.0
        %4902 = vmatprep.subr.mxu0 0.0
        %4903 = vmatpush2.msra.mxu0 0.0
        %4904 = vmatprep.subr.mxu0 0.0
        %4905 = vmatpush2.msra.mxu0 0.0
        %4906 = vmatprep.subr.mxu0 0.0
        %4907 = vmatpush2.msra.mxu0 0.0
        %4908 = vmatprep.subr.mxu0 0.0
        %4909 = vmatpush2.msra.mxu0 0.0
        %4910 = vmatprep.subr.mxu0 0.0
        %4911 = vmatpush2.msra.mxu0 0.0
        %4912 = vmatprep.subr.mxu0 0.0
        %4913 = vmatpush2.msra.mxu0 0.0
        %4914 = vmatprep.subr.mxu0 0.0
        %4915 = vmatpush2.msra.mxu0 0.0
        %4916 = vmatprep.subr.mxu0 0.0
        %4917 = vmatpush2.msra.mxu0 0.0
        %4918 = vmatprep.subr.mxu0 0.0
        %4919 = vmatpush2.msra.mxu0 0.0
        %4920 = vmatprep.subr.mxu0 0.0
        %4921 = vmatpush2.msra.mxu0 0.0
        %4922 = vmatprep.subr.mxu0 0.0
        %4923 = vmatpush2.msra.mxu0 0.0
        %4924 = vmatprep.subr.mxu0 0.0
        %4925 = vmatpush2.msra.mxu0 0.0
        %4926 = vmatprep.subr.mxu0 0.0
        %4927 = vmatpush2.msra.mxu0 0.0
        %4928 = vmatprep.subr.mxu0 0.0
        %4929 = vmatpush2.msra.mxu0 0.0
        %4930 = vmatprep.mubr.f32.mxu0 0.0
        %4931 = vmatmul.mubr.f32.gmra.mxu0 %v4850
        %v4932 = vpop.f32.mrf.mxu0
        %v4933 = vadd.f32 0.0, %v4932
        %v4934 = vpop.f32.mrf.mxu0
        %4935 = vmatprep.mubr.f32.mxu0 0.0
        %4936 = vmatmul.mubr.f32.gmra.mxu0 %v4851
        %v4937 = vpop.f32.mrf.mxu0
        %v4938 = vadd.f32 0.0, %v4937
        %v4939 = vpop.f32.mrf.mxu0
        %4940 = vmatprep.mubr.f32.mxu0 0.0
        %4941 = vmatmul.mubr.f32.gmra.mxu0 %v4852
        %v4942 = vpop.f32.mrf.mxu0
        %v4943 = vadd.f32 0.0, %v4942
        %v4944 = vpop.f32.mrf.mxu0
        %4945 = vmatprep.mubr.f32.mxu0 0.0
        %4946 = vmatmul.mubr.f32.gmra.mxu0 %v4853
        %v4947 = vpop.f32.mrf.mxu0
        %v4948 = vadd.f32 0.0, %v4947
        %v4949 = vpop.f32.mrf.mxu0
        %4950 = vmatprep.mubr.f32.mxu0 0.0
        %4951 = vmatmul.mubr.f32.gmra.mxu0 %v4854
        %v4952 = vpop.f32.mrf.mxu0
        %v4953 = vadd.f32 0.0, %v4952
        %v4954 = vpop.f32.mrf.mxu0
        %4955 = vmatprep.mubr.f32.mxu0 0.0
        %4956 = vmatmul.mubr.f32.gmra.mxu0 %v4855
        %v4957 = vpop.f32.mrf.mxu0
        %v4958 = vadd.f32 0.0, %v4957
        %v4959 = vpop.f32.mrf.mxu0
        %4960 = vmatprep.mubr.f32.mxu0 0.0
        %4961 = vmatmul.mubr.f32.gmra.mxu0 %v4856
        %v4962 = vpop.f32.mrf.mxu0
        %v4963 = vadd.f32 0.0, %v4962
        %v4964 = vpop.f32.mrf.mxu0
        %4965 = vmatprep.mubr.f32.mxu0 0.0
        %4966 = vmatmul.mubr.f32.gmra.mxu0 %v4857
        %v4967 = vpop.f32.mrf.mxu0
        %v4968 = vadd.f32 0.0, %v4967
        %v4969 = vpop.f32.mrf.mxu0
        %4970 = vmatprep.mubr.f32.mxu0 0.0
        %4971 = vmatmul.mubr.f32.gmra.mxu0 %v4858
        %v4972 = vpop.f32.mrf.mxu0
        %v4973 = vadd.f32 0.0, %v4972
        %v4974 = vpop.f32.mrf.mxu0
        %4975 = vmatprep.mubr.f32.mxu0 0.0
        %4976 = vmatmul.mubr.f32.gmra.mxu0 %v4859
        %v4977 = vpop.f32.mrf.mxu0
        %v4978 = vadd.f32 0.0, %v4977
        %v4979 = vpop.f32.mrf.mxu0
        %4980 = vmatprep.mubr.f32.mxu0 0.0
        %4981 = vmatmul.mubr.f32.gmra.mxu0 %v4860
        %v4982 = vpop.f32.mrf.mxu0
        %v4983 = vadd.f32 0.0, %v4982
        %v4984 = vpop.f32.mrf.mxu0
        %4985 = vmatprep.mubr.f32.mxu0 0.0
        %4986 = vmatmul.mubr.f32.gmra.mxu0 %v4861
        %v4987 = vpop.f32.mrf.mxu0
        %v4988 = vadd.f32 0.0, %v4987
        %v4989 = vpop.f32.mrf.mxu0
        %4990 = vmatprep.mubr.f32.mxu0 0.0
        %4991 = vmatmul.mubr.f32.gmra.mxu0 %v4862
        %v4992 = vpop.f32.mrf.mxu0
        %v4993 = vadd.f32 0.0, %v4992
        %v4994 = vpop.f32.mrf.mxu0
        %4995 = vmatprep.mubr.f32.mxu0 0.0
        %4996 = vmatmul.mubr.f32.gmra.mxu0 %v4863
        %v4997 = vpop.f32.mrf.mxu0
        %v4998 = vadd.f32 0.0, %v4997
        %v4999 = vpop.f32.mrf.mxu0
        %5000 = vmatprep.mubr.f32.mxu0 0.0
        %5001 = vmatmul.mubr.f32.gmra.mxu0 %v4864
        %v5002 = vpop.f32.mrf.mxu0
        %v5003 = vadd.f32 0.0, %v5002
        %v5004 = vpop.f32.mrf.mxu0
        %5005 = vmatprep.mubr.f32.mxu0 0.0
        %5006 = vmatmul.mubr.f32.gmra.mxu0 %v4865
        %v5007 = vpop.f32.mrf.mxu0
        %v5008 = vadd.f32 0.0, %v5007
        %v5009 = vpop.f32.mrf.mxu0
        %5010 = vdwg.mxu0
        %v5011 = vadd.f32 %v4619, %v4933
        %v5012 = vadd.f32 %v4624, %v4938
        %v5013 = vadd.f32 %v4629, %v4943
        %v5014 = vadd.f32 %v4634, %v4948
        %v5015 = vadd.f32 %v4639, %v4953
        %v5016 = vadd.f32 %v4644, %v4958
        %v5017 = vadd.f32 %v4649, %v4963
        %v5018 = vadd.f32 %v4654, %v4968
        %v5019 = vadd.f32 %v4659, %v4973
        %v5020 = vadd.f32 %v4664, %v4978
        %v5021 = vadd.f32 %v4669, %v4983
        %v5022 = vadd.f32 %v4674, %v4988
        %v5023 = vadd.f32 %v4679, %v4993
        %v5024 = vadd.f32 %v4684, %v4998
        %v5025 = vadd.f32 %v4689, %v5003
        %v5026 = vadd.f32 %v4694, %v5008
        %v5027 = vld [vmem:[%s8 + $0xc0] sm:$0xff]
        %v5028 = vld [vmem:[%s8 + $0xc8] sm:$0xff]
        %v5029 = vld [vmem:[%s8 + $0xd0] sm:$0xff]
        %v5030 = vld [vmem:[%s8 + $0xd8] sm:$0xff]
        %v5031 = vld [vmem:[%s8 + $0xe0] sm:$0xff]
        %v5032 = vld [vmem:[%s8 + $0xe8] sm:$0xff]
        %v5033 = vld [vmem:[%s8 + $0xf0] sm:$0xff]
        %v5034 = vld [vmem:[%s8 + $0xf8] sm:$0xff]
        %5035 = vmatprep.subr.mxu0 0.0
        %5036 = vmatpush1.msra.mxu0 0.0
        %5037 = vmatprep.subr.mxu0 0.0
        %5038 = vmatpush1.msra.mxu0 0.0
        %5039 = vmatprep.subr.mxu0 0.0
        %5040 = vmatpush1.msra.mxu0 0.0
        %5041 = vmatprep.subr.mxu0 0.0
        %5042 = vmatpush1.msra.mxu0 0.0
        %5043 = vmatprep.subr.mxu0 0.0
        %5044 = vmatpush1.msra.mxu0 0.0
        %5045 = vmatprep.subr.mxu0 0.0
        %5046 = vmatpush1.msra.mxu0 0.0
        %5047 = vmatprep.subr.mxu0 0.0
        %5048 = vmatpush1.msra.mxu0 0.0
        %5049 = vmatprep.subr.mxu0 0.0
        %5050 = vmatpush1.msra.mxu0 0.0
        %5051 = vmatprep.subr.mxu0 0.0
        %5052 = vmatpush1.msra.mxu0 %v5034
        %5053 = vmatprep.subr.mxu0 0.0
        %5054 = vmatpush1.msra.mxu0 %v5033
        %5055 = vmatprep.subr.mxu0 0.0
        %5056 = vmatpush1.msra.mxu0 %v5032
        %5057 = vmatprep.subr.mxu0 0.0
        %5058 = vmatpush1.msra.mxu0 %v5031
        %5059 = vmatprep.subr.mxu0 0.0
        %5060 = vmatpush1.msra.mxu0 %v5030
        %5061 = vmatprep.subr.mxu0 0.0
        %5062 = vmatpush1.msra.mxu0 %v5029
        %5063 = vmatprep.subr.mxu0 0.0
        %5064 = vmatpush1.msra.mxu0 %v5028
        %5065 = vmatprep.subr.mxu0 0.0
        %5066 = vmatpush1.msra.mxu0 %v5027
        %5067 = vmatprep.subr.mxu0 0.0
        %5068 = vmatpush2.msra.mxu0 0.0
        %5069 = vmatprep.subr.mxu0 0.0
        %5070 = vmatpush2.msra.mxu0 0.0
        %5071 = vmatprep.subr.mxu0 0.0
        %5072 = vmatpush2.msra.mxu0 0.0
        %5073 = vmatprep.subr.mxu0 0.0
        %5074 = vmatpush2.msra.mxu0 0.0
        %5075 = vmatprep.subr.mxu0 0.0
        %5076 = vmatpush2.msra.mxu0 0.0
        %5077 = vmatprep.subr.mxu0 0.0
        %5078 = vmatpush2.msra.mxu0 0.0
        %5079 = vmatprep.subr.mxu0 0.0
        %5080 = vmatpush2.msra.mxu0 0.0
        %5081 = vmatprep.subr.mxu0 0.0
        %5082 = vmatpush2.msra.mxu0 0.0
        %5083 = vmatprep.subr.mxu0 0.0
        %5084 = vmatpush2.msra.mxu0 0.0
        %5085 = vmatprep.subr.mxu0 0.0
        %5086 = vmatpush2.msra.mxu0 0.0
        %5087 = vmatprep.subr.mxu0 0.0
        %5088 = vmatpush2.msra.mxu0 0.0
        %5089 = vmatprep.subr.mxu0 0.0
        %5090 = vmatpush2.msra.mxu0 0.0
        %5091 = vmatprep.subr.mxu0 0.0
        %5092 = vmatpush2.msra.mxu0 0.0
        %5093 = vmatprep.subr.mxu0 0.0
        %5094 = vmatpush2.msra.mxu0 0.0
        %5095 = vmatprep.subr.mxu0 0.0
        %5096 = vmatpush2.msra.mxu0 0.0
        %5097 = vmatprep.subr.mxu0 0.0
        %5098 = vmatpush2.msra.mxu0 0.0
        %5099 = vmatprep.mubr.f32.mxu0 0.0
        %5100 = vmatmul.mubr.f32.gmra.mxu0 %v4030
        %v5101 = vpop.f32.mrf.mxu0
        %v5102 = vadd.f32 0.0, %v5101
        %v5103 = vpop.f32.mrf.mxu0
        %5104 = vmatprep.mubr.f32.mxu0 0.0
        %5105 = vmatmul.mubr.f32.gmra.mxu0 %v4033
        %v5106 = vpop.f32.mrf.mxu0
        %v5107 = vadd.f32 0.0, %v5106
        %v5108 = vpop.f32.mrf.mxu0
        %5109 = vmatprep.mubr.f32.mxu0 0.0
        %5110 = vmatmul.mubr.f32.gmra.mxu0 %v4036
        %v5111 = vpop.f32.mrf.mxu0
        %v5112 = vadd.f32 0.0, %v5111
        %v5113 = vpop.f32.mrf.mxu0
        %5114 = vmatprep.mubr.f32.mxu0 0.0
        %5115 = vmatmul.mubr.f32.gmra.mxu0 %v4039
        %v5116 = vpop.f32.mrf.mxu0
        %v5117 = vadd.f32 0.0, %v5116
        %v5118 = vpop.f32.mrf.mxu0
        %5119 = vmatprep.mubr.f32.mxu0 0.0
        %5120 = vmatmul.mubr.f32.gmra.mxu0 %v4042
        %v5121 = vpop.f32.mrf.mxu0
        %v5122 = vadd.f32 0.0, %v5121
        %v5123 = vpop.f32.mrf.mxu0
        %5124 = vmatprep.mubr.f32.mxu0 0.0
        %5125 = vmatmul.mubr.f32.gmra.mxu0 %v4045
        %v5126 = vpop.f32.mrf.mxu0
        %v5127 = vadd.f32 0.0, %v5126
        %v5128 = vpop.f32.mrf.mxu0
        %5129 = vmatprep.mubr.f32.mxu0 0.0
        %5130 = vmatmul.mubr.f32.gmra.mxu0 %v4048
        %v5131 = vpop.f32.mrf.mxu0
        %v5132 = vadd.f32 0.0, %v5131
        %v5133 = vpop.f32.mrf.mxu0
        %5134 = vmatprep.mubr.f32.mxu0 0.0
        %5135 = vmatmul.mubr.f32.gmra.mxu0 %v4051
        %v5136 = vpop.f32.mrf.mxu0
        %v5137 = vadd.f32 0.0, %v5136
        %v5138 = vpop.f32.mrf.mxu0
        %5139 = vmatprep.mubr.f32.mxu0 0.0
        %5140 = vmatmul.mubr.f32.gmra.mxu0 %v4054
        %v5141 = vpop.f32.mrf.mxu0
        %v5142 = vadd.f32 0.0, %v5141
        %v5143 = vpop.f32.mrf.mxu0
        %5144 = vmatprep.mubr.f32.mxu0 0.0
        %5145 = vmatmul.mubr.f32.gmra.mxu0 %v4057
        %v5146 = vpop.f32.mrf.mxu0
        %v5147 = vadd.f32 0.0, %v5146
        %v5148 = vpop.f32.mrf.mxu0
        %5149 = vmatprep.mubr.f32.mxu0 0.0
        %5150 = vmatmul.mubr.f32.gmra.mxu0 %v4060
        %v5151 = vpop.f32.mrf.mxu0
        %v5152 = vadd.f32 0.0, %v5151
        %v5153 = vpop.f32.mrf.mxu0
        %5154 = vmatprep.mubr.f32.mxu0 0.0
        %5155 = vmatmul.mubr.f32.gmra.mxu0 %v4063
        %v5156 = vpop.f32.mrf.mxu0
        %v5157 = vadd.f32 0.0, %v5156
        %v5158 = vpop.f32.mrf.mxu0
        %5159 = vmatprep.mubr.f32.mxu0 0.0
        %5160 = vmatmul.mubr.f32.gmra.mxu0 %v4066
        %v5161 = vpop.f32.mrf.mxu0
        %v5162 = vadd.f32 0.0, %v5161
        %v5163 = vpop.f32.mrf.mxu0
        %5164 = vmatprep.mubr.f32.mxu0 0.0
        %5165 = vmatmul.mubr.f32.gmra.mxu0 %v4069
        %v5166 = vpop.f32.mrf.mxu0
        %v5167 = vadd.f32 0.0, %v5166
        %v5168 = vpop.f32.mrf.mxu0
        %5169 = vmatprep.mubr.f32.mxu0 0.0
        %5170 = vmatmul.mubr.f32.gmra.mxu0 %v4072
        %v5171 = vpop.f32.mrf.mxu0
        %v5172 = vadd.f32 0.0, %v5171
        %v5173 = vpop.f32.mrf.mxu0
        %5174 = vmatprep.mubr.f32.mxu0 0.0
        %5175 = vmatmul.mubr.f32.gmra.mxu0 %v4075
        %v5176 = vpop.f32.mrf.mxu0
        %v5177 = vadd.f32 0.0, %v5176
        %v5178 = vpop.f32.mrf.mxu0
        %5179 = vdwg.mxu0
        %v5180 = vld [vmem:[%s3 + $0x18] sm:$0xff]
        %v5181 = vld [vmem:[%s3 + $0x38] sm:$0xff]
        %v5182 = vld [vmem:[%s3 + $0x58] sm:$0xff]
        %v5183 = vld [vmem:[%s3 + $0x78] sm:$0xff]
        %v5184 = vld [vmem:[%s3 + $0x98] sm:$0xff]
        %v5185 = vld [vmem:[%s3 + $0xb8] sm:$0xff]
        %v5186 = vld [vmem:[%s3 + $0xd8] sm:$0xff]
        %v5187 = vld [vmem:[%s3 + $0xf8] sm:$0xff]
        %v5188 = vld [vmem:[%s3 + $0x118] sm:$0xff]
        %v5189 = vld [vmem:[%s3 + $0x138] sm:$0xff]
        %v5190 = vld [vmem:[%s3 + $0x158] sm:$0xff]
        %v5191 = vld [vmem:[%s3 + $0x178] sm:$0xff]
        %v5192 = vld [vmem:[%s3 + $0x198] sm:$0xff]
        %v5193 = vld [vmem:[%s3 + $0x1b8] sm:$0xff]
        %v5194 = vld [vmem:[%s3 + $0x1d8] sm:$0xff]
        %v5195 = vld [vmem:[%s3 + $0x1f8] sm:$0xff]
        %5196 = vmatprep.subr.mxu0 0.0
        %5197 = vmatpush1.msra.mxu0 %v5177
        %5198 = vmatprep.subr.mxu0 0.0
        %5199 = vmatpush1.msra.mxu0 %v5172
        %5200 = vmatprep.subr.mxu0 0.0
        %5201 = vmatpush1.msra.mxu0 %v5167
        %5202 = vmatprep.subr.mxu0 0.0
        %5203 = vmatpush1.msra.mxu0 %v5162
        %5204 = vmatprep.subr.mxu0 0.0
        %5205 = vmatpush1.msra.mxu0 %v5157
        %5206 = vmatprep.subr.mxu0 0.0
        %5207 = vmatpush1.msra.mxu0 %v5152
        %5208 = vmatprep.subr.mxu0 0.0
        %5209 = vmatpush1.msra.mxu0 %v5147
        %5210 = vmatprep.subr.mxu0 0.0
        %5211 = vmatpush1.msra.mxu0 %v5142
        %5212 = vmatprep.subr.mxu0 0.0
        %5213 = vmatpush1.msra.mxu0 %v5137
        %5214 = vmatprep.subr.mxu0 0.0
        %5215 = vmatpush1.msra.mxu0 %v5132
        %5216 = vmatprep.subr.mxu0 0.0
        %5217 = vmatpush1.msra.mxu0 %v5127
        %5218 = vmatprep.subr.mxu0 0.0
        %5219 = vmatpush1.msra.mxu0 %v5122
        %5220 = vmatprep.subr.mxu0 0.0
        %5221 = vmatpush1.msra.mxu0 %v5117
        %5222 = vmatprep.subr.mxu0 0.0
        %5223 = vmatpush1.msra.mxu0 %v5112
        %5224 = vmatprep.subr.mxu0 0.0
        %5225 = vmatpush1.msra.mxu0 %v5107
        %5226 = vmatprep.subr.mxu0 0.0
        %5227 = vmatpush1.msra.mxu0 %v5102
        %5228 = vmatprep.subr.mxu0 0.0
        %5229 = vmatpush2.msra.mxu0 0.0
        %5230 = vmatprep.subr.mxu0 0.0
        %5231 = vmatpush2.msra.mxu0 0.0
        %5232 = vmatprep.subr.mxu0 0.0
        %5233 = vmatpush2.msra.mxu0 0.0
        %5234 = vmatprep.subr.mxu0 0.0
        %5235 = vmatpush2.msra.mxu0 0.0
        %5236 = vmatprep.subr.mxu0 0.0
        %5237 = vmatpush2.msra.mxu0 0.0
        %5238 = vmatprep.subr.mxu0 0.0
        %5239 = vmatpush2.msra.mxu0 0.0
        %5240 = vmatprep.subr.mxu0 0.0
        %5241 = vmatpush2.msra.mxu0 0.0
        %5242 = vmatprep.subr.mxu0 0.0
        %5243 = vmatpush2.msra.mxu0 0.0
        %5244 = vmatprep.subr.mxu0 0.0
        %5245 = vmatpush2.msra.mxu0 0.0
        %5246 = vmatprep.subr.mxu0 0.0
        %5247 = vmatpush2.msra.mxu0 0.0
        %5248 = vmatprep.subr.mxu0 0.0
        %5249 = vmatpush2.msra.mxu0 0.0
        %5250 = vmatprep.subr.mxu0 0.0
        %5251 = vmatpush2.msra.mxu0 0.0
        %5252 = vmatprep.subr.mxu0 0.0
        %5253 = vmatpush2.msra.mxu0 0.0
        %5254 = vmatprep.subr.mxu0 0.0
        %5255 = vmatpush2.msra.mxu0 0.0
        %5256 = vmatprep.subr.mxu0 0.0
        %5257 = vmatpush2.msra.mxu0 0.0
        %5258 = vmatprep.subr.mxu0 0.0
        %5259 = vmatpush2.msra.mxu0 0.0
        %5260 = vmatprep.mubr.f32.mxu0 0.0
        %5261 = vmatmul.mubr.f32.gmra.mxu0 %v5180
        %v5262 = vpop.f32.mrf.mxu0
        %v5263 = vadd.f32 0.0, %v5262
        %v5264 = vpop.f32.mrf.mxu0
        %5265 = vmatprep.mubr.f32.mxu0 0.0
        %5266 = vmatmul.mubr.f32.gmra.mxu0 %v5181
        %v5267 = vpop.f32.mrf.mxu0
        %v5268 = vadd.f32 0.0, %v5267
        %v5269 = vpop.f32.mrf.mxu0
        %5270 = vmatprep.mubr.f32.mxu0 0.0
        %5271 = vmatmul.mubr.f32.gmra.mxu0 %v5182
        %v5272 = vpop.f32.mrf.mxu0
        %v5273 = vadd.f32 0.0, %v5272
        %v5274 = vpop.f32.mrf.mxu0
        %5275 = vmatprep.mubr.f32.mxu0 0.0
        %5276 = vmatmul.mubr.f32.gmra.mxu0 %v5183
        %v5277 = vpop.f32.mrf.mxu0
        %v5278 = vadd.f32 0.0, %v5277
        %v5279 = vpop.f32.mrf.mxu0
        %5280 = vmatprep.mubr.f32.mxu0 0.0
        %5281 = vmatmul.mubr.f32.gmra.mxu0 %v5184
        %v5282 = vpop.f32.mrf.mxu0
        %v5283 = vadd.f32 0.0, %v5282
        %v5284 = vpop.f32.mrf.mxu0
        %5285 = vmatprep.mubr.f32.mxu0 0.0
        %5286 = vmatmul.mubr.f32.gmra.mxu0 %v5185
        %v5287 = vpop.f32.mrf.mxu0
        %v5288 = vadd.f32 0.0, %v5287
        %v5289 = vpop.f32.mrf.mxu0
        %5290 = vmatprep.mubr.f32.mxu0 0.0
        %5291 = vmatmul.mubr.f32.gmra.mxu0 %v5186
        %v5292 = vpop.f32.mrf.mxu0
        %v5293 = vadd.f32 0.0, %v5292
        %v5294 = vpop.f32.mrf.mxu0
        %5295 = vmatprep.mubr.f32.mxu0 0.0
        %5296 = vmatmul.mubr.f32.gmra.mxu0 %v5187
        %v5297 = vpop.f32.mrf.mxu0
        %v5298 = vadd.f32 0.0, %v5297
        %v5299 = vpop.f32.mrf.mxu0
        %5300 = vmatprep.mubr.f32.mxu0 0.0
        %5301 = vmatmul.mubr.f32.gmra.mxu0 %v5188
        %v5302 = vpop.f32.mrf.mxu0
        %v5303 = vadd.f32 0.0, %v5302
        %v5304 = vpop.f32.mrf.mxu0
        %5305 = vmatprep.mubr.f32.mxu0 0.0
        %5306 = vmatmul.mubr.f32.gmra.mxu0 %v5189
        %v5307 = vpop.f32.mrf.mxu0
        %v5308 = vadd.f32 0.0, %v5307
        %v5309 = vpop.f32.mrf.mxu0
        %5310 = vmatprep.mubr.f32.mxu0 0.0
        %5311 = vmatmul.mubr.f32.gmra.mxu0 %v5190
        %v5312 = vpop.f32.mrf.mxu0
        %v5313 = vadd.f32 0.0, %v5312
        %v5314 = vpop.f32.mrf.mxu0
        %5315 = vmatprep.mubr.f32.mxu0 0.0
        %5316 = vmatmul.mubr.f32.gmra.mxu0 %v5191
        %v5317 = vpop.f32.mrf.mxu0
        %v5318 = vadd.f32 0.0, %v5317
        %v5319 = vpop.f32.mrf.mxu0
        %5320 = vmatprep.mubr.f32.mxu0 0.0
        %5321 = vmatmul.mubr.f32.gmra.mxu0 %v5192
        %v5322 = vpop.f32.mrf.mxu0
        %v5323 = vadd.f32 0.0, %v5322
        %v5324 = vpop.f32.mrf.mxu0
        %5325 = vmatprep.mubr.f32.mxu0 0.0
        %5326 = vmatmul.mubr.f32.gmra.mxu0 %v5193
        %v5327 = vpop.f32.mrf.mxu0
        %v5328 = vadd.f32 0.0, %v5327
        %v5329 = vpop.f32.mrf.mxu0
        %5330 = vmatprep.mubr.f32.mxu0 0.0
        %5331 = vmatmul.mubr.f32.gmra.mxu0 %v5194
        %v5332 = vpop.f32.mrf.mxu0
        %v5333 = vadd.f32 0.0, %v5332
        %v5334 = vpop.f32.mrf.mxu0
        %5335 = vmatprep.mubr.f32.mxu0 0.0
        %5336 = vmatmul.mubr.f32.gmra.mxu0 %v5195
        %v5337 = vpop.f32.mrf.mxu0
        %v5338 = vadd.f32 0.0, %v5337
        %v5339 = vpop.f32.mrf.mxu0
        %5340 = vdwg.mxu0
        %v5341 = vadd.f32 %v5011, %v5263
        %v5342 = vadd.f32 %v5012, %v5268
        %v5343 = vadd.f32 %v5013, %v5273
        %v5344 = vadd.f32 %v5014, %v5278
        %v5345 = vadd.f32 %v5015, %v5283
        %v5346 = vadd.f32 %v5016, %v5288
        %v5347 = vadd.f32 %v5017, %v5293
        %v5348 = vadd.f32 %v5018, %v5298
        %v5349 = vadd.f32 %v5019, %v5303
        %v5350 = vadd.f32 %v5020, %v5308
        %v5351 = vadd.f32 %v5021, %v5313
        %v5352 = vadd.f32 %v5022, %v5318
        %v5353 = vadd.f32 %v5023, %v5323
        %v5354 = vadd.f32 %v5024, %v5328
        %v5355 = vadd.f32 %v5025, %v5333
        %v5356 = vadd.f32 %v5026, %v5338
        %v5357 = vld [vmem:[%s13] sm:$0xff]
        %v5358 = vld [vmem:[%s13 + $0x8] sm:$0xff]
        %v5359 = vld [vmem:[%s13 + $0x10] sm:$0xff]
        %v5360 = vld [vmem:[%s13 + $0x18] sm:$0xff]
        %v5361 = vld [vmem:[%s13 + $0x20] sm:$0xff]
        %v5362 = vld [vmem:[%s13 + $0x28] sm:$0xff]
        %v5363 = vld [vmem:[%s13 + $0x30] sm:$0xff]
        %v5364 = vld [vmem:[%s13 + $0x38] sm:$0xff]
        %v5365 = vld [vmem:[%s13 + $0x40] sm:$0xff]
        %v5366 = vld [vmem:[%s13 + $0x48] sm:$0xff]
        %v5367 = vld [vmem:[%s13 + $0x50] sm:$0xff]
        %v5368 = vld [vmem:[%s13 + $0x58] sm:$0xff]
        %v5369 = vld [vmem:[%s13 + $0x60] sm:$0xff]
        %v5370 = vld [vmem:[%s13 + $0x68] sm:$0xff]
        %v5371 = vld [vmem:[%s13 + $0x70] sm:$0xff]
        %v5372 = vld [vmem:[%s13 + $0x78] sm:$0xff]
        %5374 = vset.pattern.permute.xlu0 0
        %5375 = vperm.xlu0 %5374, %v5357
        %v5376 = vpop.permute.xlu0 %5375
        %5379 = vset.pattern.permute.xlu0 0
        %5380 = vperm.xlu0 %5379, %v5358
        %v5381 = vpop.permute.xlu0 %5380
        %5384 = vset.pattern.permute.xlu0 0
        %5385 = vperm.xlu0 %5384, %v5359
        %v5386 = vpop.permute.xlu0 %5385
        %5389 = vset.pattern.permute.xlu0 0
        %5390 = vperm.xlu0 %5389, %v5360
        %v5391 = vpop.permute.xlu0 %5390
        %5394 = vset.pattern.permute.xlu0 0
        %5395 = vperm.xlu0 %5394, %v5361
        %v5396 = vpop.permute.xlu0 %5395
        %5399 = vset.pattern.permute.xlu0 0
        %5400 = vperm.xlu0 %5399, %v5362
        %v5401 = vpop.permute.xlu0 %5400
        %5404 = vset.pattern.permute.xlu0 0
        %5405 = vperm.xlu0 %5404, %v5363
        %v5406 = vpop.permute.xlu0 %5405
        %5409 = vset.pattern.permute.xlu0 0
        %5410 = vperm.xlu0 %5409, %v5364
        %v5411 = vpop.permute.xlu0 %5410
        %5414 = vset.pattern.permute.xlu0 0
        %5415 = vperm.xlu0 %5414, %v5365
        %v5416 = vpop.permute.xlu0 %5415
        %5419 = vset.pattern.permute.xlu0 0
        %5420 = vperm.xlu0 %5419, %v5366
        %v5421 = vpop.permute.xlu0 %5420
        %5424 = vset.pattern.permute.xlu0 0
        %5425 = vperm.xlu0 %5424, %v5367
        %v5426 = vpop.permute.xlu0 %5425
        %5429 = vset.pattern.permute.xlu0 0
        %5430 = vperm.xlu0 %5429, %v5368
        %v5431 = vpop.permute.xlu0 %5430
        %5434 = vset.pattern.permute.xlu0 0
        %5435 = vperm.xlu0 %5434, %v5369
        %v5436 = vpop.permute.xlu0 %5435
        %5439 = vset.pattern.permute.xlu0 0
        %5440 = vperm.xlu0 %5439, %v5370
        %v5441 = vpop.permute.xlu0 %5440
        %5444 = vset.pattern.permute.xlu0 0
        %5445 = vperm.xlu0 %5444, %v5371
        %v5446 = vpop.permute.xlu0 %5445
        %5449 = vset.pattern.permute.xlu0 0
        %5450 = vperm.xlu0 %5449, %v5372
        %v5451 = vpop.permute.xlu0 %5450
        %v5453 = vadd.f32 %v5341, %v5376
        %v5454 = vadd.f32 %v5342, %v5381
        %v5455 = vadd.f32 %v5343, %v5386
        %v5456 = vadd.f32 %v5344, %v5391
        %v5457 = vadd.f32 %v5345, %v5396
        %v5458 = vadd.f32 %v5346, %v5401
        %v5459 = vadd.f32 %v5347, %v5406
        %v5460 = vadd.f32 %v5348, %v5411
        %v5461 = vadd.f32 %v5349, %v5416
        %v5462 = vadd.f32 %v5350, %v5421
        %v5463 = vadd.f32 %v5351, %v5426
        %v5464 = vadd.f32 %v5352, %v5431
        %v5465 = vadd.f32 %v5353, %v5436
        %v5466 = vadd.f32 %v5354, %v5441
        %v5467 = vadd.f32 %v5355, %v5446
        %v5468 = vadd.f32 %v5356, %v5451
        %v5469 = vld [vmem:[%s17] sm:$0xff]
        %v5470 = vld [vmem:[%s17 + $0x8] sm:$0xff]
        %v5471 = vld [vmem:[%s17 + $0x10] sm:$0xff]
        %v5472 = vld [vmem:[%s17 + $0x18] sm:$0xff]
        %vm5473 = vcmask 261120
        %v5474 = vsel %vm5473, %v5453, 0.0
        %v5475 = vsel %vm5473, %v5457, 0.0
        %v5476 = vadd.f32 %v5474, %v5475
        %v5477 = vsel %vm5473, %v5461, 0.0
        %v5478 = vadd.f32 %v5476, %v5477
        %v5479 = vsel %vm5473, %v5465, 0.0
        %v5480 = vadd.f32 %v5478, %v5479
        %v5481 = vsel %vm5473, %v5454, 0.0
        %v5482 = vsel %vm5473, %v5458, 0.0
        %v5483 = vadd.f32 %v5481, %v5482
        %v5484 = vsel %vm5473, %v5462, 0.0
        %v5485 = vadd.f32 %v5483, %v5484
        %v5486 = vsel %vm5473, %v5466, 0.0
        %v5487 = vadd.f32 %v5485, %v5486
        %v5488 = vsel %vm5473, %v5455, 0.0
        %v5489 = vsel %vm5473, %v5459, 0.0
        %v5490 = vadd.f32 %v5488, %v5489
        %v5491 = vsel %vm5473, %v5463, 0.0
        %v5492 = vadd.f32 %v5490, %v5491
        %v5493 = vsel %vm5473, %v5467, 0.0
        %v5494 = vadd.f32 %v5492, %v5493
        %v5495 = vsel %vm5473, %v5456, 0.0
        %v5496 = vsel %vm5473, %v5460, 0.0
        %v5497 = vadd.f32 %v5495, %v5496
        %v5498 = vsel %vm5473, %v5464, 0.0
        %v5499 = vadd.f32 %v5497, %v5498
        %v5500 = vsel %vm5473, %v5468, 0.0
        %v5501 = vadd.f32 %v5499, %v5500
        %v5503 = vsel %vm5473, %v5480, 0
        %v5506 = vsel %vm5473, %v5487, 0
        %v5509 = vsel %vm5473, %v5494, 0
        %v5512 = vsel %vm5473, %v5501, 0
        %5514 = vmatprep.subr.mxu0 0.0
        %5515 = vmatpush1.msra.mxu0 0.0
        %5516 = vmatprep.subr.mxu0 0.0
        %5517 = vmatpush1.msra.mxu0 0.0
        %5518 = vmatprep.subr.mxu0 0.0
        %5519 = vmatpush1.msra.mxu0 0.0
        %5520 = vmatprep.subr.mxu0 0.0
        %5521 = vmatpush1.msra.mxu0 0.0
        %5522 = vmatprep.subr.mxu0 0.0
        %5523 = vmatpush1.msra.mxu0 0.0
        %5524 = vmatprep.subr.mxu0 0.0
        %5525 = vmatpush1.msra.mxu0 0.0
        %5526 = vmatprep.subr.mxu0 0.0
        %5527 = vmatpush1.msra.mxu0 0.0
        %5528 = vmatprep.subr.mxu0 0.0
        %5529 = vmatpush1.msra.mxu0 0.0
        %5530 = vmatprep.subr.mxu0 0.0
        %5531 = vmatpush1.msra.mxu0 0.0
        %5532 = vmatprep.subr.mxu0 0.0
        %5533 = vmatpush1.msra.mxu0 0.0
        %5534 = vmatprep.subr.mxu0 0.0
        %5535 = vmatpush1.msra.mxu0 0.0
        %5536 = vmatprep.subr.mxu0 0.0
        %5537 = vmatpush1.msra.mxu0 0.0
        %5538 = vmatprep.subr.mxu0 0.0
        %5539 = vmatpush1.msra.mxu0 %v5472
        %5540 = vmatprep.subr.mxu0 0.0
        %5541 = vmatpush1.msra.mxu0 %v5471
        %5542 = vmatprep.subr.mxu0 0.0
        %5543 = vmatpush1.msra.mxu0 %v5470
        %5544 = vmatprep.subr.mxu0 0.0
        %5545 = vmatpush1.msra.mxu0 %v5469
        %5546 = vmatprep.subr.mxu0 0.0
        %5547 = vmatpush2.msra.mxu0 0.0
        %5548 = vmatprep.subr.mxu0 0.0
        %5549 = vmatpush2.msra.mxu0 0.0
        %5550 = vmatprep.subr.mxu0 0.0
        %5551 = vmatpush2.msra.mxu0 0.0
        %5552 = vmatprep.subr.mxu0 0.0
        %5553 = vmatpush2.msra.mxu0 0.0
        %5554 = vmatprep.subr.mxu0 0.0
        %5555 = vmatpush2.msra.mxu0 0.0
        %5556 = vmatprep.subr.mxu0 0.0
        %5557 = vmatpush2.msra.mxu0 0.0
        %5558 = vmatprep.subr.mxu0 0.0
        %5559 = vmatpush2.msra.mxu0 0.0
        %5560 = vmatprep.subr.mxu0 0.0
        %5561 = vmatpush2.msra.mxu0 0.0
        %5562 = vmatprep.subr.mxu0 0.0
        %5563 = vmatpush2.msra.mxu0 0.0
        %5564 = vmatprep.subr.mxu0 0.0
        %5565 = vmatpush2.msra.mxu0 0.0
        %5566 = vmatprep.subr.mxu0 0.0
        %5567 = vmatpush2.msra.mxu0 0.0
        %5568 = vmatprep.subr.mxu0 0.0
        %5569 = vmatpush2.msra.mxu0 0.0
        %5570 = vmatprep.subr.mxu0 0.0
        %5571 = vmatpush2.msra.mxu0 0.0
        %5572 = vmatprep.subr.mxu0 0.0
        %5573 = vmatpush2.msra.mxu0 0.0
        %5574 = vmatprep.subr.mxu0 0.0
        %5575 = vmatpush2.msra.mxu0 0.0
        %5576 = vmatprep.subr.mxu0 0.0
        %5577 = vmatpush2.msra.mxu0 0.0
        %5578 = vmatprep.mubr.f32.mxu0 0.0
        %5579 = vmatmul.mubr.f32.gmra.mxu0 %v5503
        %v5580 = vpop.f32.mrf.mxu0
        %v5581 = vadd.f32 0.0, %v5580
        %v5582 = vpop.f32.mrf.mxu0
        %5583 = vmatprep.mubr.f32.mxu0 0.0
        %5584 = vmatmul.mubr.f32.gmra.mxu0 %v5506
        %v5585 = vpop.f32.mrf.mxu0
        %v5586 = vadd.f32 0.0, %v5585
        %v5587 = vpop.f32.mrf.mxu0
        %5588 = vmatprep.mubr.f32.mxu0 0.0
        %5589 = vmatmul.mubr.f32.gmra.mxu0 %v5509
        %v5590 = vpop.f32.mrf.mxu0
        %v5591 = vadd.f32 0.0, %v5590
        %v5592 = vpop.f32.mrf.mxu0
        %5593 = vmatprep.mubr.f32.mxu0 0.0
        %5594 = vmatmul.mubr.f32.gmra.mxu0 %v5512
        %v5595 = vpop.f32.mrf.mxu0
        %v5596 = vadd.f32 0.0, %v5595
        %v5597 = vpop.f32.mrf.mxu0
        %5598 = vdwg.mxu0
        %v5599 = vsub.f32 %v5453, %v5581
        %v5600 = vsub.f32 %v5454, %v5586
        %v5601 = vsub.f32 %v5455, %v5591
        %v5602 = vsub.f32 %v5456, %v5596
        %v5603 = vsub.f32 %v5457, %v5581
        %v5604 = vsub.f32 %v5458, %v5586
        %v5605 = vsub.f32 %v5459, %v5591
        %v5606 = vsub.f32 %v5460, %v5596
        %v5607 = vsub.f32 %v5461, %v5581
        %v5608 = vsub.f32 %v5462, %v5586
        %v5609 = vsub.f32 %v5463, %v5591
        %v5610 = vsub.f32 %v5464, %v5596
        %v5611 = vsub.f32 %v5465, %v5581
        %v5612 = vsub.f32 %v5466, %v5586
        %v5613 = vsub.f32 %v5467, %v5591
        %v5614 = vsub.f32 %v5468, %v5596
        %v5615 = vmul.f32 %v5599, %v5599
        %v5616 = vmul.f32 %v5600, %v5600
        %v5617 = vmul.f32 %v5601, %v5601
        %v5618 = vmul.f32 %v5602, %v5602
        %v5619 = vmul.f32 %v5603, %v5603
        %v5620 = vmul.f32 %v5604, %v5604
        %v5621 = vmul.f32 %v5605, %v5605
        %v5622 = vmul.f32 %v5606, %v5606
        %v5623 = vmul.f32 %v5607, %v5607
        %v5624 = vmul.f32 %v5608, %v5608
        %v5625 = vmul.f32 %v5609, %v5609
        %v5626 = vmul.f32 %v5610, %v5610
        %v5627 = vmul.f32 %v5611, %v5611
        %v5628 = vmul.f32 %v5612, %v5612
        %v5629 = vmul.f32 %v5613, %v5613
        %v5630 = vmul.f32 %v5614, %v5614
        %v5631 = vsel %vm5473, %v5615, 0.0
        %v5632 = vsel %vm5473, %v5619, 0.0
        %v5633 = vadd.f32 %v5631, %v5632
        %v5634 = vsel %vm5473, %v5623, 0.0
        %v5635 = vadd.f32 %v5633, %v5634
        %v5636 = vsel %vm5473, %v5627, 0.0
        %v5637 = vadd.f32 %v5635, %v5636
        %v5638 = vsel %vm5473, %v5616, 0.0
        %v5639 = vsel %vm5473, %v5620, 0.0
        %v5640 = vadd.f32 %v5638, %v5639
        %v5641 = vsel %vm5473, %v5624, 0.0
        %v5642 = vadd.f32 %v5640, %v5641
        %v5643 = vsel %vm5473, %v5628, 0.0
        %v5644 = vadd.f32 %v5642, %v5643
        %v5645 = vsel %vm5473, %v5617, 0.0
        %v5646 = vsel %vm5473, %v5621, 0.0
        %v5647 = vadd.f32 %v5645, %v5646
        %v5648 = vsel %vm5473, %v5625, 0.0
        %v5649 = vadd.f32 %v5647, %v5648
        %v5650 = vsel %vm5473, %v5629, 0.0
        %v5651 = vadd.f32 %v5649, %v5650
        %v5652 = vsel %vm5473, %v5618, 0.0
        %v5653 = vsel %vm5473, %v5622, 0.0
        %v5654 = vadd.f32 %v5652, %v5653
        %v5655 = vsel %vm5473, %v5626, 0.0
        %v5656 = vadd.f32 %v5654, %v5655
        %v5657 = vsel %vm5473, %v5630, 0.0
        %v5658 = vadd.f32 %v5656, %v5657
        %v5660 = vsel %vm5473, %v5637, 0
        %v5663 = vsel %vm5473, %v5644, 0
        %v5666 = vsel %vm5473, %v5651, 0
        %v5669 = vsel %vm5473, %v5658, 0
        %5671 = vmatprep.subr.mxu0 0.0
        %5672 = vmatpush1.msra.mxu0 0.0
        %5673 = vmatprep.subr.mxu0 0.0
        %5674 = vmatpush1.msra.mxu0 0.0
        %5675 = vmatprep.subr.mxu0 0.0
        %5676 = vmatpush1.msra.mxu0 0.0
        %5677 = vmatprep.subr.mxu0 0.0
        %5678 = vmatpush1.msra.mxu0 0.0
        %5679 = vmatprep.subr.mxu0 0.0
        %5680 = vmatpush1.msra.mxu0 0.0
        %5681 = vmatprep.subr.mxu0 0.0
        %5682 = vmatpush1.msra.mxu0 0.0
        %5683 = vmatprep.subr.mxu0 0.0
        %5684 = vmatpush1.msra.mxu0 0.0
        %5685 = vmatprep.subr.mxu0 0.0
        %5686 = vmatpush1.msra.mxu0 0.0
        %5687 = vmatprep.subr.mxu0 0.0
        %5688 = vmatpush1.msra.mxu0 0.0
        %5689 = vmatprep.subr.mxu0 0.0
        %5690 = vmatpush1.msra.mxu0 0.0
        %5691 = vmatprep.subr.mxu0 0.0
        %5692 = vmatpush1.msra.mxu0 0.0
        %5693 = vmatprep.subr.mxu0 0.0
        %5694 = vmatpush1.msra.mxu0 0.0
        %5695 = vmatprep.subr.mxu0 0.0
        %5696 = vmatpush1.msra.mxu0 %v5472
        %5697 = vmatprep.subr.mxu0 0.0
        %5698 = vmatpush1.msra.mxu0 %v5471
        %5699 = vmatprep.subr.mxu0 0.0
        %5700 = vmatpush1.msra.mxu0 %v5470
        %5701 = vmatprep.subr.mxu0 0.0
        %5702 = vmatpush1.msra.mxu0 %v5469
        %5703 = vmatprep.subr.mxu0 0.0
        %5704 = vmatpush2.msra.mxu0 0.0
        %5705 = vmatprep.subr.mxu0 0.0
        %5706 = vmatpush2.msra.mxu0 0.0
        %5707 = vmatprep.subr.mxu0 0.0
        %5708 = vmatpush2.msra.mxu0 0.0
        %5709 = vmatprep.subr.mxu0 0.0
        %5710 = vmatpush2.msra.mxu0 0.0
        %5711 = vmatprep.subr.mxu0 0.0
        %5712 = vmatpush2.msra.mxu0 0.0
        %5713 = vmatprep.subr.mxu0 0.0
        %5714 = vmatpush2.msra.mxu0 0.0
        %5715 = vmatprep.subr.mxu0 0.0
        %5716 = vmatpush2.msra.mxu0 0.0
        %5717 = vmatprep.subr.mxu0 0.0
        %5718 = vmatpush2.msra.mxu0 0.0
        %5719 = vmatprep.subr.mxu0 0.0
        %5720 = vmatpush2.msra.mxu0 0.0
        %5721 = vmatprep.subr.mxu0 0.0
        %5722 = vmatpush2.msra.mxu0 0.0
        %5723 = vmatprep.subr.mxu0 0.0
        %5724 = vmatpush2.msra.mxu0 0.0
        %5725 = vmatprep.subr.mxu0 0.0
        %5726 = vmatpush2.msra.mxu0 0.0
        %5727 = vmatprep.subr.mxu0 0.0
        %5728 = vmatpush2.msra.mxu0 0.0
        %5729 = vmatprep.subr.mxu0 0.0
        %5730 = vmatpush2.msra.mxu0 0.0
        %5731 = vmatprep.subr.mxu0 0.0
        %5732 = vmatpush2.msra.mxu0 0.0
        %5733 = vmatprep.subr.mxu0 0.0
        %5734 = vmatpush2.msra.mxu0 0.0
        %5735 = vmatprep.mubr.f32.mxu0 0.0
        %5736 = vmatmul.mubr.f32.gmra.mxu0 %v5660
        %v5737 = vpop.f32.mrf.mxu0
        %v5738 = vadd.f32 1e-05, %v5737
        %v5739 = vpop.f32.mrf.mxu0
        %5740 = vmatprep.mubr.f32.mxu0 0.0
        %5741 = vmatmul.mubr.f32.gmra.mxu0 %v5663
        %v5742 = vpop.f32.mrf.mxu0
        %v5743 = vadd.f32 1e-05, %v5742
        %v5744 = vpop.f32.mrf.mxu0
        %5745 = vmatprep.mubr.f32.mxu0 0.0
        %5746 = vmatmul.mubr.f32.gmra.mxu0 %v5666
        %v5747 = vpop.f32.mrf.mxu0
        %v5748 = vadd.f32 1e-05, %v5747
        %v5749 = vpop.f32.mrf.mxu0
        %5750 = vmatprep.mubr.f32.mxu0 0.0
        %5751 = vmatmul.mubr.f32.gmra.mxu0 %v5669
        %v5752 = vpop.f32.mrf.mxu0
        %v5753 = vadd.f32 1e-05, %v5752
        %v5754 = vpop.f32.mrf.mxu0
        %5755 = vdwg.mxu0
        %v5756 = vrsqrt.pop %v5738
        %v5757 = vrsqrt.pop %v5743
        %v5758 = vrsqrt.pop %v5748
        %v5759 = vrsqrt.pop %v5753
        %v5760 = vmul.f32 %v5599, %v5756
        %v5761 = vmul.f32 %v5600, %v5757
        %v5762 = vmul.f32 %v5601, %v5758
        %v5763 = vmul.f32 %v5602, %v5759
        %v5764 = vmul.f32 %v5603, %v5756
        %v5765 = vmul.f32 %v5604, %v5757
        %v5766 = vmul.f32 %v5605, %v5758
        %v5767 = vmul.f32 %v5606, %v5759
        %v5768 = vmul.f32 %v5607, %v5756
        %v5769 = vmul.f32 %v5608, %v5757
        %v5770 = vmul.f32 %v5609, %v5758
        %v5771 = vmul.f32 %v5610, %v5759
        %v5772 = vmul.f32 %v5611, %v5756
        %v5773 = vmul.f32 %v5612, %v5757
        %v5774 = vmul.f32 %v5613, %v5758
        %v5775 = vmul.f32 %v5614, %v5759
        %vm5776 = vcmp.ge.f32.partialorder %v5760, 0.0
        %vm5777 = vcmp.ge.f32.partialorder %v5761, 0.0
        %vm5778 = vcmp.ge.f32.partialorder %v5762, 0.0
        %vm5779 = vcmp.ge.f32.partialorder %v5763, 0.0
        %vm5780 = vcmp.ge.f32.partialorder %v5764, 0.0
        %vm5781 = vcmp.ge.f32.partialorder %v5765, 0.0
        %vm5782 = vcmp.ge.f32.partialorder %v5766, 0.0
        %vm5783 = vcmp.ge.f32.partialorder %v5767, 0.0
        %vm5784 = vcmp.ge.f32.partialorder %v5768, 0.0
        %vm5785 = vcmp.ge.f32.partialorder %v5769, 0.0
        %vm5786 = vcmp.ge.f32.partialorder %v5770, 0.0
        %vm5787 = vcmp.ge.f32.partialorder %v5771, 0.0
        %vm5788 = vcmp.ge.f32.partialorder %v5772, 0.0
        %vm5789 = vcmp.ge.f32.partialorder %v5773, 0.0
        %vm5790 = vcmp.ge.f32.partialorder %v5774, 0.0
        %vm5791 = vcmp.ge.f32.partialorder %v5775, 0.0
        %v5792 = vmul.f32 %v5760, 0.2
        %v5793 = vmul.f32 %v5761, 0.2
        %v5794 = vmul.f32 %v5762, 0.2
        %v5795 = vmul.f32 %v5763, 0.2
        %v5796 = vmul.f32 %v5764, 0.2
        %v5797 = vmul.f32 %v5765, 0.2
        %v5798 = vmul.f32 %v5766, 0.2
        %v5799 = vmul.f32 %v5767, 0.2
        %v5800 = vmul.f32 %v5768, 0.2
        %v5801 = vmul.f32 %v5769, 0.2
        %v5802 = vmul.f32 %v5770, 0.2
        %v5803 = vmul.f32 %v5771, 0.2
        %v5804 = vmul.f32 %v5772, 0.2
        %v5805 = vmul.f32 %v5773, 0.2
        %v5806 = vmul.f32 %v5774, 0.2
        %v5807 = vmul.f32 %v5775, 0.2
        %v5808 = vsel %vm5776, %v5760, %v5792
        %v5809 = vsel %vm5777, %v5761, %v5793
        %v5810 = vsel %vm5778, %v5762, %v5794
        %v5811 = vsel %vm5779, %v5763, %v5795
        %v5812 = vsel %vm5780, %v5764, %v5796
        %v5813 = vsel %vm5781, %v5765, %v5797
        %v5814 = vsel %vm5782, %v5766, %v5798
        %v5815 = vsel %vm5783, %v5767, %v5799
        %v5816 = vsel %vm5784, %v5768, %v5800
        %v5817 = vsel %vm5785, %v5769, %v5801
        %v5818 = vsel %vm5786, %v5770, %v5802
        %v5819 = vsel %vm5787, %v5771, %v5803
        %v5820 = vsel %vm5788, %v5772, %v5804
        %v5821 = vsel %vm5789, %v5773, %v5805
        %v5822 = vsel %vm5790, %v5774, %v5806
        %v5823 = vsel %vm5791, %v5775, %v5807
        %v5824 = vld [vmem:[%s9] sm:$0xff]
        %v5825 = vld [vmem:[%s9 + $0x8] sm:$0xff]
        %v5826 = vld [vmem:[%s9 + $0x10] sm:$0xff]
        %v5827 = vld [vmem:[%s9 + $0x18] sm:$0xff]
        %v5829 = vsel %vm5473, %v5808, 0
        %v5832 = vsel %vm5473, %v5809, 0
        %v5835 = vsel %vm5473, %v5810, 0
        %v5838 = vsel %vm5473, %v5811, 0
        %v5841 = vsel %vm5473, %v5812, 0
        %v5844 = vsel %vm5473, %v5813, 0
        %v5847 = vsel %vm5473, %v5814, 0
        %v5850 = vsel %vm5473, %v5815, 0
        %v5853 = vsel %vm5473, %v5816, 0
        %v5856 = vsel %vm5473, %v5817, 0
        %v5859 = vsel %vm5473, %v5818, 0
        %v5862 = vsel %vm5473, %v5819, 0
        %v5865 = vsel %vm5473, %v5820, 0
        %v5868 = vsel %vm5473, %v5821, 0
        %v5871 = vsel %vm5473, %v5822, 0
        %v5874 = vsel %vm5473, %v5823, 0
        %5876 = vmatprep.subr.mxu0 0.0
        %5877 = vmatpush1.msra.mxu0 0.0
        %5878 = vmatprep.subr.mxu0 0.0
        %5879 = vmatpush1.msra.mxu0 0.0
        %5880 = vmatprep.subr.mxu0 0.0
        %5881 = vmatpush1.msra.mxu0 0.0
        %5882 = vmatprep.subr.mxu0 0.0
        %5883 = vmatpush1.msra.mxu0 0.0
        %5884 = vmatprep.subr.mxu0 0.0
        %5885 = vmatpush1.msra.mxu0 0.0
        %5886 = vmatprep.subr.mxu0 0.0
        %5887 = vmatpush1.msra.mxu0 0.0
        %5888 = vmatprep.subr.mxu0 0.0
        %5889 = vmatpush1.msra.mxu0 0.0
        %5890 = vmatprep.subr.mxu0 0.0
        %5891 = vmatpush1.msra.mxu0 0.0
        %5892 = vmatprep.subr.mxu0 0.0
        %5893 = vmatpush1.msra.mxu0 0.0
        %5894 = vmatprep.subr.mxu0 0.0
        %5895 = vmatpush1.msra.mxu0 0.0
        %5896 = vmatprep.subr.mxu0 0.0
        %5897 = vmatpush1.msra.mxu0 0.0
        %5898 = vmatprep.subr.mxu0 0.0
        %5899 = vmatpush1.msra.mxu0 0.0
        %5900 = vmatprep.subr.mxu0 0.0
        %5901 = vmatpush1.msra.mxu0 %v5827
        %5902 = vmatprep.subr.mxu0 0.0
        %5903 = vmatpush1.msra.mxu0 %v5826
        %5904 = vmatprep.subr.mxu0 0.0
        %5905 = vmatpush1.msra.mxu0 %v5825
        %5906 = vmatprep.subr.mxu0 0.0
        %5907 = vmatpush1.msra.mxu0 %v5824
        %5908 = vmatprep.subr.mxu0 0.0
        %5909 = vmatpush2.msra.mxu0 0.0
        %5910 = vmatprep.subr.mxu0 0.0
        %5911 = vmatpush2.msra.mxu0 0.0
        %5912 = vmatprep.subr.mxu0 0.0
        %5913 = vmatpush2.msra.mxu0 0.0
        %5914 = vmatprep.subr.mxu0 0.0
        %5915 = vmatpush2.msra.mxu0 0.0
        %5916 = vmatprep.subr.mxu0 0.0
        %5917 = vmatpush2.msra.mxu0 0.0
        %5918 = vmatprep.subr.mxu0 0.0
        %5919 = vmatpush2.msra.mxu0 0.0
        %5920 = vmatprep.subr.mxu0 0.0
        %5921 = vmatpush2.msra.mxu0 0.0
        %5922 = vmatprep.subr.mxu0 0.0
        %5923 = vmatpush2.msra.mxu0 0.0
        %5924 = vmatprep.subr.mxu0 0.0
        %5925 = vmatpush2.msra.mxu0 0.0
        %5926 = vmatprep.subr.mxu0 0.0
        %5927 = vmatpush2.msra.mxu0 0.0
        %5928 = vmatprep.subr.mxu0 0.0
        %5929 = vmatpush2.msra.mxu0 0.0
        %5930 = vmatprep.subr.mxu0 0.0
        %5931 = vmatpush2.msra.mxu0 0.0
        %5932 = vmatprep.subr.mxu0 0.0
        %5933 = vmatpush2.msra.mxu0 0.0
        %5934 = vmatprep.subr.mxu0 0.0
        %5935 = vmatpush2.msra.mxu0 0.0
        %5936 = vmatprep.subr.mxu0 0.0
        %5937 = vmatpush2.msra.mxu0 0.0
        %5938 = vmatprep.subr.mxu0 0.0
        %5939 = vmatpush2.msra.mxu0 0.0
        %5940 = vmatprep.mubr.f32.mxu0 0.0
        %5941 = vmatmul.mubr.f32.gmra.mxu0 %v5829
        %v5942 = vpop.f32.mrf.mxu0
        %v5943 = vadd.f32 0.0, %v5942
        %v5944 = vpop.f32.mrf.mxu0
        %5945 = vmatprep.mubr.f32.mxu0 0.0
        %5946 = vmatmul.mubr.f32.gmra.mxu0 %v5832
        %v5947 = vpop.f32.mrf.mxu0
        %v5948 = vadd.f32 0.0, %v5947
        %v5949 = vpop.f32.mrf.mxu0
        %5950 = vmatprep.mubr.f32.mxu0 0.0
        %5951 = vmatmul.mubr.f32.gmra.mxu0 %v5835
        %v5952 = vpop.f32.mrf.mxu0
        %v5953 = vadd.f32 0.0, %v5952
        %v5954 = vpop.f32.mrf.mxu0
        %5955 = vmatprep.mubr.f32.mxu0 0.0
        %5956 = vmatmul.mubr.f32.gmra.mxu0 %v5838
        %v5957 = vpop.f32.mrf.mxu0
        %v5958 = vadd.f32 0.0, %v5957
        %v5959 = vpop.f32.mrf.mxu0
        %5960 = vmatprep.mubr.f32.mxu0 0.0
        %5961 = vmatmul.mubr.f32.gmra.mxu0 %v5841
        %v5962 = vpop.f32.mrf.mxu0
        %v5963 = vadd.f32 0.0, %v5962
        %v5964 = vpop.f32.mrf.mxu0
        %5965 = vmatprep.mubr.f32.mxu0 0.0
        %5966 = vmatmul.mubr.f32.gmra.mxu0 %v5844
        %v5967 = vpop.f32.mrf.mxu0
        %v5968 = vadd.f32 0.0, %v5967
        %v5969 = vpop.f32.mrf.mxu0
        %5970 = vmatprep.mubr.f32.mxu0 0.0
        %5971 = vmatmul.mubr.f32.gmra.mxu0 %v5847
        %v5972 = vpop.f32.mrf.mxu0
        %v5973 = vadd.f32 0.0, %v5972
        %v5974 = vpop.f32.mrf.mxu0
        %5975 = vmatprep.mubr.f32.mxu0 0.0
        %5976 = vmatmul.mubr.f32.gmra.mxu0 %v5850
        %v5977 = vpop.f32.mrf.mxu0
        %v5978 = vadd.f32 0.0, %v5977
        %v5979 = vpop.f32.mrf.mxu0
        %5980 = vmatprep.mubr.f32.mxu0 0.0
        %5981 = vmatmul.mubr.f32.gmra.mxu0 %v5853
        %v5982 = vpop.f32.mrf.mxu0
        %v5983 = vadd.f32 0.0, %v5982
        %v5984 = vpop.f32.mrf.mxu0
        %5985 = vmatprep.mubr.f32.mxu0 0.0
        %5986 = vmatmul.mubr.f32.gmra.mxu0 %v5856
        %v5987 = vpop.f32.mrf.mxu0
        %v5988 = vadd.f32 0.0, %v5987
        %v5989 = vpop.f32.mrf.mxu0
        %5990 = vmatprep.mubr.f32.mxu0 0.0
        %5991 = vmatmul.mubr.f32.gmra.mxu0 %v5859
        %v5992 = vpop.f32.mrf.mxu0
        %v5993 = vadd.f32 0.0, %v5992
        %v5994 = vpop.f32.mrf.mxu0
        %5995 = vmatprep.mubr.f32.mxu0 0.0
        %5996 = vmatmul.mubr.f32.gmra.mxu0 %v5862
        %v5997 = vpop.f32.mrf.mxu0
        %v5998 = vadd.f32 0.0, %v5997
        %v5999 = vpop.f32.mrf.mxu0
        %6000 = vmatprep.mubr.f32.mxu0 0.0
        %6001 = vmatmul.mubr.f32.gmra.mxu0 %v5865
        %v6002 = vpop.f32.mrf.mxu0
        %v6003 = vadd.f32 0.0, %v6002
        %v6004 = vpop.f32.mrf.mxu0
        %6005 = vmatprep.mubr.f32.mxu0 0.0
        %6006 = vmatmul.mubr.f32.gmra.mxu0 %v5868
        %v6007 = vpop.f32.mrf.mxu0
        %v6008 = vadd.f32 0.0, %v6007
        %v6009 = vpop.f32.mrf.mxu0
        %6010 = vmatprep.mubr.f32.mxu0 0.0
        %6011 = vmatmul.mubr.f32.gmra.mxu0 %v5871
        %v6012 = vpop.f32.mrf.mxu0
        %v6013 = vadd.f32 0.0, %v6012
        %v6014 = vpop.f32.mrf.mxu0
        %6015 = vmatprep.mubr.f32.mxu0 0.0
        %6016 = vmatmul.mubr.f32.gmra.mxu0 %v5874
        %v6017 = vpop.f32.mrf.mxu0
        %v6018 = vadd.f32 0.0, %v6017
        %v6019 = vpop.f32.mrf.mxu0
        %6020 = vdwg.mxu0
        %v6021 = vld [vmem:[%s4] sm:$0xff]
        %v6022 = vld [vmem:[%s4 + $0x20] sm:$0xff]
        %v6023 = vld [vmem:[%s4 + $0x40] sm:$0xff]
        %v6024 = vld [vmem:[%s4 + $0x60] sm:$0xff]
        %v6025 = vld [vmem:[%s4 + $0x80] sm:$0xff]
        %v6026 = vld [vmem:[%s4 + $0xa0] sm:$0xff]
        %v6027 = vld [vmem:[%s4 + $0xc0] sm:$0xff]
        %v6028 = vld [vmem:[%s4 + $0xe0] sm:$0xff]
        %v6029 = vld [vmem:[%s4 + $0x100] sm:$0xff]
        %v6030 = vld [vmem:[%s4 + $0x120] sm:$0xff]
        %v6031 = vld [vmem:[%s4 + $0x140] sm:$0xff]
        %v6032 = vld [vmem:[%s4 + $0x160] sm:$0xff]
        %v6033 = vld [vmem:[%s4 + $0x180] sm:$0xff]
        %v6034 = vld [vmem:[%s4 + $0x1a0] sm:$0xff]
        %v6035 = vld [vmem:[%s4 + $0x1c0] sm:$0xff]
        %v6036 = vld [vmem:[%s4 + $0x1e0] sm:$0xff]
        %v6037 = vld [vmem:[%s9 + $0x20] sm:$0xff]
        %v6038 = vld [vmem:[%s9 + $0x28] sm:$0xff]
        %v6039 = vld [vmem:[%s9 + $0x30] sm:$0xff]
        %v6040 = vld [vmem:[%s9 + $0x38] sm:$0xff]
        %6041 = vmatprep.subr.mxu0 0.0
        %6042 = vmatpush1.msra.mxu0 0.0
        %6043 = vmatprep.subr.mxu0 0.0
        %6044 = vmatpush1.msra.mxu0 0.0
        %6045 = vmatprep.subr.mxu0 0.0
        %6046 = vmatpush1.msra.mxu0 0.0
        %6047 = vmatprep.subr.mxu0 0.0
        %6048 = vmatpush1.msra.mxu0 0.0
        %6049 = vmatprep.subr.mxu0 0.0
        %6050 = vmatpush1.msra.mxu0 0.0
        %6051 = vmatprep.subr.mxu0 0.0
        %6052 = vmatpush1.msra.mxu0 0.0
        %6053 = vmatprep.subr.mxu0 0.0
        %6054 = vmatpush1.msra.mxu0 0.0
        %6055 = vmatprep.subr.mxu0 0.0
        %6056 = vmatpush1.msra.mxu0 0.0
        %6057 = vmatprep.subr.mxu0 0.0
        %6058 = vmatpush1.msra.mxu0 0.0
        %6059 = vmatprep.subr.mxu0 0.0
        %6060 = vmatpush1.msra.mxu0 0.0
        %6061 = vmatprep.subr.mxu0 0.0
        %6062 = vmatpush1.msra.mxu0 0.0
        %6063 = vmatprep.subr.mxu0 0.0
        %6064 = vmatpush1.msra.mxu0 0.0
        %6065 = vmatprep.subr.mxu0 0.0
        %6066 = vmatpush1.msra.mxu0 %v6040
        %6067 = vmatprep.subr.mxu0 0.0
        %6068 = vmatpush1.msra.mxu0 %v6039
        %6069 = vmatprep.subr.mxu0 0.0
        %6070 = vmatpush1.msra.mxu0 %v6038
        %6071 = vmatprep.subr.mxu0 0.0
        %6072 = vmatpush1.msra.mxu0 %v6037
        %6073 = vmatprep.subr.mxu0 0.0
        %6074 = vmatpush2.msra.mxu0 0.0
        %6075 = vmatprep.subr.mxu0 0.0
        %6076 = vmatpush2.msra.mxu0 0.0
        %6077 = vmatprep.subr.mxu0 0.0
        %6078 = vmatpush2.msra.mxu0 0.0
        %6079 = vmatprep.subr.mxu0 0.0
        %6080 = vmatpush2.msra.mxu0 0.0
        %6081 = vmatprep.subr.mxu0 0.0
        %6082 = vmatpush2.msra.mxu0 0.0
        %6083 = vmatprep.subr.mxu0 0.0
        %6084 = vmatpush2.msra.mxu0 0.0
        %6085 = vmatprep.subr.mxu0 0.0
        %6086 = vmatpush2.msra.mxu0 0.0
        %6087 = vmatprep.subr.mxu0 0.0
        %6088 = vmatpush2.msra.mxu0 0.0
        %6089 = vmatprep.subr.mxu0 0.0
        %6090 = vmatpush2.msra.mxu0 0.0
        %6091 = vmatprep.subr.mxu0 0.0
        %6092 = vmatpush2.msra.mxu0 0.0
        %6093 = vmatprep.subr.mxu0 0.0
        %6094 = vmatpush2.msra.mxu0 0.0
        %6095 = vmatprep.subr.mxu0 0.0
        %6096 = vmatpush2.msra.mxu0 0.0
        %6097 = vmatprep.subr.mxu0 0.0
        %6098 = vmatpush2.msra.mxu0 0.0
        %6099 = vmatprep.subr.mxu0 0.0
        %6100 = vmatpush2.msra.mxu0 0.0
        %6101 = vmatprep.subr.mxu0 0.0
        %6102 = vmatpush2.msra.mxu0 0.0
        %6103 = vmatprep.subr.mxu0 0.0
        %6104 = vmatpush2.msra.mxu0 0.0
        %6105 = vmatprep.mubr.f32.mxu0 0.0
        %6106 = vmatmul.mubr.f32.gmra.mxu0 %v5829
        %v6107 = vpop.f32.mrf.mxu0
        %v6108 = vadd.f32 0.0, %v6107
        %v6109 = vpop.f32.mrf.mxu0
        %6110 = vmatprep.mubr.f32.mxu0 0.0
        %6111 = vmatmul.mubr.f32.gmra.mxu0 %v5832
        %v6112 = vpop.f32.mrf.mxu0
        %v6113 = vadd.f32 0.0, %v6112
        %v6114 = vpop.f32.mrf.mxu0
        %6115 = vmatprep.mubr.f32.mxu0 0.0
        %6116 = vmatmul.mubr.f32.gmra.mxu0 %v5835
        %v6117 = vpop.f32.mrf.mxu0
        %v6118 = vadd.f32 0.0, %v6117
        %v6119 = vpop.f32.mrf.mxu0
        %6120 = vmatprep.mubr.f32.mxu0 0.0
        %6121 = vmatmul.mubr.f32.gmra.mxu0 %v5838
        %v6122 = vpop.f32.mrf.mxu0
        %v6123 = vadd.f32 0.0, %v6122
        %v6124 = vpop.f32.mrf.mxu0
        %6125 = vmatprep.mubr.f32.mxu0 0.0
        %6126 = vmatmul.mubr.f32.gmra.mxu0 %v5841
        %v6127 = vpop.f32.mrf.mxu0
        %v6128 = vadd.f32 0.0, %v6127
        %v6129 = vpop.f32.mrf.mxu0
        %6130 = vmatprep.mubr.f32.mxu0 0.0
        %6131 = vmatmul.mubr.f32.gmra.mxu0 %v5844
        %v6132 = vpop.f32.mrf.mxu0
        %v6133 = vadd.f32 0.0, %v6132
        %v6134 = vpop.f32.mrf.mxu0
        %6135 = vmatprep.mubr.f32.mxu0 0.0
        %6136 = vmatmul.mubr.f32.gmra.mxu0 %v5847
        %v6137 = vpop.f32.mrf.mxu0
        %v6138 = vadd.f32 0.0, %v6137
        %v6139 = vpop.f32.mrf.mxu0
        %6140 = vmatprep.mubr.f32.mxu0 0.0
        %6141 = vmatmul.mubr.f32.gmra.mxu0 %v5850
        %v6142 = vpop.f32.mrf.mxu0
        %v6143 = vadd.f32 0.0, %v6142
        %v6144 = vpop.f32.mrf.mxu0
        %6145 = vmatprep.mubr.f32.mxu0 0.0
        %6146 = vmatmul.mubr.f32.gmra.mxu0 %v5853
        %v6147 = vpop.f32.mrf.mxu0
        %v6148 = vadd.f32 0.0, %v6147
        %v6149 = vpop.f32.mrf.mxu0
        %6150 = vmatprep.mubr.f32.mxu0 0.0
        %6151 = vmatmul.mubr.f32.gmra.mxu0 %v5856
        %v6152 = vpop.f32.mrf.mxu0
        %v6153 = vadd.f32 0.0, %v6152
        %v6154 = vpop.f32.mrf.mxu0
        %6155 = vmatprep.mubr.f32.mxu0 0.0
        %6156 = vmatmul.mubr.f32.gmra.mxu0 %v5859
        %v6157 = vpop.f32.mrf.mxu0
        %v6158 = vadd.f32 0.0, %v6157
        %v6159 = vpop.f32.mrf.mxu0
        %6160 = vmatprep.mubr.f32.mxu0 0.0
        %6161 = vmatmul.mubr.f32.gmra.mxu0 %v5862
        %v6162 = vpop.f32.mrf.mxu0
        %v6163 = vadd.f32 0.0, %v6162
        %v6164 = vpop.f32.mrf.mxu0
        %6165 = vmatprep.mubr.f32.mxu0 0.0
        %6166 = vmatmul.mubr.f32.gmra.mxu0 %v5865
        %v6167 = vpop.f32.mrf.mxu0
        %v6168 = vadd.f32 0.0, %v6167
        %v6169 = vpop.f32.mrf.mxu0
        %6170 = vmatprep.mubr.f32.mxu0 0.0
        %6171 = vmatmul.mubr.f32.gmra.mxu0 %v5868
        %v6172 = vpop.f32.mrf.mxu0
        %v6173 = vadd.f32 0.0, %v6172
        %v6174 = vpop.f32.mrf.mxu0
        %6175 = vmatprep.mubr.f32.mxu0 0.0
        %6176 = vmatmul.mubr.f32.gmra.mxu0 %v5871
        %v6177 = vpop.f32.mrf.mxu0
        %v6178 = vadd.f32 0.0, %v6177
        %v6179 = vpop.f32.mrf.mxu0
        %6180 = vmatprep.mubr.f32.mxu0 0.0
        %6181 = vmatmul.mubr.f32.gmra.mxu0 %v5874
        %v6182 = vpop.f32.mrf.mxu0
        %v6183 = vadd.f32 0.0, %v6182
        %v6184 = vpop.f32.mrf.mxu0
        %6185 = vdwg.mxu0
        %v6186 = vld [vmem:[%s4 + $0x8] sm:$0xff]
        %v6187 = vld [vmem:[%s4 + $0x28] sm:$0xff]
        %v6188 = vld [vmem:[%s4 + $0x48] sm:$0xff]
        %v6189 = vld [vmem:[%s4 + $0x68] sm:$0xff]
        %v6190 = vld [vmem:[%s4 + $0x88] sm:$0xff]
        %v6191 = vld [vmem:[%s4 + $0xa8] sm:$0xff]
        %v6192 = vld [vmem:[%s4 + $0xc8] sm:$0xff]
        %v6193 = vld [vmem:[%s4 + $0xe8] sm:$0xff]
        %v6194 = vld [vmem:[%s4 + $0x108] sm:$0xff]
        %v6195 = vld [vmem:[%s4 + $0x128] sm:$0xff]
        %v6196 = vld [vmem:[%s4 + $0x148] sm:$0xff]
        %v6197 = vld [vmem:[%s4 + $0x168] sm:$0xff]
        %v6198 = vld [vmem:[%s4 + $0x188] sm:$0xff]
        %v6199 = vld [vmem:[%s4 + $0x1a8] sm:$0xff]
        %v6200 = vld [vmem:[%s4 + $0x1c8] sm:$0xff]
        %v6201 = vld [vmem:[%s4 + $0x1e8] sm:$0xff]
        %6202 = vmatprep.subr.mxu0 0.0
        %6203 = vmatpush1.msra.mxu0 %v6183
        %6204 = vmatprep.subr.mxu0 0.0
        %6205 = vmatpush1.msra.mxu0 %v6178
        %6206 = vmatprep.subr.mxu0 0.0
        %6207 = vmatpush1.msra.mxu0 %v6173
        %6208 = vmatprep.subr.mxu0 0.0
        %6209 = vmatpush1.msra.mxu0 %v6168
        %6210 = vmatprep.subr.mxu0 0.0
        %6211 = vmatpush1.msra.mxu0 %v6163
        %6212 = vmatprep.subr.mxu0 0.0
        %6213 = vmatpush1.msra.mxu0 %v6158
        %6214 = vmatprep.subr.mxu0 0.0
        %6215 = vmatpush1.msra.mxu0 %v6153
        %6216 = vmatprep.subr.mxu0 0.0
        %6217 = vmatpush1.msra.mxu0 %v6148
        %6218 = vmatprep.subr.mxu0 0.0
        %6219 = vmatpush1.msra.mxu0 %v6143
        %6220 = vmatprep.subr.mxu0 0.0
        %6221 = vmatpush1.msra.mxu0 %v6138
        %6222 = vmatprep.subr.mxu0 0.0
        %6223 = vmatpush1.msra.mxu0 %v6133
        %6224 = vmatprep.subr.mxu0 0.0
        %6225 = vmatpush1.msra.mxu0 %v6128
        %6226 = vmatprep.subr.mxu0 0.0
        %6227 = vmatpush1.msra.mxu0 %v6123
        %6228 = vmatprep.subr.mxu0 0.0
        %6229 = vmatpush1.msra.mxu0 %v6118
        %6230 = vmatprep.subr.mxu0 0.0
        %6231 = vmatpush1.msra.mxu0 %v6113
        %6232 = vmatprep.subr.mxu0 0.0
        %6233 = vmatpush1.msra.mxu0 %v6108
        %6234 = vmatprep.subr.mxu0 0.0
        %6235 = vmatpush2.msra.mxu0 0.0
        %6236 = vmatprep.subr.mxu0 0.0
        %6237 = vmatpush2.msra.mxu0 0.0
        %6238 = vmatprep.subr.mxu0 0.0
        %6239 = vmatpush2.msra.mxu0 0.0
        %6240 = vmatprep.subr.mxu0 0.0
        %6241 = vmatpush2.msra.mxu0 0.0
        %6242 = vmatprep.subr.mxu0 0.0
        %6243 = vmatpush2.msra.mxu0 0.0
        %6244 = vmatprep.subr.mxu0 0.0
        %6245 = vmatpush2.msra.mxu0 0.0
        %6246 = vmatprep.subr.mxu0 0.0
        %6247 = vmatpush2.msra.mxu0 0.0
        %6248 = vmatprep.subr.mxu0 0.0
        %6249 = vmatpush2.msra.mxu0 0.0
        %6250 = vmatprep.subr.mxu0 0.0
        %6251 = vmatpush2.msra.mxu0 0.0
        %6252 = vmatprep.subr.mxu0 0.0
        %6253 = vmatpush2.msra.mxu0 0.0
        %6254 = vmatprep.subr.mxu0 0.0
        %6255 = vmatpush2.msra.mxu0 0.0
        %6256 = vmatprep.subr.mxu0 0.0
        %6257 = vmatpush2.msra.mxu0 0.0
        %6258 = vmatprep.subr.mxu0 0.0
        %6259 = vmatpush2.msra.mxu0 0.0
        %6260 = vmatprep.subr.mxu0 0.0
        %6261 = vmatpush2.msra.mxu0 0.0
        %6262 = vmatprep.subr.mxu0 0.0
        %6263 = vmatpush2.msra.mxu0 0.0
        %6264 = vmatprep.subr.mxu0 0.0
        %6265 = vmatpush2.msra.mxu0 0.0
        %6266 = vmatprep.mubr.f32.mxu0 0.0
        %6267 = vmatmul.mubr.f32.gmra.mxu0 %v6186
        %v6268 = vpop.f32.mrf.mxu0
        %v6269 = vadd.f32 0.0, %v6268
        %v6270 = vpop.f32.mrf.mxu0
        %6271 = vmatprep.mubr.f32.mxu0 0.0
        %6272 = vmatmul.mubr.f32.gmra.mxu0 %v6187
        %v6273 = vpop.f32.mrf.mxu0
        %v6274 = vadd.f32 0.0, %v6273
        %v6275 = vpop.f32.mrf.mxu0
        %6276 = vmatprep.mubr.f32.mxu0 0.0
        %6277 = vmatmul.mubr.f32.gmra.mxu0 %v6188
        %v6278 = vpop.f32.mrf.mxu0
        %v6279 = vadd.f32 0.0, %v6278
        %v6280 = vpop.f32.mrf.mxu0
        %6281 = vmatprep.mubr.f32.mxu0 0.0
        %6282 = vmatmul.mubr.f32.gmra.mxu0 %v6189
        %v6283 = vpop.f32.mrf.mxu0
        %v6284 = vadd.f32 0.0, %v6283
        %v6285 = vpop.f32.mrf.mxu0
        %6286 = vmatprep.mubr.f32.mxu0 0.0
        %6287 = vmatmul.mubr.f32.gmra.mxu0 %v6190
        %v6288 = vpop.f32.mrf.mxu0
        %v6289 = vadd.f32 0.0, %v6288
        %v6290 = vpop.f32.mrf.mxu0
        %6291 = vmatprep.mubr.f32.mxu0 0.0
        %6292 = vmatmul.mubr.f32.gmra.mxu0 %v6191
        %v6293 = vpop.f32.mrf.mxu0
        %v6294 = vadd.f32 0.0, %v6293
        %v6295 = vpop.f32.mrf.mxu0
        %6296 = vmatprep.mubr.f32.mxu0 0.0
        %6297 = vmatmul.mubr.f32.gmra.mxu0 %v6192
        %v6298 = vpop.f32.mrf.mxu0
        %v6299 = vadd.f32 0.0, %v6298
        %v6300 = vpop.f32.mrf.mxu0
        %6301 = vmatprep.mubr.f32.mxu0 0.0
        %6302 = vmatmul.mubr.f32.gmra.mxu0 %v6193
        %v6303 = vpop.f32.mrf.mxu0
        %v6304 = vadd.f32 0.0, %v6303
        %v6305 = vpop.f32.mrf.mxu0
        %6306 = vmatprep.mubr.f32.mxu0 0.0
        %6307 = vmatmul.mubr.f32.gmra.mxu0 %v6194
        %v6308 = vpop.f32.mrf.mxu0
        %v6309 = vadd.f32 0.0, %v6308
        %v6310 = vpop.f32.mrf.mxu0
        %6311 = vmatprep.mubr.f32.mxu0 0.0
        %6312 = vmatmul.mubr.f32.gmra.mxu0 %v6195
        %v6313 = vpop.f32.mrf.mxu0
        %v6314 = vadd.f32 0.0, %v6313
        %v6315 = vpop.f32.mrf.mxu0
        %6316 = vmatprep.mubr.f32.mxu0 0.0
        %6317 = vmatmul.mubr.f32.gmra.mxu0 %v6196
        %v6318 = vpop.f32.mrf.mxu0
        %v6319 = vadd.f32 0.0, %v6318
        %v6320 = vpop.f32.mrf.mxu0
        %6321 = vmatprep.mubr.f32.mxu0 0.0
        %6322 = vmatmul.mubr.f32.gmra.mxu0 %v6197
        %v6323 = vpop.f32.mrf.mxu0
        %v6324 = vadd.f32 0.0, %v6323
        %v6325 = vpop.f32.mrf.mxu0
        %6326 = vmatprep.mubr.f32.mxu0 0.0
        %6327 = vmatmul.mubr.f32.gmra.mxu0 %v6198
        %v6328 = vpop.f32.mrf.mxu0
        %v6329 = vadd.f32 0.0, %v6328
        %v6330 = vpop.f32.mrf.mxu0
        %6331 = vmatprep.mubr.f32.mxu0 0.0
        %6332 = vmatmul.mubr.f32.gmra.mxu0 %v6199
        %v6333 = vpop.f32.mrf.mxu0
        %v6334 = vadd.f32 0.0, %v6333
        %v6335 = vpop.f32.mrf.mxu0
        %6336 = vmatprep.mubr.f32.mxu0 0.0
        %6337 = vmatmul.mubr.f32.gmra.mxu0 %v6200
        %v6338 = vpop.f32.mrf.mxu0
        %v6339 = vadd.f32 0.0, %v6338
        %v6340 = vpop.f32.mrf.mxu0
        %6341 = vmatprep.mubr.f32.mxu0 0.0
        %6342 = vmatmul.mubr.f32.gmra.mxu0 %v6201
        %v6343 = vpop.f32.mrf.mxu0
        %v6344 = vadd.f32 0.0, %v6343
        %v6345 = vpop.f32.mrf.mxu0
        %6346 = vdwg.mxu0
        %6347 = vmatprep.subr.mxu0 0.0
        %6348 = vmatpush1.msra.mxu0 %v6018
        %6349 = vmatprep.subr.mxu0 0.0
        %6350 = vmatpush1.msra.mxu0 %v6013
        %6351 = vmatprep.subr.mxu0 0.0
        %6352 = vmatpush1.msra.mxu0 %v6008
        %6353 = vmatprep.subr.mxu0 0.0
        %6354 = vmatpush1.msra.mxu0 %v6003
        %6355 = vmatprep.subr.mxu0 0.0
        %6356 = vmatpush1.msra.mxu0 %v5998
        %6357 = vmatprep.subr.mxu0 0.0
        %6358 = vmatpush1.msra.mxu0 %v5993
        %6359 = vmatprep.subr.mxu0 0.0
        %6360 = vmatpush1.msra.mxu0 %v5988
        %6361 = vmatprep.subr.mxu0 0.0
        %6362 = vmatpush1.msra.mxu0 %v5983
        %6363 = vmatprep.subr.mxu0 0.0
        %6364 = vmatpush1.msra.mxu0 %v5978
        %6365 = vmatprep.subr.mxu0 0.0
        %6366 = vmatpush1.msra.mxu0 %v5973
        %6367 = vmatprep.subr.mxu0 0.0
        %6368 = vmatpush1.msra.mxu0 %v5968
        %6369 = vmatprep.subr.mxu0 0.0
        %6370 = vmatpush1.msra.mxu0 %v5963
        %6371 = vmatprep.subr.mxu0 0.0
        %6372 = vmatpush1.msra.mxu0 %v5958
        %6373 = vmatprep.subr.mxu0 0.0
        %6374 = vmatpush1.msra.mxu0 %v5953
        %6375 = vmatprep.subr.mxu0 0.0
        %6376 = vmatpush1.msra.mxu0 %v5948
        %6377 = vmatprep.subr.mxu0 0.0
        %6378 = vmatpush1.msra.mxu0 %v5943
        %6379 = vmatprep.subr.mxu0 0.0
        %6380 = vmatpush2.msra.mxu0 0.0
        %6381 = vmatprep.subr.mxu0 0.0
        %6382 = vmatpush2.msra.mxu0 0.0
        %6383 = vmatprep.subr.mxu0 0.0
        %6384 = vmatpush2.msra.mxu0 0.0
        %6385 = vmatprep.subr.mxu0 0.0
        %6386 = vmatpush2.msra.mxu0 0.0
        %6387 = vmatprep.subr.mxu0 0.0
        %6388 = vmatpush2.msra.mxu0 0.0
        %6389 = vmatprep.subr.mxu0 0.0
        %6390 = vmatpush2.msra.mxu0 0.0
        %6391 = vmatprep.subr.mxu0 0.0
        %6392 = vmatpush2.msra.mxu0 0.0
        %6393 = vmatprep.subr.mxu0 0.0
        %6394 = vmatpush2.msra.mxu0 0.0
        %6395 = vmatprep.subr.mxu0 0.0
        %6396 = vmatpush2.msra.mxu0 0.0
        %6397 = vmatprep.subr.mxu0 0.0
        %6398 = vmatpush2.msra.mxu0 0.0
        %6399 = vmatprep.subr.mxu0 0.0
        %6400 = vmatpush2.msra.mxu0 0.0
        %6401 = vmatprep.subr.mxu0 0.0
        %6402 = vmatpush2.msra.mxu0 0.0
        %6403 = vmatprep.subr.mxu0 0.0
        %6404 = vmatpush2.msra.mxu0 0.0
        %6405 = vmatprep.subr.mxu0 0.0
        %6406 = vmatpush2.msra.mxu0 0.0
        %6407 = vmatprep.subr.mxu0 0.0
        %6408 = vmatpush2.msra.mxu0 0.0
        %6409 = vmatprep.subr.mxu0 0.0
        %6410 = vmatpush2.msra.mxu0 0.0
        %6411 = vmatprep.mubr.f32.mxu0 0.0
        %6412 = vmatmul.mubr.f32.gmra.mxu0 %v6021
        %v6413 = vpop.f32.mrf.mxu0
        %v6414 = vadd.f32 %v6269, %v6413
        %v6415 = vpop.f32.mrf.mxu0
        %6416 = vmatprep.mubr.f32.mxu0 0.0
        %6417 = vmatmul.mubr.f32.gmra.mxu0 %v6022
        %v6418 = vpop.f32.mrf.mxu0
        %v6419 = vadd.f32 %v6274, %v6418
        %v6420 = vpop.f32.mrf.mxu0
        %6421 = vmatprep.mubr.f32.mxu0 0.0
        %6422 = vmatmul.mubr.f32.gmra.mxu0 %v6023
        %v6423 = vpop.f32.mrf.mxu0
        %v6424 = vadd.f32 %v6279, %v6423
        %v6425 = vpop.f32.mrf.mxu0
        %6426 = vmatprep.mubr.f32.mxu0 0.0
        %6427 = vmatmul.mubr.f32.gmra.mxu0 %v6024
        %v6428 = vpop.f32.mrf.mxu0
        %v6429 = vadd.f32 %v6284, %v6428
        %v6430 = vpop.f32.mrf.mxu0
        %6431 = vmatprep.mubr.f32.mxu0 0.0
        %6432 = vmatmul.mubr.f32.gmra.mxu0 %v6025
        %v6433 = vpop.f32.mrf.mxu0
        %v6434 = vadd.f32 %v6289, %v6433
        %v6435 = vpop.f32.mrf.mxu0
        %6436 = vmatprep.mubr.f32.mxu0 0.0
        %6437 = vmatmul.mubr.f32.gmra.mxu0 %v6026
        %v6438 = vpop.f32.mrf.mxu0
        %v6439 = vadd.f32 %v6294, %v6438
        %v6440 = vpop.f32.mrf.mxu0
        %6441 = vmatprep.mubr.f32.mxu0 0.0
        %6442 = vmatmul.mubr.f32.gmra.mxu0 %v6027
        %v6443 = vpop.f32.mrf.mxu0
        %v6444 = vadd.f32 %v6299, %v6443
        %v6445 = vpop.f32.mrf.mxu0
        %6446 = vmatprep.mubr.f32.mxu0 0.0
        %6447 = vmatmul.mubr.f32.gmra.mxu0 %v6028
        %v6448 = vpop.f32.mrf.mxu0
        %v6449 = vadd.f32 %v6304, %v6448
        %v6450 = vpop.f32.mrf.mxu0
        %6451 = vmatprep.mubr.f32.mxu0 0.0
        %6452 = vmatmul.mubr.f32.gmra.mxu0 %v6029
        %v6453 = vpop.f32.mrf.mxu0
        %v6454 = vadd.f32 %v6309, %v6453
        %v6455 = vpop.f32.mrf.mxu0
        %6456 = vmatprep.mubr.f32.mxu0 0.0
        %6457 = vmatmul.mubr.f32.gmra.mxu0 %v6030
        %v6458 = vpop.f32.mrf.mxu0
        %v6459 = vadd.f32 %v6314, %v6458
        %v6460 = vpop.f32.mrf.mxu0
        %6461 = vmatprep.mubr.f32.mxu0 0.0
        %6462 = vmatmul.mubr.f32.gmra.mxu0 %v6031
        %v6463 = vpop.f32.mrf.mxu0
        %v6464 = vadd.f32 %v6319, %v6463
        %v6465 = vpop.f32.mrf.mxu0
        %6466 = vmatprep.mubr.f32.mxu0 0.0
        %6467 = vmatmul.mubr.f32.gmra.mxu0 %v6032
        %v6468 = vpop.f32.mrf.mxu0
        %v6469 = vadd.f32 %v6324, %v6468
        %v6470 = vpop.f32.mrf.mxu0
        %6471 = vmatprep.mubr.f32.mxu0 0.0
        %6472 = vmatmul.mubr.f32.gmra.mxu0 %v6033
        %v6473 = vpop.f32.mrf.mxu0
        %v6474 = vadd.f32 %v6329, %v6473
        %v6475 = vpop.f32.mrf.mxu0
        %6476 = vmatprep.mubr.f32.mxu0 0.0
        %6477 = vmatmul.mubr.f32.gmra.mxu0 %v6034
        %v6478 = vpop.f32.mrf.mxu0
        %v6479 = vadd.f32 %v6334, %v6478
        %v6480 = vpop.f32.mrf.mxu0
        %6481 = vmatprep.mubr.f32.mxu0 0.0
        %6482 = vmatmul.mubr.f32.gmra.mxu0 %v6035
        %v6483 = vpop.f32.mrf.mxu0
        %v6484 = vadd.f32 %v6339, %v6483
        %v6485 = vpop.f32.mrf.mxu0
        %6486 = vmatprep.mubr.f32.mxu0 0.0
        %6487 = vmatmul.mubr.f32.gmra.mxu0 %v6036
        %v6488 = vpop.f32.mrf.mxu0
        %v6489 = vadd.f32 %v6344, %v6488
        %v6490 = vpop.f32.mrf.mxu0
        %6491 = vdwg.mxu0
        %v6492 = vld [vmem:[%s9 + $0x40] sm:$0xff]
        %v6493 = vld [vmem:[%s9 + $0x48] sm:$0xff]
        %v6494 = vld [vmem:[%s9 + $0x50] sm:$0xff]
        %v6495 = vld [vmem:[%s9 + $0x58] sm:$0xff]
        %6496 = vmatprep.subr.mxu0 0.0
        %6497 = vmatpush1.msra.mxu0 0.0
        %6498 = vmatprep.subr.mxu0 0.0
        %6499 = vmatpush1.msra.mxu0 0.0
        %6500 = vmatprep.subr.mxu0 0.0
        %6501 = vmatpush1.msra.mxu0 0.0
        %6502 = vmatprep.subr.mxu0 0.0
        %6503 = vmatpush1.msra.mxu0 0.0
        %6504 = vmatprep.subr.mxu0 0.0
        %6505 = vmatpush1.msra.mxu0 0.0
        %6506 = vmatprep.subr.mxu0 0.0
        %6507 = vmatpush1.msra.mxu0 0.0
        %6508 = vmatprep.subr.mxu0 0.0
        %6509 = vmatpush1.msra.mxu0 0.0
        %6510 = vmatprep.subr.mxu0 0.0
        %6511 = vmatpush1.msra.mxu0 0.0
        %6512 = vmatprep.subr.mxu0 0.0
        %6513 = vmatpush1.msra.mxu0 0.0
        %6514 = vmatprep.subr.mxu0 0.0
        %6515 = vmatpush1.msra.mxu0 0.0
        %6516 = vmatprep.subr.mxu0 0.0
        %6517 = vmatpush1.msra.mxu0 0.0
        %6518 = vmatprep.subr.mxu0 0.0
        %6519 = vmatpush1.msra.mxu0 0.0
        %6520 = vmatprep.subr.mxu0 0.0
        %6521 = vmatpush1.msra.mxu0 %v6495
        %6522 = vmatprep.subr.mxu0 0.0
        %6523 = vmatpush1.msra.mxu0 %v6494
        %6524 = vmatprep.subr.mxu0 0.0
        %6525 = vmatpush1.msra.mxu0 %v6493
        %6526 = vmatprep.subr.mxu0 0.0
        %6527 = vmatpush1.msra.mxu0 %v6492
        %6528 = vmatprep.subr.mxu0 0.0
        %6529 = vmatpush2.msra.mxu0 0.0
        %6530 = vmatprep.subr.mxu0 0.0
        %6531 = vmatpush2.msra.mxu0 0.0
        %6532 = vmatprep.subr.mxu0 0.0
        %6533 = vmatpush2.msra.mxu0 0.0
        %6534 = vmatprep.subr.mxu0 0.0
        %6535 = vmatpush2.msra.mxu0 0.0
        %6536 = vmatprep.subr.mxu0 0.0
        %6537 = vmatpush2.msra.mxu0 0.0
        %6538 = vmatprep.subr.mxu0 0.0
        %6539 = vmatpush2.msra.mxu0 0.0
        %6540 = vmatprep.subr.mxu0 0.0
        %6541 = vmatpush2.msra.mxu0 0.0
        %6542 = vmatprep.subr.mxu0 0.0
        %6543 = vmatpush2.msra.mxu0 0.0
        %6544 = vmatprep.subr.mxu0 0.0
        %6545 = vmatpush2.msra.mxu0 0.0
        %6546 = vmatprep.subr.mxu0 0.0
        %6547 = vmatpush2.msra.mxu0 0.0
        %6548 = vmatprep.subr.mxu0 0.0
        %6549 = vmatpush2.msra.mxu0 0.0
        %6550 = vmatprep.subr.mxu0 0.0
        %6551 = vmatpush2.msra.mxu0 0.0
        %6552 = vmatprep.subr.mxu0 0.0
        %6553 = vmatpush2.msra.mxu0 0.0
        %6554 = vmatprep.subr.mxu0 0.0
        %6555 = vmatpush2.msra.mxu0 0.0
        %6556 = vmatprep.subr.mxu0 0.0
        %6557 = vmatpush2.msra.mxu0 0.0
        %6558 = vmatprep.subr.mxu0 0.0
        %6559 = vmatpush2.msra.mxu0 0.0
        %6560 = vmatprep.mubr.f32.mxu0 0.0
        %6561 = vmatmul.mubr.f32.gmra.mxu0 %v5829
        %v6562 = vpop.f32.mrf.mxu0
        %v6563 = vadd.f32 0.0, %v6562
        %v6564 = vpop.f32.mrf.mxu0
        %6565 = vmatprep.mubr.f32.mxu0 0.0
        %6566 = vmatmul.mubr.f32.gmra.mxu0 %v5832
        %v6567 = vpop.f32.mrf.mxu0
        %v6568 = vadd.f32 0.0, %v6567
        %v6569 = vpop.f32.mrf.mxu0
        %6570 = vmatprep.mubr.f32.mxu0 0.0
        %6571 = vmatmul.mubr.f32.gmra.mxu0 %v5835
        %v6572 = vpop.f32.mrf.mxu0
        %v6573 = vadd.f32 0.0, %v6572
        %v6574 = vpop.f32.mrf.mxu0
        %6575 = vmatprep.mubr.f32.mxu0 0.0
        %6576 = vmatmul.mubr.f32.gmra.mxu0 %v5838
        %v6577 = vpop.f32.mrf.mxu0
        %v6578 = vadd.f32 0.0, %v6577
        %v6579 = vpop.f32.mrf.mxu0
        %6580 = vmatprep.mubr.f32.mxu0 0.0
        %6581 = vmatmul.mubr.f32.gmra.mxu0 %v5841
        %v6582 = vpop.f32.mrf.mxu0
        %v6583 = vadd.f32 0.0, %v6582
        %v6584 = vpop.f32.mrf.mxu0
        %6585 = vmatprep.mubr.f32.mxu0 0.0
        %6586 = vmatmul.mubr.f32.gmra.mxu0 %v5844
        %v6587 = vpop.f32.mrf.mxu0
        %v6588 = vadd.f32 0.0, %v6587
        %v6589 = vpop.f32.mrf.mxu0
        %6590 = vmatprep.mubr.f32.mxu0 0.0
        %6591 = vmatmul.mubr.f32.gmra.mxu0 %v5847
        %v6592 = vpop.f32.mrf.mxu0
        %v6593 = vadd.f32 0.0, %v6592
        %v6594 = vpop.f32.mrf.mxu0
        %6595 = vmatprep.mubr.f32.mxu0 0.0
        %6596 = vmatmul.mubr.f32.gmra.mxu0 %v5850
        %v6597 = vpop.f32.mrf.mxu0
        %v6598 = vadd.f32 0.0, %v6597
        %v6599 = vpop.f32.mrf.mxu0
        %6600 = vmatprep.mubr.f32.mxu0 0.0
        %6601 = vmatmul.mubr.f32.gmra.mxu0 %v5853
        %v6602 = vpop.f32.mrf.mxu0
        %v6603 = vadd.f32 0.0, %v6602
        %v6604 = vpop.f32.mrf.mxu0
        %6605 = vmatprep.mubr.f32.mxu0 0.0
        %6606 = vmatmul.mubr.f32.gmra.mxu0 %v5856
        %v6607 = vpop.f32.mrf.mxu0
        %v6608 = vadd.f32 0.0, %v6607
        %v6609 = vpop.f32.mrf.mxu0
        %6610 = vmatprep.mubr.f32.mxu0 0.0
        %6611 = vmatmul.mubr.f32.gmra.mxu0 %v5859
        %v6612 = vpop.f32.mrf.mxu0
        %v6613 = vadd.f32 0.0, %v6612
        %v6614 = vpop.f32.mrf.mxu0
        %6615 = vmatprep.mubr.f32.mxu0 0.0
        %6616 = vmatmul.mubr.f32.gmra.mxu0 %v5862
        %v6617 = vpop.f32.mrf.mxu0
        %v6618 = vadd.f32 0.0, %v6617
        %v6619 = vpop.f32.mrf.mxu0
        %6620 = vmatprep.mubr.f32.mxu0 0.0
        %6621 = vmatmul.mubr.f32.gmra.mxu0 %v5865
        %v6622 = vpop.f32.mrf.mxu0
        %v6623 = vadd.f32 0.0, %v6622
        %v6624 = vpop.f32.mrf.mxu0
        %6625 = vmatprep.mubr.f32.mxu0 0.0
        %6626 = vmatmul.mubr.f32.gmra.mxu0 %v5868
        %v6627 = vpop.f32.mrf.mxu0
        %v6628 = vadd.f32 0.0, %v6627
        %v6629 = vpop.f32.mrf.mxu0
        %6630 = vmatprep.mubr.f32.mxu0 0.0
        %6631 = vmatmul.mubr.f32.gmra.mxu0 %v5871
        %v6632 = vpop.f32.mrf.mxu0
        %v6633 = vadd.f32 0.0, %v6632
        %v6634 = vpop.f32.mrf.mxu0
        %6635 = vmatprep.mubr.f32.mxu0 0.0
        %6636 = vmatmul.mubr.f32.gmra.mxu0 %v5874
        %v6637 = vpop.f32.mrf.mxu0
        %v6638 = vadd.f32 0.0, %v6637
        %v6639 = vpop.f32.mrf.mxu0
        %6640 = vdwg.mxu0
        %v6641 = vld [vmem:[%s4 + $0x10] sm:$0xff]
        %v6642 = vld [vmem:[%s4 + $0x30] sm:$0xff]
        %v6643 = vld [vmem:[%s4 + $0x50] sm:$0xff]
        %v6644 = vld [vmem:[%s4 + $0x70] sm:$0xff]
        %v6645 = vld [vmem:[%s4 + $0x90] sm:$0xff]
        %v6646 = vld [vmem:[%s4 + $0xb0] sm:$0xff]
        %v6647 = vld [vmem:[%s4 + $0xd0] sm:$0xff]
        %v6648 = vld [vmem:[%s4 + $0xf0] sm:$0xff]
        %v6649 = vld [vmem:[%s4 + $0x110] sm:$0xff]
        %v6650 = vld [vmem:[%s4 + $0x130] sm:$0xff]
        %v6651 = vld [vmem:[%s4 + $0x150] sm:$0xff]
        %v6652 = vld [vmem:[%s4 + $0x170] sm:$0xff]
        %v6653 = vld [vmem:[%s4 + $0x190] sm:$0xff]
        %v6654 = vld [vmem:[%s4 + $0x1b0] sm:$0xff]
        %v6655 = vld [vmem:[%s4 + $0x1d0] sm:$0xff]
        %v6656 = vld [vmem:[%s4 + $0x1f0] sm:$0xff]
        %6657 = vmatprep.subr.mxu0 0.0
        %6658 = vmatpush1.msra.mxu0 %v6638
        %6659 = vmatprep.subr.mxu0 0.0
        %6660 = vmatpush1.msra.mxu0 %v6633
        %6661 = vmatprep.subr.mxu0 0.0
        %6662 = vmatpush1.msra.mxu0 %v6628
        %6663 = vmatprep.subr.mxu0 0.0
        %6664 = vmatpush1.msra.mxu0 %v6623
        %6665 = vmatprep.subr.mxu0 0.0
        %6666 = vmatpush1.msra.mxu0 %v6618
        %6667 = vmatprep.subr.mxu0 0.0
        %6668 = vmatpush1.msra.mxu0 %v6613
        %6669 = vmatprep.subr.mxu0 0.0
        %6670 = vmatpush1.msra.mxu0 %v6608
        %6671 = vmatprep.subr.mxu0 0.0
        %6672 = vmatpush1.msra.mxu0 %v6603
        %6673 = vmatprep.subr.mxu0 0.0
        %6674 = vmatpush1.msra.mxu0 %v6598
        %6675 = vmatprep.subr.mxu0 0.0
        %6676 = vmatpush1.msra.mxu0 %v6593
        %6677 = vmatprep.subr.mxu0 0.0
        %6678 = vmatpush1.msra.mxu0 %v6588
        %6679 = vmatprep.subr.mxu0 0.0
        %6680 = vmatpush1.msra.mxu0 %v6583
        %6681 = vmatprep.subr.mxu0 0.0
        %6682 = vmatpush1.msra.mxu0 %v6578
        %6683 = vmatprep.subr.mxu0 0.0
        %6684 = vmatpush1.msra.mxu0 %v6573
        %6685 = vmatprep.subr.mxu0 0.0
        %6686 = vmatpush1.msra.mxu0 %v6568
        %6687 = vmatprep.subr.mxu0 0.0
        %6688 = vmatpush1.msra.mxu0 %v6563
        %6689 = vmatprep.subr.mxu0 0.0
        %6690 = vmatpush2.msra.mxu0 0.0
        %6691 = vmatprep.subr.mxu0 0.0
        %6692 = vmatpush2.msra.mxu0 0.0
        %6693 = vmatprep.subr.mxu0 0.0
        %6694 = vmatpush2.msra.mxu0 0.0
        %6695 = vmatprep.subr.mxu0 0.0
        %6696 = vmatpush2.msra.mxu0 0.0
        %6697 = vmatprep.subr.mxu0 0.0
        %6698 = vmatpush2.msra.mxu0 0.0
        %6699 = vmatprep.subr.mxu0 0.0
        %6700 = vmatpush2.msra.mxu0 0.0
        %6701 = vmatprep.subr.mxu0 0.0
        %6702 = vmatpush2.msra.mxu0 0.0
        %6703 = vmatprep.subr.mxu0 0.0
        %6704 = vmatpush2.msra.mxu0 0.0
        %6705 = vmatprep.subr.mxu0 0.0
        %6706 = vmatpush2.msra.mxu0 0.0
        %6707 = vmatprep.subr.mxu0 0.0
        %6708 = vmatpush2.msra.mxu0 0.0
        %6709 = vmatprep.subr.mxu0 0.0
        %6710 = vmatpush2.msra.mxu0 0.0
        %6711 = vmatprep.subr.mxu0 0.0
        %6712 = vmatpush2.msra.mxu0 0.0
        %6713 = vmatprep.subr.mxu0 0.0
        %6714 = vmatpush2.msra.mxu0 0.0
        %6715 = vmatprep.subr.mxu0 0.0
        %6716 = vmatpush2.msra.mxu0 0.0
        %6717 = vmatprep.subr.mxu0 0.0
        %6718 = vmatpush2.msra.mxu0 0.0
        %6719 = vmatprep.subr.mxu0 0.0
        %6720 = vmatpush2.msra.mxu0 0.0
        %6721 = vmatprep.mubr.f32.mxu0 0.0
        %6722 = vmatmul.mubr.f32.gmra.mxu0 %v6641
        %v6723 = vpop.f32.mrf.mxu0
        %v6724 = vadd.f32 0.0, %v6723
        %v6725 = vpop.f32.mrf.mxu0
        %6726 = vmatprep.mubr.f32.mxu0 0.0
        %6727 = vmatmul.mubr.f32.gmra.mxu0 %v6642
        %v6728 = vpop.f32.mrf.mxu0
        %v6729 = vadd.f32 0.0, %v6728
        %v6730 = vpop.f32.mrf.mxu0
        %6731 = vmatprep.mubr.f32.mxu0 0.0
        %6732 = vmatmul.mubr.f32.gmra.mxu0 %v6643
        %v6733 = vpop.f32.mrf.mxu0
        %v6734 = vadd.f32 0.0, %v6733
        %v6735 = vpop.f32.mrf.mxu0
        %6736 = vmatprep.mubr.f32.mxu0 0.0
        %6737 = vmatmul.mubr.f32.gmra.mxu0 %v6644
        %v6738 = vpop.f32.mrf.mxu0
        %v6739 = vadd.f32 0.0, %v6738
        %v6740 = vpop.f32.mrf.mxu0
        %6741 = vmatprep.mubr.f32.mxu0 0.0
        %6742 = vmatmul.mubr.f32.gmra.mxu0 %v6645
        %v6743 = vpop.f32.mrf.mxu0
        %v6744 = vadd.f32 0.0, %v6743
        %v6745 = vpop.f32.mrf.mxu0
        %6746 = vmatprep.mubr.f32.mxu0 0.0
        %6747 = vmatmul.mubr.f32.gmra.mxu0 %v6646
        %v6748 = vpop.f32.mrf.mxu0
        %v6749 = vadd.f32 0.0, %v6748
        %v6750 = vpop.f32.mrf.mxu0
        %6751 = vmatprep.mubr.f32.mxu0 0.0
        %6752 = vmatmul.mubr.f32.gmra.mxu0 %v6647
        %v6753 = vpop.f32.mrf.mxu0
        %v6754 = vadd.f32 0.0, %v6753
        %v6755 = vpop.f32.mrf.mxu0
        %6756 = vmatprep.mubr.f32.mxu0 0.0
        %6757 = vmatmul.mubr.f32.gmra.mxu0 %v6648
        %v6758 = vpop.f32.mrf.mxu0
        %v6759 = vadd.f32 0.0, %v6758
        %v6760 = vpop.f32.mrf.mxu0
        %6761 = vmatprep.mubr.f32.mxu0 0.0
        %6762 = vmatmul.mubr.f32.gmra.mxu0 %v6649
        %v6763 = vpop.f32.mrf.mxu0
        %v6764 = vadd.f32 0.0, %v6763
        %v6765 = vpop.f32.mrf.mxu0
        %6766 = vmatprep.mubr.f32.mxu0 0.0
        %6767 = vmatmul.mubr.f32.gmra.mxu0 %v6650
        %v6768 = vpop.f32.mrf.mxu0
        %v6769 = vadd.f32 0.0, %v6768
        %v6770 = vpop.f32.mrf.mxu0
        %6771 = vmatprep.mubr.f32.mxu0 0.0
        %6772 = vmatmul.mubr.f32.gmra.mxu0 %v6651
        %v6773 = vpop.f32.mrf.mxu0
        %v6774 = vadd.f32 0.0, %v6773
        %v6775 = vpop.f32.mrf.mxu0
        %6776 = vmatprep.mubr.f32.mxu0 0.0
        %6777 = vmatmul.mubr.f32.gmra.mxu0 %v6652
        %v6778 = vpop.f32.mrf.mxu0
        %v6779 = vadd.f32 0.0, %v6778
        %v6780 = vpop.f32.mrf.mxu0
        %6781 = vmatprep.mubr.f32.mxu0 0.0
        %6782 = vmatmul.mubr.f32.gmra.mxu0 %v6653
        %v6783 = vpop.f32.mrf.mxu0
        %v6784 = vadd.f32 0.0, %v6783
        %v6785 = vpop.f32.mrf.mxu0
        %6786 = vmatprep.mubr.f32.mxu0 0.0
        %6787 = vmatmul.mubr.f32.gmra.mxu0 %v6654
        %v6788 = vpop.f32.mrf.mxu0
        %v6789 = vadd.f32 0.0, %v6788
        %v6790 = vpop.f32.mrf.mxu0
        %6791 = vmatprep.mubr.f32.mxu0 0.0
        %6792 = vmatmul.mubr.f32.gmra.mxu0 %v6655
        %v6793 = vpop.f32.mrf.mxu0
        %v6794 = vadd.f32 0.0, %v6793
        %v6795 = vpop.f32.mrf.mxu0
        %6796 = vmatprep.mubr.f32.mxu0 0.0
        %6797 = vmatmul.mubr.f32.gmra.mxu0 %v6656
        %v6798 = vpop.f32.mrf.mxu0
        %v6799 = vadd.f32 0.0, %v6798
        %v6800 = vpop.f32.mrf.mxu0
        %6801 = vdwg.mxu0
        %v6802 = vadd.f32 %v6414, %v6724
        %v6803 = vadd.f32 %v6419, %v6729
        %v6804 = vadd.f32 %v6424, %v6734
        %v6805 = vadd.f32 %v6429, %v6739
        %v6806 = vadd.f32 %v6434, %v6744
        %v6807 = vadd.f32 %v6439, %v6749
        %v6808 = vadd.f32 %v6444, %v6754
        %v6809 = vadd.f32 %v6449, %v6759
        %v6810 = vadd.f32 %v6454, %v6764
        %v6811 = vadd.f32 %v6459, %v6769
        %v6812 = vadd.f32 %v6464, %v6774
        %v6813 = vadd.f32 %v6469, %v6779
        %v6814 = vadd.f32 %v6474, %v6784
        %v6815 = vadd.f32 %v6479, %v6789
        %v6816 = vadd.f32 %v6484, %v6794
        %v6817 = vadd.f32 %v6489, %v6799
        %v6818 = vld [vmem:[%s9 + $0x60] sm:$0xff]
        %v6819 = vld [vmem:[%s9 + $0x68] sm:$0xff]
        %v6820 = vld [vmem:[%s9 + $0x70] sm:$0xff]
        %v6821 = vld [vmem:[%s9 + $0x78] sm:$0xff]
        %6822 = vmatprep.subr.mxu0 0.0
        %6823 = vmatpush1.msra.mxu0 0.0
        %6824 = vmatprep.subr.mxu0 0.0
        %6825 = vmatpush1.msra.mxu0 0.0
        %6826 = vmatprep.subr.mxu0 0.0
        %6827 = vmatpush1.msra.mxu0 0.0
        %6828 = vmatprep.subr.mxu0 0.0
        %6829 = vmatpush1.msra.mxu0 0.0
        %6830 = vmatprep.subr.mxu0 0.0
        %6831 = vmatpush1.msra.mxu0 0.0
        %6832 = vmatprep.subr.mxu0 0.0
        %6833 = vmatpush1.msra.mxu0 0.0
        %6834 = vmatprep.subr.mxu0 0.0
        %6835 = vmatpush1.msra.mxu0 0.0
        %6836 = vmatprep.subr.mxu0 0.0
        %6837 = vmatpush1.msra.mxu0 0.0
        %6838 = vmatprep.subr.mxu0 0.0
        %6839 = vmatpush1.msra.mxu0 0.0
        %6840 = vmatprep.subr.mxu0 0.0
        %6841 = vmatpush1.msra.mxu0 0.0
        %6842 = vmatprep.subr.mxu0 0.0
        %6843 = vmatpush1.msra.mxu0 0.0
        %6844 = vmatprep.subr.mxu0 0.0
        %6845 = vmatpush1.msra.mxu0 0.0
        %6846 = vmatprep.subr.mxu0 0.0
        %6847 = vmatpush1.msra.mxu0 %v6821
        %6848 = vmatprep.subr.mxu0 0.0
        %6849 = vmatpush1.msra.mxu0 %v6820
        %6850 = vmatprep.subr.mxu0 0.0
        %6851 = vmatpush1.msra.mxu0 %v6819
        %6852 = vmatprep.subr.mxu0 0.0
        %6853 = vmatpush1.msra.mxu0 %v6818
        %6854 = vmatprep.subr.mxu0 0.0
        %6855 = vmatpush2.msra.mxu0 0.0
        %6856 = vmatprep.subr.mxu0 0.0
        %6857 = vmatpush2.msra.mxu0 0.0
        %6858 = vmatprep.subr.mxu0 0.0
        %6859 = vmatpush2.msra.mxu0 0.0
        %6860 = vmatprep.subr.mxu0 0.0
        %6861 = vmatpush2.msra.mxu0 0.0
        %6862 = vmatprep.subr.mxu0 0.0
        %6863 = vmatpush2.msra.mxu0 0.0
        %6864 = vmatprep.subr.mxu0 0.0
        %6865 = vmatpush2.msra.mxu0 0.0
        %6866 = vmatprep.subr.mxu0 0.0
        %6867 = vmatpush2.msra.mxu0 0.0
        %6868 = vmatprep.subr.mxu0 0.0
        %6869 = vmatpush2.msra.mxu0 0.0
        %6870 = vmatprep.subr.mxu0 0.0
        %6871 = vmatpush2.msra.mxu0 0.0
        %6872 = vmatprep.subr.mxu0 0.0
        %6873 = vmatpush2.msra.mxu0 0.0
        %6874 = vmatprep.subr.mxu0 0.0
        %6875 = vmatpush2.msra.mxu0 0.0
        %6876 = vmatprep.subr.mxu0 0.0
        %6877 = vmatpush2.msra.mxu0 0.0
        %6878 = vmatprep.subr.mxu0 0.0
        %6879 = vmatpush2.msra.mxu0 0.0
        %6880 = vmatprep.subr.mxu0 0.0
        %6881 = vmatpush2.msra.mxu0 0.0
        %6882 = vmatprep.subr.mxu0 0.0
        %6883 = vmatpush2.msra.mxu0 0.0
        %6884 = vmatprep.subr.mxu0 0.0
        %6885 = vmatpush2.msra.mxu0 0.0
        %6886 = vmatprep.mubr.f32.mxu0 0.0
        %6887 = vmatmul.mubr.f32.gmra.mxu0 %v5829
        %v6888 = vpop.f32.mrf.mxu0
        %v6889 = vadd.f32 0.0, %v6888
        %v6890 = vpop.f32.mrf.mxu0
        %6891 = vmatprep.mubr.f32.mxu0 0.0
        %6892 = vmatmul.mubr.f32.gmra.mxu0 %v5832
        %v6893 = vpop.f32.mrf.mxu0
        %v6894 = vadd.f32 0.0, %v6893
        %v6895 = vpop.f32.mrf.mxu0
        %6896 = vmatprep.mubr.f32.mxu0 0.0
        %6897 = vmatmul.mubr.f32.gmra.mxu0 %v5835
        %v6898 = vpop.f32.mrf.mxu0
        %v6899 = vadd.f32 0.0, %v6898
        %v6900 = vpop.f32.mrf.mxu0
        %6901 = vmatprep.mubr.f32.mxu0 0.0
        %6902 = vmatmul.mubr.f32.gmra.mxu0 %v5838
        %v6903 = vpop.f32.mrf.mxu0
        %v6904 = vadd.f32 0.0, %v6903
        %v6905 = vpop.f32.mrf.mxu0
        %6906 = vmatprep.mubr.f32.mxu0 0.0
        %6907 = vmatmul.mubr.f32.gmra.mxu0 %v5841
        %v6908 = vpop.f32.mrf.mxu0
        %v6909 = vadd.f32 0.0, %v6908
        %v6910 = vpop.f32.mrf.mxu0
        %6911 = vmatprep.mubr.f32.mxu0 0.0
        %6912 = vmatmul.mubr.f32.gmra.mxu0 %v5844
        %v6913 = vpop.f32.mrf.mxu0
        %v6914 = vadd.f32 0.0, %v6913
        %v6915 = vpop.f32.mrf.mxu0
        %6916 = vmatprep.mubr.f32.mxu0 0.0
        %6917 = vmatmul.mubr.f32.gmra.mxu0 %v5847
        %v6918 = vpop.f32.mrf.mxu0
        %v6919 = vadd.f32 0.0, %v6918
        %v6920 = vpop.f32.mrf.mxu0
        %6921 = vmatprep.mubr.f32.mxu0 0.0
        %6922 = vmatmul.mubr.f32.gmra.mxu0 %v5850
        %v6923 = vpop.f32.mrf.mxu0
        %v6924 = vadd.f32 0.0, %v6923
        %v6925 = vpop.f32.mrf.mxu0
        %6926 = vmatprep.mubr.f32.mxu0 0.0
        %6927 = vmatmul.mubr.f32.gmra.mxu0 %v5853
        %v6928 = vpop.f32.mrf.mxu0
        %v6929 = vadd.f32 0.0, %v6928
        %v6930 = vpop.f32.mrf.mxu0
        %6931 = vmatprep.mubr.f32.mxu0 0.0
        %6932 = vmatmul.mubr.f32.gmra.mxu0 %v5856
        %v6933 = vpop.f32.mrf.mxu0
        %v6934 = vadd.f32 0.0, %v6933
        %v6935 = vpop.f32.mrf.mxu0
        %6936 = vmatprep.mubr.f32.mxu0 0.0
        %6937 = vmatmul.mubr.f32.gmra.mxu0 %v5859
        %v6938 = vpop.f32.mrf.mxu0
        %v6939 = vadd.f32 0.0, %v6938
        %v6940 = vpop.f32.mrf.mxu0
        %6941 = vmatprep.mubr.f32.mxu0 0.0
        %6942 = vmatmul.mubr.f32.gmra.mxu0 %v5862
        %v6943 = vpop.f32.mrf.mxu0
        %v6944 = vadd.f32 0.0, %v6943
        %v6945 = vpop.f32.mrf.mxu0
        %6946 = vmatprep.mubr.f32.mxu0 0.0
        %6947 = vmatmul.mubr.f32.gmra.mxu0 %v5865
        %v6948 = vpop.f32.mrf.mxu0
        %v6949 = vadd.f32 0.0, %v6948
        %v6950 = vpop.f32.mrf.mxu0
        %6951 = vmatprep.mubr.f32.mxu0 0.0
        %6952 = vmatmul.mubr.f32.gmra.mxu0 %v5868
        %v6953 = vpop.f32.mrf.mxu0
        %v6954 = vadd.f32 0.0, %v6953
        %v6955 = vpop.f32.mrf.mxu0
        %6956 = vmatprep.mubr.f32.mxu0 0.0
        %6957 = vmatmul.mubr.f32.gmra.mxu0 %v5871
        %v6958 = vpop.f32.mrf.mxu0
        %v6959 = vadd.f32 0.0, %v6958
        %v6960 = vpop.f32.mrf.mxu0
        %6961 = vmatprep.mubr.f32.mxu0 0.0
        %6962 = vmatmul.mubr.f32.gmra.mxu0 %v5874
        %v6963 = vpop.f32.mrf.mxu0
        %v6964 = vadd.f32 0.0, %v6963
        %v6965 = vpop.f32.mrf.mxu0
        %6966 = vdwg.mxu0
        %v6967 = vld [vmem:[%s4 + $0x18] sm:$0xff]
        %v6968 = vld [vmem:[%s4 + $0x38] sm:$0xff]
        %v6969 = vld [vmem:[%s4 + $0x58] sm:$0xff]
        %v6970 = vld [vmem:[%s4 + $0x78] sm:$0xff]
        %v6971 = vld [vmem:[%s4 + $0x98] sm:$0xff]
        %v6972 = vld [vmem:[%s4 + $0xb8] sm:$0xff]
        %v6973 = vld [vmem:[%s4 + $0xd8] sm:$0xff]
        %v6974 = vld [vmem:[%s4 + $0xf8] sm:$0xff]
        %v6975 = vld [vmem:[%s4 + $0x118] sm:$0xff]
        %v6976 = vld [vmem:[%s4 + $0x138] sm:$0xff]
        %v6977 = vld [vmem:[%s4 + $0x158] sm:$0xff]
        %v6978 = vld [vmem:[%s4 + $0x178] sm:$0xff]
        %v6979 = vld [vmem:[%s4 + $0x198] sm:$0xff]
        %v6980 = vld [vmem:[%s4 + $0x1b8] sm:$0xff]
        %v6981 = vld [vmem:[%s4 + $0x1d8] sm:$0xff]
        %v6982 = vld [vmem:[%s4 + $0x1f8] sm:$0xff]
        %6983 = vmatprep.subr.mxu0 0.0
        %6984 = vmatpush1.msra.mxu0 %v6964
        %6985 = vmatprep.subr.mxu0 0.0
        %6986 = vmatpush1.msra.mxu0 %v6959
        %6987 = vmatprep.subr.mxu0 0.0
        %6988 = vmatpush1.msra.mxu0 %v6954
        %6989 = vmatprep.subr.mxu0 0.0
        %6990 = vmatpush1.msra.mxu0 %v6949
        %6991 = vmatprep.subr.mxu0 0.0
        %6992 = vmatpush1.msra.mxu0 %v6944
        %6993 = vmatprep.subr.mxu0 0.0
        %6994 = vmatpush1.msra.mxu0 %v6939
        %6995 = vmatprep.subr.mxu0 0.0
        %6996 = vmatpush1.msra.mxu0 %v6934
        %6997 = vmatprep.subr.mxu0 0.0
        %6998 = vmatpush1.msra.mxu0 %v6929
        %6999 = vmatprep.subr.mxu0 0.0
        %7000 = vmatpush1.msra.mxu0 %v6924
        %7001 = vmatprep.subr.mxu0 0.0
        %7002 = vmatpush1.msra.mxu0 %v6919
        %7003 = vmatprep.subr.mxu0 0.0
        %7004 = vmatpush1.msra.mxu0 %v6914
        %7005 = vmatprep.subr.mxu0 0.0
        %7006 = vmatpush1.msra.mxu0 %v6909
        %7007 = vmatprep.subr.mxu0 0.0
        %7008 = vmatpush1.msra.mxu0 %v6904
        %7009 = vmatprep.subr.mxu0 0.0
        %7010 = vmatpush1.msra.mxu0 %v6899
        %7011 = vmatprep.subr.mxu0 0.0
        %7012 = vmatpush1.msra.mxu0 %v6894
        %7013 = vmatprep.subr.mxu0 0.0
        %7014 = vmatpush1.msra.mxu0 %v6889
        %7015 = vmatprep.subr.mxu0 0.0
        %7016 = vmatpush2.msra.mxu0 0.0
        %7017 = vmatprep.subr.mxu0 0.0
        %7018 = vmatpush2.msra.mxu0 0.0
        %7019 = vmatprep.subr.mxu0 0.0
        %7020 = vmatpush2.msra.mxu0 0.0
        %7021 = vmatprep.subr.mxu0 0.0
        %7022 = vmatpush2.msra.mxu0 0.0
        %7023 = vmatprep.subr.mxu0 0.0
        %7024 = vmatpush2.msra.mxu0 0.0
        %7025 = vmatprep.subr.mxu0 0.0
        %7026 = vmatpush2.msra.mxu0 0.0
        %7027 = vmatprep.subr.mxu0 0.0
        %7028 = vmatpush2.msra.mxu0 0.0
        %7029 = vmatprep.subr.mxu0 0.0
        %7030 = vmatpush2.msra.mxu0 0.0
        %7031 = vmatprep.subr.mxu0 0.0
        %7032 = vmatpush2.msra.mxu0 0.0
        %7033 = vmatprep.subr.mxu0 0.0
        %7034 = vmatpush2.msra.mxu0 0.0
        %7035 = vmatprep.subr.mxu0 0.0
        %7036 = vmatpush2.msra.mxu0 0.0
        %7037 = vmatprep.subr.mxu0 0.0
        %7038 = vmatpush2.msra.mxu0 0.0
        %7039 = vmatprep.subr.mxu0 0.0
        %7040 = vmatpush2.msra.mxu0 0.0
        %7041 = vmatprep.subr.mxu0 0.0
        %7042 = vmatpush2.msra.mxu0 0.0
        %7043 = vmatprep.subr.mxu0 0.0
        %7044 = vmatpush2.msra.mxu0 0.0
        %7045 = vmatprep.subr.mxu0 0.0
        %7046 = vmatpush2.msra.mxu0 0.0
        %7047 = vmatprep.mubr.f32.mxu0 0.0
        %7048 = vmatmul.mubr.f32.gmra.mxu0 %v6967
        %v7049 = vpop.f32.mrf.mxu0
        %v7050 = vadd.f32 0.0, %v7049
        %v7051 = vpop.f32.mrf.mxu0
        %7052 = vmatprep.mubr.f32.mxu0 0.0
        %7053 = vmatmul.mubr.f32.gmra.mxu0 %v6968
        %v7054 = vpop.f32.mrf.mxu0
        %v7055 = vadd.f32 0.0, %v7054
        %v7056 = vpop.f32.mrf.mxu0
        %7057 = vmatprep.mubr.f32.mxu0 0.0
        %7058 = vmatmul.mubr.f32.gmra.mxu0 %v6969
        %v7059 = vpop.f32.mrf.mxu0
        %v7060 = vadd.f32 0.0, %v7059
        %v7061 = vpop.f32.mrf.mxu0
        %7062 = vmatprep.mubr.f32.mxu0 0.0
        %7063 = vmatmul.mubr.f32.gmra.mxu0 %v6970
        %v7064 = vpop.f32.mrf.mxu0
        %v7065 = vadd.f32 0.0, %v7064
        %v7066 = vpop.f32.mrf.mxu0
        %7067 = vmatprep.mubr.f32.mxu0 0.0
        %7068 = vmatmul.mubr.f32.gmra.mxu0 %v6971
        %v7069 = vpop.f32.mrf.mxu0
        %v7070 = vadd.f32 0.0, %v7069
        %v7071 = vpop.f32.mrf.mxu0
        %7072 = vmatprep.mubr.f32.mxu0 0.0
        %7073 = vmatmul.mubr.f32.gmra.mxu0 %v6972
        %v7074 = vpop.f32.mrf.mxu0
        %v7075 = vadd.f32 0.0, %v7074
        %v7076 = vpop.f32.mrf.mxu0
        %7077 = vmatprep.mubr.f32.mxu0 0.0
        %7078 = vmatmul.mubr.f32.gmra.mxu0 %v6973
        %v7079 = vpop.f32.mrf.mxu0
        %v7080 = vadd.f32 0.0, %v7079
        %v7081 = vpop.f32.mrf.mxu0
        %7082 = vmatprep.mubr.f32.mxu0 0.0
        %7083 = vmatmul.mubr.f32.gmra.mxu0 %v6974
        %v7084 = vpop.f32.mrf.mxu0
        %v7085 = vadd.f32 0.0, %v7084
        %v7086 = vpop.f32.mrf.mxu0
        %7087 = vmatprep.mubr.f32.mxu0 0.0
        %7088 = vmatmul.mubr.f32.gmra.mxu0 %v6975
        %v7089 = vpop.f32.mrf.mxu0
        %v7090 = vadd.f32 0.0, %v7089
        %v7091 = vpop.f32.mrf.mxu0
        %7092 = vmatprep.mubr.f32.mxu0 0.0
        %7093 = vmatmul.mubr.f32.gmra.mxu0 %v6976
        %v7094 = vpop.f32.mrf.mxu0
        %v7095 = vadd.f32 0.0, %v7094
        %v7096 = vpop.f32.mrf.mxu0
        %7097 = vmatprep.mubr.f32.mxu0 0.0
        %7098 = vmatmul.mubr.f32.gmra.mxu0 %v6977
        %v7099 = vpop.f32.mrf.mxu0
        %v7100 = vadd.f32 0.0, %v7099
        %v7101 = vpop.f32.mrf.mxu0
        %7102 = vmatprep.mubr.f32.mxu0 0.0
        %7103 = vmatmul.mubr.f32.gmra.mxu0 %v6978
        %v7104 = vpop.f32.mrf.mxu0
        %v7105 = vadd.f32 0.0, %v7104
        %v7106 = vpop.f32.mrf.mxu0
        %7107 = vmatprep.mubr.f32.mxu0 0.0
        %7108 = vmatmul.mubr.f32.gmra.mxu0 %v6979
        %v7109 = vpop.f32.mrf.mxu0
        %v7110 = vadd.f32 0.0, %v7109
        %v7111 = vpop.f32.mrf.mxu0
        %7112 = vmatprep.mubr.f32.mxu0 0.0
        %7113 = vmatmul.mubr.f32.gmra.mxu0 %v6980
        %v7114 = vpop.f32.mrf.mxu0
        %v7115 = vadd.f32 0.0, %v7114
        %v7116 = vpop.f32.mrf.mxu0
        %7117 = vmatprep.mubr.f32.mxu0 0.0
        %7118 = vmatmul.mubr.f32.gmra.mxu0 %v6981
        %v7119 = vpop.f32.mrf.mxu0
        %v7120 = vadd.f32 0.0, %v7119
        %v7121 = vpop.f32.mrf.mxu0
        %7122 = vmatprep.mubr.f32.mxu0 0.0
        %7123 = vmatmul.mubr.f32.gmra.mxu0 %v6982
        %v7124 = vpop.f32.mrf.mxu0
        %v7125 = vadd.f32 0.0, %v7124
        %v7126 = vpop.f32.mrf.mxu0
        %7127 = vdwg.mxu0
        %v7128 = vadd.f32 %v6802, %v7050
        %v7129 = vadd.f32 %v6803, %v7055
        %v7130 = vadd.f32 %v6804, %v7060
        %v7131 = vadd.f32 %v6805, %v7065
        %v7132 = vadd.f32 %v6806, %v7070
        %v7133 = vadd.f32 %v6807, %v7075
        %v7134 = vadd.f32 %v6808, %v7080
        %v7135 = vadd.f32 %v6809, %v7085
        %v7136 = vadd.f32 %v6810, %v7090
        %v7137 = vadd.f32 %v6811, %v7095
        %v7138 = vadd.f32 %v6812, %v7100
        %v7139 = vadd.f32 %v6813, %v7105
        %v7140 = vadd.f32 %v6814, %v7110
        %v7141 = vadd.f32 %v6815, %v7115
        %v7142 = vadd.f32 %v6816, %v7120
        %v7143 = vadd.f32 %v6817, %v7125
        %v7144 = vld [vmem:[%s14] sm:$0xff]
        %v7145 = vld [vmem:[%s14 + $0x8] sm:$0xff]
        %v7146 = vld [vmem:[%s14 + $0x10] sm:$0xff]
        %v7147 = vld [vmem:[%s14 + $0x18] sm:$0xff]
        %v7148 = vld [vmem:[%s14 + $0x20] sm:$0xff]
        %v7149 = vld [vmem:[%s14 + $0x28] sm:$0xff]
        %v7150 = vld [vmem:[%s14 + $0x30] sm:$0xff]
        %v7151 = vld [vmem:[%s14 + $0x38] sm:$0xff]
        %v7152 = vld [vmem:[%s14 + $0x40] sm:$0xff]
        %v7153 = vld [vmem:[%s14 + $0x48] sm:$0xff]
        %v7154 = vld [vmem:[%s14 + $0x50] sm:$0xff]
        %v7155 = vld [vmem:[%s14 + $0x58] sm:$0xff]
        %v7156 = vld [vmem:[%s14 + $0x60] sm:$0xff]
        %v7157 = vld [vmem:[%s14 + $0x68] sm:$0xff]
        %v7158 = vld [vmem:[%s14 + $0x70] sm:$0xff]
        %v7159 = vld [vmem:[%s14 + $0x78] sm:$0xff]
        %7161 = vset.pattern.permute.xlu0 0
        %7162 = vperm.xlu0 %7161, %v7144
        %v7163 = vpop.permute.xlu0 %7162
        %7166 = vset.pattern.permute.xlu0 0
        %7167 = vperm.xlu0 %7166, %v7145
        %v7168 = vpop.permute.xlu0 %7167
        %7171 = vset.pattern.permute.xlu0 0
        %7172 = vperm.xlu0 %7171, %v7146
        %v7173 = vpop.permute.xlu0 %7172
        %7176 = vset.pattern.permute.xlu0 0
        %7177 = vperm.xlu0 %7176, %v7147
        %v7178 = vpop.permute.xlu0 %7177
        %7181 = vset.pattern.permute.xlu0 0
        %7182 = vperm.xlu0 %7181, %v7148
        %v7183 = vpop.permute.xlu0 %7182
        %7186 = vset.pattern.permute.xlu0 0
        %7187 = vperm.xlu0 %7186, %v7149
        %v7188 = vpop.permute.xlu0 %7187
        %7191 = vset.pattern.permute.xlu0 0
        %7192 = vperm.xlu0 %7191, %v7150
        %v7193 = vpop.permute.xlu0 %7192
        %7196 = vset.pattern.permute.xlu0 0
        %7197 = vperm.xlu0 %7196, %v7151
        %v7198 = vpop.permute.xlu0 %7197
        %7201 = vset.pattern.permute.xlu0 0
        %7202 = vperm.xlu0 %7201, %v7152
        %v7203 = vpop.permute.xlu0 %7202
        %7206 = vset.pattern.permute.xlu0 0
        %7207 = vperm.xlu0 %7206, %v7153
        %v7208 = vpop.permute.xlu0 %7207
        %7211 = vset.pattern.permute.xlu0 0
        %7212 = vperm.xlu0 %7211, %v7154
        %v7213 = vpop.permute.xlu0 %7212
        %7216 = vset.pattern.permute.xlu0 0
        %7217 = vperm.xlu0 %7216, %v7155
        %v7218 = vpop.permute.xlu0 %7217
        %7221 = vset.pattern.permute.xlu0 0
        %7222 = vperm.xlu0 %7221, %v7156
        %v7223 = vpop.permute.xlu0 %7222
        %7226 = vset.pattern.permute.xlu0 0
        %7227 = vperm.xlu0 %7226, %v7157
        %v7228 = vpop.permute.xlu0 %7227
        %7231 = vset.pattern.permute.xlu0 0
        %7232 = vperm.xlu0 %7231, %v7158
        %v7233 = vpop.permute.xlu0 %7232
        %7236 = vset.pattern.permute.xlu0 0
        %7237 = vperm.xlu0 %7236, %v7159
        %v7238 = vpop.permute.xlu0 %7237
        %v7240 = vadd.f32 %v7128, %v7163
        %v7241 = vadd.f32 %v7129, %v7168
        %v7242 = vadd.f32 %v7130, %v7173
        %v7243 = vadd.f32 %v7131, %v7178
        %v7244 = vadd.f32 %v7132, %v7183
        %v7245 = vadd.f32 %v7133, %v7188
        %v7246 = vadd.f32 %v7134, %v7193
        %v7247 = vadd.f32 %v7135, %v7198
        %v7248 = vadd.f32 %v7136, %v7203
        %v7249 = vadd.f32 %v7137, %v7208
        %v7250 = vadd.f32 %v7138, %v7213
        %v7251 = vadd.f32 %v7139, %v7218
        %v7252 = vadd.f32 %v7140, %v7223
        %v7253 = vadd.f32 %v7141, %v7228
        %v7254 = vadd.f32 %v7142, %v7233
        %v7255 = vadd.f32 %v7143, %v7238
        %v7256 = vld [vmem:[%s18] sm:$0xff]
        %v7257 = vld [vmem:[%s18 + $0x8] sm:$0xff]
        %vm7258 = vcmask 130048
        %v7259 = vsel %vm7258, %v7240, 0.0
        %v7260 = vsel %vm7258, %v7248, 0.0
        %v7261 = vadd.f32 %v7259, %v7260
        %v7262 = vsel %vm7258, %v7241, 0.0
        %v7263 = vsel %vm7258, %v7249, 0.0
        %v7264 = vadd.f32 %v7262, %v7263
        %v7265 = vsel %vm7258, %v7242, 0.0
        %v7266 = vsel %vm7258, %v7250, 0.0
        %v7267 = vadd.f32 %v7265, %v7266
        %v7268 = vsel %vm7258, %v7243, 0.0
        %v7269 = vsel %vm7258, %v7251, 0.0
        %v7270 = vadd.f32 %v7268, %v7269
        %v7271 = vsel %vm7258, %v7244, 0.0
        %v7272 = vsel %vm7258, %v7252, 0.0
        %v7273 = vadd.f32 %v7271, %v7272
        %v7274 = vsel %vm7258, %v7245, 0.0
        %v7275 = vsel %vm7258, %v7253, 0.0
        %v7276 = vadd.f32 %v7274, %v7275
        %v7277 = vsel %vm7258, %v7246, 0.0
        %v7278 = vsel %vm7258, %v7254, 0.0
        %v7279 = vadd.f32 %v7277, %v7278
        %v7280 = vsel %vm7258, %v7247, 0.0
        %v7281 = vsel %vm7258, %v7255, 0.0
        %v7282 = vadd.f32 %v7280, %v7281
        %v7284 = vsel %vm7258, %v7261, 0
        %v7287 = vsel %vm7258, %v7264, 0
        %v7290 = vsel %vm7258, %v7267, 0
        %v7293 = vsel %vm7258, %v7270, 0
        %v7296 = vsel %vm7258, %v7273, 0
        %v7299 = vsel %vm7258, %v7276, 0
        %v7302 = vsel %vm7258, %v7279, 0
        %v7305 = vsel %vm7258, %v7282, 0
        %7307 = vmatprep.subr.mxu0 0.0
        %7308 = vmatpush1.msra.mxu0 0.0
        %7309 = vmatprep.subr.mxu0 0.0
        %7310 = vmatpush1.msra.mxu0 0.0
        %7311 = vmatprep.subr.mxu0 0.0
        %7312 = vmatpush1.msra.mxu0 0.0
        %7313 = vmatprep.subr.mxu0 0.0
        %7314 = vmatpush1.msra.mxu0 0.0
        %7315 = vmatprep.subr.mxu0 0.0
        %7316 = vmatpush1.msra.mxu0 0.0
        %7317 = vmatprep.subr.mxu0 0.0
        %7318 = vmatpush1.msra.mxu0 0.0
        %7319 = vmatprep.subr.mxu0 0.0
        %7320 = vmatpush1.msra.mxu0 0.0
        %7321 = vmatprep.subr.mxu0 0.0
        %7322 = vmatpush1.msra.mxu0 0.0
        %7323 = vmatprep.subr.mxu0 0.0
        %7324 = vmatpush1.msra.mxu0 0.0
        %7325 = vmatprep.subr.mxu0 0.0
        %7326 = vmatpush1.msra.mxu0 0.0
        %7327 = vmatprep.subr.mxu0 0.0
        %7328 = vmatpush1.msra.mxu0 0.0
        %7329 = vmatprep.subr.mxu0 0.0
        %7330 = vmatpush1.msra.mxu0 0.0
        %7331 = vmatprep.subr.mxu0 0.0
        %7332 = vmatpush1.msra.mxu0 0.0
        %7333 = vmatprep.subr.mxu0 0.0
        %7334 = vmatpush1.msra.mxu0 0.0
        %7335 = vmatprep.subr.mxu0 0.0
        %7336 = vmatpush1.msra.mxu0 %v7257
        %7337 = vmatprep.subr.mxu0 0.0
        %7338 = vmatpush1.msra.mxu0 %v7256
        %7339 = vmatprep.subr.mxu0 0.0
        %7340 = vmatpush2.msra.mxu0 0.0
        %7341 = vmatprep.subr.mxu0 0.0
        %7342 = vmatpush2.msra.mxu0 0.0
        %7343 = vmatprep.subr.mxu0 0.0
        %7344 = vmatpush2.msra.mxu0 0.0
        %7345 = vmatprep.subr.mxu0 0.0
        %7346 = vmatpush2.msra.mxu0 0.0
        %7347 = vmatprep.subr.mxu0 0.0
        %7348 = vmatpush2.msra.mxu0 0.0
        %7349 = vmatprep.subr.mxu0 0.0
        %7350 = vmatpush2.msra.mxu0 0.0
        %7351 = vmatprep.subr.mxu0 0.0
        %7352 = vmatpush2.msra.mxu0 0.0
        %7353 = vmatprep.subr.mxu0 0.0
        %7354 = vmatpush2.msra.mxu0 0.0
        %7355 = vmatprep.subr.mxu0 0.0
        %7356 = vmatpush2.msra.mxu0 0.0
        %7357 = vmatprep.subr.mxu0 0.0
        %7358 = vmatpush2.msra.mxu0 0.0
        %7359 = vmatprep.subr.mxu0 0.0
        %7360 = vmatpush2.msra.mxu0 0.0
        %7361 = vmatprep.subr.mxu0 0.0
        %7362 = vmatpush2.msra.mxu0 0.0
        %7363 = vmatprep.subr.mxu0 0.0
        %7364 = vmatpush2.msra.mxu0 0.0
        %7365 = vmatprep.subr.mxu0 0.0
        %7366 = vmatpush2.msra.mxu0 0.0
        %7367 = vmatprep.subr.mxu0 0.0
        %7368 = vmatpush2.msra.mxu0 0.0
        %7369 = vmatprep.subr.mxu0 0.0
        %7370 = vmatpush2.msra.mxu0 0.0
        %7371 = vmatprep.mubr.f32.mxu0 0.0
        %7372 = vmatmul.mubr.f32.gmra.mxu0 %v7284
        %v7373 = vpop.f32.mrf.mxu0
        %v7374 = vadd.f32 0.0, %v7373
        %v7375 = vpop.f32.mrf.mxu0
        %7376 = vmatprep.mubr.f32.mxu0 0.0
        %7377 = vmatmul.mubr.f32.gmra.mxu0 %v7287
        %v7378 = vpop.f32.mrf.mxu0
        %v7379 = vadd.f32 0.0, %v7378
        %v7380 = vpop.f32.mrf.mxu0
        %7381 = vmatprep.mubr.f32.mxu0 0.0
        %7382 = vmatmul.mubr.f32.gmra.mxu0 %v7290
        %v7383 = vpop.f32.mrf.mxu0
        %v7384 = vadd.f32 0.0, %v7383
        %v7385 = vpop.f32.mrf.mxu0
        %7386 = vmatprep.mubr.f32.mxu0 0.0
        %7387 = vmatmul.mubr.f32.gmra.mxu0 %v7293
        %v7388 = vpop.f32.mrf.mxu0
        %v7389 = vadd.f32 0.0, %v7388
        %v7390 = vpop.f32.mrf.mxu0
        %7391 = vmatprep.mubr.f32.mxu0 0.0
        %7392 = vmatmul.mubr.f32.gmra.mxu0 %v7296
        %v7393 = vpop.f32.mrf.mxu0
        %v7394 = vadd.f32 0.0, %v7393
        %v7395 = vpop.f32.mrf.mxu0
        %7396 = vmatprep.mubr.f32.mxu0 0.0
        %7397 = vmatmul.mubr.f32.gmra.mxu0 %v7299
        %v7398 = vpop.f32.mrf.mxu0
        %v7399 = vadd.f32 0.0, %v7398
        %v7400 = vpop.f32.mrf.mxu0
        %7401 = vmatprep.mubr.f32.mxu0 0.0
        %7402 = vmatmul.mubr.f32.gmra.mxu0 %v7302
        %v7403 = vpop.f32.mrf.mxu0
        %v7404 = vadd.f32 0.0, %v7403
        %v7405 = vpop.f32.mrf.mxu0
        %7406 = vmatprep.mubr.f32.mxu0 0.0
        %7407 = vmatmul.mubr.f32.gmra.mxu0 %v7305
        %v7408 = vpop.f32.mrf.mxu0
        %v7409 = vadd.f32 0.0, %v7408
        %v7410 = vpop.f32.mrf.mxu0
        %7411 = vdwg.mxu0
        %v7412 = vsub.f32 %v7240, %v7374
        %v7413 = vsub.f32 %v7241, %v7379
        %v7414 = vsub.f32 %v7242, %v7384
        %v7415 = vsub.f32 %v7243, %v7389
        %v7416 = vsub.f32 %v7244, %v7394
        %v7417 = vsub.f32 %v7245, %v7399
        %v7418 = vsub.f32 %v7246, %v7404
        %v7419 = vsub.f32 %v7247, %v7409
        %v7420 = vsub.f32 %v7248, %v7374
        %v7421 = vsub.f32 %v7249, %v7379
        %v7422 = vsub.f32 %v7250, %v7384
        %v7423 = vsub.f32 %v7251, %v7389
        %v7424 = vsub.f32 %v7252, %v7394
        %v7425 = vsub.f32 %v7253, %v7399
        %v7426 = vsub.f32 %v7254, %v7404
        %v7427 = vsub.f32 %v7255, %v7409
        %v7428 = vmul.f32 %v7412, %v7412
        %v7429 = vmul.f32 %v7413, %v7413
        %v7430 = vmul.f32 %v7414, %v7414
        %v7431 = vmul.f32 %v7415, %v7415
        %v7432 = vmul.f32 %v7416, %v7416
        %v7433 = vmul.f32 %v7417, %v7417
        %v7434 = vmul.f32 %v7418, %v7418
        %v7435 = vmul.f32 %v7419, %v7419
        %v7436 = vmul.f32 %v7420, %v7420
        %v7437 = vmul.f32 %v7421, %v7421
        %v7438 = vmul.f32 %v7422, %v7422
        %v7439 = vmul.f32 %v7423, %v7423
        %v7440 = vmul.f32 %v7424, %v7424
        %v7441 = vmul.f32 %v7425, %v7425
        %v7442 = vmul.f32 %v7426, %v7426
        %v7443 = vmul.f32 %v7427, %v7427
        %v7444 = vsel %vm7258, %v7428, 0.0
        %v7445 = vsel %vm7258, %v7436, 0.0
        %v7446 = vadd.f32 %v7444, %v7445
        %v7447 = vsel %vm7258, %v7429, 0.0
        %v7448 = vsel %vm7258, %v7437, 0.0
        %v7449 = vadd.f32 %v7447, %v7448
        %v7450 = vsel %vm7258, %v7430, 0.0
        %v7451 = vsel %vm7258, %v7438, 0.0
        %v7452 = vadd.f32 %v7450, %v7451
        %v7453 = vsel %vm7258, %v7431, 0.0
        %v7454 = vsel %vm7258, %v7439, 0.0
        %v7455 = vadd.f32 %v7453, %v7454
        %v7456 = vsel %vm7258, %v7432, 0.0
        %v7457 = vsel %vm7258, %v7440, 0.0
        %v7458 = vadd.f32 %v7456, %v7457
        %v7459 = vsel %vm7258, %v7433, 0.0
        %v7460 = vsel %vm7258, %v7441, 0.0
        %v7461 = vadd.f32 %v7459, %v7460
        %v7462 = vsel %vm7258, %v7434, 0.0
        %v7463 = vsel %vm7258, %v7442, 0.0
        %v7464 = vadd.f32 %v7462, %v7463
        %v7465 = vsel %vm7258, %v7435, 0.0
        %v7466 = vsel %vm7258, %v7443, 0.0
        %v7467 = vadd.f32 %v7465, %v7466
        %v7469 = vsel %vm7258, %v7446, 0
        %v7472 = vsel %vm7258, %v7449, 0
        %v7475 = vsel %vm7258, %v7452, 0
        %v7478 = vsel %vm7258, %v7455, 0
        %v7481 = vsel %vm7258, %v7458, 0
        %v7484 = vsel %vm7258, %v7461, 0
        %v7487 = vsel %vm7258, %v7464, 0
        %v7490 = vsel %vm7258, %v7467, 0
        %7492 = vmatprep.subr.mxu0 0.0
        %7493 = vmatpush1.msra.mxu0 0.0
        %7494 = vmatprep.subr.mxu0 0.0
        %7495 = vmatpush1.msra.mxu0 0.0
        %7496 = vmatprep.subr.mxu0 0.0
        %7497 = vmatpush1.msra.mxu0 0.0
        %7498 = vmatprep.subr.mxu0 0.0
        %7499 = vmatpush1.msra.mxu0 0.0
        %7500 = vmatprep.subr.mxu0 0.0
        %7501 = vmatpush1.msra.mxu0 0.0
        %7502 = vmatprep.subr.mxu0 0.0
        %7503 = vmatpush1.msra.mxu0 0.0
        %7504 = vmatprep.subr.mxu0 0.0
        %7505 = vmatpush1.msra.mxu0 0.0
        %7506 = vmatprep.subr.mxu0 0.0
        %7507 = vmatpush1.msra.mxu0 0.0
        %7508 = vmatprep.subr.mxu0 0.0
        %7509 = vmatpush1.msra.mxu0 0.0
        %7510 = vmatprep.subr.mxu0 0.0
        %7511 = vmatpush1.msra.mxu0 0.0
        %7512 = vmatprep.subr.mxu0 0.0
        %7513 = vmatpush1.msra.mxu0 0.0
        %7514 = vmatprep.subr.mxu0 0.0
        %7515 = vmatpush1.msra.mxu0 0.0
        %7516 = vmatprep.subr.mxu0 0.0
        %7517 = vmatpush1.msra.mxu0 0.0
        %7518 = vmatprep.subr.mxu0 0.0
        %7519 = vmatpush1.msra.mxu0 0.0
        %7520 = vmatprep.subr.mxu0 0.0
        %7521 = vmatpush1.msra.mxu0 %v7257
        %7522 = vmatprep.subr.mxu0 0.0
        %7523 = vmatpush1.msra.mxu0 %v7256
        %7524 = vmatprep.subr.mxu0 0.0
        %7525 = vmatpush2.msra.mxu0 0.0
        %7526 = vmatprep.subr.mxu0 0.0
        %7527 = vmatpush2.msra.mxu0 0.0
        %7528 = vmatprep.subr.mxu0 0.0
        %7529 = vmatpush2.msra.mxu0 0.0
        %7530 = vmatprep.subr.mxu0 0.0
        %7531 = vmatpush2.msra.mxu0 0.0
        %7532 = vmatprep.subr.mxu0 0.0
        %7533 = vmatpush2.msra.mxu0 0.0
        %7534 = vmatprep.subr.mxu0 0.0
        %7535 = vmatpush2.msra.mxu0 0.0
        %7536 = vmatprep.subr.mxu0 0.0
        %7537 = vmatpush2.msra.mxu0 0.0
        %7538 = vmatprep.subr.mxu0 0.0
        %7539 = vmatpush2.msra.mxu0 0.0
        %7540 = vmatprep.subr.mxu0 0.0
        %7541 = vmatpush2.msra.mxu0 0.0
        %7542 = vmatprep.subr.mxu0 0.0
        %7543 = vmatpush2.msra.mxu0 0.0
        %7544 = vmatprep.subr.mxu0 0.0
        %7545 = vmatpush2.msra.mxu0 0.0
        %7546 = vmatprep.subr.mxu0 0.0
        %7547 = vmatpush2.msra.mxu0 0.0
        %7548 = vmatprep.subr.mxu0 0.0
        %7549 = vmatpush2.msra.mxu0 0.0
        %7550 = vmatprep.subr.mxu0 0.0
        %7551 = vmatpush2.msra.mxu0 0.0
        %7552 = vmatprep.subr.mxu0 0.0
        %7553 = vmatpush2.msra.mxu0 0.0
        %7554 = vmatprep.subr.mxu0 0.0
        %7555 = vmatpush2.msra.mxu0 0.0
        %7556 = vmatprep.mubr.f32.mxu0 0.0
        %7557 = vmatmul.mubr.f32.gmra.mxu0 %v7469
        %v7558 = vpop.f32.mrf.mxu0
        %v7559 = vadd.f32 1e-05, %v7558
        %v7560 = vpop.f32.mrf.mxu0
        %7561 = vmatprep.mubr.f32.mxu0 0.0
        %7562 = vmatmul.mubr.f32.gmra.mxu0 %v7472
        %v7563 = vpop.f32.mrf.mxu0
        %v7564 = vadd.f32 1e-05, %v7563
        %v7565 = vpop.f32.mrf.mxu0
        %7566 = vmatprep.mubr.f32.mxu0 0.0
        %7567 = vmatmul.mubr.f32.gmra.mxu0 %v7475
        %v7568 = vpop.f32.mrf.mxu0
        %v7569 = vadd.f32 1e-05, %v7568
        %v7570 = vpop.f32.mrf.mxu0
        %7571 = vmatprep.mubr.f32.mxu0 0.0
        %7572 = vmatmul.mubr.f32.gmra.mxu0 %v7478
        %v7573 = vpop.f32.mrf.mxu0
        %v7574 = vadd.f32 1e-05, %v7573
        %v7575 = vpop.f32.mrf.mxu0
        %7576 = vmatprep.mubr.f32.mxu0 0.0
        %7577 = vmatmul.mubr.f32.gmra.mxu0 %v7481
        %v7578 = vpop.f32.mrf.mxu0
        %v7579 = vadd.f32 1e-05, %v7578
        %v7580 = vpop.f32.mrf.mxu0
        %7581 = vmatprep.mubr.f32.mxu0 0.0
        %7582 = vmatmul.mubr.f32.gmra.mxu0 %v7484
        %v7583 = vpop.f32.mrf.mxu0
        %v7584 = vadd.f32 1e-05, %v7583
        %v7585 = vpop.f32.mrf.mxu0
        %7586 = vmatprep.mubr.f32.mxu0 0.0
        %7587 = vmatmul.mubr.f32.gmra.mxu0 %v7487
        %v7588 = vpop.f32.mrf.mxu0
        %v7589 = vadd.f32 1e-05, %v7588
        %v7590 = vpop.f32.mrf.mxu0
        %7591 = vmatprep.mubr.f32.mxu0 0.0
        %7592 = vmatmul.mubr.f32.gmra.mxu0 %v7490
        %v7593 = vpop.f32.mrf.mxu0
        %v7594 = vadd.f32 1e-05, %v7593
        %v7595 = vpop.f32.mrf.mxu0
        %7596 = vdwg.mxu0
        %v7597 = vrsqrt.pop %v7559
        %v7598 = vrsqrt.pop %v7564
        %v7599 = vrsqrt.pop %v7569
        %v7600 = vrsqrt.pop %v7574
        %v7601 = vrsqrt.pop %v7579
        %v7602 = vrsqrt.pop %v7584
        %v7603 = vrsqrt.pop %v7589
        %v7604 = vrsqrt.pop %v7594
        %v7605 = vmul.f32 %v7412, %v7597
        %v7606 = vmul.f32 %v7413, %v7598
        %v7607 = vmul.f32 %v7414, %v7599
        %v7608 = vmul.f32 %v7415, %v7600
        %v7609 = vmul.f32 %v7416, %v7601
        %v7610 = vmul.f32 %v7417, %v7602
        %v7611 = vmul.f32 %v7418, %v7603
        %v7612 = vmul.f32 %v7419, %v7604
        %v7613 = vmul.f32 %v7420, %v7597
        %v7614 = vmul.f32 %v7421, %v7598
        %v7615 = vmul.f32 %v7422, %v7599
        %v7616 = vmul.f32 %v7423, %v7600
        %v7617 = vmul.f32 %v7424, %v7601
        %v7618 = vmul.f32 %v7425, %v7602
        %v7619 = vmul.f32 %v7426, %v7603
        %v7620 = vmul.f32 %v7427, %v7604
        %vm7621 = vcmp.ge.f32.partialorder %v7605, 0.0
        %vm7622 = vcmp.ge.f32.partialorder %v7606, 0.0
        %vm7623 = vcmp.ge.f32.partialorder %v7607, 0.0
        %vm7624 = vcmp.ge.f32.partialorder %v7608, 0.0
        %vm7625 = vcmp.ge.f32.partialorder %v7609, 0.0
        %vm7626 = vcmp.ge.f32.partialorder %v7610, 0.0
        %vm7627 = vcmp.ge.f32.partialorder %v7611, 0.0
        %vm7628 = vcmp.ge.f32.partialorder %v7612, 0.0
        %vm7629 = vcmp.ge.f32.partialorder %v7613, 0.0
        %vm7630 = vcmp.ge.f32.partialorder %v7614, 0.0
        %vm7631 = vcmp.ge.f32.partialorder %v7615, 0.0
        %vm7632 = vcmp.ge.f32.partialorder %v7616, 0.0
        %vm7633 = vcmp.ge.f32.partialorder %v7617, 0.0
        %vm7634 = vcmp.ge.f32.partialorder %v7618, 0.0
        %vm7635 = vcmp.ge.f32.partialorder %v7619, 0.0
        %vm7636 = vcmp.ge.f32.partialorder %v7620, 0.0
        %v7637 = vmul.f32 %v7605, 0.2
        %v7638 = vmul.f32 %v7606, 0.2
        %v7639 = vmul.f32 %v7607, 0.2
        %v7640 = vmul.f32 %v7608, 0.2
        %v7641 = vmul.f32 %v7609, 0.2
        %v7642 = vmul.f32 %v7610, 0.2
        %v7643 = vmul.f32 %v7611, 0.2
        %v7644 = vmul.f32 %v7612, 0.2
        %v7645 = vmul.f32 %v7613, 0.2
        %v7646 = vmul.f32 %v7614, 0.2
        %v7647 = vmul.f32 %v7615, 0.2
        %v7648 = vmul.f32 %v7616, 0.2
        %v7649 = vmul.f32 %v7617, 0.2
        %v7650 = vmul.f32 %v7618, 0.2
        %v7651 = vmul.f32 %v7619, 0.2
        %v7652 = vmul.f32 %v7620, 0.2
        %v7653 = vsel %vm7621, %v7605, %v7637
        %v7654 = vsel %vm7622, %v7606, %v7638
        %v7655 = vsel %vm7623, %v7607, %v7639
        %v7656 = vsel %vm7624, %v7608, %v7640
        %v7657 = vsel %vm7625, %v7609, %v7641
        %v7658 = vsel %vm7626, %v7610, %v7642
        %v7659 = vsel %vm7627, %v7611, %v7643
        %v7660 = vsel %vm7628, %v7612, %v7644
        %v7661 = vsel %vm7629, %v7613, %v7645
        %v7662 = vsel %vm7630, %v7614, %v7646
        %v7663 = vsel %vm7631, %v7615, %v7647
        %v7664 = vsel %vm7632, %v7616, %v7648
        %v7665 = vsel %vm7633, %v7617, %v7649
        %v7666 = vsel %vm7634, %v7618, %v7650
        %v7667 = vsel %vm7635, %v7619, %v7651
        %v7668 = vsel %vm7636, %v7620, %v7652
        %v7669 = vld [vmem:[%s10] sm:$0xff]
        %v7670 = vld [vmem:[%s10 + $0x8] sm:$0xff]
        %v7672 = vsel %vm7258, %v7653, 0
        %v7675 = vsel %vm7258, %v7654, 0
        %v7678 = vsel %vm7258, %v7655, 0
        %v7681 = vsel %vm7258, %v7656, 0
        %v7684 = vsel %vm7258, %v7657, 0
        %v7687 = vsel %vm7258, %v7658, 0
        %v7690 = vsel %vm7258, %v7659, 0
        %v7693 = vsel %vm7258, %v7660, 0
        %v7696 = vsel %vm7258, %v7661, 0
        %v7699 = vsel %vm7258, %v7662, 0
        %v7702 = vsel %vm7258, %v7663, 0
        %v7705 = vsel %vm7258, %v7664, 0
        %v7708 = vsel %vm7258, %v7665, 0
        %v7711 = vsel %vm7258, %v7666, 0
        %v7714 = vsel %vm7258, %v7667, 0
        %v7717 = vsel %vm7258, %v7668, 0
        %7719 = vmatprep.subr.mxu0 0.0
        %7720 = vmatpush1.msra.mxu0 0.0
        %7721 = vmatprep.subr.mxu0 0.0
        %7722 = vmatpush1.msra.mxu0 0.0
        %7723 = vmatprep.subr.mxu0 0.0
        %7724 = vmatpush1.msra.mxu0 0.0
        %7725 = vmatprep.subr.mxu0 0.0
        %7726 = vmatpush1.msra.mxu0 0.0
        %7727 = vmatprep.subr.mxu0 0.0
        %7728 = vmatpush1.msra.mxu0 0.0
        %7729 = vmatprep.subr.mxu0 0.0
        %7730 = vmatpush1.msra.mxu0 0.0
        %7731 = vmatprep.subr.mxu0 0.0
        %7732 = vmatpush1.msra.mxu0 0.0
        %7733 = vmatprep.subr.mxu0 0.0
        %7734 = vmatpush1.msra.mxu0 0.0
        %7735 = vmatprep.subr.mxu0 0.0
        %7736 = vmatpush1.msra.mxu0 0.0
        %7737 = vmatprep.subr.mxu0 0.0
        %7738 = vmatpush1.msra.mxu0 0.0
        %7739 = vmatprep.subr.mxu0 0.0
        %7740 = vmatpush1.msra.mxu0 0.0
        %7741 = vmatprep.subr.mxu0 0.0
        %7742 = vmatpush1.msra.mxu0 0.0
        %7743 = vmatprep.subr.mxu0 0.0
        %7744 = vmatpush1.msra.mxu0 0.0
        %7745 = vmatprep.subr.mxu0 0.0
        %7746 = vmatpush1.msra.mxu0 0.0
        %7747 = vmatprep.subr.mxu0 0.0
        %7748 = vmatpush1.msra.mxu0 %v7670
        %7749 = vmatprep.subr.mxu0 0.0
        %7750 = vmatpush1.msra.mxu0 %v7669
        %7751 = vmatprep.subr.mxu0 0.0
        %7752 = vmatpush2.msra.mxu0 0.0
        %7753 = vmatprep.subr.mxu0 0.0
        %7754 = vmatpush2.msra.mxu0 0.0
        %7755 = vmatprep.subr.mxu0 0.0
        %7756 = vmatpush2.msra.mxu0 0.0
        %7757 = vmatprep.subr.mxu0 0.0
        %7758 = vmatpush2.msra.mxu0 0.0
        %7759 = vmatprep.subr.mxu0 0.0
        %7760 = vmatpush2.msra.mxu0 0.0
        %7761 = vmatprep.subr.mxu0 0.0
        %7762 = vmatpush2.msra.mxu0 0.0
        %7763 = vmatprep.subr.mxu0 0.0
        %7764 = vmatpush2.msra.mxu0 0.0
        %7765 = vmatprep.subr.mxu0 0.0
        %7766 = vmatpush2.msra.mxu0 0.0
        %7767 = vmatprep.subr.mxu0 0.0
        %7768 = vmatpush2.msra.mxu0 0.0
        %7769 = vmatprep.subr.mxu0 0.0
        %7770 = vmatpush2.msra.mxu0 0.0
        %7771 = vmatprep.subr.mxu0 0.0
        %7772 = vmatpush2.msra.mxu0 0.0
        %7773 = vmatprep.subr.mxu0 0.0
        %7774 = vmatpush2.msra.mxu0 0.0
        %7775 = vmatprep.subr.mxu0 0.0
        %7776 = vmatpush2.msra.mxu0 0.0
        %7777 = vmatprep.subr.mxu0 0.0
        %7778 = vmatpush2.msra.mxu0 0.0
        %7779 = vmatprep.subr.mxu0 0.0
        %7780 = vmatpush2.msra.mxu0 0.0
        %7781 = vmatprep.subr.mxu0 0.0
        %7782 = vmatpush2.msra.mxu0 0.0
        %7783 = vmatprep.mubr.f32.mxu0 0.0
        %7784 = vmatmul.mubr.f32.gmra.mxu0 %v7672
        %v7785 = vpop.f32.mrf.mxu0
        %v7786 = vadd.f32 0.0, %v7785
        %v7787 = vpop.f32.mrf.mxu0
        %7788 = vmatprep.mubr.f32.mxu0 0.0
        %7789 = vmatmul.mubr.f32.gmra.mxu0 %v7675
        %v7790 = vpop.f32.mrf.mxu0
        %v7791 = vadd.f32 0.0, %v7790
        %v7792 = vpop.f32.mrf.mxu0
        %7793 = vmatprep.mubr.f32.mxu0 0.0
        %7794 = vmatmul.mubr.f32.gmra.mxu0 %v7678
        %v7795 = vpop.f32.mrf.mxu0
        %v7796 = vadd.f32 0.0, %v7795
        %v7797 = vpop.f32.mrf.mxu0
        %7798 = vmatprep.mubr.f32.mxu0 0.0
        %7799 = vmatmul.mubr.f32.gmra.mxu0 %v7681
        %v7800 = vpop.f32.mrf.mxu0
        %v7801 = vadd.f32 0.0, %v7800
        %v7802 = vpop.f32.mrf.mxu0
        %7803 = vmatprep.mubr.f32.mxu0 0.0
        %7804 = vmatmul.mubr.f32.gmra.mxu0 %v7684
        %v7805 = vpop.f32.mrf.mxu0
        %v7806 = vadd.f32 0.0, %v7805
        %v7807 = vpop.f32.mrf.mxu0
        %7808 = vmatprep.mubr.f32.mxu0 0.0
        %7809 = vmatmul.mubr.f32.gmra.mxu0 %v7687
        %v7810 = vpop.f32.mrf.mxu0
        %v7811 = vadd.f32 0.0, %v7810
        %v7812 = vpop.f32.mrf.mxu0
        %7813 = vmatprep.mubr.f32.mxu0 0.0
        %7814 = vmatmul.mubr.f32.gmra.mxu0 %v7690
        %v7815 = vpop.f32.mrf.mxu0
        %v7816 = vadd.f32 0.0, %v7815
        %v7817 = vpop.f32.mrf.mxu0
        %7818 = vmatprep.mubr.f32.mxu0 0.0
        %7819 = vmatmul.mubr.f32.gmra.mxu0 %v7693
        %v7820 = vpop.f32.mrf.mxu0
        %v7821 = vadd.f32 0.0, %v7820
        %v7822 = vpop.f32.mrf.mxu0
        %7823 = vmatprep.mubr.f32.mxu0 0.0
        %7824 = vmatmul.mubr.f32.gmra.mxu0 %v7696
        %v7825 = vpop.f32.mrf.mxu0
        %v7826 = vadd.f32 0.0, %v7825
        %v7827 = vpop.f32.mrf.mxu0
        %7828 = vmatprep.mubr.f32.mxu0 0.0
        %7829 = vmatmul.mubr.f32.gmra.mxu0 %v7699
        %v7830 = vpop.f32.mrf.mxu0
        %v7831 = vadd.f32 0.0, %v7830
        %v7832 = vpop.f32.mrf.mxu0
        %7833 = vmatprep.mubr.f32.mxu0 0.0
        %7834 = vmatmul.mubr.f32.gmra.mxu0 %v7702
        %v7835 = vpop.f32.mrf.mxu0
        %v7836 = vadd.f32 0.0, %v7835
        %v7837 = vpop.f32.mrf.mxu0
        %7838 = vmatprep.mubr.f32.mxu0 0.0
        %7839 = vmatmul.mubr.f32.gmra.mxu0 %v7705
        %v7840 = vpop.f32.mrf.mxu0
        %v7841 = vadd.f32 0.0, %v7840
        %v7842 = vpop.f32.mrf.mxu0
        %7843 = vmatprep.mubr.f32.mxu0 0.0
        %7844 = vmatmul.mubr.f32.gmra.mxu0 %v7708
        %v7845 = vpop.f32.mrf.mxu0
        %v7846 = vadd.f32 0.0, %v7845
        %v7847 = vpop.f32.mrf.mxu0
        %7848 = vmatprep.mubr.f32.mxu0 0.0
        %7849 = vmatmul.mubr.f32.gmra.mxu0 %v7711
        %v7850 = vpop.f32.mrf.mxu0
        %v7851 = vadd.f32 0.0, %v7850
        %v7852 = vpop.f32.mrf.mxu0
        %7853 = vmatprep.mubr.f32.mxu0 0.0
        %7854 = vmatmul.mubr.f32.gmra.mxu0 %v7714
        %v7855 = vpop.f32.mrf.mxu0
        %v7856 = vadd.f32 0.0, %v7855
        %v7857 = vpop.f32.mrf.mxu0
        %7858 = vmatprep.mubr.f32.mxu0 0.0
        %7859 = vmatmul.mubr.f32.gmra.mxu0 %v7717
        %v7860 = vpop.f32.mrf.mxu0
        %v7861 = vadd.f32 0.0, %v7860
        %v7862 = vpop.f32.mrf.mxu0
        %7863 = vdwg.mxu0
        %v7864 = vld [vmem:[%s5] sm:$0x1]
        %v7865 = vld [vmem:[%s10 + $0x10] sm:$0xff]
        %v7866 = vld [vmem:[%s10 + $0x18] sm:$0xff]
        %7867 = vmatprep.subr.mxu0 0.0
        %7868 = vmatpush1.msra.mxu0 0.0
        %7869 = vmatprep.subr.mxu0 0.0
        %7870 = vmatpush1.msra.mxu0 0.0
        %7871 = vmatprep.subr.mxu0 0.0
        %7872 = vmatpush1.msra.mxu0 0.0
        %7873 = vmatprep.subr.mxu0 0.0
        %7874 = vmatpush1.msra.mxu0 0.0
        %7875 = vmatprep.subr.mxu0 0.0
        %7876 = vmatpush1.msra.mxu0 0.0
        %7877 = vmatprep.subr.mxu0 0.0
        %7878 = vmatpush1.msra.mxu0 0.0
        %7879 = vmatprep.subr.mxu0 0.0
        %7880 = vmatpush1.msra.mxu0 0.0
        %7881 = vmatprep.subr.mxu0 0.0
        %7882 = vmatpush1.msra.mxu0 0.0
        %7883 = vmatprep.subr.mxu0 0.0
        %7884 = vmatpush1.msra.mxu0 0.0
        %7885 = vmatprep.subr.mxu0 0.0
        %7886 = vmatpush1.msra.mxu0 0.0
        %7887 = vmatprep.subr.mxu0 0.0
        %7888 = vmatpush1.msra.mxu0 0.0
        %7889 = vmatprep.subr.mxu0 0.0
        %7890 = vmatpush1.msra.mxu0 0.0
        %7891 = vmatprep.subr.mxu0 0.0
        %7892 = vmatpush1.msra.mxu0 0.0
        %7893 = vmatprep.subr.mxu0 0.0
        %7894 = vmatpush1.msra.mxu0 0.0
        %7895 = vmatprep.subr.mxu0 0.0
        %7896 = vmatpush1.msra.mxu0 %v7866
        %7897 = vmatprep.subr.mxu0 0.0
        %7898 = vmatpush1.msra.mxu0 %v7865
        %7899 = vmatprep.subr.mxu0 0.0
        %7900 = vmatpush2.msra.mxu0 0.0
        %7901 = vmatprep.subr.mxu0 0.0
        %7902 = vmatpush2.msra.mxu0 0.0
        %7903 = vmatprep.subr.mxu0 0.0
        %7904 = vmatpush2.msra.mxu0 0.0
        %7905 = vmatprep.subr.mxu0 0.0
        %7906 = vmatpush2.msra.mxu0 0.0
        %7907 = vmatprep.subr.mxu0 0.0
        %7908 = vmatpush2.msra.mxu0 0.0
        %7909 = vmatprep.subr.mxu0 0.0
        %7910 = vmatpush2.msra.mxu0 0.0
        %7911 = vmatprep.subr.mxu0 0.0
        %7912 = vmatpush2.msra.mxu0 0.0
        %7913 = vmatprep.subr.mxu0 0.0
        %7914 = vmatpush2.msra.mxu0 0.0
        %7915 = vmatprep.subr.mxu0 0.0
        %7916 = vmatpush2.msra.mxu0 0.0
        %7917 = vmatprep.subr.mxu0 0.0
        %7918 = vmatpush2.msra.mxu0 0.0
        %7919 = vmatprep.subr.mxu0 0.0
        %7920 = vmatpush2.msra.mxu0 0.0
        %7921 = vmatprep.subr.mxu0 0.0
        %7922 = vmatpush2.msra.mxu0 0.0
        %7923 = vmatprep.subr.mxu0 0.0
        %7924 = vmatpush2.msra.mxu0 0.0
        %7925 = vmatprep.subr.mxu0 0.0
        %7926 = vmatpush2.msra.mxu0 0.0
        %7927 = vmatprep.subr.mxu0 0.0
        %7928 = vmatpush2.msra.mxu0 0.0
        %7929 = vmatprep.subr.mxu0 0.0
        %7930 = vmatpush2.msra.mxu0 0.0
        %7931 = vmatprep.mubr.f32.mxu0 0.0
        %7932 = vmatmul.mubr.f32.gmra.mxu0 %v7672
        %v7933 = vpop.f32.mrf.mxu0
        %v7934 = vadd.f32 0.0, %v7933
        %v7935 = vpop.f32.mrf.mxu0
        %7936 = vmatprep.mubr.f32.mxu0 0.0
        %7937 = vmatmul.mubr.f32.gmra.mxu0 %v7675
        %v7938 = vpop.f32.mrf.mxu0
        %v7939 = vadd.f32 0.0, %v7938
        %v7940 = vpop.f32.mrf.mxu0
        %7941 = vmatprep.mubr.f32.mxu0 0.0
        %7942 = vmatmul.mubr.f32.gmra.mxu0 %v7678
        %v7943 = vpop.f32.mrf.mxu0
        %v7944 = vadd.f32 0.0, %v7943
        %v7945 = vpop.f32.mrf.mxu0
        %7946 = vmatprep.mubr.f32.mxu0 0.0
        %7947 = vmatmul.mubr.f32.gmra.mxu0 %v7681
        %v7948 = vpop.f32.mrf.mxu0
        %v7949 = vadd.f32 0.0, %v7948
        %v7950 = vpop.f32.mrf.mxu0
        %7951 = vmatprep.mubr.f32.mxu0 0.0
        %7952 = vmatmul.mubr.f32.gmra.mxu0 %v7684
        %v7953 = vpop.f32.mrf.mxu0
        %v7954 = vadd.f32 0.0, %v7953
        %v7955 = vpop.f32.mrf.mxu0
        %7956 = vmatprep.mubr.f32.mxu0 0.0
        %7957 = vmatmul.mubr.f32.gmra.mxu0 %v7687
        %v7958 = vpop.f32.mrf.mxu0
        %v7959 = vadd.f32 0.0, %v7958
        %v7960 = vpop.f32.mrf.mxu0
        %7961 = vmatprep.mubr.f32.mxu0 0.0
        %7962 = vmatmul.mubr.f32.gmra.mxu0 %v7690
        %v7963 = vpop.f32.mrf.mxu0
        %v7964 = vadd.f32 0.0, %v7963
        %v7965 = vpop.f32.mrf.mxu0
        %7966 = vmatprep.mubr.f32.mxu0 0.0
        %7967 = vmatmul.mubr.f32.gmra.mxu0 %v7693
        %v7968 = vpop.f32.mrf.mxu0
        %v7969 = vadd.f32 0.0, %v7968
        %v7970 = vpop.f32.mrf.mxu0
        %7971 = vmatprep.mubr.f32.mxu0 0.0
        %7972 = vmatmul.mubr.f32.gmra.mxu0 %v7696
        %v7973 = vpop.f32.mrf.mxu0
        %v7974 = vadd.f32 0.0, %v7973
        %v7975 = vpop.f32.mrf.mxu0
        %7976 = vmatprep.mubr.f32.mxu0 0.0
        %7977 = vmatmul.mubr.f32.gmra.mxu0 %v7699
        %v7978 = vpop.f32.mrf.mxu0
        %v7979 = vadd.f32 0.0, %v7978
        %v7980 = vpop.f32.mrf.mxu0
        %7981 = vmatprep.mubr.f32.mxu0 0.0
        %7982 = vmatmul.mubr.f32.gmra.mxu0 %v7702
        %v7983 = vpop.f32.mrf.mxu0
        %v7984 = vadd.f32 0.0, %v7983
        %v7985 = vpop.f32.mrf.mxu0
        %7986 = vmatprep.mubr.f32.mxu0 0.0
        %7987 = vmatmul.mubr.f32.gmra.mxu0 %v7705
        %v7988 = vpop.f32.mrf.mxu0
        %v7989 = vadd.f32 0.0, %v7988
        %v7990 = vpop.f32.mrf.mxu0
        %7991 = vmatprep.mubr.f32.mxu0 0.0
        %7992 = vmatmul.mubr.f32.gmra.mxu0 %v7708
        %v7993 = vpop.f32.mrf.mxu0
        %v7994 = vadd.f32 0.0, %v7993
        %v7995 = vpop.f32.mrf.mxu0
        %7996 = vmatprep.mubr.f32.mxu0 0.0
        %7997 = vmatmul.mubr.f32.gmra.mxu0 %v7711
        %v7998 = vpop.f32.mrf.mxu0
        %v7999 = vadd.f32 0.0, %v7998
        %v8000 = vpop.f32.mrf.mxu0
        %8001 = vmatprep.mubr.f32.mxu0 0.0
        %8002 = vmatmul.mubr.f32.gmra.mxu0 %v7714
        %v8003 = vpop.f32.mrf.mxu0
        %v8004 = vadd.f32 0.0, %v8003
        %v8005 = vpop.f32.mrf.mxu0
        %8006 = vmatprep.mubr.f32.mxu0 0.0
        %8007 = vmatmul.mubr.f32.gmra.mxu0 %v7717
        %v8008 = vpop.f32.mrf.mxu0
        %v8009 = vadd.f32 0.0, %v8008
        %v8010 = vpop.f32.mrf.mxu0
        %8011 = vdwg.mxu0
        %v8012 = vld [vmem:[%s5 + $0x1] sm:$0x1]
        %8013 = vmatprep.subr.mxu0 0.0
        %8014 = vmatpush1.msra.mxu0 %v8009
        %8015 = vmatprep.subr.mxu0 0.0
        %8016 = vmatpush1.msra.mxu0 %v8004
        %8017 = vmatprep.subr.mxu0 0.0
        %8018 = vmatpush1.msra.mxu0 %v7999
        %8019 = vmatprep.subr.mxu0 0.0
        %8020 = vmatpush1.msra.mxu0 %v7994
        %8021 = vmatprep.subr.mxu0 0.0
        %8022 = vmatpush1.msra.mxu0 %v7989
        %8023 = vmatprep.subr.mxu0 0.0
        %8024 = vmatpush1.msra.mxu0 %v7984
        %8025 = vmatprep.subr.mxu0 0.0
        %8026 = vmatpush1.msra.mxu0 %v7979
        %8027 = vmatprep.subr.mxu0 0.0
        %8028 = vmatpush1.msra.mxu0 %v7974
        %8029 = vmatprep.subr.mxu0 0.0
        %8030 = vmatpush1.msra.mxu0 %v7969
        %8031 = vmatprep.subr.mxu0 0.0
        %8032 = vmatpush1.msra.mxu0 %v7964
        %8033 = vmatprep.subr.mxu0 0.0
        %8034 = vmatpush1.msra.mxu0 %v7959
        %8035 = vmatprep.subr.mxu0 0.0
        %8036 = vmatpush1.msra.mxu0 %v7954
        %8037 = vmatprep.subr.mxu0 0.0
        %8038 = vmatpush1.msra.mxu0 %v7949
        %8039 = vmatprep.subr.mxu0 0.0
        %8040 = vmatpush1.msra.mxu0 %v7944
        %8041 = vmatprep.subr.mxu0 0.0
        %8042 = vmatpush1.msra.mxu0 %v7939
        %8043 = vmatprep.subr.mxu0 0.0
        %8044 = vmatpush1.msra.mxu0 %v7934
        %8045 = vmatprep.subr.mxu0 0.0
        %8046 = vmatpush2.msra.mxu0 0.0
        %8047 = vmatprep.subr.mxu0 0.0
        %8048 = vmatpush2.msra.mxu0 0.0
        %8049 = vmatprep.subr.mxu0 0.0
        %8050 = vmatpush2.msra.mxu0 0.0
        %8051 = vmatprep.subr.mxu0 0.0
        %8052 = vmatpush2.msra.mxu0 0.0
        %8053 = vmatprep.subr.mxu0 0.0
        %8054 = vmatpush2.msra.mxu0 0.0
        %8055 = vmatprep.subr.mxu0 0.0
        %8056 = vmatpush2.msra.mxu0 0.0
        %8057 = vmatprep.subr.mxu0 0.0
        %8058 = vmatpush2.msra.mxu0 0.0
        %8059 = vmatprep.subr.mxu0 0.0
        %8060 = vmatpush2.msra.mxu0 0.0
        %8061 = vmatprep.subr.mxu0 0.0
        %8062 = vmatpush2.msra.mxu0 0.0
        %8063 = vmatprep.subr.mxu0 0.0
        %8064 = vmatpush2.msra.mxu0 0.0
        %8065 = vmatprep.subr.mxu0 0.0
        %8066 = vmatpush2.msra.mxu0 0.0
        %8067 = vmatprep.subr.mxu0 0.0
        %8068 = vmatpush2.msra.mxu0 0.0
        %8069 = vmatprep.subr.mxu0 0.0
        %8070 = vmatpush2.msra.mxu0 0.0
        %8071 = vmatprep.subr.mxu0 0.0
        %8072 = vmatpush2.msra.mxu0 0.0
        %8073 = vmatprep.subr.mxu0 0.0
        %8074 = vmatpush2.msra.mxu0 0.0
        %8075 = vmatprep.subr.mxu0 0.0
        %8076 = vmatpush2.msra.mxu0 0.0
        %8077 = vmatprep.mubr.f32.mxu0 0.0
        %8078 = vmatmul.mubr.f32.gmra.mxu0 %v8012
        %v8079 = vpop.f32.mrf.mxu0
        %v8080 = vadd.f32 0.0, %v8079
        %v8081 = vpop.f32.mrf.mxu0
        %8082 = vdwg.mxu0
        %8083 = vmatprep.subr.mxu0 0.0
        %8084 = vmatpush1.msra.mxu0 %v7861
        %8085 = vmatprep.subr.mxu0 0.0
        %8086 = vmatpush1.msra.mxu0 %v7856
        %8087 = vmatprep.subr.mxu0 0.0
        %8088 = vmatpush1.msra.mxu0 %v7851
        %8089 = vmatprep.subr.mxu0 0.0
        %8090 = vmatpush1.msra.mxu0 %v7846
        %8091 = vmatprep.subr.mxu0 0.0
        %8092 = vmatpush1.msra.mxu0 %v7841
        %8093 = vmatprep.subr.mxu0 0.0
        %8094 = vmatpush1.msra.mxu0 %v7836
        %8095 = vmatprep.subr.mxu0 0.0
        %8096 = vmatpush1.msra.mxu0 %v7831
        %8097 = vmatprep.subr.mxu0 0.0
        %8098 = vmatpush1.msra.mxu0 %v7826
        %8099 = vmatprep.subr.mxu0 0.0
        %8100 = vmatpush1.msra.mxu0 %v7821
        %8101 = vmatprep.subr.mxu0 0.0
        %8102 = vmatpush1.msra.mxu0 %v7816
        %8103 = vmatprep.subr.mxu0 0.0
        %8104 = vmatpush1.msra.mxu0 %v7811
        %8105 = vmatprep.subr.mxu0 0.0
        %8106 = vmatpush1.msra.mxu0 %v7806
        %8107 = vmatprep.subr.mxu0 0.0
        %8108 = vmatpush1.msra.mxu0 %v7801
        %8109 = vmatprep.subr.mxu0 0.0
        %8110 = vmatpush1.msra.mxu0 %v7796
        %8111 = vmatprep.subr.mxu0 0.0
        %8112 = vmatpush1.msra.mxu0 %v7791
        %8113 = vmatprep.subr.mxu0 0.0
        %8114 = vmatpush1.msra.mxu0 %v7786
        %8115 = vmatprep.subr.mxu0 0.0
        %8116 = vmatpush2.msra.mxu0 0.0
        %8117 = vmatprep.subr.mxu0 0.0
        %8118 = vmatpush2.msra.mxu0 0.0
        %8119 = vmatprep.subr.mxu0 0.0
        %8120 = vmatpush2.msra.mxu0 0.0
        %8121 = vmatprep.subr.mxu0 0.0
        %8122 = vmatpush2.msra.mxu0 0.0
        %8123 = vmatprep.subr.mxu0 0.0
        %8124 = vmatpush2.msra.mxu0 0.0
        %8125 = vmatprep.subr.mxu0 0.0
        %8126 = vmatpush2.msra.mxu0 0.0
        %8127 = vmatprep.subr.mxu0 0.0
        %8128 = vmatpush2.msra.mxu0 0.0
        %8129 = vmatprep.subr.mxu0 0.0
        %8130 = vmatpush2.msra.mxu0 0.0
        %8131 = vmatprep.subr.mxu0 0.0
        %8132 = vmatpush2.msra.mxu0 0.0
        %8133 = vmatprep.subr.mxu0 0.0
        %8134 = vmatpush2.msra.mxu0 0.0
        %8135 = vmatprep.subr.mxu0 0.0
        %8136 = vmatpush2.msra.mxu0 0.0
        %8137 = vmatprep.subr.mxu0 0.0
        %8138 = vmatpush2.msra.mxu0 0.0
        %8139 = vmatprep.subr.mxu0 0.0
        %8140 = vmatpush2.msra.mxu0 0.0
        %8141 = vmatprep.subr.mxu0 0.0
        %8142 = vmatpush2.msra.mxu0 0.0
        %8143 = vmatprep.subr.mxu0 0.0
        %8144 = vmatpush2.msra.mxu0 0.0
        %8145 = vmatprep.subr.mxu0 0.0
        %8146 = vmatpush2.msra.mxu0 0.0
        %8147 = vmatprep.mubr.f32.mxu0 0.0
        %8148 = vmatmul.mubr.f32.gmra.mxu0 %v7864
        %v8149 = vpop.f32.mrf.mxu0
        %v8150 = vadd.f32 %v8080, %v8149
        %v8151 = vpop.f32.mrf.mxu0
        %8152 = vdwg.mxu0
        %v8153 = vld [vmem:[%s10 + $0x20] sm:$0xff]
        %v8154 = vld [vmem:[%s10 + $0x28] sm:$0xff]
        %8155 = vmatprep.subr.mxu0 0.0
        %8156 = vmatpush1.msra.mxu0 0.0
        %8157 = vmatprep.subr.mxu0 0.0
        %8158 = vmatpush1.msra.mxu0 0.0
        %8159 = vmatprep.subr.mxu0 0.0
        %8160 = vmatpush1.msra.mxu0 0.0
        %8161 = vmatprep.subr.mxu0 0.0
        %8162 = vmatpush1.msra.mxu0 0.0
        %8163 = vmatprep.subr.mxu0 0.0
        %8164 = vmatpush1.msra.mxu0 0.0
        %8165 = vmatprep.subr.mxu0 0.0
        %8166 = vmatpush1.msra.mxu0 0.0
        %8167 = vmatprep.subr.mxu0 0.0
        %8168 = vmatpush1.msra.mxu0 0.0
        %8169 = vmatprep.subr.mxu0 0.0
        %8170 = vmatpush1.msra.mxu0 0.0
        %8171 = vmatprep.subr.mxu0 0.0
        %8172 = vmatpush1.msra.mxu0 0.0
        %8173 = vmatprep.subr.mxu0 0.0
        %8174 = vmatpush1.msra.mxu0 0.0
        %8175 = vmatprep.subr.mxu0 0.0
        %8176 = vmatpush1.msra.mxu0 0.0
        %8177 = vmatprep.subr.mxu0 0.0
        %8178 = vmatpush1.msra.mxu0 0.0
        %8179 = vmatprep.subr.mxu0 0.0
        %8180 = vmatpush1.msra.mxu0 0.0
        %8181 = vmatprep.subr.mxu0 0.0
        %8182 = vmatpush1.msra.mxu0 0.0
        %8183 = vmatprep.subr.mxu0 0.0
        %8184 = vmatpush1.msra.mxu0 %v8154
        %8185 = vmatprep.subr.mxu0 0.0
        %8186 = vmatpush1.msra.mxu0 %v8153
        %8187 = vmatprep.subr.mxu0 0.0
        %8188 = vmatpush2.msra.mxu0 0.0
        %8189 = vmatprep.subr.mxu0 0.0
        %8190 = vmatpush2.msra.mxu0 0.0
        %8191 = vmatprep.subr.mxu0 0.0
        %8192 = vmatpush2.msra.mxu0 0.0
        %8193 = vmatprep.subr.mxu0 0.0
        %8194 = vmatpush2.msra.mxu0 0.0
        %8195 = vmatprep.subr.mxu0 0.0
        %8196 = vmatpush2.msra.mxu0 0.0
        %8197 = vmatprep.subr.mxu0 0.0
        %8198 = vmatpush2.msra.mxu0 0.0
        %8199 = vmatprep.subr.mxu0 0.0
        %8200 = vmatpush2.msra.mxu0 0.0
        %8201 = vmatprep.subr.mxu0 0.0
        %8202 = vmatpush2.msra.mxu0 0.0
        %8203 = vmatprep.subr.mxu0 0.0
        %8204 = vmatpush2.msra.mxu0 0.0
        %8205 = vmatprep.subr.mxu0 0.0
        %8206 = vmatpush2.msra.mxu0 0.0
        %8207 = vmatprep.subr.mxu0 0.0
        %8208 = vmatpush2.msra.mxu0 0.0
        %8209 = vmatprep.subr.mxu0 0.0
        %8210 = vmatpush2.msra.mxu0 0.0
        %8211 = vmatprep.subr.mxu0 0.0
        %8212 = vmatpush2.msra.mxu0 0.0
        %8213 = vmatprep.subr.mxu0 0.0
        %8214 = vmatpush2.msra.mxu0 0.0
        %8215 = vmatprep.subr.mxu0 0.0
        %8216 = vmatpush2.msra.mxu0 0.0
        %8217 = vmatprep.subr.mxu0 0.0
        %8218 = vmatpush2.msra.mxu0 0.0
        %8219 = vmatprep.mubr.f32.mxu0 0.0
        %8220 = vmatmul.mubr.f32.gmra.mxu0 %v7672
        %v8221 = vpop.f32.mrf.mxu0
        %v8222 = vadd.f32 0.0, %v8221
        %v8223 = vpop.f32.mrf.mxu0
        %8224 = vmatprep.mubr.f32.mxu0 0.0
        %8225 = vmatmul.mubr.f32.gmra.mxu0 %v7675
        %v8226 = vpop.f32.mrf.mxu0
        %v8227 = vadd.f32 0.0, %v8226
        %v8228 = vpop.f32.mrf.mxu0
        %8229 = vmatprep.mubr.f32.mxu0 0.0
        %8230 = vmatmul.mubr.f32.gmra.mxu0 %v7678
        %v8231 = vpop.f32.mrf.mxu0
        %v8232 = vadd.f32 0.0, %v8231
        %v8233 = vpop.f32.mrf.mxu0
        %8234 = vmatprep.mubr.f32.mxu0 0.0
        %8235 = vmatmul.mubr.f32.gmra.mxu0 %v7681
        %v8236 = vpop.f32.mrf.mxu0
        %v8237 = vadd.f32 0.0, %v8236
        %v8238 = vpop.f32.mrf.mxu0
        %8239 = vmatprep.mubr.f32.mxu0 0.0
        %8240 = vmatmul.mubr.f32.gmra.mxu0 %v7684
        %v8241 = vpop.f32.mrf.mxu0
        %v8242 = vadd.f32 0.0, %v8241
        %v8243 = vpop.f32.mrf.mxu0
        %8244 = vmatprep.mubr.f32.mxu0 0.0
        %8245 = vmatmul.mubr.f32.gmra.mxu0 %v7687
        %v8246 = vpop.f32.mrf.mxu0
        %v8247 = vadd.f32 0.0, %v8246
        %v8248 = vpop.f32.mrf.mxu0
        %8249 = vmatprep.mubr.f32.mxu0 0.0
        %8250 = vmatmul.mubr.f32.gmra.mxu0 %v7690
        %v8251 = vpop.f32.mrf.mxu0
        %v8252 = vadd.f32 0.0, %v8251
        %v8253 = vpop.f32.mrf.mxu0
        %8254 = vmatprep.mubr.f32.mxu0 0.0
        %8255 = vmatmul.mubr.f32.gmra.mxu0 %v7693
        %v8256 = vpop.f32.mrf.mxu0
        %v8257 = vadd.f32 0.0, %v8256
        %v8258 = vpop.f32.mrf.mxu0
        %8259 = vmatprep.mubr.f32.mxu0 0.0
        %8260 = vmatmul.mubr.f32.gmra.mxu0 %v7696
        %v8261 = vpop.f32.mrf.mxu0
        %v8262 = vadd.f32 0.0, %v8261
        %v8263 = vpop.f32.mrf.mxu0
        %8264 = vmatprep.mubr.f32.mxu0 0.0
        %8265 = vmatmul.mubr.f32.gmra.mxu0 %v7699
        %v8266 = vpop.f32.mrf.mxu0
        %v8267 = vadd.f32 0.0, %v8266
        %v8268 = vpop.f32.mrf.mxu0
        %8269 = vmatprep.mubr.f32.mxu0 0.0
        %8270 = vmatmul.mubr.f32.gmra.mxu0 %v7702
        %v8271 = vpop.f32.mrf.mxu0
        %v8272 = vadd.f32 0.0, %v8271
        %v8273 = vpop.f32.mrf.mxu0
        %8274 = vmatprep.mubr.f32.mxu0 0.0
        %8275 = vmatmul.mubr.f32.gmra.mxu0 %v7705
        %v8276 = vpop.f32.mrf.mxu0
        %v8277 = vadd.f32 0.0, %v8276
        %v8278 = vpop.f32.mrf.mxu0
        %8279 = vmatprep.mubr.f32.mxu0 0.0
        %8280 = vmatmul.mubr.f32.gmra.mxu0 %v7708
        %v8281 = vpop.f32.mrf.mxu0
        %v8282 = vadd.f32 0.0, %v8281
        %v8283 = vpop.f32.mrf.mxu0
        %8284 = vmatprep.mubr.f32.mxu0 0.0
        %8285 = vmatmul.mubr.f32.gmra.mxu0 %v7711
        %v8286 = vpop.f32.mrf.mxu0
        %v8287 = vadd.f32 0.0, %v8286
        %v8288 = vpop.f32.mrf.mxu0
        %8289 = vmatprep.mubr.f32.mxu0 0.0
        %8290 = vmatmul.mubr.f32.gmra.mxu0 %v7714
        %v8291 = vpop.f32.mrf.mxu0
        %v8292 = vadd.f32 0.0, %v8291
        %v8293 = vpop.f32.mrf.mxu0
        %8294 = vmatprep.mubr.f32.mxu0 0.0
        %8295 = vmatmul.mubr.f32.gmra.mxu0 %v7717
        %v8296 = vpop.f32.mrf.mxu0
        %v8297 = vadd.f32 0.0, %v8296
        %v8298 = vpop.f32.mrf.mxu0
        %8299 = vdwg.mxu0
        %v8300 = vld [vmem:[%s5 + $0x2] sm:$0x1]
        %8301 = vmatprep.subr.mxu0 0.0
        %8302 = vmatpush1.msra.mxu0 %v8297
        %8303 = vmatprep.subr.mxu0 0.0
        %8304 = vmatpush1.msra.mxu0 %v8292
        %8305 = vmatprep.subr.mxu0 0.0
        %8306 = vmatpush1.msra.mxu0 %v8287
        %8307 = vmatprep.subr.mxu0 0.0
        %8308 = vmatpush1.msra.mxu0 %v8282
        %8309 = vmatprep.subr.mxu0 0.0
        %8310 = vmatpush1.msra.mxu0 %v8277
        %8311 = vmatprep.subr.mxu0 0.0
        %8312 = vmatpush1.msra.mxu0 %v8272
        %8313 = vmatprep.subr.mxu0 0.0
        %8314 = vmatpush1.msra.mxu0 %v8267
        %8315 = vmatprep.subr.mxu0 0.0
        %8316 = vmatpush1.msra.mxu0 %v8262
        %8317 = vmatprep.subr.mxu0 0.0
        %8318 = vmatpush1.msra.mxu0 %v8257
        %8319 = vmatprep.subr.mxu0 0.0
        %8320 = vmatpush1.msra.mxu0 %v8252
        %8321 = vmatprep.subr.mxu0 0.0
        %8322 = vmatpush1.msra.mxu0 %v8247
        %8323 = vmatprep.subr.mxu0 0.0
        %8324 = vmatpush1.msra.mxu0 %v8242
        %8325 = vmatprep.subr.mxu0 0.0
        %8326 = vmatpush1.msra.mxu0 %v8237
        %8327 = vmatprep.subr.mxu0 0.0
        %8328 = vmatpush1.msra.mxu0 %v8232
        %8329 = vmatprep.subr.mxu0 0.0
        %8330 = vmatpush1.msra.mxu0 %v8227
        %8331 = vmatprep.subr.mxu0 0.0
        %8332 = vmatpush1.msra.mxu0 %v8222
        %8333 = vmatprep.subr.mxu0 0.0
        %8334 = vmatpush2.msra.mxu0 0.0
        %8335 = vmatprep.subr.mxu0 0.0
        %8336 = vmatpush2.msra.mxu0 0.0
        %8337 = vmatprep.subr.mxu0 0.0
        %8338 = vmatpush2.msra.mxu0 0.0
        %8339 = vmatprep.subr.mxu0 0.0
        %8340 = vmatpush2.msra.mxu0 0.0
        %8341 = vmatprep.subr.mxu0 0.0
        %8342 = vmatpush2.msra.mxu0 0.0
        %8343 = vmatprep.subr.mxu0 0.0
        %8344 = vmatpush2.msra.mxu0 0.0
        %8345 = vmatprep.subr.mxu0 0.0
        %8346 = vmatpush2.msra.mxu0 0.0
        %8347 = vmatprep.subr.mxu0 0.0
        %8348 = vmatpush2.msra.mxu0 0.0
        %8349 = vmatprep.subr.mxu0 0.0
        %8350 = vmatpush2.msra.mxu0 0.0
        %8351 = vmatprep.subr.mxu0 0.0
        %8352 = vmatpush2.msra.mxu0 0.0
        %8353 = vmatprep.subr.mxu0 0.0
        %8354 = vmatpush2.msra.mxu0 0.0
        %8355 = vmatprep.subr.mxu0 0.0
        %8356 = vmatpush2.msra.mxu0 0.0
        %8357 = vmatprep.subr.mxu0 0.0
        %8358 = vmatpush2.msra.mxu0 0.0
        %8359 = vmatprep.subr.mxu0 0.0
        %8360 = vmatpush2.msra.mxu0 0.0
        %8361 = vmatprep.subr.mxu0 0.0
        %8362 = vmatpush2.msra.mxu0 0.0
        %8363 = vmatprep.subr.mxu0 0.0
        %8364 = vmatpush2.msra.mxu0 0.0
        %8365 = vmatprep.mubr.f32.mxu0 0.0
        %8366 = vmatmul.mubr.f32.gmra.mxu0 %v8300
        %v8367 = vpop.f32.mrf.mxu0
        %v8368 = vadd.f32 0.0, %v8367
        %v8369 = vpop.f32.mrf.mxu0
        %8370 = vdwg.mxu0
        %v8371 = vadd.f32 %v8150, %v8368
        %v8372 = vld [vmem:[%s10 + $0x30] sm:$0xff]
        %v8373 = vld [vmem:[%s10 + $0x38] sm:$0xff]
        %8374 = vmatprep.subr.mxu0 0.0
        %8375 = vmatpush1.msra.mxu0 0.0
        %8376 = vmatprep.subr.mxu0 0.0
        %8377 = vmatpush1.msra.mxu0 0.0
        %8378 = vmatprep.subr.mxu0 0.0
        %8379 = vmatpush1.msra.mxu0 0.0
        %8380 = vmatprep.subr.mxu0 0.0
        %8381 = vmatpush1.msra.mxu0 0.0
        %8382 = vmatprep.subr.mxu0 0.0
        %8383 = vmatpush1.msra.mxu0 0.0
        %8384 = vmatprep.subr.mxu0 0.0
        %8385 = vmatpush1.msra.mxu0 0.0
        %8386 = vmatprep.subr.mxu0 0.0
        %8387 = vmatpush1.msra.mxu0 0.0
        %8388 = vmatprep.subr.mxu0 0.0
        %8389 = vmatpush1.msra.mxu0 0.0
        %8390 = vmatprep.subr.mxu0 0.0
        %8391 = vmatpush1.msra.mxu0 0.0
        %8392 = vmatprep.subr.mxu0 0.0
        %8393 = vmatpush1.msra.mxu0 0.0
        %8394 = vmatprep.subr.mxu0 0.0
        %8395 = vmatpush1.msra.mxu0 0.0
        %8396 = vmatprep.subr.mxu0 0.0
        %8397 = vmatpush1.msra.mxu0 0.0
        %8398 = vmatprep.subr.mxu0 0.0
        %8399 = vmatpush1.msra.mxu0 0.0
        %8400 = vmatprep.subr.mxu0 0.0
        %8401 = vmatpush1.msra.mxu0 0.0
        %8402 = vmatprep.subr.mxu0 0.0
        %8403 = vmatpush1.msra.mxu0 %v8373
        %8404 = vmatprep.subr.mxu0 0.0
        %8405 = vmatpush1.msra.mxu0 %v8372
        %8406 = vmatprep.subr.mxu0 0.0
        %8407 = vmatpush2.msra.mxu0 0.0
        %8408 = vmatprep.subr.mxu0 0.0
        %8409 = vmatpush2.msra.mxu0 0.0
        %8410 = vmatprep.subr.mxu0 0.0
        %8411 = vmatpush2.msra.mxu0 0.0
        %8412 = vmatprep.subr.mxu0 0.0
        %8413 = vmatpush2.msra.mxu0 0.0
        %8414 = vmatprep.subr.mxu0 0.0
        %8415 = vmatpush2.msra.mxu0 0.0
        %8416 = vmatprep.subr.mxu0 0.0
        %8417 = vmatpush2.msra.mxu0 0.0
        %8418 = vmatprep.subr.mxu0 0.0
        %8419 = vmatpush2.msra.mxu0 0.0
        %8420 = vmatprep.subr.mxu0 0.0
        %8421 = vmatpush2.msra.mxu0 0.0
        %8422 = vmatprep.subr.mxu0 0.0
        %8423 = vmatpush2.msra.mxu0 0.0
        %8424 = vmatprep.subr.mxu0 0.0
        %8425 = vmatpush2.msra.mxu0 0.0
        %8426 = vmatprep.subr.mxu0 0.0
        %8427 = vmatpush2.msra.mxu0 0.0
        %8428 = vmatprep.subr.mxu0 0.0
        %8429 = vmatpush2.msra.mxu0 0.0
        %8430 = vmatprep.subr.mxu0 0.0
        %8431 = vmatpush2.msra.mxu0 0.0
        %8432 = vmatprep.subr.mxu0 0.0
        %8433 = vmatpush2.msra.mxu0 0.0
        %8434 = vmatprep.subr.mxu0 0.0
        %8435 = vmatpush2.msra.mxu0 0.0
        %8436 = vmatprep.subr.mxu0 0.0
        %8437 = vmatpush2.msra.mxu0 0.0
        %8438 = vmatprep.mubr.f32.mxu0 0.0
        %8439 = vmatmul.mubr.f32.gmra.mxu0 %v7672
        %v8440 = vpop.f32.mrf.mxu0
        %v8441 = vadd.f32 0.0, %v8440
        %v8442 = vpop.f32.mrf.mxu0
        %8443 = vmatprep.mubr.f32.mxu0 0.0
        %8444 = vmatmul.mubr.f32.gmra.mxu0 %v7675
        %v8445 = vpop.f32.mrf.mxu0
        %v8446 = vadd.f32 0.0, %v8445
        %v8447 = vpop.f32.mrf.mxu0
        %8448 = vmatprep.mubr.f32.mxu0 0.0
        %8449 = vmatmul.mubr.f32.gmra.mxu0 %v7678
        %v8450 = vpop.f32.mrf.mxu0
        %v8451 = vadd.f32 0.0, %v8450
        %v8452 = vpop.f32.mrf.mxu0
        %8453 = vmatprep.mubr.f32.mxu0 0.0
        %8454 = vmatmul.mubr.f32.gmra.mxu0 %v7681
        %v8455 = vpop.f32.mrf.mxu0
        %v8456 = vadd.f32 0.0, %v8455
        %v8457 = vpop.f32.mrf.mxu0
        %8458 = vmatprep.mubr.f32.mxu0 0.0
        %8459 = vmatmul.mubr.f32.gmra.mxu0 %v7684
        %v8460 = vpop.f32.mrf.mxu0
        %v8461 = vadd.f32 0.0, %v8460
        %v8462 = vpop.f32.mrf.mxu0
        %8463 = vmatprep.mubr.f32.mxu0 0.0
        %8464 = vmatmul.mubr.f32.gmra.mxu0 %v7687
        %v8465 = vpop.f32.mrf.mxu0
        %v8466 = vadd.f32 0.0, %v8465
        %v8467 = vpop.f32.mrf.mxu0
        %8468 = vmatprep.mubr.f32.mxu0 0.0
        %8469 = vmatmul.mubr.f32.gmra.mxu0 %v7690
        %v8470 = vpop.f32.mrf.mxu0
        %v8471 = vadd.f32 0.0, %v8470
        %v8472 = vpop.f32.mrf.mxu0
        %8473 = vmatprep.mubr.f32.mxu0 0.0
        %8474 = vmatmul.mubr.f32.gmra.mxu0 %v7693
        %v8475 = vpop.f32.mrf.mxu0
        %v8476 = vadd.f32 0.0, %v8475
        %v8477 = vpop.f32.mrf.mxu0
        %8478 = vmatprep.mubr.f32.mxu0 0.0
        %8479 = vmatmul.mubr.f32.gmra.mxu0 %v7696
        %v8480 = vpop.f32.mrf.mxu0
        %v8481 = vadd.f32 0.0, %v8480
        %v8482 = vpop.f32.mrf.mxu0
        %8483 = vmatprep.mubr.f32.mxu0 0.0
        %8484 = vmatmul.mubr.f32.gmra.mxu0 %v7699
        %v8485 = vpop.f32.mrf.mxu0
        %v8486 = vadd.f32 0.0, %v8485
        %v8487 = vpop.f32.mrf.mxu0
        %8488 = vmatprep.mubr.f32.mxu0 0.0
        %8489 = vmatmul.mubr.f32.gmra.mxu0 %v7702
        %v8490 = vpop.f32.mrf.mxu0
        %v8491 = vadd.f32 0.0, %v8490
        %v8492 = vpop.f32.mrf.mxu0
        %8493 = vmatprep.mubr.f32.mxu0 0.0
        %8494 = vmatmul.mubr.f32.gmra.mxu0 %v7705
        %v8495 = vpop.f32.mrf.mxu0
        %v8496 = vadd.f32 0.0, %v8495
        %v8497 = vpop.f32.mrf.mxu0
        %8498 = vmatprep.mubr.f32.mxu0 0.0
        %8499 = vmatmul.mubr.f32.gmra.mxu0 %v7708
        %v8500 = vpop.f32.mrf.mxu0
        %v8501 = vadd.f32 0.0, %v8500
        %v8502 = vpop.f32.mrf.mxu0
        %8503 = vmatprep.mubr.f32.mxu0 0.0
        %8504 = vmatmul.mubr.f32.gmra.mxu0 %v7711
        %v8505 = vpop.f32.mrf.mxu0
        %v8506 = vadd.f32 0.0, %v8505
        %v8507 = vpop.f32.mrf.mxu0
        %8508 = vmatprep.mubr.f32.mxu0 0.0
        %8509 = vmatmul.mubr.f32.gmra.mxu0 %v7714
        %v8510 = vpop.f32.mrf.mxu0
        %v8511 = vadd.f32 0.0, %v8510
        %v8512 = vpop.f32.mrf.mxu0
        %8513 = vmatprep.mubr.f32.mxu0 0.0
        %8514 = vmatmul.mubr.f32.gmra.mxu0 %v7717
        %v8515 = vpop.f32.mrf.mxu0
        %v8516 = vadd.f32 0.0, %v8515
        %v8517 = vpop.f32.mrf.mxu0
        %8518 = vdwg.mxu0
        %v8519 = vld [vmem:[%s5 + $0x3] sm:$0x1]
        %8520 = vmatprep.subr.mxu0 0.0
        %8521 = vmatpush1.msra.mxu0 %v8516
        %8522 = vmatprep.subr.mxu0 0.0
        %8523 = vmatpush1.msra.mxu0 %v8511
        %8524 = vmatprep.subr.mxu0 0.0
        %8525 = vmatpush1.msra.mxu0 %v8506
        %8526 = vmatprep.subr.mxu0 0.0
        %8527 = vmatpush1.msra.mxu0 %v8501
        %8528 = vmatprep.subr.mxu0 0.0
        %8529 = vmatpush1.msra.mxu0 %v8496
        %8530 = vmatprep.subr.mxu0 0.0
        %8531 = vmatpush1.msra.mxu0 %v8491
        %8532 = vmatprep.subr.mxu0 0.0
        %8533 = vmatpush1.msra.mxu0 %v8486
        %8534 = vmatprep.subr.mxu0 0.0
        %8535 = vmatpush1.msra.mxu0 %v8481
        %8536 = vmatprep.subr.mxu0 0.0
        %8537 = vmatpush1.msra.mxu0 %v8476
        %8538 = vmatprep.subr.mxu0 0.0
        %8539 = vmatpush1.msra.mxu0 %v8471
        %8540 = vmatprep.subr.mxu0 0.0
        %8541 = vmatpush1.msra.mxu0 %v8466
        %8542 = vmatprep.subr.mxu0 0.0
        %8543 = vmatpush1.msra.mxu0 %v8461
        %8544 = vmatprep.subr.mxu0 0.0
        %8545 = vmatpush1.msra.mxu0 %v8456
        %8546 = vmatprep.subr.mxu0 0.0
        %8547 = vmatpush1.msra.mxu0 %v8451
        %8548 = vmatprep.subr.mxu0 0.0
        %8549 = vmatpush1.msra.mxu0 %v8446
        %8550 = vmatprep.subr.mxu0 0.0
        %8551 = vmatpush1.msra.mxu0 %v8441
        %8552 = vmatprep.subr.mxu0 0.0
        %8553 = vmatpush2.msra.mxu0 0.0
        %8554 = vmatprep.subr.mxu0 0.0
        %8555 = vmatpush2.msra.mxu0 0.0
        %8556 = vmatprep.subr.mxu0 0.0
        %8557 = vmatpush2.msra.mxu0 0.0
        %8558 = vmatprep.subr.mxu0 0.0
        %8559 = vmatpush2.msra.mxu0 0.0
        %8560 = vmatprep.subr.mxu0 0.0
        %8561 = vmatpush2.msra.mxu0 0.0
        %8562 = vmatprep.subr.mxu0 0.0
        %8563 = vmatpush2.msra.mxu0 0.0
        %8564 = vmatprep.subr.mxu0 0.0
        %8565 = vmatpush2.msra.mxu0 0.0
        %8566 = vmatprep.subr.mxu0 0.0
        %8567 = vmatpush2.msra.mxu0 0.0
        %8568 = vmatprep.subr.mxu0 0.0
        %8569 = vmatpush2.msra.mxu0 0.0
        %8570 = vmatprep.subr.mxu0 0.0
        %8571 = vmatpush2.msra.mxu0 0.0
        %8572 = vmatprep.subr.mxu0 0.0
        %8573 = vmatpush2.msra.mxu0 0.0
        %8574 = vmatprep.subr.mxu0 0.0
        %8575 = vmatpush2.msra.mxu0 0.0
        %8576 = vmatprep.subr.mxu0 0.0
        %8577 = vmatpush2.msra.mxu0 0.0
        %8578 = vmatprep.subr.mxu0 0.0
        %8579 = vmatpush2.msra.mxu0 0.0
        %8580 = vmatprep.subr.mxu0 0.0
        %8581 = vmatpush2.msra.mxu0 0.0
        %8582 = vmatprep.subr.mxu0 0.0
        %8583 = vmatpush2.msra.mxu0 0.0
        %8584 = vmatprep.mubr.f32.mxu0 0.0
        %8585 = vmatmul.mubr.f32.gmra.mxu0 %v8519
        %v8586 = vpop.f32.mrf.mxu0
        %v8587 = vadd.f32 0.0, %v8586
        %v8588 = vpop.f32.mrf.mxu0
        %8589 = vdwg.mxu0
        %v8590 = vadd.f32 %v8371, %v8587
        %v8591 = vld [vmem:[#allocation2] sm:$0x1]
        %8593 = vset.pattern.permute.xlu0 0
        %8594 = vperm.xlu0 %8593, %v8591
        %v8595 = vpop.permute.xlu0 %8594
        %v8597 = vlaneseq
        %v8598 = vshrl.u32 %v8597, 7
        %v8599 = vsub.s32 0, %v8598
        %v8600 = vrot.slane %v8595, %v8599
        %v8601 = vadd.f32 %v8590, %v8600
        %v8602 = vxor.u32 %v8601, 2147483648
        %v8603 = vmul.f32 %v8602, 1.442695
        %v8604 = vpow.pop %v8603
        %v8605 = vadd.f32 %v8604, 1.0
        %v8606 = vrcp.pop %v8605
        %v8607 = vmul.f32 1.0, %v8606
        %vm8608 = vcmask 57344
        %8609 = vst.msk [vmem:[%s683] sm:$0x1] %vm8608, %v8607
        %p8610 = scmp.lt.s32.totalorder %s32, 1
        %s8611 = scalar_select %p8610, %s32, 1
        %s8612 = scalar_lea.vmem %s19, %s8611
        // Predicated region
        $region120: #{discriminator_forward.1} parent=114 // pred_check
          %p8613 = pneg %p454
        $region121: #{discriminator_forward.1} parent=114 // pred_check_branch
          %8615 = sbr.rel (%p8613) target = $region123
        $region122: #{discriminator_forward.1} parent=114 // pred_region
          _
        $region123: #{discriminator_forward.1} parent=114 // pred_fallthru
          _
      $region115: #{discriminator_forward.1} parent=5 // pred_fallthru
        _
      %p8616 = scmp.le.s32.totalorder 2, %s27
      // Predicated region
      $region124: #{discriminator_forward.1} parent=5 // pred_check
        %p8617 = pneg %p8616
      $region125: #{discriminator_forward.1} parent=5 // pred_check_branch
        %8619 = sbr.rel (%p8617) target = $region127
      $region126: #{discriminator_forward.1} parent=5 // pred_region
        %s8620 = ssub.s32 %s27, 2
        // Predicated region
        $region128: #{discriminator_forward.1} parent=126 // pred_check
          %p8621 = pneg %p460
        $region129: #{discriminator_forward.1} parent=126 // pred_check_branch
          %8623 = sbr.rel (%p8621) target = $region131
        $region130: #{discriminator_forward.1} parent=126 // pred_region
          %p8624 = scmp.lt.s32.totalorder %s33, 1
          %s8625 = scalar_select %p8624, %s33, 1
          %s8626 = scalar_lea.vmem %s19, %s8625
        $region131: #{discriminator_forward.1} parent=126 // pred_fallthru
          _
      $region127: #{discriminator_forward.1} parent=5 // pred_fallthru
        _
    $region6: #{discriminator_forward.1} parent=1 // loop_footer
      %s31 = sadd.s32 1, %s27
    $region7: #{discriminator_forward.1} parent=1 // loop_footer_branch
      %26 = sbr.rel target = $region3
    $region8: #{discriminator_forward.1} parent=1 // loop_exit
      _

</llo_original>
